<compile_context>
chip_gen: v5e
topology: v5e:2x2
jax: 0.10.0
libtpu: 0.0.40
codegen_flags: <defaults>
</compile_context>

<pallas_src>
import functools
from types import SimpleNamespace

import numpy as np
import jax
import jax.numpy as jnp
from jax.experimental import pallas as pl
from jax.experimental.pallas import tpu as pltpu


# ----------------------------------------------------------------------------- kernel

def prior_kernel(*refs, n_layers, kk, layer_dims, n_imgs, slope, eps,
                 t_steps, batch, hidden, nz, clamp_lo, clamp_hi):
    """Fused Prior forward: (conv+leaky[+IN+leaky])*n_layers -> pool -> dense0 -> LSTM -> heads.

    refs = (x, [gsel_l, wstack_l, bias_l] * n_layers,
            d0w, d0b, wih, whh, blstm, wz, bz, out)
    Activations stay in VMEM in a [N*C, S] layout (rows = (image, channel), lanes = spatial).
    Each conv layer is: one batched mix einsum with true weights, a regroup into
    [N*Cout, KK*S_in], and one gather GEMM with a 0/1 selection matrix that also performs
    the tap summation inside the MXU.
    """
    x_ref = refs[0]
    conv_refs = refs[1:1 + 3 * n_layers]
    (d0w_ref, d0b_ref, wih_ref, whh_ref,
     blstm_ref, wz_ref, bz_ref) = refs[1 + 3 * n_layers:-1]
    out_ref = refs[-1]

    a = x_ref[...]                                            # [N*Cin0, S0]
    for l in range(n_layers):
        cin, cout, s_in, s_out = layer_dims[l]
        g_ref = conv_refs[3 * l]                              # [KK*S_in, S_out] bf16 (0/1)
        ws_ref = conv_refs[3 * l + 1]                         # [KK*Cout, Cin] f32 (true W^T)
        b_ref = conv_refs[3 * l + 2]                          # [N*Cout, 1] f32

        # (1) mix-first with the true weights, all taps in one batched einsum.
        a3 = a.reshape(n_imgs, cin, s_in)                     # free reshape (cin % 8 == 0)
        wb = jnp.broadcast_to(ws_ref[...][None], (n_imgs, kk * cout, cin))
        mall = jnp.einsum('nij,njs->nis', wb, a3,
                          preferred_element_type=jnp.float32)  # [N, KK*Cout, S_in]

        # (2) regroup rows (n, k, co) -> rows (n, co), lanes (k, s) with aligned slices.
        pieces = [mall[:, k * cout:(k + 1) * cout, :].reshape(n_imgs * cout, s_in)
                  for k in range(kk)]
        mcat = jnp.concatenate(pieces, axis=1)                # [N*Cout, KK*S_in]

        # (3) gather + tap accumulation as one GEMM against the 0/1 selection matrix.
        gsel = g_ref[...].astype(jnp.float32)                 # [KK*S_in, S_out]
        acc = jnp.dot(mcat, gsel, preferred_element_type=jnp.float32)   # [N*Cout, S_out]

        acc = acc + b_ref[...]
        acc = jnp.where(acc >= 0, acc, slope * acc)           # leaky_relu after conv
        if l > 0:
            # InstanceNorm2d(affine=False, eps=1e-6): per (image, channel) == per row here.
            mu = jnp.mean(acc, axis=1, keepdims=True)
            var = jnp.mean(jnp.square(acc - mu), axis=1, keepdims=True)
            acc = (acc - mu) * jax.lax.rsqrt(var + eps)
            acc = jnp.where(acc >= 0, acc, slope * acc)       # leaky_relu after norm
        a = acc

    # global average pool over spatial lanes -> [N, C_enc]
    c_enc = layer_dims[-1][1]
    s_last = layer_dims[-1][3]
    pooled = jnp.mean(a.reshape(n_imgs, c_enc, s_last), axis=2)

    # dense0 (all rows at once)
    h0 = jnp.dot(pooled, d0w_ref[...], preferred_element_type=jnp.float32) + d0b_ref[...]

    # LSTM: input projection hoisted out of the serial loop, b_ih + b_hh pre-summed.
    xp = jnp.dot(h0, wih_ref[...], preferred_element_type=jnp.float32) + blstm_ref[...]
    h_st = jnp.zeros((batch, hidden), jnp.float32)
    c_st = jnp.zeros((batch, hidden), jnp.float32)
    hs = []
    for t in range(t_steps):                                  # static unroll; only h@Whh serial
        gates = xp[t * batch:(t + 1) * batch, :] + jnp.dot(
            h_st, whh_ref[...], preferred_element_type=jnp.float32)
        i_g = jax.nn.sigmoid(gates[:, 0 * hidden:1 * hidden])
        f_g = jax.nn.sigmoid(gates[:, 1 * hidden:2 * hidden])
        g_g = jnp.tanh(gates[:, 2 * hidden:3 * hidden])
        o_g = jax.nn.sigmoid(gates[:, 3 * hidden:4 * hidden])
        c_st = f_g * c_st + i_g * g_g
        h_st = o_g * jnp.tanh(c_st)
        hs.append(h_st)
    hh = jnp.concatenate(hs, axis=0)                          # [t_steps*batch, hidden]

    # fused heads -> single lane-dense [rows, 2*nz] output; clamp only the log-sigma half.
    z = jnp.dot(hh, wz_ref[...], preferred_element_type=jnp.float32) + bz_ref[...]
    col = jax.lax.broadcasted_iota(jnp.int32, z.shape, 1)
    z = jnp.where(col >= nz, jnp.clip(z, clamp_lo, clamp_hi), z)
    out_ref[...] = z


# ----------------------------------------------------------------------------- wrapper

def _full_spec(shape):
    nd = len(shape)
    return pl.BlockSpec(shape, lambda i, _nd=nd: (0,) * _nd)


def _selection_matrix(H, W, K, stride, pad):
    """0/1 selection matrix [K*K*H*W, OH*OW]; row (k*S_in + s) -> output o iff s == src(k,o)."""
    OH = (H + 2 * pad - K) // stride + 1
    OW = (W + 2 * pad - K) // stride + 1
    S_in = H * W
    G = np.zeros((K * K * S_in, OH * OW), np.float32)
    for kh in range(K):
        for kw in range(K):
            k = kh * K + kw
            for oh in range(OH):
                for ow in range(OW):
                    h = stride * oh + kh - pad
                    w = stride * ow + kw - pad
                    if 0 <= h < H and 0 <= w < W:
                        G[k * S_in + h * W + w, oh * OW + ow] = 1.0
    return G, OH, OW


def prepare_prior_params(params, hp, input_shape):
    """One-time parameter preprocessing (hoisted out of the jitted forward)."""
    T, B, C, H, W = input_shape
    cf = hp.context_frames
    concat_t = (cf - 1) % T
    assert concat_t > 0, "degenerate concat_shape[0] == 0 (context_frames - 1 == T)"
    # TODO(synk): sequence_length > context_frames (h_zeros rows through dense0) unsupported.
    assert hp.sequence_length == hp.context_frames
    if hp.rnn != "lstm":
        raise NotImplementedError  # TODO(synk): GRU branch of the original module.

    N = concat_t * B
    K, stride, pad = 4, 2, 1
    conv_args, layer_dims = [], []
    h_cur, w_cur = H, W
    for w_t, b_t in zip(params["conv_w"], params["conv_b"]):
        cout, cin = int(w_t.shape[0]), int(w_t.shape[1])
        G, OH, OW = _selection_matrix(h_cur, w_cur, K, stride, pad)
        # true weights, per-tap transposed & stacked: rows = (k, cout), cols = cin
        wstack = jnp.transpose(w_t, (2, 3, 0, 1)).reshape(K * K * cout, cin).astype(jnp.float32)
        btile = jnp.tile(b_t.astype(jnp.float32), N).reshape(N * cout, 1)
        conv_args += [jnp.asarray(G, jnp.bfloat16), wstack, btile]
        layer_dims.append((cin, cout, h_cur * w_cur, OH * OW))
        h_cur, w_cur = OH, OW

    hid = int(params["d0_w"].shape[1])
    nz = int(params["d1_w"].shape[1])
    lstm = params["lstm"]
    tail_args = [
        params["d0_w"].astype(jnp.float32),
        params["d0_b"].reshape(1, hid).astype(jnp.float32),
        lstm["wih"].astype(jnp.float32),
        lstm["whh"].astype(jnp.float32),
        (lstm["bih"] + lstm["bhh"]).reshape(1, 4 * hid).astype(jnp.float32),
        jnp.concatenate([params["d1_w"], params["d2_w"]], axis=1).astype(jnp.float32),
        jnp.concatenate([params["d1_b"], params["d2_b"]]).reshape(1, 2 * nz).astype(jnp.float32),
    ]
    arrays = tuple(conv_args + tail_args)
    meta = dict(n_layers=len(params["conv_w"]), kk=K * K, layer_dims=tuple(layer_dims),
                n_imgs=N, t_steps=concat_t, batch=B, hidden=hid, nz=nz,
                cf=cf, in_ch=2 * C, hw=H * W)
    return arrays, meta


def fused_prior_call(x2d, prep_arrays, meta):
    args = (x2d,) + tuple(prep_arrays)
    n_rows = meta["t_steps"] * meta["batch"]
    kern = functools.partial(
        prior_kernel, n_layers=meta["n_layers"], kk=meta["kk"],
        layer_dims=meta["layer_dims"], n_imgs=meta["n_imgs"], slope=0.2, eps=1e-6,
        t_steps=meta["t_steps"], batch=meta["batch"], hidden=meta["hidden"],
        nz=meta["nz"], clamp_lo=-10.0, clamp_hi=10.0)
    return pl.pallas_call(
        kern,
        out_shape=jax.ShapeDtypeStruct((n_rows, 2 * meta["nz"]), jnp.float32),
        grid=(1,),
        in_specs=[_full_spec(a.shape) for a in args],
        out_specs=_full_spec((n_rows, 2 * meta["nz"])),
        compiler_params=pltpu.CompilerParams(dimension_semantics=("arbitrary",)),
    )(*args)
    # TODO(synk): for larger H/W or batch, stream per-layer selection/weight tensors with
    # manual double-buffered DMA (pl.ANY + make_async_copy) and split the batch across the
    # two v7x TensorCores; at these shapes the resident-VMEM single-launch version is fine.


def prior_forward(prep_arrays, inputs, *, meta):
    """inputs: [T, B, C, H, W] float32 (PyTorch NCHW frames)."""
    cf = meta["cf"]
    B = inputs.shape[1]
    nz = meta["nz"]
    ct = meta["t_steps"]
    # concat consecutive context frames along the channel axis, flatten to [N*2C, H*W]
    x = jnp.concatenate([inputs[:cf - 1], inputs[1:cf]], axis=-3)
    x2d = x.reshape(meta["n_imgs"] * meta["in_ch"], meta["hw"]).astype(jnp.float32)
    z = fused_prior_call(x2d, prep_arrays, meta)              # [ct*B, 2*nz]
    return {"zs_mu": z[:, :nz].reshape(ct, B, nz),
            "zs_log_sigma_sq": z[:, nz:].reshape(ct, B, nz)}


# ----------------------------------------------------------------------------- reference

def reference_forward(params, inputs, hp):
    """Plain-XLA reference (HIGHEST matmul precision) for a numerics check."""
    T, B, C, H, W = inputs.shape
    cf = hp.context_frames
    concat_t = (cf - 1) % T
    prec = jax.lax.Precision.HIGHEST

    x = jnp.concatenate([inputs[:cf - 1], inputs[1:cf]], axis=-3).reshape(-1, 2 * C, H, W)
    h = x
    for i, (w, b) in enumerate(zip(params["conv_w"], params["conv_b"])):
        out = jax.lax.conv_general_dilated(
            h, w, window_strides=(2, 2), padding=((1, 1), (1, 1)),
            dimension_numbers=("NCHW", "OIHW", "NCHW"), precision=prec)
        out = out + b[None, :, None, None]
        out = jnp.where(out >= 0, out, 0.2 * out)
        if i > 0:
            mean = out.mean(axis=(2, 3), keepdims=True)
            var = jnp.square(out - mean).mean(axis=(2, 3), keepdims=True)
            out = (out - mean) / jnp.sqrt(var + 1e-6)
            out = jnp.where(out >= 0, out, 0.2 * out)
        h = out
    h = h.mean(axis=(2, 3))                                              # [N, C_enc]
    h = jnp.dot(h, params["d0_w"], precision=prec) + params["d0_b"]      # [N, hid]

    hid = params["d0_w"].shape[1]
    lstm = params["lstm"]
    bsum = lstm["bih"] + lstm["bhh"]
    x_seq = h.reshape(concat_t, B, hid)
    h_st = jnp.zeros((B, hid), jnp.float32)
    c_st = jnp.zeros((B, hid), jnp.float32)
    hs = []
    for t in range(concat_t):
        gates = (jnp.dot(x_seq[t], lstm["wih"], precision=prec)
                 + jnp.dot(h_st, lstm["whh"], precision=prec) + bsum)
        i_g = jax.nn.sigmoid(gates[:, 0 * hid:1 * hid])
        f_g = jax.nn.sigmoid(gates[:, 1 * hid:2 * hid])
        g_g = jnp.tanh(gates[:, 2 * hid:3 * hid])
        o_g = jax.nn.sigmoid(gates[:, 3 * hid:4 * hid])
        c_st = f_g * c_st + i_g * g_g
        h_st = o_g * jnp.tanh(c_st)
        hs.append(h_st)
    hh = jnp.concatenate(hs, axis=0)
    nz = params["d1_w"].shape[1]
    z_mu = jnp.dot(hh, params["d1_w"], precision=prec) + params["d1_b"]
    z_lss = jnp.clip(jnp.dot(hh, params["d2_w"], precision=prec) + params["d2_b"],
                     -10.0, 10.0)
    return z_mu.reshape(concat_t, B, nz), z_lss.reshape(concat_t, B, nz)


# ----------------------------------------------------------------------------- params

def init_params(key, hp, in_channels):
    """Conv weights in PyTorch layout [Cout, Cin, K, K]; Dense kernels [in, out]."""
    nef = hp.nef
    ks = iter(jax.random.split(key, 32))
    chans = [in_channels, nef] + [nef * min(2 ** i, 4) for i in range(1, hp.n_layers)]
    conv_w, conv_b = [], []
    for i in range(hp.n_layers):
        conv_w.append(0.05 * jax.random.normal(next(ks), (chans[i + 1], chans[i], 4, 4),
                                               jnp.float32))
        conv_b.append(0.05 * jax.random.normal(next(ks), (chans[i + 1],), jnp.float32))
    c_enc = nef * min(4, 2 ** (hp.n_layers - 1))
    hid = nef * 4
    return {
        "conv_w": conv_w, "conv_b": conv_b,
        "d0_w": 0.02 * jax.random.normal(next(ks), (c_enc, hid), jnp.float32),
        "d0_b": jnp.zeros((hid,), jnp.float32),
        "lstm": {
            "wih": 0.05 * jax.random.normal(next(ks), (hid, 4 * hid), jnp.float32),
            "whh": 0.05 * jax.random.normal(next(ks), (hid, 4 * hid), jnp.float32),
            "bih": 0.05 * jax.random.normal(next(ks), (4 * hid,), jnp.float32),
            "bhh": 0.05 * jax.random.normal(next(ks), (4 * hid,), jnp.float32),
        },
        "d1_w": 0.02 * jax.random.normal(next(ks), (hid, hp.nz), jnp.float32),
        "d1_b": jnp.zeros((hp.nz,), jnp.float32),
        "d2_w": 0.02 * jax.random.normal(next(ks), (hid, hp.nz), jnp.float32),
        "d2_b": jnp.zeros((hp.nz,), jnp.float32),
    }


# ----------------------------------------------------------------------------- main

if __name__ == "__main__":
    hp = SimpleNamespace(context_frames=4, sequence_length=4, nef=8, n_layers=3,
                         nz=8, rnn="lstm")
    T, B, C, H, W = 4, 2, 4, 16, 16

    inputs = jax.random.normal(jax.random.PRNGKey(0), (T, B, C, H, W), jnp.float32)
    params = init_params(jax.random.PRNGKey(1), hp, in_channels=2 * C)

    # One-time parameter prep (outside jit), then a single fused Pallas call per forward.
    prep_arrays, meta = prepare_prior_params(params, hp, (T, B, C, H, W))
    fwd = jax.jit(functools.partial(prior_forward, meta=meta))
    out = jax.block_until_ready(fwd(prep_arrays, inputs))

    concat_t = (hp.context_frames - 1) % T
    assert out["zs_mu"].shape == (concat_t, B, hp.nz)
    assert out["zs_log_sigma_sq"].shape == (concat_t, B, hp.nz)
    assert bool(jnp.all(jnp.isfinite(out["zs_mu"])))
    assert bool(jnp.all(jnp.isfinite(out["zs_log_sigma_sq"])))

    # numerics check vs the plain-XLA reference (loose tolerance: MXU f32 paths differ)
    ref_mu, ref_lss = reference_forward(params, inputs, hp)
    assert bool(jnp.allclose(out["zs_mu"], ref_mu, rtol=5e-2, atol=5e-3)), "zs_mu mismatch"
    assert bool(jnp.allclose(out["zs_log_sigma_sq"], ref_lss, rtol=5e-2, atol=5e-3)), \
        "zs_log_sigma_sq mismatch"

    print("KERNEL_OK")
</pallas_src>

<mosaic_0001>
module attributes {stable_mosaic.version = 11 : i64} {
  func.func @prior_kernel(%arg0: i32, %arg1: memref<48x256xf32, #tpu.memory_space<vmem>>, %arg2: memref<4096x64xbf16, #tpu.memory_space<vmem>>, %arg3: memref<128x8xf32, #tpu.memory_space<vmem>>, %arg4: memref<48x1xf32, #tpu.memory_space<vmem>>, %arg5: memref<1024x16xbf16, #tpu.memory_space<vmem>>, %arg6: memref<256x8xf32, #tpu.memory_space<vmem>>, %arg7: memref<96x1xf32, #tpu.memory_space<vmem>>, %arg8: memref<256x4xbf16, #tpu.memory_space<vmem>>, %arg9: memref<512x16xf32, #tpu.memory_space<vmem>>, %arg10: memref<192x1xf32, #tpu.memory_space<vmem>>, %arg11: memref<32x32xf32, #tpu.memory_space<vmem>>, %arg12: memref<1x32xf32, #tpu.memory_space<vmem>>, %arg13: memref<32x128xf32, #tpu.memory_space<vmem>>, %arg14: memref<32x128xf32, #tpu.memory_space<vmem>>, %arg15: memref<1x128xf32, #tpu.memory_space<vmem>>, %arg16: memref<32x16xf32, #tpu.memory_space<vmem>>, %arg17: memref<1x16xf32, #tpu.memory_space<vmem>>, %arg18: memref<6x16xf32, #tpu.memory_space<vmem>>) attributes {dimension_semantics = [#tpu.dimension_semantics<arbitrary>], iteration_bounds = array<i64: 1>, scalar_prefetch = 0 : i64, scratch_operands = 0 : i64, tpu.core_type = #tpu.core_type<tc>, window_params = [{pipeline_mode = #tpu.pipeline_mode<synchronous>, transform_indices = @transform_0, window_bounds = array<i64: 48, 256>}, {pipeline_mode = #tpu.pipeline_mode<synchronous>, transform_indices = @transform_1, window_bounds = array<i64: 4096, 64>}, {pipeline_mode = #tpu.pipeline_mode<synchronous>, transform_indices = @transform_2, window_bounds = array<i64: 128, 8>}, {pipeline_mode = #tpu.pipeline_mode<synchronous>, transform_indices = @transform_3, window_bounds = array<i64: 48, 1>}, {pipeline_mode = #tpu.pipeline_mode<synchronous>, transform_indices = @transform_4, window_bounds = array<i64: 1024, 16>}, {pipeline_mode = #tpu.pipeline_mode<synchronous>, transform_indices = @transform_5, window_bounds = array<i64: 256, 8>}, {pipeline_mode = #tpu.pipeline_mode<synchronous>, transform_indices = @transform_6, window_bounds = array<i64: 96, 1>}, {pipeline_mode = #tpu.pipeline_mode<synchronous>, transform_indices = @transform_7, window_bounds = array<i64: 256, 4>}, {pipeline_mode = #tpu.pipeline_mode<synchronous>, transform_indices = @transform_8, window_bounds = array<i64: 512, 16>}, {pipeline_mode = #tpu.pipeline_mode<synchronous>, transform_indices = @transform_9, window_bounds = array<i64: 192, 1>}, {pipeline_mode = #tpu.pipeline_mode<synchronous>, transform_indices = @transform_10, window_bounds = array<i64: 32, 32>}, {pipeline_mode = #tpu.pipeline_mode<synchronous>, transform_indices = @transform_11, window_bounds = array<i64: 1, 32>}, {pipeline_mode = #tpu.pipeline_mode<synchronous>, transform_indices = @transform_12, window_bounds = array<i64: 32, 128>}, {pipeline_mode = #tpu.pipeline_mode<synchronous>, transform_indices = @transform_13, window_bounds = array<i64: 32, 128>}, {pipeline_mode = #tpu.pipeline_mode<synchronous>, transform_indices = @transform_14, window_bounds = array<i64: 1, 128>}, {pipeline_mode = #tpu.pipeline_mode<synchronous>, transform_indices = @transform_15, window_bounds = array<i64: 32, 16>}, {pipeline_mode = #tpu.pipeline_mode<synchronous>, transform_indices = @transform_16, window_bounds = array<i64: 1, 16>}, {pipeline_mode = #tpu.pipeline_mode<synchronous>, transform_indices = @transform_17, window_bounds = array<i64: 6, 16>}]} {
    %c0 = arith.constant 0 : index
    %c0_0 = arith.constant 0 : index
    %0 = vector.load %arg1[%c0, %c0_0] : memref<48x256xf32, #tpu.memory_space<vmem>>, vector<48x256xf32>
    %1 = vector.shape_cast %0 : vector<48x256xf32> to vector<6x8x256xf32>
    %c0_1 = arith.constant 0 : index
    %c0_2 = arith.constant 0 : index
    %2 = vector.load %arg3[%c0_1, %c0_2] : memref<128x8xf32, #tpu.memory_space<vmem>>, vector<128x8xf32>
    %3 = vector.shape_cast %2 : vector<128x8xf32> to vector<1x128x8xf32>
    %4 = vector.shape_cast %3 : vector<1x128x8xf32> to vector<1x128x8xf32>
    %5 = vector.broadcast %4 : vector<1x128x8xf32> to vector<6x128x8xf32>
    "tpu.trace_start"() <{level = 10 : i32, message = "nij,njs->nis"}> : () -> ()
    %cst = arith.constant dense<0.000000e+00> : vector<6x128x256xf32>
    %6 = tpu.matmul %5, %1, %cst {dimension_numbers = #tpu.dot_dimension_numbers<[2], [1], [1], [2], [0, 0, 0, 1, 1, 2], [0], [0]>} : vector<6x128x8xf32>, vector<6x8x256xf32>, vector<6x128x256xf32> -> vector<6x128x256xf32>
    "tpu.trace_stop"() : () -> ()
    %7 = vector.extract_strided_slice %6 {offsets = [0, 0, 0], sizes = [6, 8, 256], strides = [1, 1, 1]} : vector<6x128x256xf32> to vector<6x8x256xf32>
    %8 = vector.shape_cast %7 : vector<6x8x256xf32> to vector<48x256xf32>
    %9 = vector.extract_strided_slice %6 {offsets = [0, 8, 0], sizes = [6, 8, 256], strides = [1, 1, 1]} : vector<6x128x256xf32> to vector<6x8x256xf32>
    %10 = vector.shape_cast %9 : vector<6x8x256xf32> to vector<48x256xf32>
    %11 = vector.extract_strided_slice %6 {offsets = [0, 16, 0], sizes = [6, 8, 256], strides = [1, 1, 1]} : vector<6x128x256xf32> to vector<6x8x256xf32>
    %12 = vector.shape_cast %11 : vector<6x8x256xf32> to vector<48x256xf32>
    %13 = vector.extract_strided_slice %6 {offsets = [0, 24, 0], sizes = [6, 8, 256], strides = [1, 1, 1]} : vector<6x128x256xf32> to vector<6x8x256xf32>
    %14 = vector.shape_cast %13 : vector<6x8x256xf32> to vector<48x256xf32>
    %15 = vector.extract_strided_slice %6 {offsets = [0, 32, 0], sizes = [6, 8, 256], strides = [1, 1, 1]} : vector<6x128x256xf32> to vector<6x8x256xf32>
    %16 = vector.shape_cast %15 : vector<6x8x256xf32> to vector<48x256xf32>
    %17 = vector.extract_strided_slice %6 {offsets = [0, 40, 0], sizes = [6, 8, 256], strides = [1, 1, 1]} : vector<6x128x256xf32> to vector<6x8x256xf32>
    %18 = vector.shape_cast %17 : vector<6x8x256xf32> to vector<48x256xf32>
    %19 = vector.extract_strided_slice %6 {offsets = [0, 48, 0], sizes = [6, 8, 256], strides = [1, 1, 1]} : vector<6x128x256xf32> to vector<6x8x256xf32>
    %20 = vector.shape_cast %19 : vector<6x8x256xf32> to vector<48x256xf32>
    %21 = vector.extract_strided_slice %6 {offsets = [0, 56, 0], sizes = [6, 8, 256], strides = [1, 1, 1]} : vector<6x128x256xf32> to vector<6x8x256xf32>
    %22 = vector.shape_cast %21 : vector<6x8x256xf32> to vector<48x256xf32>
    %23 = vector.extract_strided_slice %6 {offsets = [0, 64, 0], sizes = [6, 8, 256], strides = [1, 1, 1]} : vector<6x128x256xf32> to vector<6x8x256xf32>
    %24 = vector.shape_cast %23 : vector<6x8x256xf32> to vector<48x256xf32>
    %25 = vector.extract_strided_slice %6 {offsets = [0, 72, 0], sizes = [6, 8, 256], strides = [1, 1, 1]} : vector<6x128x256xf32> to vector<6x8x256xf32>
    %26 = vector.shape_cast %25 : vector<6x8x256xf32> to vector<48x256xf32>
    %27 = vector.extract_strided_slice %6 {offsets = [0, 80, 0], sizes = [6, 8, 256], strides = [1, 1, 1]} : vector<6x128x256xf32> to vector<6x8x256xf32>
    %28 = vector.shape_cast %27 : vector<6x8x256xf32> to vector<48x256xf32>
    %29 = vector.extract_strided_slice %6 {offsets = [0, 88, 0], sizes = [6, 8, 256], strides = [1, 1, 1]} : vector<6x128x256xf32> to vector<6x8x256xf32>
    %30 = vector.shape_cast %29 : vector<6x8x256xf32> to vector<48x256xf32>
    %31 = vector.extract_strided_slice %6 {offsets = [0, 96, 0], sizes = [6, 8, 256], strides = [1, 1, 1]} : vector<6x128x256xf32> to vector<6x8x256xf32>
    %32 = vector.shape_cast %31 : vector<6x8x256xf32> to vector<48x256xf32>
    %33 = vector.extract_strided_slice %6 {offsets = [0, 104, 0], sizes = [6, 8, 256], strides = [1, 1, 1]} : vector<6x128x256xf32> to vector<6x8x256xf32>
    %34 = vector.shape_cast %33 : vector<6x8x256xf32> to vector<48x256xf32>
    %35 = vector.extract_strided_slice %6 {offsets = [0, 112, 0], sizes = [6, 8, 256], strides = [1, 1, 1]} : vector<6x128x256xf32> to vector<6x8x256xf32>
    %36 = vector.shape_cast %35 : vector<6x8x256xf32> to vector<48x256xf32>
    %37 = vector.extract_strided_slice %6 {offsets = [0, 120, 0], sizes = [6, 8, 256], strides = [1, 1, 1]} : vector<6x128x256xf32> to vector<6x8x256xf32>
    %38 = vector.shape_cast %37 : vector<6x8x256xf32> to vector<48x256xf32>
    %39 = tpu.concatenate %8, %10, %12, %14, %16, %18, %20, %22, %24, %26, %28, %30, %32, %34, %36, %38 in 1 : vector<48x256xf32>, vector<48x256xf32>, vector<48x256xf32>, vector<48x256xf32>, vector<48x256xf32>, vector<48x256xf32>, vector<48x256xf32>, vector<48x256xf32>, vector<48x256xf32>, vector<48x256xf32>, vector<48x256xf32>, vector<48x256xf32>, vector<48x256xf32>, vector<48x256xf32>, vector<48x256xf32>, vector<48x256xf32> -> vector<48x4096xf32>
    %c0_3 = arith.constant 0 : index
    %c0_4 = arith.constant 0 : index
    %40 = vector.load %arg2[%c0_3, %c0_4] : memref<4096x64xbf16, #tpu.memory_space<vmem>>, vector<4096x64xbf16>
    %41 = arith.extf %40 : vector<4096x64xbf16> to vector<4096x64xf32>
    %cst_5 = arith.constant dense<0.000000e+00> : vector<48x64xf32>
    %42 = tpu.matmul %39, %41, %cst_5 {dimension_numbers = #tpu.dot_dimension_numbers<[1], [0], [0], [1], [0, 0, 1, 1], [], []>} : vector<48x4096xf32>, vector<4096x64xf32>, vector<48x64xf32> -> vector<48x64xf32>
    %c0_6 = arith.constant 0 : index
    %c0_7 = arith.constant 0 : index
    %43 = vector.load %arg4[%c0_6, %c0_7] : memref<48x1xf32, #tpu.memory_space<vmem>>, vector<48x1xf32>
    %44 = vector.broadcast %43 : vector<48x1xf32> to vector<48x64xf32>
    %45 = arith.addf %42, %44 : vector<48x64xf32>
    %cst_8 = arith.constant 0.000000e+00 : f32
    %46 = vector.broadcast %cst_8 : f32 to vector<48x64xf32>
    %47 = arith.cmpf oge, %45, %46 : vector<48x64xf32>
    %cst_9 = arith.constant 2.000000e-01 : f32
    %48 = vector.broadcast %cst_9 : f32 to vector<48x64xf32>
    %49 = arith.mulf %48, %45 : vector<48x64xf32>
    %50 = arith.select %47, %45, %49 : vector<48x64xi1>, vector<48x64xf32>
    %51 = vector.shape_cast %50 : vector<48x64xf32> to vector<6x8x64xf32>
    %c0_10 = arith.constant 0 : index
    %c0_11 = arith.constant 0 : index
    %52 = vector.load %arg6[%c0_10, %c0_11] : memref<256x8xf32, #tpu.memory_space<vmem>>, vector<256x8xf32>
    %53 = vector.shape_cast %52 : vector<256x8xf32> to vector<1x256x8xf32>
    %54 = vector.shape_cast %53 : vector<1x256x8xf32> to vector<1x256x8xf32>
    %55 = vector.broadcast %54 : vector<1x256x8xf32> to vector<6x256x8xf32>
    "tpu.trace_start"() <{level = 10 : i32, message = "nij,njs->nis"}> : () -> ()
    %cst_12 = arith.constant dense<0.000000e+00> : vector<6x256x64xf32>
    %56 = tpu.matmul %55, %51, %cst_12 {dimension_numbers = #tpu.dot_dimension_numbers<[2], [1], [1], [2], [0, 0, 0, 1, 1, 2], [0], [0]>} : vector<6x256x8xf32>, vector<6x8x64xf32>, vector<6x256x64xf32> -> vector<6x256x64xf32>
    "tpu.trace_stop"() : () -> ()
    %57 = vector.extract_strided_slice %56 {offsets = [0, 0, 0], sizes = [6, 16, 64], strides = [1, 1, 1]} : vector<6x256x64xf32> to vector<6x16x64xf32>
    %58 = vector.shape_cast %57 : vector<6x16x64xf32> to vector<96x64xf32>
    %59 = vector.extract_strided_slice %56 {offsets = [0, 16, 0], sizes = [6, 16, 64], strides = [1, 1, 1]} : vector<6x256x64xf32> to vector<6x16x64xf32>
    %60 = vector.shape_cast %59 : vector<6x16x64xf32> to vector<96x64xf32>
    %61 = vector.extract_strided_slice %56 {offsets = [0, 32, 0], sizes = [6, 16, 64], strides = [1, 1, 1]} : vector<6x256x64xf32> to vector<6x16x64xf32>
    %62 = vector.shape_cast %61 : vector<6x16x64xf32> to vector<96x64xf32>
    %63 = vector.extract_strided_slice %56 {offsets = [0, 48, 0], sizes = [6, 16, 64], strides = [1, 1, 1]} : vector<6x256x64xf32> to vector<6x16x64xf32>
    %64 = vector.shape_cast %63 : vector<6x16x64xf32> to vector<96x64xf32>
    %65 = vector.extract_strided_slice %56 {offsets = [0, 64, 0], sizes = [6, 16, 64], strides = [1, 1, 1]} : vector<6x256x64xf32> to vector<6x16x64xf32>
    %66 = vector.shape_cast %65 : vector<6x16x64xf32> to vector<96x64xf32>
    %67 = vector.extract_strided_slice %56 {offsets = [0, 80, 0], sizes = [6, 16, 64], strides = [1, 1, 1]} : vector<6x256x64xf32> to vector<6x16x64xf32>
    %68 = vector.shape_cast %67 : vector<6x16x64xf32> to vector<96x64xf32>
    %69 = vector.extract_strided_slice %56 {offsets = [0, 96, 0], sizes = [6, 16, 64], strides = [1, 1, 1]} : vector<6x256x64xf32> to vector<6x16x64xf32>
    %70 = vector.shape_cast %69 : vector<6x16x64xf32> to vector<96x64xf32>
    %71 = vector.extract_strided_slice %56 {offsets = [0, 112, 0], sizes = [6, 16, 64], strides = [1, 1, 1]} : vector<6x256x64xf32> to vector<6x16x64xf32>
    %72 = vector.shape_cast %71 : vector<6x16x64xf32> to vector<96x64xf32>
    %73 = vector.extract_strided_slice %56 {offsets = [0, 128, 0], sizes = [6, 16, 64], strides = [1, 1, 1]} : vector<6x256x64xf32> to vector<6x16x64xf32>
    %74 = vector.shape_cast %73 : vector<6x16x64xf32> to vector<96x64xf32>
    %75 = vector.extract_strided_slice %56 {offsets = [0, 144, 0], sizes = [6, 16, 64], strides = [1, 1, 1]} : vector<6x256x64xf32> to vector<6x16x64xf32>
    %76 = vector.shape_cast %75 : vector<6x16x64xf32> to vector<96x64xf32>
    %77 = vector.extract_strided_slice %56 {offsets = [0, 160, 0], sizes = [6, 16, 64], strides = [1, 1, 1]} : vector<6x256x64xf32> to vector<6x16x64xf32>
    %78 = vector.shape_cast %77 : vector<6x16x64xf32> to vector<96x64xf32>
    %79 = vector.extract_strided_slice %56 {offsets = [0, 176, 0], sizes = [6, 16, 64], strides = [1, 1, 1]} : vector<6x256x64xf32> to vector<6x16x64xf32>
    %80 = vector.shape_cast %79 : vector<6x16x64xf32> to vector<96x64xf32>
    %81 = vector.extract_strided_slice %56 {offsets = [0, 192, 0], sizes = [6, 16, 64], strides = [1, 1, 1]} : vector<6x256x64xf32> to vector<6x16x64xf32>
    %82 = vector.shape_cast %81 : vector<6x16x64xf32> to vector<96x64xf32>
    %83 = vector.extract_strided_slice %56 {offsets = [0, 208, 0], sizes = [6, 16, 64], strides = [1, 1, 1]} : vector<6x256x64xf32> to vector<6x16x64xf32>
    %84 = vector.shape_cast %83 : vector<6x16x64xf32> to vector<96x64xf32>
    %85 = vector.extract_strided_slice %56 {offsets = [0, 224, 0], sizes = [6, 16, 64], strides = [1, 1, 1]} : vector<6x256x64xf32> to vector<6x16x64xf32>
    %86 = vector.shape_cast %85 : vector<6x16x64xf32> to vector<96x64xf32>
    %87 = vector.extract_strided_slice %56 {offsets = [0, 240, 0], sizes = [6, 16, 64], strides = [1, 1, 1]} : vector<6x256x64xf32> to vector<6x16x64xf32>
    %88 = vector.shape_cast %87 : vector<6x16x64xf32> to vector<96x64xf32>
    %89 = tpu.concatenate %58, %60, %62, %64, %66, %68, %70, %72, %74, %76, %78, %80, %82, %84, %86, %88 in 1 : vector<96x64xf32>, vector<96x64xf32>, vector<96x64xf32>, vector<96x64xf32>, vector<96x64xf32>, vector<96x64xf32>, vector<96x64xf32>, vector<96x64xf32>, vector<96x64xf32>, vector<96x64xf32>, vector<96x64xf32>, vector<96x64xf32>, vector<96x64xf32>, vector<96x64xf32>, vector<96x64xf32>, vector<96x64xf32> -> vector<96x1024xf32>
    %c0_13 = arith.constant 0 : index
    %c0_14 = arith.constant 0 : index
    %90 = vector.load %arg5[%c0_13, %c0_14] : memref<1024x16xbf16, #tpu.memory_space<vmem>>, vector<1024x16xbf16>
    %91 = arith.extf %90 : vector<1024x16xbf16> to vector<1024x16xf32>
    %cst_15 = arith.constant dense<0.000000e+00> : vector<96x16xf32>
    %92 = tpu.matmul %89, %91, %cst_15 {dimension_numbers = #tpu.dot_dimension_numbers<[1], [0], [0], [1], [0, 0, 1, 1], [], []>} : vector<96x1024xf32>, vector<1024x16xf32>, vector<96x16xf32> -> vector<96x16xf32>
    %c0_16 = arith.constant 0 : index
    %c0_17 = arith.constant 0 : index
    %93 = vector.load %arg7[%c0_16, %c0_17] : memref<96x1xf32, #tpu.memory_space<vmem>>, vector<96x1xf32>
    %94 = vector.broadcast %93 : vector<96x1xf32> to vector<96x16xf32>
    %95 = arith.addf %92, %94 : vector<96x16xf32>
    %cst_18 = arith.constant 0.000000e+00 : f32
    %96 = vector.broadcast %cst_18 : f32 to vector<96x16xf32>
    %97 = arith.cmpf oge, %95, %96 : vector<96x16xf32>
    %cst_19 = arith.constant 2.000000e-01 : f32
    %98 = vector.broadcast %cst_19 : f32 to vector<96x16xf32>
    %99 = arith.mulf %98, %95 : vector<96x16xf32>
    %100 = arith.select %97, %95, %99 : vector<96x16xi1>, vector<96x16xf32>
    %cst_20 = arith.constant dense<0.000000e+00> : vector<96xf32>
    %101 = vector.multi_reduction <add>, %100, %cst_20 [1] : vector<96x16xf32> to vector<96xf32>
    %102 = vector.shape_cast %101 : vector<96xf32> to vector<96x1xf32>
    %cst_21 = arith.constant 1.600000e+01 : f32
    %103 = vector.broadcast %cst_21 : f32 to vector<96x1xf32>
    %104 = arith.divf %102, %103 : vector<96x1xf32>
    %105 = vector.broadcast %104 : vector<96x1xf32> to vector<96x16xf32>
    %106 = arith.subf %100, %105 : vector<96x16xf32>
    %107 = arith.mulf %106, %106 : vector<96x16xf32>
    %cst_22 = arith.constant dense<0.000000e+00> : vector<96xf32>
    %108 = vector.multi_reduction <add>, %107, %cst_22 [1] : vector<96x16xf32> to vector<96xf32>
    %109 = vector.shape_cast %108 : vector<96xf32> to vector<96x1xf32>
    %cst_23 = arith.constant 1.600000e+01 : f32
    %110 = vector.broadcast %cst_23 : f32 to vector<96x1xf32>
    %111 = arith.divf %109, %110 : vector<96x1xf32>
    %112 = vector.broadcast %104 : vector<96x1xf32> to vector<96x16xf32>
    %113 = arith.subf %100, %112 : vector<96x16xf32>
    %cst_24 = arith.constant 9.99999997E-7 : f32
    %114 = vector.broadcast %cst_24 : f32 to vector<96x1xf32>
    %115 = arith.addf %111, %114 : vector<96x1xf32>
    %116 = math.rsqrt %115 : vector<96x1xf32>
    %117 = vector.broadcast %116 : vector<96x1xf32> to vector<96x16xf32>
    %118 = arith.mulf %113, %117 : vector<96x16xf32>
    %cst_25 = arith.constant 0.000000e+00 : f32
    %119 = vector.broadcast %cst_25 : f32 to vector<96x16xf32>
    %120 = arith.cmpf oge, %118, %119 : vector<96x16xf32>
    %cst_26 = arith.constant 2.000000e-01 : f32
    %121 = vector.broadcast %cst_26 : f32 to vector<96x16xf32>
    %122 = arith.mulf %121, %118 : vector<96x16xf32>
    %123 = arith.select %120, %118, %122 : vector<96x16xi1>, vector<96x16xf32>
    %124 = vector.shape_cast %123 : vector<96x16xf32> to vector<6x16x16xf32>
    %c0_27 = arith.constant 0 : index
    %c0_28 = arith.constant 0 : index
    %125 = vector.load %arg9[%c0_27, %c0_28] : memref<512x16xf32, #tpu.memory_space<vmem>>, vector<512x16xf32>
    %126 = vector.shape_cast %125 : vector<512x16xf32> to vector<1x512x16xf32>
    %127 = vector.shape_cast %126 : vector<1x512x16xf32> to vector<1x512x16xf32>
    %128 = vector.broadcast %127 : vector<1x512x16xf32> to vector<6x512x16xf32>
    "tpu.trace_start"() <{level = 10 : i32, message = "nij,njs->nis"}> : () -> ()
    %cst_29 = arith.constant dense<0.000000e+00> : vector<6x512x16xf32>
    %129 = tpu.matmul %128, %124, %cst_29 {dimension_numbers = #tpu.dot_dimension_numbers<[2], [1], [1], [2], [0, 0, 0, 1, 1, 2], [0], [0]>} : vector<6x512x16xf32>, vector<6x16x16xf32>, vector<6x512x16xf32> -> vector<6x512x16xf32>
    "tpu.trace_stop"() : () -> ()
    %130 = vector.extract_strided_slice %129 {offsets = [0, 0, 0], sizes = [6, 32, 16], strides = [1, 1, 1]} : vector<6x512x16xf32> to vector<6x32x16xf32>
    %131 = vector.shape_cast %130 : vector<6x32x16xf32> to vector<192x16xf32>
    %132 = vector.extract_strided_slice %129 {offsets = [0, 32, 0], sizes = [6, 32, 16], strides = [1, 1, 1]} : vector<6x512x16xf32> to vector<6x32x16xf32>
    %133 = vector.shape_cast %132 : vector<6x32x16xf32> to vector<192x16xf32>
    %134 = vector.extract_strided_slice %129 {offsets = [0, 64, 0], sizes = [6, 32, 16], strides = [1, 1, 1]} : vector<6x512x16xf32> to vector<6x32x16xf32>
    %135 = vector.shape_cast %134 : vector<6x32x16xf32> to vector<192x16xf32>
    %136 = vector.extract_strided_slice %129 {offsets = [0, 96, 0], sizes = [6, 32, 16], strides = [1, 1, 1]} : vector<6x512x16xf32> to vector<6x32x16xf32>
    %137 = vector.shape_cast %136 : vector<6x32x16xf32> to vector<192x16xf32>
    %138 = vector.extract_strided_slice %129 {offsets = [0, 128, 0], sizes = [6, 32, 16], strides = [1, 1, 1]} : vector<6x512x16xf32> to vector<6x32x16xf32>
    %139 = vector.shape_cast %138 : vector<6x32x16xf32> to vector<192x16xf32>
    %140 = vector.extract_strided_slice %129 {offsets = [0, 160, 0], sizes = [6, 32, 16], strides = [1, 1, 1]} : vector<6x512x16xf32> to vector<6x32x16xf32>
    %141 = vector.shape_cast %140 : vector<6x32x16xf32> to vector<192x16xf32>
    %142 = vector.extract_strided_slice %129 {offsets = [0, 192, 0], sizes = [6, 32, 16], strides = [1, 1, 1]} : vector<6x512x16xf32> to vector<6x32x16xf32>
    %143 = vector.shape_cast %142 : vector<6x32x16xf32> to vector<192x16xf32>
    %144 = vector.extract_strided_slice %129 {offsets = [0, 224, 0], sizes = [6, 32, 16], strides = [1, 1, 1]} : vector<6x512x16xf32> to vector<6x32x16xf32>
    %145 = vector.shape_cast %144 : vector<6x32x16xf32> to vector<192x16xf32>
    %146 = vector.extract_strided_slice %129 {offsets = [0, 256, 0], sizes = [6, 32, 16], strides = [1, 1, 1]} : vector<6x512x16xf32> to vector<6x32x16xf32>
    %147 = vector.shape_cast %146 : vector<6x32x16xf32> to vector<192x16xf32>
    %148 = vector.extract_strided_slice %129 {offsets = [0, 288, 0], sizes = [6, 32, 16], strides = [1, 1, 1]} : vector<6x512x16xf32> to vector<6x32x16xf32>
    %149 = vector.shape_cast %148 : vector<6x32x16xf32> to vector<192x16xf32>
    %150 = vector.extract_strided_slice %129 {offsets = [0, 320, 0], sizes = [6, 32, 16], strides = [1, 1, 1]} : vector<6x512x16xf32> to vector<6x32x16xf32>
    %151 = vector.shape_cast %150 : vector<6x32x16xf32> to vector<192x16xf32>
    %152 = vector.extract_strided_slice %129 {offsets = [0, 352, 0], sizes = [6, 32, 16], strides = [1, 1, 1]} : vector<6x512x16xf32> to vector<6x32x16xf32>
    %153 = vector.shape_cast %152 : vector<6x32x16xf32> to vector<192x16xf32>
    %154 = vector.extract_strided_slice %129 {offsets = [0, 384, 0], sizes = [6, 32, 16], strides = [1, 1, 1]} : vector<6x512x16xf32> to vector<6x32x16xf32>
    %155 = vector.shape_cast %154 : vector<6x32x16xf32> to vector<192x16xf32>
    %156 = vector.extract_strided_slice %129 {offsets = [0, 416, 0], sizes = [6, 32, 16], strides = [1, 1, 1]} : vector<6x512x16xf32> to vector<6x32x16xf32>
    %157 = vector.shape_cast %156 : vector<6x32x16xf32> to vector<192x16xf32>
    %158 = vector.extract_strided_slice %129 {offsets = [0, 448, 0], sizes = [6, 32, 16], strides = [1, 1, 1]} : vector<6x512x16xf32> to vector<6x32x16xf32>
    %159 = vector.shape_cast %158 : vector<6x32x16xf32> to vector<192x16xf32>
    %160 = vector.extract_strided_slice %129 {offsets = [0, 480, 0], sizes = [6, 32, 16], strides = [1, 1, 1]} : vector<6x512x16xf32> to vector<6x32x16xf32>
    %161 = vector.shape_cast %160 : vector<6x32x16xf32> to vector<192x16xf32>
    %162 = tpu.concatenate %131, %133, %135, %137, %139, %141, %143, %145, %147, %149, %151, %153, %155, %157, %159, %161 in 1 : vector<192x16xf32>, vector<192x16xf32>, vector<192x16xf32>, vector<192x16xf32>, vector<192x16xf32>, vector<192x16xf32>, vector<192x16xf32>, vector<192x16xf32>, vector<192x16xf32>, vector<192x16xf32>, vector<192x16xf32>, vector<192x16xf32>, vector<192x16xf32>, vector<192x16xf32>, vector<192x16xf32>, vector<192x16xf32> -> vector<192x256xf32>
    %c0_30 = arith.constant 0 : index
    %c0_31 = arith.constant 0 : index
    %163 = vector.load %arg8[%c0_30, %c0_31] : memref<256x4xbf16, #tpu.memory_space<vmem>>, vector<256x4xbf16>
    %164 = arith.extf %163 : vector<256x4xbf16> to vector<256x4xf32>
    %cst_32 = arith.constant dense<0.000000e+00> : vector<192x4xf32>
    %165 = tpu.matmul %162, %164, %cst_32 {dimension_numbers = #tpu.dot_dimension_numbers<[1], [0], [0], [1], [0, 0, 1, 1], [], []>} : vector<192x256xf32>, vector<256x4xf32>, vector<192x4xf32> -> vector<192x4xf32>
    %c0_33 = arith.constant 0 : index
    %c0_34 = arith.constant 0 : index
    %166 = vector.load %arg10[%c0_33, %c0_34] : memref<192x1xf32, #tpu.memory_space<vmem>>, vector<192x1xf32>
    %167 = vector.broadcast %166 : vector<192x1xf32> to vector<192x4xf32>
    %168 = arith.addf %165, %167 : vector<192x4xf32>
    %cst_35 = arith.constant 0.000000e+00 : f32
    %169 = vector.broadcast %cst_35 : f32 to vector<192x4xf32>
    %170 = arith.cmpf oge, %168, %169 : vector<192x4xf32>
    %cst_36 = arith.constant 2.000000e-01 : f32
    %171 = vector.broadcast %cst_36 : f32 to vector<192x4xf32>
    %172 = arith.mulf %171, %168 : vector<192x4xf32>
    %173 = arith.select %170, %168, %172 : vector<192x4xi1>, vector<192x4xf32>
    %cst_37 = arith.constant dense<0.000000e+00> : vector<192xf32>
    %174 = vector.multi_reduction <add>, %173, %cst_37 [1] : vector<192x4xf32> to vector<192xf32>
    %175 = vector.shape_cast %174 : vector<192xf32> to vector<192x1xf32>
    %cst_38 = arith.constant 4.000000e+00 : f32
    %176 = vector.broadcast %cst_38 : f32 to vector<192x1xf32>
    %177 = arith.divf %175, %176 : vector<192x1xf32>
    %178 = vector.broadcast %177 : vector<192x1xf32> to vector<192x4xf32>
    %179 = arith.subf %173, %178 : vector<192x4xf32>
    %180 = arith.mulf %179, %179 : vector<192x4xf32>
    %cst_39 = arith.constant dense<0.000000e+00> : vector<192xf32>
    %181 = vector.multi_reduction <add>, %180, %cst_39 [1] : vector<192x4xf32> to vector<192xf32>
    %182 = vector.shape_cast %181 : vector<192xf32> to vector<192x1xf32>
    %cst_40 = arith.constant 4.000000e+00 : f32
    %183 = vector.broadcast %cst_40 : f32 to vector<192x1xf32>
    %184 = arith.divf %182, %183 : vector<192x1xf32>
    %185 = vector.broadcast %177 : vector<192x1xf32> to vector<192x4xf32>
    %186 = arith.subf %173, %185 : vector<192x4xf32>
    %cst_41 = arith.constant 9.99999997E-7 : f32
    %187 = vector.broadcast %cst_41 : f32 to vector<192x1xf32>
    %188 = arith.addf %184, %187 : vector<192x1xf32>
    %189 = math.rsqrt %188 : vector<192x1xf32>
    %190 = vector.broadcast %189 : vector<192x1xf32> to vector<192x4xf32>
    %191 = arith.mulf %186, %190 : vector<192x4xf32>
    %cst_42 = arith.constant 0.000000e+00 : f32
    %192 = vector.broadcast %cst_42 : f32 to vector<192x4xf32>
    %193 = arith.cmpf oge, %191, %192 : vector<192x4xf32>
    %cst_43 = arith.constant 2.000000e-01 : f32
    %194 = vector.broadcast %cst_43 : f32 to vector<192x4xf32>
    %195 = arith.mulf %194, %191 : vector<192x4xf32>
    %196 = arith.select %193, %191, %195 : vector<192x4xi1>, vector<192x4xf32>
    %197 = vector.shape_cast %196 : vector<192x4xf32> to vector<6x32x4xf32>
    %cst_44 = arith.constant dense<0.000000e+00> : vector<6x32xf32>
    %198 = vector.multi_reduction <add>, %197, %cst_44 [2] : vector<6x32x4xf32> to vector<6x32xf32>
    %cst_45 = arith.constant 4.000000e+00 : f32
    %199 = vector.broadcast %cst_45 : f32 to vector<6x32xf32>
    %200 = arith.divf %198, %199 : vector<6x32xf32>
    %c0_46 = arith.constant 0 : index
    %c0_47 = arith.constant 0 : index
    %201 = vector.load %arg11[%c0_46, %c0_47] : memref<32x32xf32, #tpu.memory_space<vmem>>, vector<32x32xf32>
    %cst_48 = arith.constant dense<0.000000e+00> : vector<6x32xf32>
    %202 = tpu.matmul %200, %201, %cst_48 {dimension_numbers = #tpu.dot_dimension_numbers<[1], [0], [0], [1], [0, 0, 1, 1], [], []>} : vector<6x32xf32>, vector<32x32xf32>, vector<6x32xf32> -> vector<6x32xf32>
    %c0_49 = arith.constant 0 : index
    %c0_50 = arith.constant 0 : index
    %203 = vector.load %arg12[%c0_49, %c0_50] : memref<1x32xf32, #tpu.memory_space<vmem>>, vector<1x32xf32>
    %204 = vector.broadcast %203 : vector<1x32xf32> to vector<6x32xf32>
    %205 = arith.addf %202, %204 : vector<6x32xf32>
    %c0_51 = arith.constant 0 : index
    %c0_52 = arith.constant 0 : index
    %206 = vector.load %arg13[%c0_51, %c0_52] : memref<32x128xf32, #tpu.memory_space<vmem>>, vector<32x128xf32>
    %cst_53 = arith.constant dense<0.000000e+00> : vector<6x128xf32>
    %207 = tpu.matmul %205, %206, %cst_53 {dimension_numbers = #tpu.dot_dimension_numbers<[1], [0], [0], [1], [0, 0, 1, 1], [], []>} : vector<6x32xf32>, vector<32x128xf32>, vector<6x128xf32> -> vector<6x128xf32>
    %c0_54 = arith.constant 0 : index
    %c0_55 = arith.constant 0 : index
    %208 = vector.load %arg15[%c0_54, %c0_55] : memref<1x128xf32, #tpu.memory_space<vmem>>, vector<1x128xf32>
    %209 = vector.broadcast %208 : vector<1x128xf32> to vector<6x128xf32>
    %210 = arith.addf %207, %209 : vector<6x128xf32>
    %cst_56 = arith.constant 0.000000e+00 : f32
    %211 = vector.broadcast %cst_56 : f32 to vector<2x32xf32>
    %cst_57 = arith.constant 0.000000e+00 : f32
    %212 = vector.broadcast %cst_57 : f32 to vector<2x32xf32>
    %213 = vector.extract_strided_slice %210 {offsets = [0, 0], sizes = [2, 128], strides = [1, 1]} : vector<6x128xf32> to vector<2x128xf32>
    %c0_58 = arith.constant 0 : index
    %c0_59 = arith.constant 0 : index
    %214 = vector.load %arg14[%c0_58, %c0_59] : memref<32x128xf32, #tpu.memory_space<vmem>>, vector<32x128xf32>
    %cst_60 = arith.constant dense<0.000000e+00> : vector<2x128xf32>
    %215 = tpu.matmul %211, %214, %cst_60 {dimension_numbers = #tpu.dot_dimension_numbers<[1], [0], [0], [1], [0, 0, 1, 1], [], []>} : vector<2x32xf32>, vector<32x128xf32>, vector<2x128xf32> -> vector<2x128xf32>
    %216 = arith.addf %213, %215 : vector<2x128xf32>
    %217 = vector.extract_strided_slice %216 {offsets = [0, 0], sizes = [2, 32], strides = [1, 1]} : vector<2x128xf32> to vector<2x32xf32>
    %218 = arith.negf %217 : vector<2x32xf32>
    %219 = math.exp %218 : vector<2x32xf32>
    %cst_61 = arith.constant 1.000000e+00 : f32
    %220 = vector.broadcast %cst_61 : f32 to vector<2x32xf32>
    %221 = arith.addf %220, %219 : vector<2x32xf32>
    %222 = arith.divf %220, %221 : vector<2x32xf32>
    %223 = vector.extract_strided_slice %216 {offsets = [0, 32], sizes = [2, 32], strides = [1, 1]} : vector<2x128xf32> to vector<2x32xf32>
    %224 = arith.negf %223 : vector<2x32xf32>
    %225 = math.exp %224 : vector<2x32xf32>
    %cst_62 = arith.constant 1.000000e+00 : f32
    %226 = vector.broadcast %cst_62 : f32 to vector<2x32xf32>
    %227 = arith.addf %226, %225 : vector<2x32xf32>
    %228 = arith.divf %226, %227 : vector<2x32xf32>
    %229 = vector.extract_strided_slice %216 {offsets = [0, 64], sizes = [2, 32], strides = [1, 1]} : vector<2x128xf32> to vector<2x32xf32>
    %230 = math.tanh %229 : vector<2x32xf32>
    %231 = vector.extract_strided_slice %216 {offsets = [0, 96], sizes = [2, 32], strides = [1, 1]} : vector<2x128xf32> to vector<2x32xf32>
    %232 = arith.negf %231 : vector<2x32xf32>
    %233 = math.exp %232 : vector<2x32xf32>
    %cst_63 = arith.constant 1.000000e+00 : f32
    %234 = vector.broadcast %cst_63 : f32 to vector<2x32xf32>
    %235 = arith.addf %234, %233 : vector<2x32xf32>
    %236 = arith.divf %234, %235 : vector<2x32xf32>
    %237 = arith.mulf %228, %212 : vector<2x32xf32>
    %238 = arith.mulf %222, %230 : vector<2x32xf32>
    %239 = arith.addf %237, %238 : vector<2x32xf32>
    %240 = math.tanh %239 : vector<2x32xf32>
    %241 = arith.mulf %236, %240 : vector<2x32xf32>
    %242 = vector.extract_strided_slice %210 {offsets = [2, 0], sizes = [2, 128], strides = [1, 1]} : vector<6x128xf32> to vector<2x128xf32>
    %c0_64 = arith.constant 0 : index
    %c0_65 = arith.constant 0 : index
    %243 = vector.load %arg14[%c0_64, %c0_65] : memref<32x128xf32, #tpu.memory_space<vmem>>, vector<32x128xf32>
    %cst_66 = arith.constant dense<0.000000e+00> : vector<2x128xf32>
    %244 = tpu.matmul %241, %243, %cst_66 {dimension_numbers = #tpu.dot_dimension_numbers<[1], [0], [0], [1], [0, 0, 1, 1], [], []>} : vector<2x32xf32>, vector<32x128xf32>, vector<2x128xf32> -> vector<2x128xf32>
    %245 = arith.addf %242, %244 : vector<2x128xf32>
    %246 = vector.extract_strided_slice %245 {offsets = [0, 0], sizes = [2, 32], strides = [1, 1]} : vector<2x128xf32> to vector<2x32xf32>
    %247 = arith.negf %246 : vector<2x32xf32>
    %248 = math.exp %247 : vector<2x32xf32>
    %cst_67 = arith.constant 1.000000e+00 : f32
    %249 = vector.broadcast %cst_67 : f32 to vector<2x32xf32>
    %250 = arith.addf %249, %248 : vector<2x32xf32>
    %251 = arith.divf %249, %250 : vector<2x32xf32>
    %252 = vector.extract_strided_slice %245 {offsets = [0, 32], sizes = [2, 32], strides = [1, 1]} : vector<2x128xf32> to vector<2x32xf32>
    %253 = arith.negf %252 : vector<2x32xf32>
    %254 = math.exp %253 : vector<2x32xf32>
    %cst_68 = arith.constant 1.000000e+00 : f32
    %255 = vector.broadcast %cst_68 : f32 to vector<2x32xf32>
    %256 = arith.addf %255, %254 : vector<2x32xf32>
    %257 = arith.divf %255, %256 : vector<2x32xf32>
    %258 = vector.extract_strided_slice %245 {offsets = [0, 64], sizes = [2, 32], strides = [1, 1]} : vector<2x128xf32> to vector<2x32xf32>
    %259 = math.tanh %258 : vector<2x32xf32>
    %260 = vector.extract_strided_slice %245 {offsets = [0, 96], sizes = [2, 32], strides = [1, 1]} : vector<2x128xf32> to vector<2x32xf32>
    %261 = arith.negf %260 : vector<2x32xf32>
    %262 = math.exp %261 : vector<2x32xf32>
    %cst_69 = arith.constant 1.000000e+00 : f32
    %263 = vector.broadcast %cst_69 : f32 to vector<2x32xf32>
    %264 = arith.addf %263, %262 : vector<2x32xf32>
    %265 = arith.divf %263, %264 : vector<2x32xf32>
    %266 = arith.mulf %257, %239 : vector<2x32xf32>
    %267 = arith.mulf %251, %259 : vector<2x32xf32>
    %268 = arith.addf %266, %267 : vector<2x32xf32>
    %269 = math.tanh %268 : vector<2x32xf32>
    %270 = arith.mulf %265, %269 : vector<2x32xf32>
    %271 = vector.extract_strided_slice %210 {offsets = [4, 0], sizes = [2, 128], strides = [1, 1]} : vector<6x128xf32> to vector<2x128xf32>
    %c0_70 = arith.constant 0 : index
    %c0_71 = arith.constant 0 : index
    %272 = vector.load %arg14[%c0_70, %c0_71] : memref<32x128xf32, #tpu.memory_space<vmem>>, vector<32x128xf32>
    %cst_72 = arith.constant dense<0.000000e+00> : vector<2x128xf32>
    %273 = tpu.matmul %270, %272, %cst_72 {dimension_numbers = #tpu.dot_dimension_numbers<[1], [0], [0], [1], [0, 0, 1, 1], [], []>} : vector<2x32xf32>, vector<32x128xf32>, vector<2x128xf32> -> vector<2x128xf32>
    %274 = arith.addf %271, %273 : vector<2x128xf32>
    %275 = vector.extract_strided_slice %274 {offsets = [0, 0], sizes = [2, 32], strides = [1, 1]} : vector<2x128xf32> to vector<2x32xf32>
    %276 = arith.negf %275 : vector<2x32xf32>
    %277 = math.exp %276 : vector<2x32xf32>
    %cst_73 = arith.constant 1.000000e+00 : f32
    %278 = vector.broadcast %cst_73 : f32 to vector<2x32xf32>
    %279 = arith.addf %278, %277 : vector<2x32xf32>
    %280 = arith.divf %278, %279 : vector<2x32xf32>
    %281 = vector.extract_strided_slice %274 {offsets = [0, 32], sizes = [2, 32], strides = [1, 1]} : vector<2x128xf32> to vector<2x32xf32>
    %282 = arith.negf %281 : vector<2x32xf32>
    %283 = math.exp %282 : vector<2x32xf32>
    %cst_74 = arith.constant 1.000000e+00 : f32
    %284 = vector.broadcast %cst_74 : f32 to vector<2x32xf32>
    %285 = arith.addf %284, %283 : vector<2x32xf32>
    %286 = arith.divf %284, %285 : vector<2x32xf32>
    %287 = vector.extract_strided_slice %274 {offsets = [0, 64], sizes = [2, 32], strides = [1, 1]} : vector<2x128xf32> to vector<2x32xf32>
    %288 = math.tanh %287 : vector<2x32xf32>
    %289 = vector.extract_strided_slice %274 {offsets = [0, 96], sizes = [2, 32], strides = [1, 1]} : vector<2x128xf32> to vector<2x32xf32>
    %290 = arith.negf %289 : vector<2x32xf32>
    %291 = math.exp %290 : vector<2x32xf32>
    %cst_75 = arith.constant 1.000000e+00 : f32
    %292 = vector.broadcast %cst_75 : f32 to vector<2x32xf32>
    %293 = arith.addf %292, %291 : vector<2x32xf32>
    %294 = arith.divf %292, %293 : vector<2x32xf32>
    %295 = arith.mulf %286, %268 : vector<2x32xf32>
    %296 = arith.mulf %280, %288 : vector<2x32xf32>
    %297 = arith.addf %295, %296 : vector<2x32xf32>
    %298 = math.tanh %297 : vector<2x32xf32>
    %299 = arith.mulf %294, %298 : vector<2x32xf32>
    %300 = tpu.concatenate %241, %270, %299 in 0 : vector<2x32xf32>, vector<2x32xf32>, vector<2x32xf32> -> vector<6x32xf32>
    %c0_76 = arith.constant 0 : index
    %c0_77 = arith.constant 0 : index
    %301 = vector.load %arg16[%c0_76, %c0_77] : memref<32x16xf32, #tpu.memory_space<vmem>>, vector<32x16xf32>
    %cst_78 = arith.constant dense<0.000000e+00> : vector<6x16xf32>
    %302 = tpu.matmul %300, %301, %cst_78 {dimension_numbers = #tpu.dot_dimension_numbers<[1], [0], [0], [1], [0, 0, 1, 1], [], []>} : vector<6x32xf32>, vector<32x16xf32>, vector<6x16xf32> -> vector<6x16xf32>
    %c0_79 = arith.constant 0 : index
    %c0_80 = arith.constant 0 : index
    %303 = vector.load %arg17[%c0_79, %c0_80] : memref<1x16xf32, #tpu.memory_space<vmem>>, vector<1x16xf32>
    %304 = vector.broadcast %303 : vector<1x16xf32> to vector<6x16xf32>
    %305 = arith.addf %302, %304 : vector<6x16xf32>
    %306 = tpu.iota {dimensions = array<i32: 1>} : vector<6x16xi32>
    %c8_i32 = arith.constant 8 : i32
    %307 = vector.broadcast %c8_i32 : i32 to vector<6x16xi32>
    %308 = arith.cmpi sge, %306, %307 : vector<6x16xi32>
    %cst_81 = arith.constant -1.000000e+01 : f32
    %cst_82 = arith.constant 1.000000e+01 : f32
    %309 = vector.broadcast %cst_81 : f32 to vector<6x16xf32>
    %310 = arith.maximumf %309, %305 : vector<6x16xf32>
    %311 = vector.broadcast %cst_82 : f32 to vector<6x16xf32>
    %312 = arith.minimumf %311, %310 : vector<6x16xf32>
    %313 = arith.select %308, %312, %305 : vector<6x16xi1>, vector<6x16xf32>
    %c0_83 = arith.constant 0 : index
    %c0_84 = arith.constant 0 : index
    %314 = vector.load %arg18[%c0_83, %c0_84] : memref<6x16xf32, #tpu.memory_space<vmem>>, vector<6x16xf32>
    tpu.vector_store %arg18[%c0_83, %c0_84], %313 {strides = array<i32>} : memref<6x16xf32, #tpu.memory_space<vmem>>, vector<6x16xf32>,
    return
  }
  func.func @transform_0(%arg0: i32) -> (i32, i32) {
    %c0_i32 = arith.constant 0 : i32
    %c0_i32_0 = arith.constant 0 : i32
    %c0_i32_1 = arith.constant 0 : i32
    return %c0_i32, %c0_i32_0 : i32, i32
  }
  func.func @transform_1(%arg0: i32) -> (i32, i32) {
    %c0_i32 = arith.constant 0 : i32
    %c0_i32_0 = arith.constant 0 : i32
    %c0_i32_1 = arith.constant 0 : i32
    return %c0_i32, %c0_i32_0 : i32, i32
  }
  func.func @transform_2(%arg0: i32) -> (i32, i32) {
    %c0_i32 = arith.constant 0 : i32
    %c0_i32_0 = arith.constant 0 : i32
    %c0_i32_1 = arith.constant 0 : i32
    return %c0_i32, %c0_i32_0 : i32, i32
  }
  func.func @transform_3(%arg0: i32) -> (i32, i32) {
    %c0_i32 = arith.constant 0 : i32
    %c0_i32_0 = arith.constant 0 : i32
    %c0_i32_1 = arith.constant 0 : i32
    return %c0_i32, %c0_i32_0 : i32, i32
  }
  func.func @transform_4(%arg0: i32) -> (i32, i32) {
    %c0_i32 = arith.constant 0 : i32
    %c0_i32_0 = arith.constant 0 : i32
    %c0_i32_1 = arith.constant 0 : i32
    return %c0_i32, %c0_i32_0 : i32, i32
  }
  func.func @transform_5(%arg0: i32) -> (i32, i32) {
    %c0_i32 = arith.constant 0 : i32
    %c0_i32_0 = arith.constant 0 : i32
    %c0_i32_1 = arith.constant 0 : i32
    return %c0_i32, %c0_i32_0 : i32, i32
  }
  func.func @transform_6(%arg0: i32) -> (i32, i32) {
    %c0_i32 = arith.constant 0 : i32
    %c0_i32_0 = arith.constant 0 : i32
    %c0_i32_1 = arith.constant 0 : i32
    return %c0_i32, %c0_i32_0 : i32, i32
  }
  func.func @transform_7(%arg0: i32) -> (i32, i32) {
    %c0_i32 = arith.constant 0 : i32
    %c0_i32_0 = arith.constant 0 : i32
    %c0_i32_1 = arith.constant 0 : i32
    return %c0_i32, %c0_i32_0 : i32, i32
  }
  func.func @transform_8(%arg0: i32) -> (i32, i32) {
    %c0_i32 = arith.constant 0 : i32
    %c0_i32_0 = arith.constant 0 : i32
    %c0_i32_1 = arith.constant 0 : i32
    return %c0_i32, %c0_i32_0 : i32, i32
  }
  func.func @transform_9(%arg0: i32) -> (i32, i32) {
    %c0_i32 = arith.constant 0 : i32
    %c0_i32_0 = arith.constant 0 : i32
    %c0_i32_1 = arith.constant 0 : i32
    return %c0_i32, %c0_i32_0 : i32, i32
  }
  func.func @transform_10(%arg0: i32) -> (i32, i32) {
    %c0_i32 = arith.constant 0 : i32
    %c0_i32_0 = arith.constant 0 : i32
    %c0_i32_1 = arith.constant 0 : i32
    return %c0_i32, %c0_i32_0 : i32, i32
  }
  func.func @transform_11(%arg0: i32) -> (i32, i32) {
    %c0_i32 = arith.constant 0 : i32
    %c0_i32_0 = arith.constant 0 : i32
    %c0_i32_1 = arith.constant 0 : i32
    return %c0_i32, %c0_i32_0 : i32, i32
  }
  func.func @transform_12(%arg0: i32) -> (i32, i32) {
    %c0_i32 = arith.constant 0 : i32
    %c0_i32_0 = arith.constant 0 : i32
    %c0_i32_1 = arith.constant 0 : i32
    return %c0_i32, %c0_i32_0 : i32, i32
  }
  func.func @transform_13(%arg0: i32) -> (i32, i32) {
    %c0_i32 = arith.constant 0 : i32
    %c0_i32_0 = arith.constant 0 : i32
    %c0_i32_1 = arith.constant 0 : i32
    return %c0_i32, %c0_i32_0 : i32, i32
  }
  func.func @transform_14(%arg0: i32) -> (i32, i32) {
    %c0_i32 = arith.constant 0 : i32
    %c0_i32_0 = arith.constant 0 : i32
    %c0_i32_1 = arith.constant 0 : i32
    return %c0_i32, %c0_i32_0 : i32, i32
  }
  func.func @transform_15(%arg0: i32) -> (i32, i32) {
    %c0_i32 = arith.constant 0 : i32
    %c0_i32_0 = arith.constant 0 : i32
    %c0_i32_1 = arith.constant 0 : i32
    return %c0_i32, %c0_i32_0 : i32, i32
  }
  func.func @transform_16(%arg0: i32) -> (i32, i32) {
    %c0_i32 = arith.constant 0 : i32
    %c0_i32_0 = arith.constant 0 : i32
    %c0_i32_1 = arith.constant 0 : i32
    return %c0_i32, %c0_i32_0 : i32, i32
  }
  func.func @transform_17(%arg0: i32) -> (i32, i32) {
    %c0_i32 = arith.constant 0 : i32
    %c0_i32_0 = arith.constant 0 : i32
    %c0_i32_1 = arith.constant 0 : i32
    return %c0_i32, %c0_i32_0 : i32, i32
  }
}

</mosaic_0001>

<llo_original>
// kernel: prior_forward.1
$region0: #{prior_forward.1}
  #allocation0 [shape = 'u32[]', space=smem, size = 0x4, offset = 0x4, fixed_abs, tag = 'smem constant byte address 0x4 - core index']
  #allocation1 [shape = 'u32[72,128]{1,0:T(1,128)}', space=vmem, size = 0x9000, scoped, tag = 'internal scratch']
  %s0 = inlined_call_operand.vmem [shape: f32[48,256], index: 0, kind: input, shape index: {}]
  %s1 = inlined_call_operand.vmem [shape: bf16[4096,64], index: 1, kind: input, shape index: {}]
  %s2 = inlined_call_operand.vmem [shape: f32[128,8], index: 2, kind: input, shape index: {}]
  %s3 = inlined_call_operand.vmem [shape: f32[48,1], index: 3, kind: input, shape index: {}]
  %s4 = inlined_call_operand.vmem [shape: bf16[1024,16], index: 4, kind: input, shape index: {}]
  %s5 = inlined_call_operand.vmem [shape: f32[256,8], index: 5, kind: input, shape index: {}]
  %s6 = inlined_call_operand.vmem [shape: f32[96,1], index: 6, kind: input, shape index: {}]
  %s7 = inlined_call_operand.vmem [shape: bf16[256,4], index: 7, kind: input, shape index: {}]
  %s8 = inlined_call_operand.vmem [shape: f32[512,16], index: 8, kind: input, shape index: {}]
  %s9 = inlined_call_operand.vmem [shape: f32[192,1], index: 9, kind: input, shape index: {}]
  %s10 = inlined_call_operand.vmem [shape: f32[32,32], index: 10, kind: input, shape index: {}]
  %s11 = inlined_call_operand.vmem [shape: f32[1,32], index: 11, kind: input, shape index: {}]
  %s12 = inlined_call_operand.vmem [shape: f32[32,128], index: 12, kind: input, shape index: {}]
  %s13 = inlined_call_operand.vmem [shape: f32[32,128], index: 13, kind: input, shape index: {}]
  %s14 = inlined_call_operand.vmem [shape: f32[1,128], index: 14, kind: input, shape index: {}]
  %s15 = inlined_call_operand.vmem [shape: f32[32,16], index: 15, kind: input, shape index: {}]
  %s16 = inlined_call_operand.vmem [shape: f32[1,16], index: 16, kind: input, shape index: {}]
  %s17 = inlined_call_operand.vmem [shape: f32[6,16], index: 17, kind: output, shape index: {}]
  %s18 = sld [smem:[#allocation0]]
  $region78: #{prior_forward.1} parent=0
    _
  %s20 = ssub.s32 1, %s18
  %s21 = scalar_select 0, %s20, %s18
  // Predicated region
  $region2: #{prior_forward.1} parent=0 // pred_check
    _
  $region3: #{prior_forward.1} parent=0 // pred_check_branch
    %23 = sbr.rel (0) target = $region5
  $region4: #{prior_forward.1} parent=0 // pred_region
    _
  $region5: #{prior_forward.1} parent=0 // pred_fallthru
    _
  // Predicated region
  $region6: #{prior_forward.1} parent=0 // pred_check
    _
  $region7: #{prior_forward.1} parent=0 // pred_check_branch
    %25 = sbr.rel (0) target = $region9
  $region8: #{prior_forward.1} parent=0 // pred_region
    _
  $region9: #{prior_forward.1} parent=0 // pred_fallthru
    _
  // Predicated region
  $region10: #{prior_forward.1} parent=0 // pred_check
    _
  $region11: #{prior_forward.1} parent=0 // pred_check_branch
    %27 = sbr.rel (0) target = $region13
  $region12: #{prior_forward.1} parent=0 // pred_region
    _
  $region13: #{prior_forward.1} parent=0 // pred_fallthru
    _
  // Predicated region
  $region14: #{prior_forward.1} parent=0 // pred_check
    _
  $region15: #{prior_forward.1} parent=0 // pred_check_branch
    %29 = sbr.rel (0) target = $region17
  $region16: #{prior_forward.1} parent=0 // pred_region
    _
  $region17: #{prior_forward.1} parent=0 // pred_fallthru
    _
  // Predicated region
  $region18: #{prior_forward.1} parent=0 // pred_check
    _
  $region19: #{prior_forward.1} parent=0 // pred_check_branch
    %31 = sbr.rel (0) target = $region21
  $region20: #{prior_forward.1} parent=0 // pred_region
    _
  $region21: #{prior_forward.1} parent=0 // pred_fallthru
    _
  // Predicated region
  $region22: #{prior_forward.1} parent=0 // pred_check
    _
  $region23: #{prior_forward.1} parent=0 // pred_check_branch
    %33 = sbr.rel (0) target = $region25
  $region24: #{prior_forward.1} parent=0 // pred_region
    _
  $region25: #{prior_forward.1} parent=0 // pred_fallthru
    _
  // Predicated region
  $region26: #{prior_forward.1} parent=0 // pred_check
    _
  $region27: #{prior_forward.1} parent=0 // pred_check_branch
    %35 = sbr.rel (0) target = $region29
  $region28: #{prior_forward.1} parent=0 // pred_region
    _
  $region29: #{prior_forward.1} parent=0 // pred_fallthru
    _
  // Predicated region
  $region30: #{prior_forward.1} parent=0 // pred_check
    _
  $region31: #{prior_forward.1} parent=0 // pred_check_branch
    %37 = sbr.rel (0) target = $region33
  $region32: #{prior_forward.1} parent=0 // pred_region
    _
  $region33: #{prior_forward.1} parent=0 // pred_fallthru
    _
  // Predicated region
  $region34: #{prior_forward.1} parent=0 // pred_check
    _
  $region35: #{prior_forward.1} parent=0 // pred_check_branch
    %39 = sbr.rel (0) target = $region37
  $region36: #{prior_forward.1} parent=0 // pred_region
    _
  $region37: #{prior_forward.1} parent=0 // pred_fallthru
    _
  // Predicated region
  $region38: #{prior_forward.1} parent=0 // pred_check
    _
  $region39: #{prior_forward.1} parent=0 // pred_check_branch
    %41 = sbr.rel (0) target = $region41
  $region40: #{prior_forward.1} parent=0 // pred_region
    _
  $region41: #{prior_forward.1} parent=0 // pred_fallthru
    _
  // Predicated region
  $region42: #{prior_forward.1} parent=0 // pred_check
    _
  $region43: #{prior_forward.1} parent=0 // pred_check_branch
    %43 = sbr.rel (0) target = $region45
  $region44: #{prior_forward.1} parent=0 // pred_region
    _
  $region45: #{prior_forward.1} parent=0 // pred_fallthru
    _
  // Predicated region
  $region46: #{prior_forward.1} parent=0 // pred_check
    _
  $region47: #{prior_forward.1} parent=0 // pred_check_branch
    %45 = sbr.rel (0) target = $region49
  $region48: #{prior_forward.1} parent=0 // pred_region
    _
  $region49: #{prior_forward.1} parent=0 // pred_fallthru
    _
  // Predicated region
  $region50: #{prior_forward.1} parent=0 // pred_check
    _
  $region51: #{prior_forward.1} parent=0 // pred_check_branch
    %47 = sbr.rel (0) target = $region53
  $region52: #{prior_forward.1} parent=0 // pred_region
    _
  $region53: #{prior_forward.1} parent=0 // pred_fallthru
    _
  // Predicated region
  $region54: #{prior_forward.1} parent=0 // pred_check
    _
  $region55: #{prior_forward.1} parent=0 // pred_check_branch
    %49 = sbr.rel (0) target = $region57
  $region56: #{prior_forward.1} parent=0 // pred_region
    _
  $region57: #{prior_forward.1} parent=0 // pred_fallthru
    _
  // Predicated region
  $region58: #{prior_forward.1} parent=0 // pred_check
    _
  $region59: #{prior_forward.1} parent=0 // pred_check_branch
    %51 = sbr.rel (0) target = $region61
  $region60: #{prior_forward.1} parent=0 // pred_region
    _
  $region61: #{prior_forward.1} parent=0 // pred_fallthru
    _
  // Predicated region
  $region62: #{prior_forward.1} parent=0 // pred_check
    _
  $region63: #{prior_forward.1} parent=0 // pred_check_branch
    %53 = sbr.rel (0) target = $region65
  $region64: #{prior_forward.1} parent=0 // pred_region
    _
  $region65: #{prior_forward.1} parent=0 // pred_fallthru
    _
  // Predicated region
  $region66: #{prior_forward.1} parent=0 // pred_check
    _
  $region67: #{prior_forward.1} parent=0 // pred_check_branch
    %55 = sbr.rel (0) target = $region69
  $region68: #{prior_forward.1} parent=0 // pred_region
    _
  $region69: #{prior_forward.1} parent=0 // pred_fallthru
    _
  %v56 = vld [vmem:[%s0] sm:$0xff]
  %v57 = vld [vmem:[%s0 + $0x8] sm:$0xff]
  %v58 = vld [vmem:[%s0 + $0x10] sm:$0xff]
  %v59 = vld [vmem:[%s0 + $0x18] sm:$0xff]
  %v60 = vld [vmem:[%s0 + $0x20] sm:$0xff]
  %v61 = vld [vmem:[%s0 + $0x28] sm:$0xff]
  %v62 = vld [vmem:[%s0 + $0x30] sm:$0xff]
  %v63 = vld [vmem:[%s0 + $0x38] sm:$0xff]
  %v64 = vld [vmem:[%s0 + $0x40] sm:$0xff]
  %v65 = vld [vmem:[%s0 + $0x48] sm:$0xff]
  %v66 = vld [vmem:[%s0 + $0x50] sm:$0xff]
  %v67 = vld [vmem:[%s0 + $0x58] sm:$0xff]
  %v68 = vld [vmem:[%s2] sm:$0xff]
  %v69 = vld [vmem:[%s2 + $0x8] sm:$0xff]
  %v70 = vld [vmem:[%s2 + $0x10] sm:$0xff]
  %v71 = vld [vmem:[%s2 + $0x18] sm:$0xff]
  %v72 = vld [vmem:[%s2 + $0x20] sm:$0xff]
  %v73 = vld [vmem:[%s2 + $0x28] sm:$0xff]
  %v74 = vld [vmem:[%s2 + $0x30] sm:$0xff]
  %v75 = vld [vmem:[%s2 + $0x38] sm:$0xff]
  %v76 = vld [vmem:[%s2 + $0x40] sm:$0xff]
  %v77 = vld [vmem:[%s2 + $0x48] sm:$0xff]
  %v78 = vld [vmem:[%s2 + $0x50] sm:$0xff]
  %v79 = vld [vmem:[%s2 + $0x58] sm:$0xff]
  %v80 = vld [vmem:[%s2 + $0x60] sm:$0xff]
  %v81 = vld [vmem:[%s2 + $0x68] sm:$0xff]
  %v82 = vld [vmem:[%s2 + $0x70] sm:$0xff]
  %v83 = vld [vmem:[%s2 + $0x78] sm:$0xff]
  %vm84 = vcmask 64512
  %v86 = vsel %vm84, %v68, 0
  %v89 = vsel %vm84, %v69, 0
  %v92 = vsel %vm84, %v70, 0
  %v95 = vsel %vm84, %v71, 0
  %v98 = vsel %vm84, %v72, 0
  %v101 = vsel %vm84, %v73, 0
  %v104 = vsel %vm84, %v74, 0
  %v107 = vsel %vm84, %v75, 0
  %v110 = vsel %vm84, %v76, 0
  %v113 = vsel %vm84, %v77, 0
  %v116 = vsel %vm84, %v78, 0
  %v119 = vsel %vm84, %v79, 0
  %v122 = vsel %vm84, %v80, 0
  %v125 = vsel %vm84, %v81, 0
  %v128 = vsel %vm84, %v82, 0
  %v131 = vsel %vm84, %v83, 0
  %133 = vmatpush.msra.mxu0 0.0
  %134 = vmatpush.msra.mxu0 0.0
  %135 = vmatpush.msra.mxu0 0.0
  %136 = vmatpush.msra.mxu0 0.0
  %137 = vmatpush.msra.mxu0 0.0
  %138 = vmatpush.msra.mxu0 0.0
  %139 = vmatpush.msra.mxu0 0.0
  %140 = vmatpush.msra.mxu0 0.0
  %141 = vmatpush.msra.mxu0 0.0
  %142 = vmatpush.msra.mxu0 0.0
  %143 = vmatpush.msra.mxu0 0.0
  %144 = vmatpush.msra.mxu0 0.0
  %145 = vmatpush.msra.mxu0 0.0
  %146 = vmatpush.msra.mxu0 0.0
  %147 = vmatpush.msra.mxu0 0.0
  %148 = vmatpush.msra.mxu0 %v56
  %149 = vmatmul.f32.gmra.mxu0 %v86
  %v150 = vpop.f32.mrf.mxu0
  %v151 = vadd.f32 0.0, %v150
  %152 = vmatmul.f32.gmra.mxu0 %v89
  %v153 = vpop.f32.mrf.mxu0
  %v154 = vadd.f32 0.0, %v153
  %155 = vmatmul.f32.gmra.mxu0 %v92
  %v156 = vpop.f32.mrf.mxu0
  %v157 = vadd.f32 0.0, %v156
  %158 = vmatmul.f32.gmra.mxu0 %v95
  %v159 = vpop.f32.mrf.mxu0
  %v160 = vadd.f32 0.0, %v159
  %161 = vmatmul.f32.gmra.mxu0 %v98
  %v162 = vpop.f32.mrf.mxu0
  %v163 = vadd.f32 0.0, %v162
  %164 = vmatmul.f32.gmra.mxu0 %v101
  %v165 = vpop.f32.mrf.mxu0
  %v166 = vadd.f32 0.0, %v165
  %167 = vmatmul.f32.gmra.mxu0 %v104
  %v168 = vpop.f32.mrf.mxu0
  %v169 = vadd.f32 0.0, %v168
  %170 = vmatmul.f32.gmra.mxu0 %v107
  %v171 = vpop.f32.mrf.mxu0
  %v172 = vadd.f32 0.0, %v171
  %173 = vmatmul.f32.gmra.mxu0 %v110
  %v174 = vpop.f32.mrf.mxu0
  %v175 = vadd.f32 0.0, %v174
  %176 = vmatmul.f32.gmra.mxu0 %v113
  %v177 = vpop.f32.mrf.mxu0
  %v178 = vadd.f32 0.0, %v177
  %179 = vmatmul.f32.gmra.mxu0 %v116
  %v180 = vpop.f32.mrf.mxu0
  %v181 = vadd.f32 0.0, %v180
  %182 = vmatmul.f32.gmra.mxu0 %v119
  %v183 = vpop.f32.mrf.mxu0
  %v184 = vadd.f32 0.0, %v183
  %185 = vmatmul.f32.gmra.mxu0 %v122
  %v186 = vpop.f32.mrf.mxu0
  %v187 = vadd.f32 0.0, %v186
  %188 = vmatmul.f32.gmra.mxu0 %v125
  %v189 = vpop.f32.mrf.mxu0
  %v190 = vadd.f32 0.0, %v189
  %191 = vmatmul.f32.gmra.mxu0 %v128
  %v192 = vpop.f32.mrf.mxu0
  %v193 = vadd.f32 0.0, %v192
  %194 = vmatmul.f32.gmra.mxu0 %v131
  %v195 = vpop.f32.mrf.mxu0
  %v196 = vadd.f32 0.0, %v195
  %197 = vdwg.mxu0
  %198 = vmatpush.msra.mxu0 0.0
  %199 = vmatpush.msra.mxu0 0.0
  %200 = vmatpush.msra.mxu0 0.0
  %201 = vmatpush.msra.mxu0 0.0
  %202 = vmatpush.msra.mxu0 0.0
  %203 = vmatpush.msra.mxu0 0.0
  %204 = vmatpush.msra.mxu0 0.0
  %205 = vmatpush.msra.mxu0 0.0
  %206 = vmatpush.msra.mxu0 0.0
  %207 = vmatpush.msra.mxu0 0.0
  %208 = vmatpush.msra.mxu0 0.0
  %209 = vmatpush.msra.mxu0 0.0
  %210 = vmatpush.msra.mxu0 0.0
  %211 = vmatpush.msra.mxu0 0.0
  %212 = vmatpush.msra.mxu0 0.0
  %213 = vmatpush.msra.mxu0 %v57
  %214 = vmatmul.f32.gmra.mxu0 %v86
  %v215 = vpop.f32.mrf.mxu0
  %v216 = vadd.f32 0.0, %v215
  %217 = vmatmul.f32.gmra.mxu0 %v89
  %v218 = vpop.f32.mrf.mxu0
  %v219 = vadd.f32 0.0, %v218
  %220 = vmatmul.f32.gmra.mxu0 %v92
  %v221 = vpop.f32.mrf.mxu0
  %v222 = vadd.f32 0.0, %v221
  %223 = vmatmul.f32.gmra.mxu0 %v95
  %v224 = vpop.f32.mrf.mxu0
  %v225 = vadd.f32 0.0, %v224
  %226 = vmatmul.f32.gmra.mxu0 %v98
  %v227 = vpop.f32.mrf.mxu0
  %v228 = vadd.f32 0.0, %v227
  %229 = vmatmul.f32.gmra.mxu0 %v101
  %v230 = vpop.f32.mrf.mxu0
  %v231 = vadd.f32 0.0, %v230
  %232 = vmatmul.f32.gmra.mxu0 %v104
  %v233 = vpop.f32.mrf.mxu0
  %v234 = vadd.f32 0.0, %v233
  %235 = vmatmul.f32.gmra.mxu0 %v107
  %v236 = vpop.f32.mrf.mxu0
  %v237 = vadd.f32 0.0, %v236
  %238 = vmatmul.f32.gmra.mxu0 %v110
  %v239 = vpop.f32.mrf.mxu0
  %v240 = vadd.f32 0.0, %v239
  %241 = vmatmul.f32.gmra.mxu0 %v113
  %v242 = vpop.f32.mrf.mxu0
  %v243 = vadd.f32 0.0, %v242
  %244 = vmatmul.f32.gmra.mxu0 %v116
  %v245 = vpop.f32.mrf.mxu0
  %v246 = vadd.f32 0.0, %v245
  %247 = vmatmul.f32.gmra.mxu0 %v119
  %v248 = vpop.f32.mrf.mxu0
  %v249 = vadd.f32 0.0, %v248
  %250 = vmatmul.f32.gmra.mxu0 %v122
  %v251 = vpop.f32.mrf.mxu0
  %v252 = vadd.f32 0.0, %v251
  %253 = vmatmul.f32.gmra.mxu0 %v125
  %v254 = vpop.f32.mrf.mxu0
  %v255 = vadd.f32 0.0, %v254
  %256 = vmatmul.f32.gmra.mxu0 %v128
  %v257 = vpop.f32.mrf.mxu0
  %v258 = vadd.f32 0.0, %v257
  %259 = vmatmul.f32.gmra.mxu0 %v131
  %v260 = vpop.f32.mrf.mxu0
  %v261 = vadd.f32 0.0, %v260
  %262 = vdwg.mxu0
  %263 = vmatpush.msra.mxu0 0.0
  %264 = vmatpush.msra.mxu0 0.0
  %265 = vmatpush.msra.mxu0 0.0
  %266 = vmatpush.msra.mxu0 0.0
  %267 = vmatpush.msra.mxu0 0.0
  %268 = vmatpush.msra.mxu0 0.0
  %269 = vmatpush.msra.mxu0 0.0
  %270 = vmatpush.msra.mxu0 0.0
  %271 = vmatpush.msra.mxu0 0.0
  %272 = vmatpush.msra.mxu0 0.0
  %273 = vmatpush.msra.mxu0 0.0
  %274 = vmatpush.msra.mxu0 0.0
  %275 = vmatpush.msra.mxu0 0.0
  %276 = vmatpush.msra.mxu0 0.0
  %277 = vmatpush.msra.mxu0 0.0
  %278 = vmatpush.msra.mxu0 %v58
  %279 = vmatmul.f32.gmra.mxu0 %v86
  %v280 = vpop.f32.mrf.mxu0
  %v281 = vadd.f32 0.0, %v280
  %282 = vmatmul.f32.gmra.mxu0 %v89
  %v283 = vpop.f32.mrf.mxu0
  %v284 = vadd.f32 0.0, %v283
  %285 = vmatmul.f32.gmra.mxu0 %v92
  %v286 = vpop.f32.mrf.mxu0
  %v287 = vadd.f32 0.0, %v286
  %288 = vmatmul.f32.gmra.mxu0 %v95
  %v289 = vpop.f32.mrf.mxu0
  %v290 = vadd.f32 0.0, %v289
  %291 = vmatmul.f32.gmra.mxu0 %v98
  %v292 = vpop.f32.mrf.mxu0
  %v293 = vadd.f32 0.0, %v292
  %294 = vmatmul.f32.gmra.mxu0 %v101
  %v295 = vpop.f32.mrf.mxu0
  %v296 = vadd.f32 0.0, %v295
  %297 = vmatmul.f32.gmra.mxu0 %v104
  %v298 = vpop.f32.mrf.mxu0
  %v299 = vadd.f32 0.0, %v298
  %300 = vmatmul.f32.gmra.mxu0 %v107
  %v301 = vpop.f32.mrf.mxu0
  %v302 = vadd.f32 0.0, %v301
  %303 = vmatmul.f32.gmra.mxu0 %v110
  %v304 = vpop.f32.mrf.mxu0
  %v305 = vadd.f32 0.0, %v304
  %306 = vmatmul.f32.gmra.mxu0 %v113
  %v307 = vpop.f32.mrf.mxu0
  %v308 = vadd.f32 0.0, %v307
  %309 = vmatmul.f32.gmra.mxu0 %v116
  %v310 = vpop.f32.mrf.mxu0
  %v311 = vadd.f32 0.0, %v310
  %312 = vmatmul.f32.gmra.mxu0 %v119
  %v313 = vpop.f32.mrf.mxu0
  %v314 = vadd.f32 0.0, %v313
  %315 = vmatmul.f32.gmra.mxu0 %v122
  %v316 = vpop.f32.mrf.mxu0
  %v317 = vadd.f32 0.0, %v316
  %318 = vmatmul.f32.gmra.mxu0 %v125
  %v319 = vpop.f32.mrf.mxu0
  %v320 = vadd.f32 0.0, %v319
  %321 = vmatmul.f32.gmra.mxu0 %v128
  %v322 = vpop.f32.mrf.mxu0
  %v323 = vadd.f32 0.0, %v322
  %324 = vmatmul.f32.gmra.mxu0 %v131
  %v325 = vpop.f32.mrf.mxu0
  %v326 = vadd.f32 0.0, %v325
  %327 = vdwg.mxu0
  %328 = vmatpush.msra.mxu0 0.0
  %329 = vmatpush.msra.mxu0 0.0
  %330 = vmatpush.msra.mxu0 0.0
  %331 = vmatpush.msra.mxu0 0.0
  %332 = vmatpush.msra.mxu0 0.0
  %333 = vmatpush.msra.mxu0 0.0
  %334 = vmatpush.msra.mxu0 0.0
  %335 = vmatpush.msra.mxu0 0.0
  %336 = vmatpush.msra.mxu0 0.0
  %337 = vmatpush.msra.mxu0 0.0
  %338 = vmatpush.msra.mxu0 0.0
  %339 = vmatpush.msra.mxu0 0.0
  %340 = vmatpush.msra.mxu0 0.0
  %341 = vmatpush.msra.mxu0 0.0
  %342 = vmatpush.msra.mxu0 0.0
  %343 = vmatpush.msra.mxu0 %v59
  %344 = vmatmul.f32.gmra.mxu0 %v86
  %v345 = vpop.f32.mrf.mxu0
  %v346 = vadd.f32 0.0, %v345
  %347 = vmatmul.f32.gmra.mxu0 %v89
  %v348 = vpop.f32.mrf.mxu0
  %v349 = vadd.f32 0.0, %v348
  %350 = vmatmul.f32.gmra.mxu0 %v92
  %v351 = vpop.f32.mrf.mxu0
  %v352 = vadd.f32 0.0, %v351
  %353 = vmatmul.f32.gmra.mxu0 %v95
  %v354 = vpop.f32.mrf.mxu0
  %v355 = vadd.f32 0.0, %v354
  %356 = vmatmul.f32.gmra.mxu0 %v98
  %v357 = vpop.f32.mrf.mxu0
  %v358 = vadd.f32 0.0, %v357
  %359 = vmatmul.f32.gmra.mxu0 %v101
  %v360 = vpop.f32.mrf.mxu0
  %v361 = vadd.f32 0.0, %v360
  %362 = vmatmul.f32.gmra.mxu0 %v104
  %v363 = vpop.f32.mrf.mxu0
  %v364 = vadd.f32 0.0, %v363
  %365 = vmatmul.f32.gmra.mxu0 %v107
  %v366 = vpop.f32.mrf.mxu0
  %v367 = vadd.f32 0.0, %v366
  %368 = vmatmul.f32.gmra.mxu0 %v110
  %v369 = vpop.f32.mrf.mxu0
  %v370 = vadd.f32 0.0, %v369
  %371 = vmatmul.f32.gmra.mxu0 %v113
  %v372 = vpop.f32.mrf.mxu0
  %v373 = vadd.f32 0.0, %v372
  %374 = vmatmul.f32.gmra.mxu0 %v116
  %v375 = vpop.f32.mrf.mxu0
  %v376 = vadd.f32 0.0, %v375
  %377 = vmatmul.f32.gmra.mxu0 %v119
  %v378 = vpop.f32.mrf.mxu0
  %v379 = vadd.f32 0.0, %v378
  %380 = vmatmul.f32.gmra.mxu0 %v122
  %v381 = vpop.f32.mrf.mxu0
  %v382 = vadd.f32 0.0, %v381
  %383 = vmatmul.f32.gmra.mxu0 %v125
  %v384 = vpop.f32.mrf.mxu0
  %v385 = vadd.f32 0.0, %v384
  %386 = vmatmul.f32.gmra.mxu0 %v128
  %v387 = vpop.f32.mrf.mxu0
  %v388 = vadd.f32 0.0, %v387
  %389 = vmatmul.f32.gmra.mxu0 %v131
  %v390 = vpop.f32.mrf.mxu0
  %v391 = vadd.f32 0.0, %v390
  %392 = vdwg.mxu0
  %393 = vmatpush.msra.mxu0 0.0
  %394 = vmatpush.msra.mxu0 0.0
  %395 = vmatpush.msra.mxu0 0.0
  %396 = vmatpush.msra.mxu0 0.0
  %397 = vmatpush.msra.mxu0 0.0
  %398 = vmatpush.msra.mxu0 0.0
  %399 = vmatpush.msra.mxu0 0.0
  %400 = vmatpush.msra.mxu0 0.0
  %401 = vmatpush.msra.mxu0 0.0
  %402 = vmatpush.msra.mxu0 0.0
  %403 = vmatpush.msra.mxu0 0.0
  %404 = vmatpush.msra.mxu0 0.0
  %405 = vmatpush.msra.mxu0 0.0
  %406 = vmatpush.msra.mxu0 0.0
  %407 = vmatpush.msra.mxu0 0.0
  %408 = vmatpush.msra.mxu0 %v60
  %409 = vmatmul.f32.gmra.mxu0 %v86
  %v410 = vpop.f32.mrf.mxu0
  %v411 = vadd.f32 0.0, %v410
  %412 = vmatmul.f32.gmra.mxu0 %v89
  %v413 = vpop.f32.mrf.mxu0
  %v414 = vadd.f32 0.0, %v413
  %415 = vmatmul.f32.gmra.mxu0 %v92
  %v416 = vpop.f32.mrf.mxu0
  %v417 = vadd.f32 0.0, %v416
  %418 = vmatmul.f32.gmra.mxu0 %v95
  %v419 = vpop.f32.mrf.mxu0
  %v420 = vadd.f32 0.0, %v419
  %421 = vmatmul.f32.gmra.mxu0 %v98
  %v422 = vpop.f32.mrf.mxu0
  %v423 = vadd.f32 0.0, %v422
  %424 = vmatmul.f32.gmra.mxu0 %v101
  %v425 = vpop.f32.mrf.mxu0
  %v426 = vadd.f32 0.0, %v425
  %427 = vmatmul.f32.gmra.mxu0 %v104
  %v428 = vpop.f32.mrf.mxu0
  %v429 = vadd.f32 0.0, %v428
  %430 = vmatmul.f32.gmra.mxu0 %v107
  %v431 = vpop.f32.mrf.mxu0
  %v432 = vadd.f32 0.0, %v431
  %433 = vmatmul.f32.gmra.mxu0 %v110
  %v434 = vpop.f32.mrf.mxu0
  %v435 = vadd.f32 0.0, %v434
  %436 = vmatmul.f32.gmra.mxu0 %v113
  %v437 = vpop.f32.mrf.mxu0
  %v438 = vadd.f32 0.0, %v437
  %439 = vmatmul.f32.gmra.mxu0 %v116
  %v440 = vpop.f32.mrf.mxu0
  %v441 = vadd.f32 0.0, %v440
  %442 = vmatmul.f32.gmra.mxu0 %v119
  %v443 = vpop.f32.mrf.mxu0
  %v444 = vadd.f32 0.0, %v443
  %445 = vmatmul.f32.gmra.mxu0 %v122
  %v446 = vpop.f32.mrf.mxu0
  %v447 = vadd.f32 0.0, %v446
  %448 = vmatmul.f32.gmra.mxu0 %v125
  %v449 = vpop.f32.mrf.mxu0
  %v450 = vadd.f32 0.0, %v449
  %451 = vmatmul.f32.gmra.mxu0 %v128
  %v452 = vpop.f32.mrf.mxu0
  %v453 = vadd.f32 0.0, %v452
  %454 = vmatmul.f32.gmra.mxu0 %v131
  %v455 = vpop.f32.mrf.mxu0
  %v456 = vadd.f32 0.0, %v455
  %457 = vdwg.mxu0
  %458 = vmatpush.msra.mxu0 0.0
  %459 = vmatpush.msra.mxu0 0.0
  %460 = vmatpush.msra.mxu0 0.0
  %461 = vmatpush.msra.mxu0 0.0
  %462 = vmatpush.msra.mxu0 0.0
  %463 = vmatpush.msra.mxu0 0.0
  %464 = vmatpush.msra.mxu0 0.0
  %465 = vmatpush.msra.mxu0 0.0
  %466 = vmatpush.msra.mxu0 0.0
  %467 = vmatpush.msra.mxu0 0.0
  %468 = vmatpush.msra.mxu0 0.0
  %469 = vmatpush.msra.mxu0 0.0
  %470 = vmatpush.msra.mxu0 0.0
  %471 = vmatpush.msra.mxu0 0.0
  %472 = vmatpush.msra.mxu0 0.0
  %473 = vmatpush.msra.mxu0 %v61
  %474 = vmatmul.f32.gmra.mxu0 %v86
  %v475 = vpop.f32.mrf.mxu0
  %v476 = vadd.f32 0.0, %v475
  %477 = vmatmul.f32.gmra.mxu0 %v89
  %v478 = vpop.f32.mrf.mxu0
  %v479 = vadd.f32 0.0, %v478
  %480 = vmatmul.f32.gmra.mxu0 %v92
  %v481 = vpop.f32.mrf.mxu0
  %v482 = vadd.f32 0.0, %v481
  %483 = vmatmul.f32.gmra.mxu0 %v95
  %v484 = vpop.f32.mrf.mxu0
  %v485 = vadd.f32 0.0, %v484
  %486 = vmatmul.f32.gmra.mxu0 %v98
  %v487 = vpop.f32.mrf.mxu0
  %v488 = vadd.f32 0.0, %v487
  %489 = vmatmul.f32.gmra.mxu0 %v101
  %v490 = vpop.f32.mrf.mxu0
  %v491 = vadd.f32 0.0, %v490
  %492 = vmatmul.f32.gmra.mxu0 %v104
  %v493 = vpop.f32.mrf.mxu0
  %v494 = vadd.f32 0.0, %v493
  %495 = vmatmul.f32.gmra.mxu0 %v107
  %v496 = vpop.f32.mrf.mxu0
  %v497 = vadd.f32 0.0, %v496
  %498 = vmatmul.f32.gmra.mxu0 %v110
  %v499 = vpop.f32.mrf.mxu0
  %v500 = vadd.f32 0.0, %v499
  %501 = vmatmul.f32.gmra.mxu0 %v113
  %v502 = vpop.f32.mrf.mxu0
  %v503 = vadd.f32 0.0, %v502
  %504 = vmatmul.f32.gmra.mxu0 %v116
  %v505 = vpop.f32.mrf.mxu0
  %v506 = vadd.f32 0.0, %v505
  %507 = vmatmul.f32.gmra.mxu0 %v119
  %v508 = vpop.f32.mrf.mxu0
  %v509 = vadd.f32 0.0, %v508
  %510 = vmatmul.f32.gmra.mxu0 %v122
  %v511 = vpop.f32.mrf.mxu0
  %v512 = vadd.f32 0.0, %v511
  %513 = vmatmul.f32.gmra.mxu0 %v125
  %v514 = vpop.f32.mrf.mxu0
  %v515 = vadd.f32 0.0, %v514
  %516 = vmatmul.f32.gmra.mxu0 %v128
  %v517 = vpop.f32.mrf.mxu0
  %v518 = vadd.f32 0.0, %v517
  %519 = vmatmul.f32.gmra.mxu0 %v131
  %v520 = vpop.f32.mrf.mxu0
  %v521 = vadd.f32 0.0, %v520
  %522 = vdwg.mxu0
  %523 = vmatpush.msra.mxu0 0.0
  %524 = vmatpush.msra.mxu0 0.0
  %525 = vmatpush.msra.mxu0 0.0
  %526 = vmatpush.msra.mxu0 0.0
  %527 = vmatpush.msra.mxu0 0.0
  %528 = vmatpush.msra.mxu0 0.0
  %529 = vmatpush.msra.mxu0 0.0
  %530 = vmatpush.msra.mxu0 0.0
  %531 = vmatpush.msra.mxu0 0.0
  %532 = vmatpush.msra.mxu0 0.0
  %533 = vmatpush.msra.mxu0 0.0
  %534 = vmatpush.msra.mxu0 0.0
  %535 = vmatpush.msra.mxu0 0.0
  %536 = vmatpush.msra.mxu0 0.0
  %537 = vmatpush.msra.mxu0 0.0
  %538 = vmatpush.msra.mxu0 %v62
  %539 = vmatmul.f32.gmra.mxu0 %v86
  %v540 = vpop.f32.mrf.mxu0
  %v541 = vadd.f32 0.0, %v540
  %542 = vmatmul.f32.gmra.mxu0 %v89
  %v543 = vpop.f32.mrf.mxu0
  %v544 = vadd.f32 0.0, %v543
  %545 = vmatmul.f32.gmra.mxu0 %v92
  %v546 = vpop.f32.mrf.mxu0
  %v547 = vadd.f32 0.0, %v546
  %548 = vmatmul.f32.gmra.mxu0 %v95
  %v549 = vpop.f32.mrf.mxu0
  %v550 = vadd.f32 0.0, %v549
  %551 = vmatmul.f32.gmra.mxu0 %v98
  %v552 = vpop.f32.mrf.mxu0
  %v553 = vadd.f32 0.0, %v552
  %554 = vmatmul.f32.gmra.mxu0 %v101
  %v555 = vpop.f32.mrf.mxu0
  %v556 = vadd.f32 0.0, %v555
  %557 = vmatmul.f32.gmra.mxu0 %v104
  %v558 = vpop.f32.mrf.mxu0
  %v559 = vadd.f32 0.0, %v558
  %560 = vmatmul.f32.gmra.mxu0 %v107
  %v561 = vpop.f32.mrf.mxu0
  %v562 = vadd.f32 0.0, %v561
  %563 = vmatmul.f32.gmra.mxu0 %v110
  %v564 = vpop.f32.mrf.mxu0
  %v565 = vadd.f32 0.0, %v564
  %566 = vmatmul.f32.gmra.mxu0 %v113
  %v567 = vpop.f32.mrf.mxu0
  %v568 = vadd.f32 0.0, %v567
  %569 = vmatmul.f32.gmra.mxu0 %v116
  %v570 = vpop.f32.mrf.mxu0
  %v571 = vadd.f32 0.0, %v570
  %572 = vmatmul.f32.gmra.mxu0 %v119
  %v573 = vpop.f32.mrf.mxu0
  %v574 = vadd.f32 0.0, %v573
  %575 = vmatmul.f32.gmra.mxu0 %v122
  %v576 = vpop.f32.mrf.mxu0
  %v577 = vadd.f32 0.0, %v576
  %578 = vmatmul.f32.gmra.mxu0 %v125
  %v579 = vpop.f32.mrf.mxu0
  %v580 = vadd.f32 0.0, %v579
  %581 = vmatmul.f32.gmra.mxu0 %v128
  %v582 = vpop.f32.mrf.mxu0
  %v583 = vadd.f32 0.0, %v582
  %584 = vmatmul.f32.gmra.mxu0 %v131
  %v585 = vpop.f32.mrf.mxu0
  %v586 = vadd.f32 0.0, %v585
  %587 = vdwg.mxu0
  %588 = vmatpush.msra.mxu0 0.0
  %589 = vmatpush.msra.mxu0 0.0
  %590 = vmatpush.msra.mxu0 0.0
  %591 = vmatpush.msra.mxu0 0.0
  %592 = vmatpush.msra.mxu0 0.0
  %593 = vmatpush.msra.mxu0 0.0
  %594 = vmatpush.msra.mxu0 0.0
  %595 = vmatpush.msra.mxu0 0.0
  %596 = vmatpush.msra.mxu0 0.0
  %597 = vmatpush.msra.mxu0 0.0
  %598 = vmatpush.msra.mxu0 0.0
  %599 = vmatpush.msra.mxu0 0.0
  %600 = vmatpush.msra.mxu0 0.0
  %601 = vmatpush.msra.mxu0 0.0
  %602 = vmatpush.msra.mxu0 0.0
  %603 = vmatpush.msra.mxu0 %v63
  %604 = vmatmul.f32.gmra.mxu0 %v86
  %v605 = vpop.f32.mrf.mxu0
  %v606 = vadd.f32 0.0, %v605
  %607 = vmatmul.f32.gmra.mxu0 %v89
  %v608 = vpop.f32.mrf.mxu0
  %v609 = vadd.f32 0.0, %v608
  %610 = vmatmul.f32.gmra.mxu0 %v92
  %v611 = vpop.f32.mrf.mxu0
  %v612 = vadd.f32 0.0, %v611
  %613 = vmatmul.f32.gmra.mxu0 %v95
  %v614 = vpop.f32.mrf.mxu0
  %v615 = vadd.f32 0.0, %v614
  %616 = vmatmul.f32.gmra.mxu0 %v98
  %v617 = vpop.f32.mrf.mxu0
  %v618 = vadd.f32 0.0, %v617
  %619 = vmatmul.f32.gmra.mxu0 %v101
  %v620 = vpop.f32.mrf.mxu0
  %v621 = vadd.f32 0.0, %v620
  %622 = vmatmul.f32.gmra.mxu0 %v104
  %v623 = vpop.f32.mrf.mxu0
  %v624 = vadd.f32 0.0, %v623
  %625 = vmatmul.f32.gmra.mxu0 %v107
  %v626 = vpop.f32.mrf.mxu0
  %v627 = vadd.f32 0.0, %v626
  %628 = vmatmul.f32.gmra.mxu0 %v110
  %v629 = vpop.f32.mrf.mxu0
  %v630 = vadd.f32 0.0, %v629
  %631 = vmatmul.f32.gmra.mxu0 %v113
  %v632 = vpop.f32.mrf.mxu0
  %v633 = vadd.f32 0.0, %v632
  %634 = vmatmul.f32.gmra.mxu0 %v116
  %v635 = vpop.f32.mrf.mxu0
  %v636 = vadd.f32 0.0, %v635
  %637 = vmatmul.f32.gmra.mxu0 %v119
  %v638 = vpop.f32.mrf.mxu0
  %v639 = vadd.f32 0.0, %v638
  %640 = vmatmul.f32.gmra.mxu0 %v122
  %v641 = vpop.f32.mrf.mxu0
  %v642 = vadd.f32 0.0, %v641
  %643 = vmatmul.f32.gmra.mxu0 %v125
  %v644 = vpop.f32.mrf.mxu0
  %v645 = vadd.f32 0.0, %v644
  %646 = vmatmul.f32.gmra.mxu0 %v128
  %v647 = vpop.f32.mrf.mxu0
  %v648 = vadd.f32 0.0, %v647
  %649 = vmatmul.f32.gmra.mxu0 %v131
  %v650 = vpop.f32.mrf.mxu0
  %v651 = vadd.f32 0.0, %v650
  %652 = vdwg.mxu0
  %653 = vmatpush.msra.mxu0 0.0
  %654 = vmatpush.msra.mxu0 0.0
  %655 = vmatpush.msra.mxu0 0.0
  %656 = vmatpush.msra.mxu0 0.0
  %657 = vmatpush.msra.mxu0 0.0
  %658 = vmatpush.msra.mxu0 0.0
  %659 = vmatpush.msra.mxu0 0.0
  %660 = vmatpush.msra.mxu0 0.0
  %661 = vmatpush.msra.mxu0 0.0
  %662 = vmatpush.msra.mxu0 0.0
  %663 = vmatpush.msra.mxu0 0.0
  %664 = vmatpush.msra.mxu0 0.0
  %665 = vmatpush.msra.mxu0 0.0
  %666 = vmatpush.msra.mxu0 0.0
  %667 = vmatpush.msra.mxu0 0.0
  %668 = vmatpush.msra.mxu0 %v64
  %669 = vmatmul.f32.gmra.mxu0 %v86
  %v670 = vpop.f32.mrf.mxu0
  %v671 = vadd.f32 0.0, %v670
  %672 = vmatmul.f32.gmra.mxu0 %v89
  %v673 = vpop.f32.mrf.mxu0
  %v674 = vadd.f32 0.0, %v673
  %675 = vmatmul.f32.gmra.mxu0 %v92
  %v676 = vpop.f32.mrf.mxu0
  %v677 = vadd.f32 0.0, %v676
  %678 = vmatmul.f32.gmra.mxu0 %v95
  %v679 = vpop.f32.mrf.mxu0
  %v680 = vadd.f32 0.0, %v679
  %681 = vmatmul.f32.gmra.mxu0 %v98
  %v682 = vpop.f32.mrf.mxu0
  %v683 = vadd.f32 0.0, %v682
  %684 = vmatmul.f32.gmra.mxu0 %v101
  %v685 = vpop.f32.mrf.mxu0
  %v686 = vadd.f32 0.0, %v685
  %687 = vmatmul.f32.gmra.mxu0 %v104
  %v688 = vpop.f32.mrf.mxu0
  %v689 = vadd.f32 0.0, %v688
  %690 = vmatmul.f32.gmra.mxu0 %v107
  %v691 = vpop.f32.mrf.mxu0
  %v692 = vadd.f32 0.0, %v691
  %693 = vmatmul.f32.gmra.mxu0 %v110
  %v694 = vpop.f32.mrf.mxu0
  %v695 = vadd.f32 0.0, %v694
  %696 = vmatmul.f32.gmra.mxu0 %v113
  %v697 = vpop.f32.mrf.mxu0
  %v698 = vadd.f32 0.0, %v697
  %699 = vmatmul.f32.gmra.mxu0 %v116
  %v700 = vpop.f32.mrf.mxu0
  %v701 = vadd.f32 0.0, %v700
  %702 = vmatmul.f32.gmra.mxu0 %v119
  %v703 = vpop.f32.mrf.mxu0
  %v704 = vadd.f32 0.0, %v703
  %705 = vmatmul.f32.gmra.mxu0 %v122
  %v706 = vpop.f32.mrf.mxu0
  %v707 = vadd.f32 0.0, %v706
  %708 = vmatmul.f32.gmra.mxu0 %v125
  %v709 = vpop.f32.mrf.mxu0
  %v710 = vadd.f32 0.0, %v709
  %711 = vmatmul.f32.gmra.mxu0 %v128
  %v712 = vpop.f32.mrf.mxu0
  %v713 = vadd.f32 0.0, %v712
  %714 = vmatmul.f32.gmra.mxu0 %v131
  %v715 = vpop.f32.mrf.mxu0
  %v716 = vadd.f32 0.0, %v715
  %717 = vdwg.mxu0
  %718 = vmatpush.msra.mxu0 0.0
  %719 = vmatpush.msra.mxu0 0.0
  %720 = vmatpush.msra.mxu0 0.0
  %721 = vmatpush.msra.mxu0 0.0
  %722 = vmatpush.msra.mxu0 0.0
  %723 = vmatpush.msra.mxu0 0.0
  %724 = vmatpush.msra.mxu0 0.0
  %725 = vmatpush.msra.mxu0 0.0
  %726 = vmatpush.msra.mxu0 0.0
  %727 = vmatpush.msra.mxu0 0.0
  %728 = vmatpush.msra.mxu0 0.0
  %729 = vmatpush.msra.mxu0 0.0
  %730 = vmatpush.msra.mxu0 0.0
  %731 = vmatpush.msra.mxu0 0.0
  %732 = vmatpush.msra.mxu0 0.0
  %733 = vmatpush.msra.mxu0 %v65
  %734 = vmatmul.f32.gmra.mxu0 %v86
  %v735 = vpop.f32.mrf.mxu0
  %v736 = vadd.f32 0.0, %v735
  %737 = vmatmul.f32.gmra.mxu0 %v89
  %v738 = vpop.f32.mrf.mxu0
  %v739 = vadd.f32 0.0, %v738
  %740 = vmatmul.f32.gmra.mxu0 %v92
  %v741 = vpop.f32.mrf.mxu0
  %v742 = vadd.f32 0.0, %v741
  %743 = vmatmul.f32.gmra.mxu0 %v95
  %v744 = vpop.f32.mrf.mxu0
  %v745 = vadd.f32 0.0, %v744
  %746 = vmatmul.f32.gmra.mxu0 %v98
  %v747 = vpop.f32.mrf.mxu0
  %v748 = vadd.f32 0.0, %v747
  %749 = vmatmul.f32.gmra.mxu0 %v101
  %v750 = vpop.f32.mrf.mxu0
  %v751 = vadd.f32 0.0, %v750
  %752 = vmatmul.f32.gmra.mxu0 %v104
  %v753 = vpop.f32.mrf.mxu0
  %v754 = vadd.f32 0.0, %v753
  %755 = vmatmul.f32.gmra.mxu0 %v107
  %v756 = vpop.f32.mrf.mxu0
  %v757 = vadd.f32 0.0, %v756
  %758 = vmatmul.f32.gmra.mxu0 %v110
  %v759 = vpop.f32.mrf.mxu0
  %v760 = vadd.f32 0.0, %v759
  %761 = vmatmul.f32.gmra.mxu0 %v113
  %v762 = vpop.f32.mrf.mxu0
  %v763 = vadd.f32 0.0, %v762
  %764 = vmatmul.f32.gmra.mxu0 %v116
  %v765 = vpop.f32.mrf.mxu0
  %v766 = vadd.f32 0.0, %v765
  %767 = vmatmul.f32.gmra.mxu0 %v119
  %v768 = vpop.f32.mrf.mxu0
  %v769 = vadd.f32 0.0, %v768
  %770 = vmatmul.f32.gmra.mxu0 %v122
  %v771 = vpop.f32.mrf.mxu0
  %v772 = vadd.f32 0.0, %v771
  %773 = vmatmul.f32.gmra.mxu0 %v125
  %v774 = vpop.f32.mrf.mxu0
  %v775 = vadd.f32 0.0, %v774
  %776 = vmatmul.f32.gmra.mxu0 %v128
  %v777 = vpop.f32.mrf.mxu0
  %v778 = vadd.f32 0.0, %v777
  %779 = vmatmul.f32.gmra.mxu0 %v131
  %v780 = vpop.f32.mrf.mxu0
  %v781 = vadd.f32 0.0, %v780
  %782 = vdwg.mxu0
  %783 = vmatpush.msra.mxu0 0.0
  %784 = vmatpush.msra.mxu0 0.0
  %785 = vmatpush.msra.mxu0 0.0
  %786 = vmatpush.msra.mxu0 0.0
  %787 = vmatpush.msra.mxu0 0.0
  %788 = vmatpush.msra.mxu0 0.0
  %789 = vmatpush.msra.mxu0 0.0
  %790 = vmatpush.msra.mxu0 0.0
  %791 = vmatpush.msra.mxu0 0.0
  %792 = vmatpush.msra.mxu0 0.0
  %793 = vmatpush.msra.mxu0 0.0
  %794 = vmatpush.msra.mxu0 0.0
  %795 = vmatpush.msra.mxu0 0.0
  %796 = vmatpush.msra.mxu0 0.0
  %797 = vmatpush.msra.mxu0 0.0
  %798 = vmatpush.msra.mxu0 %v66
  %799 = vmatmul.f32.gmra.mxu0 %v86
  %v800 = vpop.f32.mrf.mxu0
  %v801 = vadd.f32 0.0, %v800
  %802 = vmatmul.f32.gmra.mxu0 %v89
  %v803 = vpop.f32.mrf.mxu0
  %v804 = vadd.f32 0.0, %v803
  %805 = vmatmul.f32.gmra.mxu0 %v92
  %v806 = vpop.f32.mrf.mxu0
  %v807 = vadd.f32 0.0, %v806
  %808 = vmatmul.f32.gmra.mxu0 %v95
  %v809 = vpop.f32.mrf.mxu0
  %v810 = vadd.f32 0.0, %v809
  %811 = vmatmul.f32.gmra.mxu0 %v98
  %v812 = vpop.f32.mrf.mxu0
  %v813 = vadd.f32 0.0, %v812
  %814 = vmatmul.f32.gmra.mxu0 %v101
  %v815 = vpop.f32.mrf.mxu0
  %v816 = vadd.f32 0.0, %v815
  %817 = vmatmul.f32.gmra.mxu0 %v104
  %v818 = vpop.f32.mrf.mxu0
  %v819 = vadd.f32 0.0, %v818
  %820 = vmatmul.f32.gmra.mxu0 %v107
  %v821 = vpop.f32.mrf.mxu0
  %v822 = vadd.f32 0.0, %v821
  %823 = vmatmul.f32.gmra.mxu0 %v110
  %v824 = vpop.f32.mrf.mxu0
  %v825 = vadd.f32 0.0, %v824
  %826 = vmatmul.f32.gmra.mxu0 %v113
  %v827 = vpop.f32.mrf.mxu0
  %v828 = vadd.f32 0.0, %v827
  %829 = vmatmul.f32.gmra.mxu0 %v116
  %v830 = vpop.f32.mrf.mxu0
  %v831 = vadd.f32 0.0, %v830
  %832 = vmatmul.f32.gmra.mxu0 %v119
  %v833 = vpop.f32.mrf.mxu0
  %v834 = vadd.f32 0.0, %v833
  %835 = vmatmul.f32.gmra.mxu0 %v122
  %v836 = vpop.f32.mrf.mxu0
  %v837 = vadd.f32 0.0, %v836
  %838 = vmatmul.f32.gmra.mxu0 %v125
  %v839 = vpop.f32.mrf.mxu0
  %v840 = vadd.f32 0.0, %v839
  %841 = vmatmul.f32.gmra.mxu0 %v128
  %v842 = vpop.f32.mrf.mxu0
  %v843 = vadd.f32 0.0, %v842
  %844 = vmatmul.f32.gmra.mxu0 %v131
  %v845 = vpop.f32.mrf.mxu0
  %v846 = vadd.f32 0.0, %v845
  %847 = vdwg.mxu0
  %848 = vmatpush.msra.mxu0 0.0
  %849 = vmatpush.msra.mxu0 0.0
  %850 = vmatpush.msra.mxu0 0.0
  %851 = vmatpush.msra.mxu0 0.0
  %852 = vmatpush.msra.mxu0 0.0
  %853 = vmatpush.msra.mxu0 0.0
  %854 = vmatpush.msra.mxu0 0.0
  %855 = vmatpush.msra.mxu0 0.0
  %856 = vmatpush.msra.mxu0 0.0
  %857 = vmatpush.msra.mxu0 0.0
  %858 = vmatpush.msra.mxu0 0.0
  %859 = vmatpush.msra.mxu0 0.0
  %860 = vmatpush.msra.mxu0 0.0
  %861 = vmatpush.msra.mxu0 0.0
  %862 = vmatpush.msra.mxu0 0.0
  %863 = vmatpush.msra.mxu0 %v67
  %864 = vmatmul.f32.gmra.mxu0 %v86
  %v865 = vpop.f32.mrf.mxu0
  %v866 = vadd.f32 0.0, %v865
  %867 = vmatmul.f32.gmra.mxu0 %v89
  %v868 = vpop.f32.mrf.mxu0
  %v869 = vadd.f32 0.0, %v868
  %870 = vmatmul.f32.gmra.mxu0 %v92
  %v871 = vpop.f32.mrf.mxu0
  %v872 = vadd.f32 0.0, %v871
  %873 = vmatmul.f32.gmra.mxu0 %v95
  %v874 = vpop.f32.mrf.mxu0
  %v875 = vadd.f32 0.0, %v874
  %876 = vmatmul.f32.gmra.mxu0 %v98
  %v877 = vpop.f32.mrf.mxu0
  %v878 = vadd.f32 0.0, %v877
  %879 = vmatmul.f32.gmra.mxu0 %v101
  %v880 = vpop.f32.mrf.mxu0
  %v881 = vadd.f32 0.0, %v880
  %882 = vmatmul.f32.gmra.mxu0 %v104
  %v883 = vpop.f32.mrf.mxu0
  %v884 = vadd.f32 0.0, %v883
  %885 = vmatmul.f32.gmra.mxu0 %v107
  %v886 = vpop.f32.mrf.mxu0
  %v887 = vadd.f32 0.0, %v886
  %888 = vmatmul.f32.gmra.mxu0 %v110
  %v889 = vpop.f32.mrf.mxu0
  %v890 = vadd.f32 0.0, %v889
  %891 = vmatmul.f32.gmra.mxu0 %v113
  %v892 = vpop.f32.mrf.mxu0
  %v893 = vadd.f32 0.0, %v892
  %894 = vmatmul.f32.gmra.mxu0 %v116
  %v895 = vpop.f32.mrf.mxu0
  %v896 = vadd.f32 0.0, %v895
  %897 = vmatmul.f32.gmra.mxu0 %v119
  %v898 = vpop.f32.mrf.mxu0
  %v899 = vadd.f32 0.0, %v898
  %900 = vmatmul.f32.gmra.mxu0 %v122
  %v901 = vpop.f32.mrf.mxu0
  %v902 = vadd.f32 0.0, %v901
  %903 = vmatmul.f32.gmra.mxu0 %v125
  %v904 = vpop.f32.mrf.mxu0
  %v905 = vadd.f32 0.0, %v904
  %906 = vmatmul.f32.gmra.mxu0 %v128
  %v907 = vpop.f32.mrf.mxu0
  %v908 = vadd.f32 0.0, %v907
  %909 = vmatmul.f32.gmra.mxu0 %v131
  %v910 = vpop.f32.mrf.mxu0
  %v911 = vadd.f32 0.0, %v910
  %912 = vdwg.mxu0
  %v913 = vld [vmem:[%s1] sm:$0xf]
  %v914 = vld [vmem:[%s1 + $0x4] sm:$0xf]
  %v915 = vld [vmem:[%s1 + $0x8] sm:$0xf]
  %v916 = vld [vmem:[%s1 + $0xc] sm:$0xf]
  %v917 = vld [vmem:[%s1 + $0x10] sm:$0xf]
  %v918 = vld [vmem:[%s1 + $0x14] sm:$0xf]
  %v919 = vld [vmem:[%s1 + $0x18] sm:$0xf]
  %v920 = vld [vmem:[%s1 + $0x1c] sm:$0xf]
  %v921 = vld [vmem:[%s1 + $0x20] sm:$0xf]
  %v922 = vld [vmem:[%s1 + $0x24] sm:$0xf]
  %v923 = vld [vmem:[%s1 + $0x28] sm:$0xf]
  %v924 = vld [vmem:[%s1 + $0x2c] sm:$0xf]
  %v925 = vld [vmem:[%s1 + $0x30] sm:$0xf]
  %v926 = vld [vmem:[%s1 + $0x34] sm:$0xf]
  %v927 = vld [vmem:[%s1 + $0x38] sm:$0xf]
  %v928 = vld [vmem:[%s1 + $0x3c] sm:$0xf]
  %v929 = vld [vmem:[%s1 + $0x40] sm:$0xf]
  %v930 = vld [vmem:[%s1 + $0x44] sm:$0xf]
  %v931 = vld [vmem:[%s1 + $0x48] sm:$0xf]
  %v932 = vld [vmem:[%s1 + $0x4c] sm:$0xf]
  %v933 = vld [vmem:[%s1 + $0x50] sm:$0xf]
  %v934 = vld [vmem:[%s1 + $0x54] sm:$0xf]
  %v935 = vld [vmem:[%s1 + $0x58] sm:$0xf]
  %v936 = vld [vmem:[%s1 + $0x5c] sm:$0xf]
  %v937 = vld [vmem:[%s1 + $0x60] sm:$0xf]
  %v938 = vld [vmem:[%s1 + $0x64] sm:$0xf]
  %v939 = vld [vmem:[%s1 + $0x68] sm:$0xf]
  %v940 = vld [vmem:[%s1 + $0x6c] sm:$0xf]
  %v941 = vld [vmem:[%s1 + $0x70] sm:$0xf]
  %v942 = vld [vmem:[%s1 + $0x74] sm:$0xf]
  %v943 = vld [vmem:[%s1 + $0x78] sm:$0xf]
  %v944 = vld [vmem:[%s1 + $0x7c] sm:$0xf]
  %v945 = vld [vmem:[%s1 + $0x80] sm:$0xf]
  %v946 = vld [vmem:[%s1 + $0x84] sm:$0xf]
  %v947 = vld [vmem:[%s1 + $0x88] sm:$0xf]
  %v948 = vld [vmem:[%s1 + $0x8c] sm:$0xf]
  %v949 = vld [vmem:[%s1 + $0x90] sm:$0xf]
  %v950 = vld [vmem:[%s1 + $0x94] sm:$0xf]
  %v951 = vld [vmem:[%s1 + $0x98] sm:$0xf]
  %v952 = vld [vmem:[%s1 + $0x9c] sm:$0xf]
  %v953 = vld [vmem:[%s1 + $0xa0] sm:$0xf]
  %v954 = vld [vmem:[%s1 + $0xa4] sm:$0xf]
  %v955 = vld [vmem:[%s1 + $0xa8] sm:$0xf]
  %v956 = vld [vmem:[%s1 + $0xac] sm:$0xf]
  %v957 = vld [vmem:[%s1 + $0xb0] sm:$0xf]
  %v958 = vld [vmem:[%s1 + $0xb4] sm:$0xf]
  %v959 = vld [vmem:[%s1 + $0xb8] sm:$0xf]
  %v960 = vld [vmem:[%s1 + $0xbc] sm:$0xf]
  %v961 = vld [vmem:[%s1 + $0xc0] sm:$0xf]
  %v962 = vld [vmem:[%s1 + $0xc4] sm:$0xf]
  %v963 = vld [vmem:[%s1 + $0xc8] sm:$0xf]
  %v964 = vld [vmem:[%s1 + $0xcc] sm:$0xf]
  %v965 = vld [vmem:[%s1 + $0xd0] sm:$0xf]
  %v966 = vld [vmem:[%s1 + $0xd4] sm:$0xf]
  %v967 = vld [vmem:[%s1 + $0xd8] sm:$0xf]
  %v968 = vld [vmem:[%s1 + $0xdc] sm:$0xf]
  %v969 = vld [vmem:[%s1 + $0xe0] sm:$0xf]
  %v970 = vld [vmem:[%s1 + $0xe4] sm:$0xf]
  %v971 = vld [vmem:[%s1 + $0xe8] sm:$0xf]
  %v972 = vld [vmem:[%s1 + $0xec] sm:$0xf]
  %v973 = vld [vmem:[%s1 + $0xf0] sm:$0xf]
  %v974 = vld [vmem:[%s1 + $0xf4] sm:$0xf]
  %v975 = vld [vmem:[%s1 + $0xf8] sm:$0xf]
  %v976 = vld [vmem:[%s1 + $0xfc] sm:$0xf]
  %v977 = vld [vmem:[%s1 + $0x100] sm:$0xf]
  %v978 = vld [vmem:[%s1 + $0x104] sm:$0xf]
  %v979 = vld [vmem:[%s1 + $0x108] sm:$0xf]
  %v980 = vld [vmem:[%s1 + $0x10c] sm:$0xf]
  %v981 = vld [vmem:[%s1 + $0x110] sm:$0xf]
  %v982 = vld [vmem:[%s1 + $0x114] sm:$0xf]
  %v983 = vld [vmem:[%s1 + $0x118] sm:$0xf]
  %v984 = vld [vmem:[%s1 + $0x11c] sm:$0xf]
  %v985 = vld [vmem:[%s1 + $0x120] sm:$0xf]
  %v986 = vld [vmem:[%s1 + $0x124] sm:$0xf]
  %v987 = vld [vmem:[%s1 + $0x128] sm:$0xf]
  %v988 = vld [vmem:[%s1 + $0x12c] sm:$0xf]
  %v989 = vld [vmem:[%s1 + $0x130] sm:$0xf]
  %v990 = vld [vmem:[%s1 + $0x134] sm:$0xf]
  %v991 = vld [vmem:[%s1 + $0x138] sm:$0xf]
  %v992 = vld [vmem:[%s1 + $0x13c] sm:$0xf]
  %v993 = vld [vmem:[%s1 + $0x140] sm:$0xf]
  %v994 = vld [vmem:[%s1 + $0x144] sm:$0xf]
  %v995 = vld [vmem:[%s1 + $0x148] sm:$0xf]
  %v996 = vld [vmem:[%s1 + $0x14c] sm:$0xf]
  %v997 = vld [vmem:[%s1 + $0x150] sm:$0xf]
  %v998 = vld [vmem:[%s1 + $0x154] sm:$0xf]
  %v999 = vld [vmem:[%s1 + $0x158] sm:$0xf]
  %v1000 = vld [vmem:[%s1 + $0x15c] sm:$0xf]
  %v1001 = vld [vmem:[%s1 + $0x160] sm:$0xf]
  %v1002 = vld [vmem:[%s1 + $0x164] sm:$0xf]
  %v1003 = vld [vmem:[%s1 + $0x168] sm:$0xf]
  %v1004 = vld [vmem:[%s1 + $0x16c] sm:$0xf]
  %v1005 = vld [vmem:[%s1 + $0x170] sm:$0xf]
  %v1006 = vld [vmem:[%s1 + $0x174] sm:$0xf]
  %v1007 = vld [vmem:[%s1 + $0x178] sm:$0xf]
  %v1008 = vld [vmem:[%s1 + $0x17c] sm:$0xf]
  %v1009 = vld [vmem:[%s1 + $0x180] sm:$0xf]
  %v1010 = vld [vmem:[%s1 + $0x184] sm:$0xf]
  %v1011 = vld [vmem:[%s1 + $0x188] sm:$0xf]
  %v1012 = vld [vmem:[%s1 + $0x18c] sm:$0xf]
  %v1013 = vld [vmem:[%s1 + $0x190] sm:$0xf]
  %v1014 = vld [vmem:[%s1 + $0x194] sm:$0xf]
  %v1015 = vld [vmem:[%s1 + $0x198] sm:$0xf]
  %v1016 = vld [vmem:[%s1 + $0x19c] sm:$0xf]
  %v1017 = vld [vmem:[%s1 + $0x1a0] sm:$0xf]
  %v1018 = vld [vmem:[%s1 + $0x1a4] sm:$0xf]
  %v1019 = vld [vmem:[%s1 + $0x1a8] sm:$0xf]
  %v1020 = vld [vmem:[%s1 + $0x1ac] sm:$0xf]
  %v1021 = vld [vmem:[%s1 + $0x1b0] sm:$0xf]
  %v1022 = vld [vmem:[%s1 + $0x1b4] sm:$0xf]
  %v1023 = vld [vmem:[%s1 + $0x1b8] sm:$0xf]
  %v1024 = vld [vmem:[%s1 + $0x1bc] sm:$0xf]
  %v1025 = vld [vmem:[%s1 + $0x1c0] sm:$0xf]
  %v1026 = vld [vmem:[%s1 + $0x1c4] sm:$0xf]
  %v1027 = vld [vmem:[%s1 + $0x1c8] sm:$0xf]
  %v1028 = vld [vmem:[%s1 + $0x1cc] sm:$0xf]
  %v1029 = vld [vmem:[%s1 + $0x1d0] sm:$0xf]
  %v1030 = vld [vmem:[%s1 + $0x1d4] sm:$0xf]
  %v1031 = vld [vmem:[%s1 + $0x1d8] sm:$0xf]
  %v1032 = vld [vmem:[%s1 + $0x1dc] sm:$0xf]
  %v1033 = vld [vmem:[%s1 + $0x1e0] sm:$0xf]
  %v1034 = vld [vmem:[%s1 + $0x1e4] sm:$0xf]
  %v1035 = vld [vmem:[%s1 + $0x1e8] sm:$0xf]
  %v1036 = vld [vmem:[%s1 + $0x1ec] sm:$0xf]
  %v1037 = vld [vmem:[%s1 + $0x1f0] sm:$0xf]
  %v1038 = vld [vmem:[%s1 + $0x1f4] sm:$0xf]
  %v1039 = vld [vmem:[%s1 + $0x1f8] sm:$0xf]
  %v1040 = vld [vmem:[%s1 + $0x1fc] sm:$0xf]
  %v1041 = vld [vmem:[%s1 + $0x200] sm:$0xf]
  %v1042 = vld [vmem:[%s1 + $0x204] sm:$0xf]
  %v1043 = vld [vmem:[%s1 + $0x208] sm:$0xf]
  %v1044 = vld [vmem:[%s1 + $0x20c] sm:$0xf]
  %v1045 = vld [vmem:[%s1 + $0x210] sm:$0xf]
  %v1046 = vld [vmem:[%s1 + $0x214] sm:$0xf]
  %v1047 = vld [vmem:[%s1 + $0x218] sm:$0xf]
  %v1048 = vld [vmem:[%s1 + $0x21c] sm:$0xf]
  %v1049 = vld [vmem:[%s1 + $0x220] sm:$0xf]
  %v1050 = vld [vmem:[%s1 + $0x224] sm:$0xf]
  %v1051 = vld [vmem:[%s1 + $0x228] sm:$0xf]
  %v1052 = vld [vmem:[%s1 + $0x22c] sm:$0xf]
  %v1053 = vld [vmem:[%s1 + $0x230] sm:$0xf]
  %v1054 = vld [vmem:[%s1 + $0x234] sm:$0xf]
  %v1055 = vld [vmem:[%s1 + $0x238] sm:$0xf]
  %v1056 = vld [vmem:[%s1 + $0x23c] sm:$0xf]
  %v1057 = vld [vmem:[%s1 + $0x240] sm:$0xf]
  %v1058 = vld [vmem:[%s1 + $0x244] sm:$0xf]
  %v1059 = vld [vmem:[%s1 + $0x248] sm:$0xf]
  %v1060 = vld [vmem:[%s1 + $0x24c] sm:$0xf]
  %v1061 = vld [vmem:[%s1 + $0x250] sm:$0xf]
  %v1062 = vld [vmem:[%s1 + $0x254] sm:$0xf]
  %v1063 = vld [vmem:[%s1 + $0x258] sm:$0xf]
  %v1064 = vld [vmem:[%s1 + $0x25c] sm:$0xf]
  %v1065 = vld [vmem:[%s1 + $0x260] sm:$0xf]
  %v1066 = vld [vmem:[%s1 + $0x264] sm:$0xf]
  %v1067 = vld [vmem:[%s1 + $0x268] sm:$0xf]
  %v1068 = vld [vmem:[%s1 + $0x26c] sm:$0xf]
  %v1069 = vld [vmem:[%s1 + $0x270] sm:$0xf]
  %v1070 = vld [vmem:[%s1 + $0x274] sm:$0xf]
  %v1071 = vld [vmem:[%s1 + $0x278] sm:$0xf]
  %v1072 = vld [vmem:[%s1 + $0x27c] sm:$0xf]
  %v1073 = vld [vmem:[%s1 + $0x280] sm:$0xf]
  %v1074 = vld [vmem:[%s1 + $0x284] sm:$0xf]
  %v1075 = vld [vmem:[%s1 + $0x288] sm:$0xf]
  %v1076 = vld [vmem:[%s1 + $0x28c] sm:$0xf]
  %v1077 = vld [vmem:[%s1 + $0x290] sm:$0xf]
  %v1078 = vld [vmem:[%s1 + $0x294] sm:$0xf]
  %v1079 = vld [vmem:[%s1 + $0x298] sm:$0xf]
  %v1080 = vld [vmem:[%s1 + $0x29c] sm:$0xf]
  %v1081 = vld [vmem:[%s1 + $0x2a0] sm:$0xf]
  %v1082 = vld [vmem:[%s1 + $0x2a4] sm:$0xf]
  %v1083 = vld [vmem:[%s1 + $0x2a8] sm:$0xf]
  %v1084 = vld [vmem:[%s1 + $0x2ac] sm:$0xf]
  %v1085 = vld [vmem:[%s1 + $0x2b0] sm:$0xf]
  %v1086 = vld [vmem:[%s1 + $0x2b4] sm:$0xf]
  %v1087 = vld [vmem:[%s1 + $0x2b8] sm:$0xf]
  %v1088 = vld [vmem:[%s1 + $0x2bc] sm:$0xf]
  %v1089 = vld [vmem:[%s1 + $0x2c0] sm:$0xf]
  %v1090 = vld [vmem:[%s1 + $0x2c4] sm:$0xf]
  %v1091 = vld [vmem:[%s1 + $0x2c8] sm:$0xf]
  %v1092 = vld [vmem:[%s1 + $0x2cc] sm:$0xf]
  %v1093 = vld [vmem:[%s1 + $0x2d0] sm:$0xf]
  %v1094 = vld [vmem:[%s1 + $0x2d4] sm:$0xf]
  %v1095 = vld [vmem:[%s1 + $0x2d8] sm:$0xf]
  %v1096 = vld [vmem:[%s1 + $0x2dc] sm:$0xf]
  %v1097 = vld [vmem:[%s1 + $0x2e0] sm:$0xf]
  %v1098 = vld [vmem:[%s1 + $0x2e4] sm:$0xf]
  %v1099 = vld [vmem:[%s1 + $0x2e8] sm:$0xf]
  %v1100 = vld [vmem:[%s1 + $0x2ec] sm:$0xf]
  %v1101 = vld [vmem:[%s1 + $0x2f0] sm:$0xf]
  %v1102 = vld [vmem:[%s1 + $0x2f4] sm:$0xf]
  %v1103 = vld [vmem:[%s1 + $0x2f8] sm:$0xf]
  %v1104 = vld [vmem:[%s1 + $0x2fc] sm:$0xf]
  %v1105 = vld [vmem:[%s1 + $0x300] sm:$0xf]
  %v1106 = vld [vmem:[%s1 + $0x304] sm:$0xf]
  %v1107 = vld [vmem:[%s1 + $0x308] sm:$0xf]
  %v1108 = vld [vmem:[%s1 + $0x30c] sm:$0xf]
  %v1109 = vld [vmem:[%s1 + $0x310] sm:$0xf]
  %v1110 = vld [vmem:[%s1 + $0x314] sm:$0xf]
  %v1111 = vld [vmem:[%s1 + $0x318] sm:$0xf]
  %v1112 = vld [vmem:[%s1 + $0x31c] sm:$0xf]
  %v1113 = vld [vmem:[%s1 + $0x320] sm:$0xf]
  %v1114 = vld [vmem:[%s1 + $0x324] sm:$0xf]
  %v1115 = vld [vmem:[%s1 + $0x328] sm:$0xf]
  %v1116 = vld [vmem:[%s1 + $0x32c] sm:$0xf]
  %v1117 = vld [vmem:[%s1 + $0x330] sm:$0xf]
  %v1118 = vld [vmem:[%s1 + $0x334] sm:$0xf]
  %v1119 = vld [vmem:[%s1 + $0x338] sm:$0xf]
  %v1120 = vld [vmem:[%s1 + $0x33c] sm:$0xf]
  %v1121 = vld [vmem:[%s1 + $0x340] sm:$0xf]
  %v1122 = vld [vmem:[%s1 + $0x344] sm:$0xf]
  %v1123 = vld [vmem:[%s1 + $0x348] sm:$0xf]
  %v1124 = vld [vmem:[%s1 + $0x34c] sm:$0xf]
  %v1125 = vld [vmem:[%s1 + $0x350] sm:$0xf]
  %v1126 = vld [vmem:[%s1 + $0x354] sm:$0xf]
  %v1127 = vld [vmem:[%s1 + $0x358] sm:$0xf]
  %v1128 = vld [vmem:[%s1 + $0x35c] sm:$0xf]
  %v1129 = vld [vmem:[%s1 + $0x360] sm:$0xf]
  %v1130 = vld [vmem:[%s1 + $0x364] sm:$0xf]
  %v1131 = vld [vmem:[%s1 + $0x368] sm:$0xf]
  %v1132 = vld [vmem:[%s1 + $0x36c] sm:$0xf]
  %v1133 = vld [vmem:[%s1 + $0x370] sm:$0xf]
  %v1134 = vld [vmem:[%s1 + $0x374] sm:$0xf]
  %v1135 = vld [vmem:[%s1 + $0x378] sm:$0xf]
  %v1136 = vld [vmem:[%s1 + $0x37c] sm:$0xf]
  %v1137 = vld [vmem:[%s1 + $0x380] sm:$0xf]
  %v1138 = vld [vmem:[%s1 + $0x384] sm:$0xf]
  %v1139 = vld [vmem:[%s1 + $0x388] sm:$0xf]
  %v1140 = vld [vmem:[%s1 + $0x38c] sm:$0xf]
  %v1141 = vld [vmem:[%s1 + $0x390] sm:$0xf]
  %v1142 = vld [vmem:[%s1 + $0x394] sm:$0xf]
  %v1143 = vld [vmem:[%s1 + $0x398] sm:$0xf]
  %v1144 = vld [vmem:[%s1 + $0x39c] sm:$0xf]
  %v1145 = vld [vmem:[%s1 + $0x3a0] sm:$0xf]
  %v1146 = vld [vmem:[%s1 + $0x3a4] sm:$0xf]
  %v1147 = vld [vmem:[%s1 + $0x3a8] sm:$0xf]
  %v1148 = vld [vmem:[%s1 + $0x3ac] sm:$0xf]
  %v1149 = vld [vmem:[%s1 + $0x3b0] sm:$0xf]
  %v1150 = vld [vmem:[%s1 + $0x3b4] sm:$0xf]
  %v1151 = vld [vmem:[%s1 + $0x3b8] sm:$0xf]
  %v1152 = vld [vmem:[%s1 + $0x3bc] sm:$0xf]
  %v1153 = vld [vmem:[%s1 + $0x3c0] sm:$0xf]
  %v1154 = vld [vmem:[%s1 + $0x3c4] sm:$0xf]
  %v1155 = vld [vmem:[%s1 + $0x3c8] sm:$0xf]
  %v1156 = vld [vmem:[%s1 + $0x3cc] sm:$0xf]
  %v1157 = vld [vmem:[%s1 + $0x3d0] sm:$0xf]
  %v1158 = vld [vmem:[%s1 + $0x3d4] sm:$0xf]
  %v1159 = vld [vmem:[%s1 + $0x3d8] sm:$0xf]
  %v1160 = vld [vmem:[%s1 + $0x3dc] sm:$0xf]
  %v1161 = vld [vmem:[%s1 + $0x3e0] sm:$0xf]
  %v1162 = vld [vmem:[%s1 + $0x3e4] sm:$0xf]
  %v1163 = vld [vmem:[%s1 + $0x3e8] sm:$0xf]
  %v1164 = vld [vmem:[%s1 + $0x3ec] sm:$0xf]
  %v1165 = vld [vmem:[%s1 + $0x3f0] sm:$0xf]
  %v1166 = vld [vmem:[%s1 + $0x3f4] sm:$0xf]
  %v1167 = vld [vmem:[%s1 + $0x3f8] sm:$0xf]
  %v1168 = vld [vmem:[%s1 + $0x3fc] sm:$0xf]
  %v1169 = vld [vmem:[%s1 + $0x400] sm:$0xf]
  %v1170 = vld [vmem:[%s1 + $0x404] sm:$0xf]
  %v1171 = vld [vmem:[%s1 + $0x408] sm:$0xf]
  %v1172 = vld [vmem:[%s1 + $0x40c] sm:$0xf]
  %v1173 = vld [vmem:[%s1 + $0x410] sm:$0xf]
  %v1174 = vld [vmem:[%s1 + $0x414] sm:$0xf]
  %v1175 = vld [vmem:[%s1 + $0x418] sm:$0xf]
  %v1176 = vld [vmem:[%s1 + $0x41c] sm:$0xf]
  %v1177 = vld [vmem:[%s1 + $0x420] sm:$0xf]
  %v1178 = vld [vmem:[%s1 + $0x424] sm:$0xf]
  %v1179 = vld [vmem:[%s1 + $0x428] sm:$0xf]
  %v1180 = vld [vmem:[%s1 + $0x42c] sm:$0xf]
  %v1181 = vld [vmem:[%s1 + $0x430] sm:$0xf]
  %v1182 = vld [vmem:[%s1 + $0x434] sm:$0xf]
  %v1183 = vld [vmem:[%s1 + $0x438] sm:$0xf]
  %v1184 = vld [vmem:[%s1 + $0x43c] sm:$0xf]
  %v1185 = vld [vmem:[%s1 + $0x440] sm:$0xf]
  %v1186 = vld [vmem:[%s1 + $0x444] sm:$0xf]
  %v1187 = vld [vmem:[%s1 + $0x448] sm:$0xf]
  %v1188 = vld [vmem:[%s1 + $0x44c] sm:$0xf]
  %v1189 = vld [vmem:[%s1 + $0x450] sm:$0xf]
  %v1190 = vld [vmem:[%s1 + $0x454] sm:$0xf]
  %v1191 = vld [vmem:[%s1 + $0x458] sm:$0xf]
  %v1192 = vld [vmem:[%s1 + $0x45c] sm:$0xf]
  %v1193 = vld [vmem:[%s1 + $0x460] sm:$0xf]
  %v1194 = vld [vmem:[%s1 + $0x464] sm:$0xf]
  %v1195 = vld [vmem:[%s1 + $0x468] sm:$0xf]
  %v1196 = vld [vmem:[%s1 + $0x46c] sm:$0xf]
  %v1197 = vld [vmem:[%s1 + $0x470] sm:$0xf]
  %v1198 = vld [vmem:[%s1 + $0x474] sm:$0xf]
  %v1199 = vld [vmem:[%s1 + $0x478] sm:$0xf]
  %v1200 = vld [vmem:[%s1 + $0x47c] sm:$0xf]
  %v1201 = vld [vmem:[%s1 + $0x480] sm:$0xf]
  %v1202 = vld [vmem:[%s1 + $0x484] sm:$0xf]
  %v1203 = vld [vmem:[%s1 + $0x488] sm:$0xf]
  %v1204 = vld [vmem:[%s1 + $0x48c] sm:$0xf]
  %v1205 = vld [vmem:[%s1 + $0x490] sm:$0xf]
  %v1206 = vld [vmem:[%s1 + $0x494] sm:$0xf]
  %v1207 = vld [vmem:[%s1 + $0x498] sm:$0xf]
  %v1208 = vld [vmem:[%s1 + $0x49c] sm:$0xf]
  %v1209 = vld [vmem:[%s1 + $0x4a0] sm:$0xf]
  %v1210 = vld [vmem:[%s1 + $0x4a4] sm:$0xf]
  %v1211 = vld [vmem:[%s1 + $0x4a8] sm:$0xf]
  %v1212 = vld [vmem:[%s1 + $0x4ac] sm:$0xf]
  %v1213 = vld [vmem:[%s1 + $0x4b0] sm:$0xf]
  %v1214 = vld [vmem:[%s1 + $0x4b4] sm:$0xf]
  %v1215 = vld [vmem:[%s1 + $0x4b8] sm:$0xf]
  %v1216 = vld [vmem:[%s1 + $0x4bc] sm:$0xf]
  %v1217 = vld [vmem:[%s1 + $0x4c0] sm:$0xf]
  %v1218 = vld [vmem:[%s1 + $0x4c4] sm:$0xf]
  %v1219 = vld [vmem:[%s1 + $0x4c8] sm:$0xf]
  %v1220 = vld [vmem:[%s1 + $0x4cc] sm:$0xf]
  %v1221 = vld [vmem:[%s1 + $0x4d0] sm:$0xf]
  %v1222 = vld [vmem:[%s1 + $0x4d4] sm:$0xf]
  %v1223 = vld [vmem:[%s1 + $0x4d8] sm:$0xf]
  %v1224 = vld [vmem:[%s1 + $0x4dc] sm:$0xf]
  %v1225 = vld [vmem:[%s1 + $0x4e0] sm:$0xf]
  %v1226 = vld [vmem:[%s1 + $0x4e4] sm:$0xf]
  %v1227 = vld [vmem:[%s1 + $0x4e8] sm:$0xf]
  %v1228 = vld [vmem:[%s1 + $0x4ec] sm:$0xf]
  %v1229 = vld [vmem:[%s1 + $0x4f0] sm:$0xf]
  %v1230 = vld [vmem:[%s1 + $0x4f4] sm:$0xf]
  %v1231 = vld [vmem:[%s1 + $0x4f8] sm:$0xf]
  %v1232 = vld [vmem:[%s1 + $0x4fc] sm:$0xf]
  %v1233 = vld [vmem:[%s1 + $0x500] sm:$0xf]
  %v1234 = vld [vmem:[%s1 + $0x504] sm:$0xf]
  %v1235 = vld [vmem:[%s1 + $0x508] sm:$0xf]
  %v1236 = vld [vmem:[%s1 + $0x50c] sm:$0xf]
  %v1237 = vld [vmem:[%s1 + $0x510] sm:$0xf]
  %v1238 = vld [vmem:[%s1 + $0x514] sm:$0xf]
  %v1239 = vld [vmem:[%s1 + $0x518] sm:$0xf]
  %v1240 = vld [vmem:[%s1 + $0x51c] sm:$0xf]
  %v1241 = vld [vmem:[%s1 + $0x520] sm:$0xf]
  %v1242 = vld [vmem:[%s1 + $0x524] sm:$0xf]
  %v1243 = vld [vmem:[%s1 + $0x528] sm:$0xf]
  %v1244 = vld [vmem:[%s1 + $0x52c] sm:$0xf]
  %v1245 = vld [vmem:[%s1 + $0x530] sm:$0xf]
  %v1246 = vld [vmem:[%s1 + $0x534] sm:$0xf]
  %v1247 = vld [vmem:[%s1 + $0x538] sm:$0xf]
  %v1248 = vld [vmem:[%s1 + $0x53c] sm:$0xf]
  %v1249 = vld [vmem:[%s1 + $0x540] sm:$0xf]
  %v1250 = vld [vmem:[%s1 + $0x544] sm:$0xf]
  %v1251 = vld [vmem:[%s1 + $0x548] sm:$0xf]
  %v1252 = vld [vmem:[%s1 + $0x54c] sm:$0xf]
  %v1253 = vld [vmem:[%s1 + $0x550] sm:$0xf]
  %v1254 = vld [vmem:[%s1 + $0x554] sm:$0xf]
  %v1255 = vld [vmem:[%s1 + $0x558] sm:$0xf]
  %v1256 = vld [vmem:[%s1 + $0x55c] sm:$0xf]
  %v1257 = vld [vmem:[%s1 + $0x560] sm:$0xf]
  %v1258 = vld [vmem:[%s1 + $0x564] sm:$0xf]
  %v1259 = vld [vmem:[%s1 + $0x568] sm:$0xf]
  %v1260 = vld [vmem:[%s1 + $0x56c] sm:$0xf]
  %v1261 = vld [vmem:[%s1 + $0x570] sm:$0xf]
  %v1262 = vld [vmem:[%s1 + $0x574] sm:$0xf]
  %v1263 = vld [vmem:[%s1 + $0x578] sm:$0xf]
  %v1264 = vld [vmem:[%s1 + $0x57c] sm:$0xf]
  %v1265 = vld [vmem:[%s1 + $0x580] sm:$0xf]
  %v1266 = vld [vmem:[%s1 + $0x584] sm:$0xf]
  %v1267 = vld [vmem:[%s1 + $0x588] sm:$0xf]
  %v1268 = vld [vmem:[%s1 + $0x58c] sm:$0xf]
  %v1269 = vld [vmem:[%s1 + $0x590] sm:$0xf]
  %v1270 = vld [vmem:[%s1 + $0x594] sm:$0xf]
  %v1271 = vld [vmem:[%s1 + $0x598] sm:$0xf]
  %v1272 = vld [vmem:[%s1 + $0x59c] sm:$0xf]
  %v1273 = vld [vmem:[%s1 + $0x5a0] sm:$0xf]
  %v1274 = vld [vmem:[%s1 + $0x5a4] sm:$0xf]
  %v1275 = vld [vmem:[%s1 + $0x5a8] sm:$0xf]
  %v1276 = vld [vmem:[%s1 + $0x5ac] sm:$0xf]
  %v1277 = vld [vmem:[%s1 + $0x5b0] sm:$0xf]
  %v1278 = vld [vmem:[%s1 + $0x5b4] sm:$0xf]
  %v1279 = vld [vmem:[%s1 + $0x5b8] sm:$0xf]
  %v1280 = vld [vmem:[%s1 + $0x5bc] sm:$0xf]
  %v1281 = vld [vmem:[%s1 + $0x5c0] sm:$0xf]
  %v1282 = vld [vmem:[%s1 + $0x5c4] sm:$0xf]
  %v1283 = vld [vmem:[%s1 + $0x5c8] sm:$0xf]
  %v1284 = vld [vmem:[%s1 + $0x5cc] sm:$0xf]
  %v1285 = vld [vmem:[%s1 + $0x5d0] sm:$0xf]
  %v1286 = vld [vmem:[%s1 + $0x5d4] sm:$0xf]
  %v1287 = vld [vmem:[%s1 + $0x5d8] sm:$0xf]
  %v1288 = vld [vmem:[%s1 + $0x5dc] sm:$0xf]
  %v1289 = vld [vmem:[%s1 + $0x5e0] sm:$0xf]
  %v1290 = vld [vmem:[%s1 + $0x5e4] sm:$0xf]
  %v1291 = vld [vmem:[%s1 + $0x5e8] sm:$0xf]
  %v1292 = vld [vmem:[%s1 + $0x5ec] sm:$0xf]
  %v1293 = vld [vmem:[%s1 + $0x5f0] sm:$0xf]
  %v1294 = vld [vmem:[%s1 + $0x5f4] sm:$0xf]
  %v1295 = vld [vmem:[%s1 + $0x5f8] sm:$0xf]
  %v1296 = vld [vmem:[%s1 + $0x5fc] sm:$0xf]
  %v1297 = vld [vmem:[%s1 + $0x600] sm:$0xf]
  %v1298 = vld [vmem:[%s1 + $0x604] sm:$0xf]
  %v1299 = vld [vmem:[%s1 + $0x608] sm:$0xf]
  %v1300 = vld [vmem:[%s1 + $0x60c] sm:$0xf]
  %v1301 = vld [vmem:[%s1 + $0x610] sm:$0xf]
  %v1302 = vld [vmem:[%s1 + $0x614] sm:$0xf]
  %v1303 = vld [vmem:[%s1 + $0x618] sm:$0xf]
  %v1304 = vld [vmem:[%s1 + $0x61c] sm:$0xf]
  %v1305 = vld [vmem:[%s1 + $0x620] sm:$0xf]
  %v1306 = vld [vmem:[%s1 + $0x624] sm:$0xf]
  %v1307 = vld [vmem:[%s1 + $0x628] sm:$0xf]
  %v1308 = vld [vmem:[%s1 + $0x62c] sm:$0xf]
  %v1309 = vld [vmem:[%s1 + $0x630] sm:$0xf]
  %v1310 = vld [vmem:[%s1 + $0x634] sm:$0xf]
  %v1311 = vld [vmem:[%s1 + $0x638] sm:$0xf]
  %v1312 = vld [vmem:[%s1 + $0x63c] sm:$0xf]
  %v1313 = vld [vmem:[%s1 + $0x640] sm:$0xf]
  %v1314 = vld [vmem:[%s1 + $0x644] sm:$0xf]
  %v1315 = vld [vmem:[%s1 + $0x648] sm:$0xf]
  %v1316 = vld [vmem:[%s1 + $0x64c] sm:$0xf]
  %v1317 = vld [vmem:[%s1 + $0x650] sm:$0xf]
  %v1318 = vld [vmem:[%s1 + $0x654] sm:$0xf]
  %v1319 = vld [vmem:[%s1 + $0x658] sm:$0xf]
  %v1320 = vld [vmem:[%s1 + $0x65c] sm:$0xf]
  %v1321 = vld [vmem:[%s1 + $0x660] sm:$0xf]
  %v1322 = vld [vmem:[%s1 + $0x664] sm:$0xf]
  %v1323 = vld [vmem:[%s1 + $0x668] sm:$0xf]
  %v1324 = vld [vmem:[%s1 + $0x66c] sm:$0xf]
  %v1325 = vld [vmem:[%s1 + $0x670] sm:$0xf]
  %v1326 = vld [vmem:[%s1 + $0x674] sm:$0xf]
  %v1327 = vld [vmem:[%s1 + $0x678] sm:$0xf]
  %v1328 = vld [vmem:[%s1 + $0x67c] sm:$0xf]
  %v1329 = vld [vmem:[%s1 + $0x680] sm:$0xf]
  %v1330 = vld [vmem:[%s1 + $0x684] sm:$0xf]
  %v1331 = vld [vmem:[%s1 + $0x688] sm:$0xf]
  %v1332 = vld [vmem:[%s1 + $0x68c] sm:$0xf]
  %v1333 = vld [vmem:[%s1 + $0x690] sm:$0xf]
  %v1334 = vld [vmem:[%s1 + $0x694] sm:$0xf]
  %v1335 = vld [vmem:[%s1 + $0x698] sm:$0xf]
  %v1336 = vld [vmem:[%s1 + $0x69c] sm:$0xf]
  %v1337 = vld [vmem:[%s1 + $0x6a0] sm:$0xf]
  %v1338 = vld [vmem:[%s1 + $0x6a4] sm:$0xf]
  %v1339 = vld [vmem:[%s1 + $0x6a8] sm:$0xf]
  %v1340 = vld [vmem:[%s1 + $0x6ac] sm:$0xf]
  %v1341 = vld [vmem:[%s1 + $0x6b0] sm:$0xf]
  %v1342 = vld [vmem:[%s1 + $0x6b4] sm:$0xf]
  %v1343 = vld [vmem:[%s1 + $0x6b8] sm:$0xf]
  %v1344 = vld [vmem:[%s1 + $0x6bc] sm:$0xf]
  %v1345 = vld [vmem:[%s1 + $0x6c0] sm:$0xf]
  %v1346 = vld [vmem:[%s1 + $0x6c4] sm:$0xf]
  %v1347 = vld [vmem:[%s1 + $0x6c8] sm:$0xf]
  %v1348 = vld [vmem:[%s1 + $0x6cc] sm:$0xf]
  %v1349 = vld [vmem:[%s1 + $0x6d0] sm:$0xf]
  %v1350 = vld [vmem:[%s1 + $0x6d4] sm:$0xf]
  %v1351 = vld [vmem:[%s1 + $0x6d8] sm:$0xf]
  %v1352 = vld [vmem:[%s1 + $0x6dc] sm:$0xf]
  %v1353 = vld [vmem:[%s1 + $0x6e0] sm:$0xf]
  %v1354 = vld [vmem:[%s1 + $0x6e4] sm:$0xf]
  %v1355 = vld [vmem:[%s1 + $0x6e8] sm:$0xf]
  %v1356 = vld [vmem:[%s1 + $0x6ec] sm:$0xf]
  %v1357 = vld [vmem:[%s1 + $0x6f0] sm:$0xf]
  %v1358 = vld [vmem:[%s1 + $0x6f4] sm:$0xf]
  %v1359 = vld [vmem:[%s1 + $0x6f8] sm:$0xf]
  %v1360 = vld [vmem:[%s1 + $0x6fc] sm:$0xf]
  %v1361 = vld [vmem:[%s1 + $0x700] sm:$0xf]
  %v1362 = vld [vmem:[%s1 + $0x704] sm:$0xf]
  %v1363 = vld [vmem:[%s1 + $0x708] sm:$0xf]
  %v1364 = vld [vmem:[%s1 + $0x70c] sm:$0xf]
  %v1365 = vld [vmem:[%s1 + $0x710] sm:$0xf]
  %v1366 = vld [vmem:[%s1 + $0x714] sm:$0xf]
  %v1367 = vld [vmem:[%s1 + $0x718] sm:$0xf]
  %v1368 = vld [vmem:[%s1 + $0x71c] sm:$0xf]
  %v1369 = vld [vmem:[%s1 + $0x720] sm:$0xf]
  %v1370 = vld [vmem:[%s1 + $0x724] sm:$0xf]
  %v1371 = vld [vmem:[%s1 + $0x728] sm:$0xf]
  %v1372 = vld [vmem:[%s1 + $0x72c] sm:$0xf]
  %v1373 = vld [vmem:[%s1 + $0x730] sm:$0xf]
  %v1374 = vld [vmem:[%s1 + $0x734] sm:$0xf]
  %v1375 = vld [vmem:[%s1 + $0x738] sm:$0xf]
  %v1376 = vld [vmem:[%s1 + $0x73c] sm:$0xf]
  %v1377 = vld [vmem:[%s1 + $0x740] sm:$0xf]
  %v1378 = vld [vmem:[%s1 + $0x744] sm:$0xf]
  %v1379 = vld [vmem:[%s1 + $0x748] sm:$0xf]
  %v1380 = vld [vmem:[%s1 + $0x74c] sm:$0xf]
  %v1381 = vld [vmem:[%s1 + $0x750] sm:$0xf]
  %v1382 = vld [vmem:[%s1 + $0x754] sm:$0xf]
  %v1383 = vld [vmem:[%s1 + $0x758] sm:$0xf]
  %v1384 = vld [vmem:[%s1 + $0x75c] sm:$0xf]
  %v1385 = vld [vmem:[%s1 + $0x760] sm:$0xf]
  %v1386 = vld [vmem:[%s1 + $0x764] sm:$0xf]
  %v1387 = vld [vmem:[%s1 + $0x768] sm:$0xf]
  %v1388 = vld [vmem:[%s1 + $0x76c] sm:$0xf]
  %v1389 = vld [vmem:[%s1 + $0x770] sm:$0xf]
  %v1390 = vld [vmem:[%s1 + $0x774] sm:$0xf]
  %v1391 = vld [vmem:[%s1 + $0x778] sm:$0xf]
  %v1392 = vld [vmem:[%s1 + $0x77c] sm:$0xf]
  %v1393 = vld [vmem:[%s1 + $0x780] sm:$0xf]
  %v1394 = vld [vmem:[%s1 + $0x784] sm:$0xf]
  %v1395 = vld [vmem:[%s1 + $0x788] sm:$0xf]
  %v1396 = vld [vmem:[%s1 + $0x78c] sm:$0xf]
  %v1397 = vld [vmem:[%s1 + $0x790] sm:$0xf]
  %v1398 = vld [vmem:[%s1 + $0x794] sm:$0xf]
  %v1399 = vld [vmem:[%s1 + $0x798] sm:$0xf]
  %v1400 = vld [vmem:[%s1 + $0x79c] sm:$0xf]
  %v1401 = vld [vmem:[%s1 + $0x7a0] sm:$0xf]
  %v1402 = vld [vmem:[%s1 + $0x7a4] sm:$0xf]
  %v1403 = vld [vmem:[%s1 + $0x7a8] sm:$0xf]
  %v1404 = vld [vmem:[%s1 + $0x7ac] sm:$0xf]
  %v1405 = vld [vmem:[%s1 + $0x7b0] sm:$0xf]
  %v1406 = vld [vmem:[%s1 + $0x7b4] sm:$0xf]
  %v1407 = vld [vmem:[%s1 + $0x7b8] sm:$0xf]
  %v1408 = vld [vmem:[%s1 + $0x7bc] sm:$0xf]
  %v1409 = vld [vmem:[%s1 + $0x7c0] sm:$0xf]
  %v1410 = vld [vmem:[%s1 + $0x7c4] sm:$0xf]
  %v1411 = vld [vmem:[%s1 + $0x7c8] sm:$0xf]
  %v1412 = vld [vmem:[%s1 + $0x7cc] sm:$0xf]
  %v1413 = vld [vmem:[%s1 + $0x7d0] sm:$0xf]
  %v1414 = vld [vmem:[%s1 + $0x7d4] sm:$0xf]
  %v1415 = vld [vmem:[%s1 + $0x7d8] sm:$0xf]
  %v1416 = vld [vmem:[%s1 + $0x7dc] sm:$0xf]
  %v1417 = vld [vmem:[%s1 + $0x7e0] sm:$0xf]
  %v1418 = vld [vmem:[%s1 + $0x7e4] sm:$0xf]
  %v1419 = vld [vmem:[%s1 + $0x7e8] sm:$0xf]
  %v1420 = vld [vmem:[%s1 + $0x7ec] sm:$0xf]
  %v1421 = vld [vmem:[%s1 + $0x7f0] sm:$0xf]
  %v1422 = vld [vmem:[%s1 + $0x7f4] sm:$0xf]
  %v1423 = vld [vmem:[%s1 + $0x7f8] sm:$0xf]
  %v1424 = vld [vmem:[%s1 + $0x7fc] sm:$0xf]
  %v1425 = vunpack.c.l.bf16 %v913
  %v1426 = vunpack.c.l.bf16 %v914
  %v1427 = vunpack.c.l.bf16 %v915
  %v1428 = vunpack.c.l.bf16 %v916
  %v1429 = vunpack.c.l.bf16 %v917
  %v1430 = vunpack.c.l.bf16 %v918
  %v1431 = vunpack.c.l.bf16 %v919
  %v1432 = vunpack.c.l.bf16 %v920
  %v1433 = vunpack.c.l.bf16 %v921
  %v1434 = vunpack.c.l.bf16 %v922
  %v1435 = vunpack.c.l.bf16 %v923
  %v1436 = vunpack.c.l.bf16 %v924
  %v1437 = vunpack.c.l.bf16 %v925
  %v1438 = vunpack.c.l.bf16 %v926
  %v1439 = vunpack.c.l.bf16 %v927
  %v1440 = vunpack.c.l.bf16 %v928
  %v1441 = vunpack.c.l.bf16 %v929
  %v1442 = vunpack.c.l.bf16 %v930
  %v1443 = vunpack.c.l.bf16 %v931
  %v1444 = vunpack.c.l.bf16 %v932
  %v1445 = vunpack.c.l.bf16 %v933
  %v1446 = vunpack.c.l.bf16 %v934
  %v1447 = vunpack.c.l.bf16 %v935
  %v1448 = vunpack.c.l.bf16 %v936
  %v1449 = vunpack.c.l.bf16 %v937
  %v1450 = vunpack.c.l.bf16 %v938
  %v1451 = vunpack.c.l.bf16 %v939
  %v1452 = vunpack.c.l.bf16 %v940
  %v1453 = vunpack.c.l.bf16 %v941
  %v1454 = vunpack.c.l.bf16 %v942
  %v1455 = vunpack.c.l.bf16 %v943
  %v1456 = vunpack.c.l.bf16 %v944
  %v1457 = vunpack.c.l.bf16 %v945
  %v1458 = vunpack.c.l.bf16 %v946
  %v1459 = vunpack.c.l.bf16 %v947
  %v1460 = vunpack.c.l.bf16 %v948
  %v1461 = vunpack.c.l.bf16 %v949
  %v1462 = vunpack.c.l.bf16 %v950
  %v1463 = vunpack.c.l.bf16 %v951
  %v1464 = vunpack.c.l.bf16 %v952
  %v1465 = vunpack.c.l.bf16 %v953
  %v1466 = vunpack.c.l.bf16 %v954
  %v1467 = vunpack.c.l.bf16 %v955
  %v1468 = vunpack.c.l.bf16 %v956
  %v1469 = vunpack.c.l.bf16 %v957
  %v1470 = vunpack.c.l.bf16 %v958
  %v1471 = vunpack.c.l.bf16 %v959
  %v1472 = vunpack.c.l.bf16 %v960
  %v1473 = vunpack.c.l.bf16 %v961
  %v1474 = vunpack.c.l.bf16 %v962
  %v1475 = vunpack.c.l.bf16 %v963
  %v1476 = vunpack.c.l.bf16 %v964
  %v1477 = vunpack.c.l.bf16 %v965
  %v1478 = vunpack.c.l.bf16 %v966
  %v1479 = vunpack.c.l.bf16 %v967
  %v1480 = vunpack.c.l.bf16 %v968
  %v1481 = vunpack.c.l.bf16 %v969
  %v1482 = vunpack.c.l.bf16 %v970
  %v1483 = vunpack.c.l.bf16 %v971
  %v1484 = vunpack.c.l.bf16 %v972
  %v1485 = vunpack.c.l.bf16 %v973
  %v1486 = vunpack.c.l.bf16 %v974
  %v1487 = vunpack.c.l.bf16 %v975
  %v1488 = vunpack.c.l.bf16 %v976
  %v1489 = vunpack.c.l.bf16 %v977
  %v1490 = vunpack.c.l.bf16 %v978
  %v1491 = vunpack.c.l.bf16 %v979
  %v1492 = vunpack.c.l.bf16 %v980
  %v1493 = vunpack.c.l.bf16 %v981
  %v1494 = vunpack.c.l.bf16 %v982
  %v1495 = vunpack.c.l.bf16 %v983
  %v1496 = vunpack.c.l.bf16 %v984
  %v1497 = vunpack.c.l.bf16 %v985
  %v1498 = vunpack.c.l.bf16 %v986
  %v1499 = vunpack.c.l.bf16 %v987
  %v1500 = vunpack.c.l.bf16 %v988
  %v1501 = vunpack.c.l.bf16 %v989
  %v1502 = vunpack.c.l.bf16 %v990
  %v1503 = vunpack.c.l.bf16 %v991
  %v1504 = vunpack.c.l.bf16 %v992
  %v1505 = vunpack.c.l.bf16 %v993
  %v1506 = vunpack.c.l.bf16 %v994
  %v1507 = vunpack.c.l.bf16 %v995
  %v1508 = vunpack.c.l.bf16 %v996
  %v1509 = vunpack.c.l.bf16 %v997
  %v1510 = vunpack.c.l.bf16 %v998
  %v1511 = vunpack.c.l.bf16 %v999
  %v1512 = vunpack.c.l.bf16 %v1000
  %v1513 = vunpack.c.l.bf16 %v1001
  %v1514 = vunpack.c.l.bf16 %v1002
  %v1515 = vunpack.c.l.bf16 %v1003
  %v1516 = vunpack.c.l.bf16 %v1004
  %v1517 = vunpack.c.l.bf16 %v1005
  %v1518 = vunpack.c.l.bf16 %v1006
  %v1519 = vunpack.c.l.bf16 %v1007
  %v1520 = vunpack.c.l.bf16 %v1008
  %v1521 = vunpack.c.l.bf16 %v1009
  %v1522 = vunpack.c.l.bf16 %v1010
  %v1523 = vunpack.c.l.bf16 %v1011
  %v1524 = vunpack.c.l.bf16 %v1012
  %v1525 = vunpack.c.l.bf16 %v1013
  %v1526 = vunpack.c.l.bf16 %v1014
  %v1527 = vunpack.c.l.bf16 %v1015
  %v1528 = vunpack.c.l.bf16 %v1016
  %v1529 = vunpack.c.l.bf16 %v1017
  %v1530 = vunpack.c.l.bf16 %v1018
  %v1531 = vunpack.c.l.bf16 %v1019
  %v1532 = vunpack.c.l.bf16 %v1020
  %v1533 = vunpack.c.l.bf16 %v1021
  %v1534 = vunpack.c.l.bf16 %v1022
  %v1535 = vunpack.c.l.bf16 %v1023
  %v1536 = vunpack.c.l.bf16 %v1024
  %v1537 = vunpack.c.l.bf16 %v1025
  %v1538 = vunpack.c.l.bf16 %v1026
  %v1539 = vunpack.c.l.bf16 %v1027
  %v1540 = vunpack.c.l.bf16 %v1028
  %v1541 = vunpack.c.l.bf16 %v1029
  %v1542 = vunpack.c.l.bf16 %v1030
  %v1543 = vunpack.c.l.bf16 %v1031
  %v1544 = vunpack.c.l.bf16 %v1032
  %v1545 = vunpack.c.l.bf16 %v1033
  %v1546 = vunpack.c.l.bf16 %v1034
  %v1547 = vunpack.c.l.bf16 %v1035
  %v1548 = vunpack.c.l.bf16 %v1036
  %v1549 = vunpack.c.l.bf16 %v1037
  %v1550 = vunpack.c.l.bf16 %v1038
  %v1551 = vunpack.c.l.bf16 %v1039
  %v1552 = vunpack.c.l.bf16 %v1040
  %v1553 = vunpack.c.l.bf16 %v1041
  %v1554 = vunpack.c.l.bf16 %v1042
  %v1555 = vunpack.c.l.bf16 %v1043
  %v1556 = vunpack.c.l.bf16 %v1044
  %v1557 = vunpack.c.l.bf16 %v1045
  %v1558 = vunpack.c.l.bf16 %v1046
  %v1559 = vunpack.c.l.bf16 %v1047
  %v1560 = vunpack.c.l.bf16 %v1048
  %v1561 = vunpack.c.l.bf16 %v1049
  %v1562 = vunpack.c.l.bf16 %v1050
  %v1563 = vunpack.c.l.bf16 %v1051
  %v1564 = vunpack.c.l.bf16 %v1052
  %v1565 = vunpack.c.l.bf16 %v1053
  %v1566 = vunpack.c.l.bf16 %v1054
  %v1567 = vunpack.c.l.bf16 %v1055
  %v1568 = vunpack.c.l.bf16 %v1056
  %v1569 = vunpack.c.l.bf16 %v1057
  %v1570 = vunpack.c.l.bf16 %v1058
  %v1571 = vunpack.c.l.bf16 %v1059
  %v1572 = vunpack.c.l.bf16 %v1060
  %v1573 = vunpack.c.l.bf16 %v1061
  %v1574 = vunpack.c.l.bf16 %v1062
  %v1575 = vunpack.c.l.bf16 %v1063
  %v1576 = vunpack.c.l.bf16 %v1064
  %v1577 = vunpack.c.l.bf16 %v1065
  %v1578 = vunpack.c.l.bf16 %v1066
  %v1579 = vunpack.c.l.bf16 %v1067
  %v1580 = vunpack.c.l.bf16 %v1068
  %v1581 = vunpack.c.l.bf16 %v1069
  %v1582 = vunpack.c.l.bf16 %v1070
  %v1583 = vunpack.c.l.bf16 %v1071
  %v1584 = vunpack.c.l.bf16 %v1072
  %v1585 = vunpack.c.l.bf16 %v1073
  %v1586 = vunpack.c.l.bf16 %v1074
  %v1587 = vunpack.c.l.bf16 %v1075
  %v1588 = vunpack.c.l.bf16 %v1076
  %v1589 = vunpack.c.l.bf16 %v1077
  %v1590 = vunpack.c.l.bf16 %v1078
  %v1591 = vunpack.c.l.bf16 %v1079
  %v1592 = vunpack.c.l.bf16 %v1080
  %v1593 = vunpack.c.l.bf16 %v1081
  %v1594 = vunpack.c.l.bf16 %v1082
  %v1595 = vunpack.c.l.bf16 %v1083
  %v1596 = vunpack.c.l.bf16 %v1084
  %v1597 = vunpack.c.l.bf16 %v1085
  %v1598 = vunpack.c.l.bf16 %v1086
  %v1599 = vunpack.c.l.bf16 %v1087
  %v1600 = vunpack.c.l.bf16 %v1088
  %v1601 = vunpack.c.l.bf16 %v1089
  %v1602 = vunpack.c.l.bf16 %v1090
  %v1603 = vunpack.c.l.bf16 %v1091
  %v1604 = vunpack.c.l.bf16 %v1092
  %v1605 = vunpack.c.l.bf16 %v1093
  %v1606 = vunpack.c.l.bf16 %v1094
  %v1607 = vunpack.c.l.bf16 %v1095
  %v1608 = vunpack.c.l.bf16 %v1096
  %v1609 = vunpack.c.l.bf16 %v1097
  %v1610 = vunpack.c.l.bf16 %v1098
  %v1611 = vunpack.c.l.bf16 %v1099
  %v1612 = vunpack.c.l.bf16 %v1100
  %v1613 = vunpack.c.l.bf16 %v1101
  %v1614 = vunpack.c.l.bf16 %v1102
  %v1615 = vunpack.c.l.bf16 %v1103
  %v1616 = vunpack.c.l.bf16 %v1104
  %v1617 = vunpack.c.l.bf16 %v1105
  %v1618 = vunpack.c.l.bf16 %v1106
  %v1619 = vunpack.c.l.bf16 %v1107
  %v1620 = vunpack.c.l.bf16 %v1108
  %v1621 = vunpack.c.l.bf16 %v1109
  %v1622 = vunpack.c.l.bf16 %v1110
  %v1623 = vunpack.c.l.bf16 %v1111
  %v1624 = vunpack.c.l.bf16 %v1112
  %v1625 = vunpack.c.l.bf16 %v1113
  %v1626 = vunpack.c.l.bf16 %v1114
  %v1627 = vunpack.c.l.bf16 %v1115
  %v1628 = vunpack.c.l.bf16 %v1116
  %v1629 = vunpack.c.l.bf16 %v1117
  %v1630 = vunpack.c.l.bf16 %v1118
  %v1631 = vunpack.c.l.bf16 %v1119
  %v1632 = vunpack.c.l.bf16 %v1120
  %v1633 = vunpack.c.l.bf16 %v1121
  %v1634 = vunpack.c.l.bf16 %v1122
  %v1635 = vunpack.c.l.bf16 %v1123
  %v1636 = vunpack.c.l.bf16 %v1124
  %v1637 = vunpack.c.l.bf16 %v1125
  %v1638 = vunpack.c.l.bf16 %v1126
  %v1639 = vunpack.c.l.bf16 %v1127
  %v1640 = vunpack.c.l.bf16 %v1128
  %v1641 = vunpack.c.l.bf16 %v1129
  %v1642 = vunpack.c.l.bf16 %v1130
  %v1643 = vunpack.c.l.bf16 %v1131
  %v1644 = vunpack.c.l.bf16 %v1132
  %v1645 = vunpack.c.l.bf16 %v1133
  %v1646 = vunpack.c.l.bf16 %v1134
  %v1647 = vunpack.c.l.bf16 %v1135
  %v1648 = vunpack.c.l.bf16 %v1136
  %v1649 = vunpack.c.l.bf16 %v1137
  %v1650 = vunpack.c.l.bf16 %v1138
  %v1651 = vunpack.c.l.bf16 %v1139
  %v1652 = vunpack.c.l.bf16 %v1140
  %v1653 = vunpack.c.l.bf16 %v1141
  %v1654 = vunpack.c.l.bf16 %v1142
  %v1655 = vunpack.c.l.bf16 %v1143
  %v1656 = vunpack.c.l.bf16 %v1144
  %v1657 = vunpack.c.l.bf16 %v1145
  %v1658 = vunpack.c.l.bf16 %v1146
  %v1659 = vunpack.c.l.bf16 %v1147
  %v1660 = vunpack.c.l.bf16 %v1148
  %v1661 = vunpack.c.l.bf16 %v1149
  %v1662 = vunpack.c.l.bf16 %v1150
  %v1663 = vunpack.c.l.bf16 %v1151
  %v1664 = vunpack.c.l.bf16 %v1152
  %v1665 = vunpack.c.l.bf16 %v1153
  %v1666 = vunpack.c.l.bf16 %v1154
  %v1667 = vunpack.c.l.bf16 %v1155
  %v1668 = vunpack.c.l.bf16 %v1156
  %v1669 = vunpack.c.l.bf16 %v1157
  %v1670 = vunpack.c.l.bf16 %v1158
  %v1671 = vunpack.c.l.bf16 %v1159
  %v1672 = vunpack.c.l.bf16 %v1160
  %v1673 = vunpack.c.l.bf16 %v1161
  %v1674 = vunpack.c.l.bf16 %v1162
  %v1675 = vunpack.c.l.bf16 %v1163
  %v1676 = vunpack.c.l.bf16 %v1164
  %v1677 = vunpack.c.l.bf16 %v1165
  %v1678 = vunpack.c.l.bf16 %v1166
  %v1679 = vunpack.c.l.bf16 %v1167
  %v1680 = vunpack.c.l.bf16 %v1168
  %v1681 = vunpack.c.l.bf16 %v1169
  %v1682 = vunpack.c.l.bf16 %v1170
  %v1683 = vunpack.c.l.bf16 %v1171
  %v1684 = vunpack.c.l.bf16 %v1172
  %v1685 = vunpack.c.l.bf16 %v1173
  %v1686 = vunpack.c.l.bf16 %v1174
  %v1687 = vunpack.c.l.bf16 %v1175
  %v1688 = vunpack.c.l.bf16 %v1176
  %v1689 = vunpack.c.l.bf16 %v1177
  %v1690 = vunpack.c.l.bf16 %v1178
  %v1691 = vunpack.c.l.bf16 %v1179
  %v1692 = vunpack.c.l.bf16 %v1180
  %v1693 = vunpack.c.l.bf16 %v1181
  %v1694 = vunpack.c.l.bf16 %v1182
  %v1695 = vunpack.c.l.bf16 %v1183
  %v1696 = vunpack.c.l.bf16 %v1184
  %v1697 = vunpack.c.l.bf16 %v1185
  %v1698 = vunpack.c.l.bf16 %v1186
  %v1699 = vunpack.c.l.bf16 %v1187
  %v1700 = vunpack.c.l.bf16 %v1188
  %v1701 = vunpack.c.l.bf16 %v1189
  %v1702 = vunpack.c.l.bf16 %v1190
  %v1703 = vunpack.c.l.bf16 %v1191
  %v1704 = vunpack.c.l.bf16 %v1192
  %v1705 = vunpack.c.l.bf16 %v1193
  %v1706 = vunpack.c.l.bf16 %v1194
  %v1707 = vunpack.c.l.bf16 %v1195
  %v1708 = vunpack.c.l.bf16 %v1196
  %v1709 = vunpack.c.l.bf16 %v1197
  %v1710 = vunpack.c.l.bf16 %v1198
  %v1711 = vunpack.c.l.bf16 %v1199
  %v1712 = vunpack.c.l.bf16 %v1200
  %v1713 = vunpack.c.l.bf16 %v1201
  %v1714 = vunpack.c.l.bf16 %v1202
  %v1715 = vunpack.c.l.bf16 %v1203
  %v1716 = vunpack.c.l.bf16 %v1204
  %v1717 = vunpack.c.l.bf16 %v1205
  %v1718 = vunpack.c.l.bf16 %v1206
  %v1719 = vunpack.c.l.bf16 %v1207
  %v1720 = vunpack.c.l.bf16 %v1208
  %v1721 = vunpack.c.l.bf16 %v1209
  %v1722 = vunpack.c.l.bf16 %v1210
  %v1723 = vunpack.c.l.bf16 %v1211
  %v1724 = vunpack.c.l.bf16 %v1212
  %v1725 = vunpack.c.l.bf16 %v1213
  %v1726 = vunpack.c.l.bf16 %v1214
  %v1727 = vunpack.c.l.bf16 %v1215
  %v1728 = vunpack.c.l.bf16 %v1216
  %v1729 = vunpack.c.l.bf16 %v1217
  %v1730 = vunpack.c.l.bf16 %v1218
  %v1731 = vunpack.c.l.bf16 %v1219
  %v1732 = vunpack.c.l.bf16 %v1220
  %v1733 = vunpack.c.l.bf16 %v1221
  %v1734 = vunpack.c.l.bf16 %v1222
  %v1735 = vunpack.c.l.bf16 %v1223
  %v1736 = vunpack.c.l.bf16 %v1224
  %v1737 = vunpack.c.l.bf16 %v1225
  %v1738 = vunpack.c.l.bf16 %v1226
  %v1739 = vunpack.c.l.bf16 %v1227
  %v1740 = vunpack.c.l.bf16 %v1228
  %v1741 = vunpack.c.l.bf16 %v1229
  %v1742 = vunpack.c.l.bf16 %v1230
  %v1743 = vunpack.c.l.bf16 %v1231
  %v1744 = vunpack.c.l.bf16 %v1232
  %v1745 = vunpack.c.l.bf16 %v1233
  %v1746 = vunpack.c.l.bf16 %v1234
  %v1747 = vunpack.c.l.bf16 %v1235
  %v1748 = vunpack.c.l.bf16 %v1236
  %v1749 = vunpack.c.l.bf16 %v1237
  %v1750 = vunpack.c.l.bf16 %v1238
  %v1751 = vunpack.c.l.bf16 %v1239
  %v1752 = vunpack.c.l.bf16 %v1240
  %v1753 = vunpack.c.l.bf16 %v1241
  %v1754 = vunpack.c.l.bf16 %v1242
  %v1755 = vunpack.c.l.bf16 %v1243
  %v1756 = vunpack.c.l.bf16 %v1244
  %v1757 = vunpack.c.l.bf16 %v1245
  %v1758 = vunpack.c.l.bf16 %v1246
  %v1759 = vunpack.c.l.bf16 %v1247
  %v1760 = vunpack.c.l.bf16 %v1248
  %v1761 = vunpack.c.l.bf16 %v1249
  %v1762 = vunpack.c.l.bf16 %v1250
  %v1763 = vunpack.c.l.bf16 %v1251
  %v1764 = vunpack.c.l.bf16 %v1252
  %v1765 = vunpack.c.l.bf16 %v1253
  %v1766 = vunpack.c.l.bf16 %v1254
  %v1767 = vunpack.c.l.bf16 %v1255
  %v1768 = vunpack.c.l.bf16 %v1256
  %v1769 = vunpack.c.l.bf16 %v1257
  %v1770 = vunpack.c.l.bf16 %v1258
  %v1771 = vunpack.c.l.bf16 %v1259
  %v1772 = vunpack.c.l.bf16 %v1260
  %v1773 = vunpack.c.l.bf16 %v1261
  %v1774 = vunpack.c.l.bf16 %v1262
  %v1775 = vunpack.c.l.bf16 %v1263
  %v1776 = vunpack.c.l.bf16 %v1264
  %v1777 = vunpack.c.l.bf16 %v1265
  %v1778 = vunpack.c.l.bf16 %v1266
  %v1779 = vunpack.c.l.bf16 %v1267
  %v1780 = vunpack.c.l.bf16 %v1268
  %v1781 = vunpack.c.l.bf16 %v1269
  %v1782 = vunpack.c.l.bf16 %v1270
  %v1783 = vunpack.c.l.bf16 %v1271
  %v1784 = vunpack.c.l.bf16 %v1272
  %v1785 = vunpack.c.l.bf16 %v1273
  %v1786 = vunpack.c.l.bf16 %v1274
  %v1787 = vunpack.c.l.bf16 %v1275
  %v1788 = vunpack.c.l.bf16 %v1276
  %v1789 = vunpack.c.l.bf16 %v1277
  %v1790 = vunpack.c.l.bf16 %v1278
  %v1791 = vunpack.c.l.bf16 %v1279
  %v1792 = vunpack.c.l.bf16 %v1280
  %v1793 = vunpack.c.l.bf16 %v1281
  %v1794 = vunpack.c.l.bf16 %v1282
  %v1795 = vunpack.c.l.bf16 %v1283
  %v1796 = vunpack.c.l.bf16 %v1284
  %v1797 = vunpack.c.l.bf16 %v1285
  %v1798 = vunpack.c.l.bf16 %v1286
  %v1799 = vunpack.c.l.bf16 %v1287
  %v1800 = vunpack.c.l.bf16 %v1288
  %v1801 = vunpack.c.l.bf16 %v1289
  %v1802 = vunpack.c.l.bf16 %v1290
  %v1803 = vunpack.c.l.bf16 %v1291
  %v1804 = vunpack.c.l.bf16 %v1292
  %v1805 = vunpack.c.l.bf16 %v1293
  %v1806 = vunpack.c.l.bf16 %v1294
  %v1807 = vunpack.c.l.bf16 %v1295
  %v1808 = vunpack.c.l.bf16 %v1296
  %v1809 = vunpack.c.l.bf16 %v1297
  %v1810 = vunpack.c.l.bf16 %v1298
  %v1811 = vunpack.c.l.bf16 %v1299
  %v1812 = vunpack.c.l.bf16 %v1300
  %v1813 = vunpack.c.l.bf16 %v1301
  %v1814 = vunpack.c.l.bf16 %v1302
  %v1815 = vunpack.c.l.bf16 %v1303
  %v1816 = vunpack.c.l.bf16 %v1304
  %v1817 = vunpack.c.l.bf16 %v1305
  %v1818 = vunpack.c.l.bf16 %v1306
  %v1819 = vunpack.c.l.bf16 %v1307
  %v1820 = vunpack.c.l.bf16 %v1308
  %v1821 = vunpack.c.l.bf16 %v1309
  %v1822 = vunpack.c.l.bf16 %v1310
  %v1823 = vunpack.c.l.bf16 %v1311
  %v1824 = vunpack.c.l.bf16 %v1312
  %v1825 = vunpack.c.l.bf16 %v1313
  %v1826 = vunpack.c.l.bf16 %v1314
  %v1827 = vunpack.c.l.bf16 %v1315
  %v1828 = vunpack.c.l.bf16 %v1316
  %v1829 = vunpack.c.l.bf16 %v1317
  %v1830 = vunpack.c.l.bf16 %v1318
  %v1831 = vunpack.c.l.bf16 %v1319
  %v1832 = vunpack.c.l.bf16 %v1320
  %v1833 = vunpack.c.l.bf16 %v1321
  %v1834 = vunpack.c.l.bf16 %v1322
  %v1835 = vunpack.c.l.bf16 %v1323
  %v1836 = vunpack.c.l.bf16 %v1324
  %v1837 = vunpack.c.l.bf16 %v1325
  %v1838 = vunpack.c.l.bf16 %v1326
  %v1839 = vunpack.c.l.bf16 %v1327
  %v1840 = vunpack.c.l.bf16 %v1328
  %v1841 = vunpack.c.l.bf16 %v1329
  %v1842 = vunpack.c.l.bf16 %v1330
  %v1843 = vunpack.c.l.bf16 %v1331
  %v1844 = vunpack.c.l.bf16 %v1332
  %v1845 = vunpack.c.l.bf16 %v1333
  %v1846 = vunpack.c.l.bf16 %v1334
  %v1847 = vunpack.c.l.bf16 %v1335
  %v1848 = vunpack.c.l.bf16 %v1336
  %v1849 = vunpack.c.l.bf16 %v1337
  %v1850 = vunpack.c.l.bf16 %v1338
  %v1851 = vunpack.c.l.bf16 %v1339
  %v1852 = vunpack.c.l.bf16 %v1340
  %v1853 = vunpack.c.l.bf16 %v1341
  %v1854 = vunpack.c.l.bf16 %v1342
  %v1855 = vunpack.c.l.bf16 %v1343
  %v1856 = vunpack.c.l.bf16 %v1344
  %v1857 = vunpack.c.l.bf16 %v1345
  %v1858 = vunpack.c.l.bf16 %v1346
  %v1859 = vunpack.c.l.bf16 %v1347
  %v1860 = vunpack.c.l.bf16 %v1348
  %v1861 = vunpack.c.l.bf16 %v1349
  %v1862 = vunpack.c.l.bf16 %v1350
  %v1863 = vunpack.c.l.bf16 %v1351
  %v1864 = vunpack.c.l.bf16 %v1352
  %v1865 = vunpack.c.l.bf16 %v1353
  %v1866 = vunpack.c.l.bf16 %v1354
  %v1867 = vunpack.c.l.bf16 %v1355
  %v1868 = vunpack.c.l.bf16 %v1356
  %v1869 = vunpack.c.l.bf16 %v1357
  %v1870 = vunpack.c.l.bf16 %v1358
  %v1871 = vunpack.c.l.bf16 %v1359
  %v1872 = vunpack.c.l.bf16 %v1360
  %v1873 = vunpack.c.l.bf16 %v1361
  %v1874 = vunpack.c.l.bf16 %v1362
  %v1875 = vunpack.c.l.bf16 %v1363
  %v1876 = vunpack.c.l.bf16 %v1364
  %v1877 = vunpack.c.l.bf16 %v1365
  %v1878 = vunpack.c.l.bf16 %v1366
  %v1879 = vunpack.c.l.bf16 %v1367
  %v1880 = vunpack.c.l.bf16 %v1368
  %v1881 = vunpack.c.l.bf16 %v1369
  %v1882 = vunpack.c.l.bf16 %v1370
  %v1883 = vunpack.c.l.bf16 %v1371
  %v1884 = vunpack.c.l.bf16 %v1372
  %v1885 = vunpack.c.l.bf16 %v1373
  %v1886 = vunpack.c.l.bf16 %v1374
  %v1887 = vunpack.c.l.bf16 %v1375
  %v1888 = vunpack.c.l.bf16 %v1376
  %v1889 = vunpack.c.l.bf16 %v1377
  %v1890 = vunpack.c.l.bf16 %v1378
  %v1891 = vunpack.c.l.bf16 %v1379
  %v1892 = vunpack.c.l.bf16 %v1380
  %v1893 = vunpack.c.l.bf16 %v1381
  %v1894 = vunpack.c.l.bf16 %v1382
  %v1895 = vunpack.c.l.bf16 %v1383
  %v1896 = vunpack.c.l.bf16 %v1384
  %v1897 = vunpack.c.l.bf16 %v1385
  %v1898 = vunpack.c.l.bf16 %v1386
  %v1899 = vunpack.c.l.bf16 %v1387
  %v1900 = vunpack.c.l.bf16 %v1388
  %v1901 = vunpack.c.l.bf16 %v1389
  %v1902 = vunpack.c.l.bf16 %v1390
  %v1903 = vunpack.c.l.bf16 %v1391
  %v1904 = vunpack.c.l.bf16 %v1392
  %v1905 = vunpack.c.l.bf16 %v1393
  %v1906 = vunpack.c.l.bf16 %v1394
  %v1907 = vunpack.c.l.bf16 %v1395
  %v1908 = vunpack.c.l.bf16 %v1396
  %v1909 = vunpack.c.l.bf16 %v1397
  %v1910 = vunpack.c.l.bf16 %v1398
  %v1911 = vunpack.c.l.bf16 %v1399
  %v1912 = vunpack.c.l.bf16 %v1400
  %v1913 = vunpack.c.l.bf16 %v1401
  %v1914 = vunpack.c.l.bf16 %v1402
  %v1915 = vunpack.c.l.bf16 %v1403
  %v1916 = vunpack.c.l.bf16 %v1404
  %v1917 = vunpack.c.l.bf16 %v1405
  %v1918 = vunpack.c.l.bf16 %v1406
  %v1919 = vunpack.c.l.bf16 %v1407
  %v1920 = vunpack.c.l.bf16 %v1408
  %v1921 = vunpack.c.l.bf16 %v1409
  %v1922 = vunpack.c.l.bf16 %v1410
  %v1923 = vunpack.c.l.bf16 %v1411
  %v1924 = vunpack.c.l.bf16 %v1412
  %v1925 = vunpack.c.l.bf16 %v1413
  %v1926 = vunpack.c.l.bf16 %v1414
  %v1927 = vunpack.c.l.bf16 %v1415
  %v1928 = vunpack.c.l.bf16 %v1416
  %v1929 = vunpack.c.l.bf16 %v1417
  %v1930 = vunpack.c.l.bf16 %v1418
  %v1931 = vunpack.c.l.bf16 %v1419
  %v1932 = vunpack.c.l.bf16 %v1420
  %v1933 = vunpack.c.l.bf16 %v1421
  %v1934 = vunpack.c.l.bf16 %v1422
  %v1935 = vunpack.c.l.bf16 %v1423
  %v1936 = vunpack.c.l.bf16 %v1424
  %v1937 = vld [vmem:[%s3] sm:$0xff]
  %v1938 = vld [vmem:[%s3 + $0x8] sm:$0xff]
  %v1939 = vld [vmem:[%s3 + $0x10] sm:$0xff]
  %v1940 = vld [vmem:[%s3 + $0x18] sm:$0xff]
  %v1941 = vld [vmem:[%s3 + $0x20] sm:$0xff]
  %v1942 = vld [vmem:[%s3 + $0x28] sm:$0xff]
  %1944 = vset.pattern.permute.xlu0 0
  %1945 = vperm.xlu0 %1944, %v1937
  %v1946 = vpop.permute.xlu0 %1945
  %1949 = vset.pattern.permute.xlu0 0
  %1950 = vperm.xlu0 %1949, %v1938
  %v1951 = vpop.permute.xlu0 %1950
  %1954 = vset.pattern.permute.xlu0 0
  %1955 = vperm.xlu0 %1954, %v1939
  %v1956 = vpop.permute.xlu0 %1955
  %1959 = vset.pattern.permute.xlu0 0
  %1960 = vperm.xlu0 %1959, %v1940
  %v1961 = vpop.permute.xlu0 %1960
  %1964 = vset.pattern.permute.xlu0 0
  %1965 = vperm.xlu0 %1964, %v1941
  %v1966 = vpop.permute.xlu0 %1965
  %1969 = vset.pattern.permute.xlu0 0
  %1970 = vperm.xlu0 %1969, %v1942
  %v1971 = vpop.permute.xlu0 %1970
  %1973 = vmatpush.msra.mxu0 %v1440
  %1974 = vmatpush.msra.mxu0 %v1439
  %1975 = vmatpush.msra.mxu0 %v1438
  %1976 = vmatpush.msra.mxu0 %v1437
  %1977 = vmatpush.msra.mxu0 %v1436
  %1978 = vmatpush.msra.mxu0 %v1435
  %1979 = vmatpush.msra.mxu0 %v1434
  %1980 = vmatpush.msra.mxu0 %v1433
  %1981 = vmatpush.msra.mxu0 %v1432
  %1982 = vmatpush.msra.mxu0 %v1431
  %1983 = vmatpush.msra.mxu0 %v1430
  %1984 = vmatpush.msra.mxu0 %v1429
  %1985 = vmatpush.msra.mxu0 %v1428
  %1986 = vmatpush.msra.mxu0 %v1427
  %1987 = vmatpush.msra.mxu0 %v1426
  %1988 = vmatpush.msra.mxu0 %v1425
  %1989 = vmatmul.f32.gmra.mxu0 %v151
  %v1990 = vpop.f32.mrf.mxu0
  %v1991 = vadd.f32 %v1946, %v1990
  %1992 = vmatmul.f32.gmra.mxu0 %v281
  %v1993 = vpop.f32.mrf.mxu0
  %v1994 = vadd.f32 %v1951, %v1993
  %1995 = vmatmul.f32.gmra.mxu0 %v411
  %v1996 = vpop.f32.mrf.mxu0
  %v1997 = vadd.f32 %v1956, %v1996
  %1998 = vmatmul.f32.gmra.mxu0 %v541
  %v1999 = vpop.f32.mrf.mxu0
  %v2000 = vadd.f32 %v1961, %v1999
  %2001 = vmatmul.f32.gmra.mxu0 %v671
  %v2002 = vpop.f32.mrf.mxu0
  %v2003 = vadd.f32 %v1966, %v2002
  %2004 = vmatmul.f32.gmra.mxu0 %v801
  %v2005 = vpop.f32.mrf.mxu0
  %v2006 = vadd.f32 %v1971, %v2005
  %2007 = vdwg.mxu0
  %2008 = vmatpush.msra.mxu0 %v1456
  %2009 = vmatpush.msra.mxu0 %v1455
  %2010 = vmatpush.msra.mxu0 %v1454
  %2011 = vmatpush.msra.mxu0 %v1453
  %2012 = vmatpush.msra.mxu0 %v1452
  %2013 = vmatpush.msra.mxu0 %v1451
  %2014 = vmatpush.msra.mxu0 %v1450
  %2015 = vmatpush.msra.mxu0 %v1449
  %2016 = vmatpush.msra.mxu0 %v1448
  %2017 = vmatpush.msra.mxu0 %v1447
  %2018 = vmatpush.msra.mxu0 %v1446
  %2019 = vmatpush.msra.mxu0 %v1445
  %2020 = vmatpush.msra.mxu0 %v1444
  %2021 = vmatpush.msra.mxu0 %v1443
  %2022 = vmatpush.msra.mxu0 %v1442
  %2023 = vmatpush.msra.mxu0 %v1441
  %2024 = vmatmul.f32.gmra.mxu0 %v216
  %v2025 = vpop.f32.mrf.mxu0
  %v2026 = vadd.f32 %v1991, %v2025
  %2027 = vmatmul.f32.gmra.mxu0 %v346
  %v2028 = vpop.f32.mrf.mxu0
  %v2029 = vadd.f32 %v1994, %v2028
  %2030 = vmatmul.f32.gmra.mxu0 %v476
  %v2031 = vpop.f32.mrf.mxu0
  %v2032 = vadd.f32 %v1997, %v2031
  %2033 = vmatmul.f32.gmra.mxu0 %v606
  %v2034 = vpop.f32.mrf.mxu0
  %v2035 = vadd.f32 %v2000, %v2034
  %2036 = vmatmul.f32.gmra.mxu0 %v736
  %v2037 = vpop.f32.mrf.mxu0
  %v2038 = vadd.f32 %v2003, %v2037
  %2039 = vmatmul.f32.gmra.mxu0 %v866
  %v2040 = vpop.f32.mrf.mxu0
  %v2041 = vadd.f32 %v2006, %v2040
  %2042 = vdwg.mxu0
  %2043 = vmatpush.msra.mxu0 %v1472
  %2044 = vmatpush.msra.mxu0 %v1471
  %2045 = vmatpush.msra.mxu0 %v1470
  %2046 = vmatpush.msra.mxu0 %v1469
  %2047 = vmatpush.msra.mxu0 %v1468
  %2048 = vmatpush.msra.mxu0 %v1467
  %2049 = vmatpush.msra.mxu0 %v1466
  %2050 = vmatpush.msra.mxu0 %v1465
  %2051 = vmatpush.msra.mxu0 %v1464
  %2052 = vmatpush.msra.mxu0 %v1463
  %2053 = vmatpush.msra.mxu0 %v1462
  %2054 = vmatpush.msra.mxu0 %v1461
  %2055 = vmatpush.msra.mxu0 %v1460
  %2056 = vmatpush.msra.mxu0 %v1459
  %2057 = vmatpush.msra.mxu0 %v1458
  %2058 = vmatpush.msra.mxu0 %v1457
  %2059 = vmatmul.f32.gmra.mxu0 %v154
  %v2060 = vpop.f32.mrf.mxu0
  %v2061 = vadd.f32 %v2026, %v2060
  %2062 = vmatmul.f32.gmra.mxu0 %v284
  %v2063 = vpop.f32.mrf.mxu0
  %v2064 = vadd.f32 %v2029, %v2063
  %2065 = vmatmul.f32.gmra.mxu0 %v414
  %v2066 = vpop.f32.mrf.mxu0
  %v2067 = vadd.f32 %v2032, %v2066
  %2068 = vmatmul.f32.gmra.mxu0 %v544
  %v2069 = vpop.f32.mrf.mxu0
  %v2070 = vadd.f32 %v2035, %v2069
  %2071 = vmatmul.f32.gmra.mxu0 %v674
  %v2072 = vpop.f32.mrf.mxu0
  %v2073 = vadd.f32 %v2038, %v2072
  %2074 = vmatmul.f32.gmra.mxu0 %v804
  %v2075 = vpop.f32.mrf.mxu0
  %v2076 = vadd.f32 %v2041, %v2075
  %2077 = vdwg.mxu0
  %2078 = vmatpush.msra.mxu0 %v1488
  %2079 = vmatpush.msra.mxu0 %v1487
  %2080 = vmatpush.msra.mxu0 %v1486
  %2081 = vmatpush.msra.mxu0 %v1485
  %2082 = vmatpush.msra.mxu0 %v1484
  %2083 = vmatpush.msra.mxu0 %v1483
  %2084 = vmatpush.msra.mxu0 %v1482
  %2085 = vmatpush.msra.mxu0 %v1481
  %2086 = vmatpush.msra.mxu0 %v1480
  %2087 = vmatpush.msra.mxu0 %v1479
  %2088 = vmatpush.msra.mxu0 %v1478
  %2089 = vmatpush.msra.mxu0 %v1477
  %2090 = vmatpush.msra.mxu0 %v1476
  %2091 = vmatpush.msra.mxu0 %v1475
  %2092 = vmatpush.msra.mxu0 %v1474
  %2093 = vmatpush.msra.mxu0 %v1473
  %2094 = vmatmul.f32.gmra.mxu0 %v219
  %v2095 = vpop.f32.mrf.mxu0
  %v2096 = vadd.f32 %v2061, %v2095
  %2097 = vmatmul.f32.gmra.mxu0 %v349
  %v2098 = vpop.f32.mrf.mxu0
  %v2099 = vadd.f32 %v2064, %v2098
  %2100 = vmatmul.f32.gmra.mxu0 %v479
  %v2101 = vpop.f32.mrf.mxu0
  %v2102 = vadd.f32 %v2067, %v2101
  %2103 = vmatmul.f32.gmra.mxu0 %v609
  %v2104 = vpop.f32.mrf.mxu0
  %v2105 = vadd.f32 %v2070, %v2104
  %2106 = vmatmul.f32.gmra.mxu0 %v739
  %v2107 = vpop.f32.mrf.mxu0
  %v2108 = vadd.f32 %v2073, %v2107
  %2109 = vmatmul.f32.gmra.mxu0 %v869
  %v2110 = vpop.f32.mrf.mxu0
  %v2111 = vadd.f32 %v2076, %v2110
  %2112 = vdwg.mxu0
  %2113 = vmatpush.msra.mxu0 %v1504
  %2114 = vmatpush.msra.mxu0 %v1503
  %2115 = vmatpush.msra.mxu0 %v1502
  %2116 = vmatpush.msra.mxu0 %v1501
  %2117 = vmatpush.msra.mxu0 %v1500
  %2118 = vmatpush.msra.mxu0 %v1499
  %2119 = vmatpush.msra.mxu0 %v1498
  %2120 = vmatpush.msra.mxu0 %v1497
  %2121 = vmatpush.msra.mxu0 %v1496
  %2122 = vmatpush.msra.mxu0 %v1495
  %2123 = vmatpush.msra.mxu0 %v1494
  %2124 = vmatpush.msra.mxu0 %v1493
  %2125 = vmatpush.msra.mxu0 %v1492
  %2126 = vmatpush.msra.mxu0 %v1491
  %2127 = vmatpush.msra.mxu0 %v1490
  %2128 = vmatpush.msra.mxu0 %v1489
  %2129 = vmatmul.f32.gmra.mxu0 %v157
  %v2130 = vpop.f32.mrf.mxu0
  %v2131 = vadd.f32 %v2096, %v2130
  %2132 = vmatmul.f32.gmra.mxu0 %v287
  %v2133 = vpop.f32.mrf.mxu0
  %v2134 = vadd.f32 %v2099, %v2133
  %2135 = vmatmul.f32.gmra.mxu0 %v417
  %v2136 = vpop.f32.mrf.mxu0
  %v2137 = vadd.f32 %v2102, %v2136
  %2138 = vmatmul.f32.gmra.mxu0 %v547
  %v2139 = vpop.f32.mrf.mxu0
  %v2140 = vadd.f32 %v2105, %v2139
  %2141 = vmatmul.f32.gmra.mxu0 %v677
  %v2142 = vpop.f32.mrf.mxu0
  %v2143 = vadd.f32 %v2108, %v2142
  %2144 = vmatmul.f32.gmra.mxu0 %v807
  %v2145 = vpop.f32.mrf.mxu0
  %v2146 = vadd.f32 %v2111, %v2145
  %2147 = vdwg.mxu0
  %2148 = vmatpush.msra.mxu0 %v1520
  %2149 = vmatpush.msra.mxu0 %v1519
  %2150 = vmatpush.msra.mxu0 %v1518
  %2151 = vmatpush.msra.mxu0 %v1517
  %2152 = vmatpush.msra.mxu0 %v1516
  %2153 = vmatpush.msra.mxu0 %v1515
  %2154 = vmatpush.msra.mxu0 %v1514
  %2155 = vmatpush.msra.mxu0 %v1513
  %2156 = vmatpush.msra.mxu0 %v1512
  %2157 = vmatpush.msra.mxu0 %v1511
  %2158 = vmatpush.msra.mxu0 %v1510
  %2159 = vmatpush.msra.mxu0 %v1509
  %2160 = vmatpush.msra.mxu0 %v1508
  %2161 = vmatpush.msra.mxu0 %v1507
  %2162 = vmatpush.msra.mxu0 %v1506
  %2163 = vmatpush.msra.mxu0 %v1505
  %2164 = vmatmul.f32.gmra.mxu0 %v222
  %v2165 = vpop.f32.mrf.mxu0
  %v2166 = vadd.f32 %v2131, %v2165
  %2167 = vmatmul.f32.gmra.mxu0 %v352
  %v2168 = vpop.f32.mrf.mxu0
  %v2169 = vadd.f32 %v2134, %v2168
  %2170 = vmatmul.f32.gmra.mxu0 %v482
  %v2171 = vpop.f32.mrf.mxu0
  %v2172 = vadd.f32 %v2137, %v2171
  %2173 = vmatmul.f32.gmra.mxu0 %v612
  %v2174 = vpop.f32.mrf.mxu0
  %v2175 = vadd.f32 %v2140, %v2174
  %2176 = vmatmul.f32.gmra.mxu0 %v742
  %v2177 = vpop.f32.mrf.mxu0
  %v2178 = vadd.f32 %v2143, %v2177
  %2179 = vmatmul.f32.gmra.mxu0 %v872
  %v2180 = vpop.f32.mrf.mxu0
  %v2181 = vadd.f32 %v2146, %v2180
  %2182 = vdwg.mxu0
  %2183 = vmatpush.msra.mxu0 %v1536
  %2184 = vmatpush.msra.mxu0 %v1535
  %2185 = vmatpush.msra.mxu0 %v1534
  %2186 = vmatpush.msra.mxu0 %v1533
  %2187 = vmatpush.msra.mxu0 %v1532
  %2188 = vmatpush.msra.mxu0 %v1531
  %2189 = vmatpush.msra.mxu0 %v1530
  %2190 = vmatpush.msra.mxu0 %v1529
  %2191 = vmatpush.msra.mxu0 %v1528
  %2192 = vmatpush.msra.mxu0 %v1527
  %2193 = vmatpush.msra.mxu0 %v1526
  %2194 = vmatpush.msra.mxu0 %v1525
  %2195 = vmatpush.msra.mxu0 %v1524
  %2196 = vmatpush.msra.mxu0 %v1523
  %2197 = vmatpush.msra.mxu0 %v1522
  %2198 = vmatpush.msra.mxu0 %v1521
  %2199 = vmatmul.f32.gmra.mxu0 %v160
  %v2200 = vpop.f32.mrf.mxu0
  %v2201 = vadd.f32 %v2166, %v2200
  %2202 = vmatmul.f32.gmra.mxu0 %v290
  %v2203 = vpop.f32.mrf.mxu0
  %v2204 = vadd.f32 %v2169, %v2203
  %2205 = vmatmul.f32.gmra.mxu0 %v420
  %v2206 = vpop.f32.mrf.mxu0
  %v2207 = vadd.f32 %v2172, %v2206
  %2208 = vmatmul.f32.gmra.mxu0 %v550
  %v2209 = vpop.f32.mrf.mxu0
  %v2210 = vadd.f32 %v2175, %v2209
  %2211 = vmatmul.f32.gmra.mxu0 %v680
  %v2212 = vpop.f32.mrf.mxu0
  %v2213 = vadd.f32 %v2178, %v2212
  %2214 = vmatmul.f32.gmra.mxu0 %v810
  %v2215 = vpop.f32.mrf.mxu0
  %v2216 = vadd.f32 %v2181, %v2215
  %2217 = vdwg.mxu0
  %2218 = vmatpush.msra.mxu0 %v1552
  %2219 = vmatpush.msra.mxu0 %v1551
  %2220 = vmatpush.msra.mxu0 %v1550
  %2221 = vmatpush.msra.mxu0 %v1549
  %2222 = vmatpush.msra.mxu0 %v1548
  %2223 = vmatpush.msra.mxu0 %v1547
  %2224 = vmatpush.msra.mxu0 %v1546
  %2225 = vmatpush.msra.mxu0 %v1545
  %2226 = vmatpush.msra.mxu0 %v1544
  %2227 = vmatpush.msra.mxu0 %v1543
  %2228 = vmatpush.msra.mxu0 %v1542
  %2229 = vmatpush.msra.mxu0 %v1541
  %2230 = vmatpush.msra.mxu0 %v1540
  %2231 = vmatpush.msra.mxu0 %v1539
  %2232 = vmatpush.msra.mxu0 %v1538
  %2233 = vmatpush.msra.mxu0 %v1537
  %2234 = vmatmul.f32.gmra.mxu0 %v225
  %v2235 = vpop.f32.mrf.mxu0
  %v2236 = vadd.f32 %v2201, %v2235
  %2237 = vmatmul.f32.gmra.mxu0 %v355
  %v2238 = vpop.f32.mrf.mxu0
  %v2239 = vadd.f32 %v2204, %v2238
  %2240 = vmatmul.f32.gmra.mxu0 %v485
  %v2241 = vpop.f32.mrf.mxu0
  %v2242 = vadd.f32 %v2207, %v2241
  %2243 = vmatmul.f32.gmra.mxu0 %v615
  %v2244 = vpop.f32.mrf.mxu0
  %v2245 = vadd.f32 %v2210, %v2244
  %2246 = vmatmul.f32.gmra.mxu0 %v745
  %v2247 = vpop.f32.mrf.mxu0
  %v2248 = vadd.f32 %v2213, %v2247
  %2249 = vmatmul.f32.gmra.mxu0 %v875
  %v2250 = vpop.f32.mrf.mxu0
  %v2251 = vadd.f32 %v2216, %v2250
  %2252 = vdwg.mxu0
  %2253 = vmatpush.msra.mxu0 %v1568
  %2254 = vmatpush.msra.mxu0 %v1567
  %2255 = vmatpush.msra.mxu0 %v1566
  %2256 = vmatpush.msra.mxu0 %v1565
  %2257 = vmatpush.msra.mxu0 %v1564
  %2258 = vmatpush.msra.mxu0 %v1563
  %2259 = vmatpush.msra.mxu0 %v1562
  %2260 = vmatpush.msra.mxu0 %v1561
  %2261 = vmatpush.msra.mxu0 %v1560
  %2262 = vmatpush.msra.mxu0 %v1559
  %2263 = vmatpush.msra.mxu0 %v1558
  %2264 = vmatpush.msra.mxu0 %v1557
  %2265 = vmatpush.msra.mxu0 %v1556
  %2266 = vmatpush.msra.mxu0 %v1555
  %2267 = vmatpush.msra.mxu0 %v1554
  %2268 = vmatpush.msra.mxu0 %v1553
  %2269 = vmatmul.f32.gmra.mxu0 %v163
  %v2270 = vpop.f32.mrf.mxu0
  %v2271 = vadd.f32 %v2236, %v2270
  %2272 = vmatmul.f32.gmra.mxu0 %v293
  %v2273 = vpop.f32.mrf.mxu0
  %v2274 = vadd.f32 %v2239, %v2273
  %2275 = vmatmul.f32.gmra.mxu0 %v423
  %v2276 = vpop.f32.mrf.mxu0
  %v2277 = vadd.f32 %v2242, %v2276
  %2278 = vmatmul.f32.gmra.mxu0 %v553
  %v2279 = vpop.f32.mrf.mxu0
  %v2280 = vadd.f32 %v2245, %v2279
  %2281 = vmatmul.f32.gmra.mxu0 %v683
  %v2282 = vpop.f32.mrf.mxu0
  %v2283 = vadd.f32 %v2248, %v2282
  %2284 = vmatmul.f32.gmra.mxu0 %v813
  %v2285 = vpop.f32.mrf.mxu0
  %v2286 = vadd.f32 %v2251, %v2285
  %2287 = vdwg.mxu0
  %2288 = vmatpush.msra.mxu0 %v1584
  %2289 = vmatpush.msra.mxu0 %v1583
  %2290 = vmatpush.msra.mxu0 %v1582
  %2291 = vmatpush.msra.mxu0 %v1581
  %2292 = vmatpush.msra.mxu0 %v1580
  %2293 = vmatpush.msra.mxu0 %v1579
  %2294 = vmatpush.msra.mxu0 %v1578
  %2295 = vmatpush.msra.mxu0 %v1577
  %2296 = vmatpush.msra.mxu0 %v1576
  %2297 = vmatpush.msra.mxu0 %v1575
  %2298 = vmatpush.msra.mxu0 %v1574
  %2299 = vmatpush.msra.mxu0 %v1573
  %2300 = vmatpush.msra.mxu0 %v1572
  %2301 = vmatpush.msra.mxu0 %v1571
  %2302 = vmatpush.msra.mxu0 %v1570
  %2303 = vmatpush.msra.mxu0 %v1569
  %2304 = vmatmul.f32.gmra.mxu0 %v228
  %v2305 = vpop.f32.mrf.mxu0
  %v2306 = vadd.f32 %v2271, %v2305
  %2307 = vmatmul.f32.gmra.mxu0 %v358
  %v2308 = vpop.f32.mrf.mxu0
  %v2309 = vadd.f32 %v2274, %v2308
  %2310 = vmatmul.f32.gmra.mxu0 %v488
  %v2311 = vpop.f32.mrf.mxu0
  %v2312 = vadd.f32 %v2277, %v2311
  %2313 = vmatmul.f32.gmra.mxu0 %v618
  %v2314 = vpop.f32.mrf.mxu0
  %v2315 = vadd.f32 %v2280, %v2314
  %2316 = vmatmul.f32.gmra.mxu0 %v748
  %v2317 = vpop.f32.mrf.mxu0
  %v2318 = vadd.f32 %v2283, %v2317
  %2319 = vmatmul.f32.gmra.mxu0 %v878
  %v2320 = vpop.f32.mrf.mxu0
  %v2321 = vadd.f32 %v2286, %v2320
  %2322 = vdwg.mxu0
  %2323 = vmatpush.msra.mxu0 %v1600
  %2324 = vmatpush.msra.mxu0 %v1599
  %2325 = vmatpush.msra.mxu0 %v1598
  %2326 = vmatpush.msra.mxu0 %v1597
  %2327 = vmatpush.msra.mxu0 %v1596
  %2328 = vmatpush.msra.mxu0 %v1595
  %2329 = vmatpush.msra.mxu0 %v1594
  %2330 = vmatpush.msra.mxu0 %v1593
  %2331 = vmatpush.msra.mxu0 %v1592
  %2332 = vmatpush.msra.mxu0 %v1591
  %2333 = vmatpush.msra.mxu0 %v1590
  %2334 = vmatpush.msra.mxu0 %v1589
  %2335 = vmatpush.msra.mxu0 %v1588
  %2336 = vmatpush.msra.mxu0 %v1587
  %2337 = vmatpush.msra.mxu0 %v1586
  %2338 = vmatpush.msra.mxu0 %v1585
  %2339 = vmatmul.f32.gmra.mxu0 %v166
  %v2340 = vpop.f32.mrf.mxu0
  %v2341 = vadd.f32 %v2306, %v2340
  %2342 = vmatmul.f32.gmra.mxu0 %v296
  %v2343 = vpop.f32.mrf.mxu0
  %v2344 = vadd.f32 %v2309, %v2343
  %2345 = vmatmul.f32.gmra.mxu0 %v426
  %v2346 = vpop.f32.mrf.mxu0
  %v2347 = vadd.f32 %v2312, %v2346
  %2348 = vmatmul.f32.gmra.mxu0 %v556
  %v2349 = vpop.f32.mrf.mxu0
  %v2350 = vadd.f32 %v2315, %v2349
  %2351 = vmatmul.f32.gmra.mxu0 %v686
  %v2352 = vpop.f32.mrf.mxu0
  %v2353 = vadd.f32 %v2318, %v2352
  %2354 = vmatmul.f32.gmra.mxu0 %v816
  %v2355 = vpop.f32.mrf.mxu0
  %v2356 = vadd.f32 %v2321, %v2355
  %2357 = vdwg.mxu0
  %2358 = vmatpush.msra.mxu0 %v1616
  %2359 = vmatpush.msra.mxu0 %v1615
  %2360 = vmatpush.msra.mxu0 %v1614
  %2361 = vmatpush.msra.mxu0 %v1613
  %2362 = vmatpush.msra.mxu0 %v1612
  %2363 = vmatpush.msra.mxu0 %v1611
  %2364 = vmatpush.msra.mxu0 %v1610
  %2365 = vmatpush.msra.mxu0 %v1609
  %2366 = vmatpush.msra.mxu0 %v1608
  %2367 = vmatpush.msra.mxu0 %v1607
  %2368 = vmatpush.msra.mxu0 %v1606
  %2369 = vmatpush.msra.mxu0 %v1605
  %2370 = vmatpush.msra.mxu0 %v1604
  %2371 = vmatpush.msra.mxu0 %v1603
  %2372 = vmatpush.msra.mxu0 %v1602
  %2373 = vmatpush.msra.mxu0 %v1601
  %2374 = vmatmul.f32.gmra.mxu0 %v231
  %v2375 = vpop.f32.mrf.mxu0
  %v2376 = vadd.f32 %v2341, %v2375
  %2377 = vmatmul.f32.gmra.mxu0 %v361
  %v2378 = vpop.f32.mrf.mxu0
  %v2379 = vadd.f32 %v2344, %v2378
  %2380 = vmatmul.f32.gmra.mxu0 %v491
  %v2381 = vpop.f32.mrf.mxu0
  %v2382 = vadd.f32 %v2347, %v2381
  %2383 = vmatmul.f32.gmra.mxu0 %v621
  %v2384 = vpop.f32.mrf.mxu0
  %v2385 = vadd.f32 %v2350, %v2384
  %2386 = vmatmul.f32.gmra.mxu0 %v751
  %v2387 = vpop.f32.mrf.mxu0
  %v2388 = vadd.f32 %v2353, %v2387
  %2389 = vmatmul.f32.gmra.mxu0 %v881
  %v2390 = vpop.f32.mrf.mxu0
  %v2391 = vadd.f32 %v2356, %v2390
  %2392 = vdwg.mxu0
  %2393 = vmatpush.msra.mxu0 %v1632
  %2394 = vmatpush.msra.mxu0 %v1631
  %2395 = vmatpush.msra.mxu0 %v1630
  %2396 = vmatpush.msra.mxu0 %v1629
  %2397 = vmatpush.msra.mxu0 %v1628
  %2398 = vmatpush.msra.mxu0 %v1627
  %2399 = vmatpush.msra.mxu0 %v1626
  %2400 = vmatpush.msra.mxu0 %v1625
  %2401 = vmatpush.msra.mxu0 %v1624
  %2402 = vmatpush.msra.mxu0 %v1623
  %2403 = vmatpush.msra.mxu0 %v1622
  %2404 = vmatpush.msra.mxu0 %v1621
  %2405 = vmatpush.msra.mxu0 %v1620
  %2406 = vmatpush.msra.mxu0 %v1619
  %2407 = vmatpush.msra.mxu0 %v1618
  %2408 = vmatpush.msra.mxu0 %v1617
  %2409 = vmatmul.f32.gmra.mxu0 %v169
  %v2410 = vpop.f32.mrf.mxu0
  %v2411 = vadd.f32 %v2376, %v2410
  %2412 = vmatmul.f32.gmra.mxu0 %v299
  %v2413 = vpop.f32.mrf.mxu0
  %v2414 = vadd.f32 %v2379, %v2413
  %2415 = vmatmul.f32.gmra.mxu0 %v429
  %v2416 = vpop.f32.mrf.mxu0
  %v2417 = vadd.f32 %v2382, %v2416
  %2418 = vmatmul.f32.gmra.mxu0 %v559
  %v2419 = vpop.f32.mrf.mxu0
  %v2420 = vadd.f32 %v2385, %v2419
  %2421 = vmatmul.f32.gmra.mxu0 %v689
  %v2422 = vpop.f32.mrf.mxu0
  %v2423 = vadd.f32 %v2388, %v2422
  %2424 = vmatmul.f32.gmra.mxu0 %v819
  %v2425 = vpop.f32.mrf.mxu0
  %v2426 = vadd.f32 %v2391, %v2425
  %2427 = vdwg.mxu0
  %2428 = vmatpush.msra.mxu0 %v1648
  %2429 = vmatpush.msra.mxu0 %v1647
  %2430 = vmatpush.msra.mxu0 %v1646
  %2431 = vmatpush.msra.mxu0 %v1645
  %2432 = vmatpush.msra.mxu0 %v1644
  %2433 = vmatpush.msra.mxu0 %v1643
  %2434 = vmatpush.msra.mxu0 %v1642
  %2435 = vmatpush.msra.mxu0 %v1641
  %2436 = vmatpush.msra.mxu0 %v1640
  %2437 = vmatpush.msra.mxu0 %v1639
  %2438 = vmatpush.msra.mxu0 %v1638
  %2439 = vmatpush.msra.mxu0 %v1637
  %2440 = vmatpush.msra.mxu0 %v1636
  %2441 = vmatpush.msra.mxu0 %v1635
  %2442 = vmatpush.msra.mxu0 %v1634
  %2443 = vmatpush.msra.mxu0 %v1633
  %2444 = vmatmul.f32.gmra.mxu0 %v234
  %v2445 = vpop.f32.mrf.mxu0
  %v2446 = vadd.f32 %v2411, %v2445
  %2447 = vmatmul.f32.gmra.mxu0 %v364
  %v2448 = vpop.f32.mrf.mxu0
  %v2449 = vadd.f32 %v2414, %v2448
  %2450 = vmatmul.f32.gmra.mxu0 %v494
  %v2451 = vpop.f32.mrf.mxu0
  %v2452 = vadd.f32 %v2417, %v2451
  %2453 = vmatmul.f32.gmra.mxu0 %v624
  %v2454 = vpop.f32.mrf.mxu0
  %v2455 = vadd.f32 %v2420, %v2454
  %2456 = vmatmul.f32.gmra.mxu0 %v754
  %v2457 = vpop.f32.mrf.mxu0
  %v2458 = vadd.f32 %v2423, %v2457
  %2459 = vmatmul.f32.gmra.mxu0 %v884
  %v2460 = vpop.f32.mrf.mxu0
  %v2461 = vadd.f32 %v2426, %v2460
  %2462 = vdwg.mxu0
  %2463 = vmatpush.msra.mxu0 %v1664
  %2464 = vmatpush.msra.mxu0 %v1663
  %2465 = vmatpush.msra.mxu0 %v1662
  %2466 = vmatpush.msra.mxu0 %v1661
  %2467 = vmatpush.msra.mxu0 %v1660
  %2468 = vmatpush.msra.mxu0 %v1659
  %2469 = vmatpush.msra.mxu0 %v1658
  %2470 = vmatpush.msra.mxu0 %v1657
  %2471 = vmatpush.msra.mxu0 %v1656
  %2472 = vmatpush.msra.mxu0 %v1655
  %2473 = vmatpush.msra.mxu0 %v1654
  %2474 = vmatpush.msra.mxu0 %v1653
  %2475 = vmatpush.msra.mxu0 %v1652
  %2476 = vmatpush.msra.mxu0 %v1651
  %2477 = vmatpush.msra.mxu0 %v1650
  %2478 = vmatpush.msra.mxu0 %v1649
  %2479 = vmatmul.f32.gmra.mxu0 %v172
  %v2480 = vpop.f32.mrf.mxu0
  %v2481 = vadd.f32 %v2446, %v2480
  %2482 = vmatmul.f32.gmra.mxu0 %v302
  %v2483 = vpop.f32.mrf.mxu0
  %v2484 = vadd.f32 %v2449, %v2483
  %2485 = vmatmul.f32.gmra.mxu0 %v432
  %v2486 = vpop.f32.mrf.mxu0
  %v2487 = vadd.f32 %v2452, %v2486
  %2488 = vmatmul.f32.gmra.mxu0 %v562
  %v2489 = vpop.f32.mrf.mxu0
  %v2490 = vadd.f32 %v2455, %v2489
  %2491 = vmatmul.f32.gmra.mxu0 %v692
  %v2492 = vpop.f32.mrf.mxu0
  %v2493 = vadd.f32 %v2458, %v2492
  %2494 = vmatmul.f32.gmra.mxu0 %v822
  %v2495 = vpop.f32.mrf.mxu0
  %v2496 = vadd.f32 %v2461, %v2495
  %2497 = vdwg.mxu0
  %2498 = vmatpush.msra.mxu0 %v1680
  %2499 = vmatpush.msra.mxu0 %v1679
  %2500 = vmatpush.msra.mxu0 %v1678
  %2501 = vmatpush.msra.mxu0 %v1677
  %2502 = vmatpush.msra.mxu0 %v1676
  %2503 = vmatpush.msra.mxu0 %v1675
  %2504 = vmatpush.msra.mxu0 %v1674
  %2505 = vmatpush.msra.mxu0 %v1673
  %2506 = vmatpush.msra.mxu0 %v1672
  %2507 = vmatpush.msra.mxu0 %v1671
  %2508 = vmatpush.msra.mxu0 %v1670
  %2509 = vmatpush.msra.mxu0 %v1669
  %2510 = vmatpush.msra.mxu0 %v1668
  %2511 = vmatpush.msra.mxu0 %v1667
  %2512 = vmatpush.msra.mxu0 %v1666
  %2513 = vmatpush.msra.mxu0 %v1665
  %2514 = vmatmul.f32.gmra.mxu0 %v237
  %v2515 = vpop.f32.mrf.mxu0
  %v2516 = vadd.f32 %v2481, %v2515
  %2517 = vmatmul.f32.gmra.mxu0 %v367
  %v2518 = vpop.f32.mrf.mxu0
  %v2519 = vadd.f32 %v2484, %v2518
  %2520 = vmatmul.f32.gmra.mxu0 %v497
  %v2521 = vpop.f32.mrf.mxu0
  %v2522 = vadd.f32 %v2487, %v2521
  %2523 = vmatmul.f32.gmra.mxu0 %v627
  %v2524 = vpop.f32.mrf.mxu0
  %v2525 = vadd.f32 %v2490, %v2524
  %2526 = vmatmul.f32.gmra.mxu0 %v757
  %v2527 = vpop.f32.mrf.mxu0
  %v2528 = vadd.f32 %v2493, %v2527
  %2529 = vmatmul.f32.gmra.mxu0 %v887
  %v2530 = vpop.f32.mrf.mxu0
  %v2531 = vadd.f32 %v2496, %v2530
  %2532 = vdwg.mxu0
  %2533 = vmatpush.msra.mxu0 %v1696
  %2534 = vmatpush.msra.mxu0 %v1695
  %2535 = vmatpush.msra.mxu0 %v1694
  %2536 = vmatpush.msra.mxu0 %v1693
  %2537 = vmatpush.msra.mxu0 %v1692
  %2538 = vmatpush.msra.mxu0 %v1691
  %2539 = vmatpush.msra.mxu0 %v1690
  %2540 = vmatpush.msra.mxu0 %v1689
  %2541 = vmatpush.msra.mxu0 %v1688
  %2542 = vmatpush.msra.mxu0 %v1687
  %2543 = vmatpush.msra.mxu0 %v1686
  %2544 = vmatpush.msra.mxu0 %v1685
  %2545 = vmatpush.msra.mxu0 %v1684
  %2546 = vmatpush.msra.mxu0 %v1683
  %2547 = vmatpush.msra.mxu0 %v1682
  %2548 = vmatpush.msra.mxu0 %v1681
  %2549 = vmatmul.f32.gmra.mxu0 %v175
  %v2550 = vpop.f32.mrf.mxu0
  %v2551 = vadd.f32 %v2516, %v2550
  %2552 = vmatmul.f32.gmra.mxu0 %v305
  %v2553 = vpop.f32.mrf.mxu0
  %v2554 = vadd.f32 %v2519, %v2553
  %2555 = vmatmul.f32.gmra.mxu0 %v435
  %v2556 = vpop.f32.mrf.mxu0
  %v2557 = vadd.f32 %v2522, %v2556
  %2558 = vmatmul.f32.gmra.mxu0 %v565
  %v2559 = vpop.f32.mrf.mxu0
  %v2560 = vadd.f32 %v2525, %v2559
  %2561 = vmatmul.f32.gmra.mxu0 %v695
  %v2562 = vpop.f32.mrf.mxu0
  %v2563 = vadd.f32 %v2528, %v2562
  %2564 = vmatmul.f32.gmra.mxu0 %v825
  %v2565 = vpop.f32.mrf.mxu0
  %v2566 = vadd.f32 %v2531, %v2565
  %2567 = vdwg.mxu0
  %2568 = vmatpush.msra.mxu0 %v1712
  %2569 = vmatpush.msra.mxu0 %v1711
  %2570 = vmatpush.msra.mxu0 %v1710
  %2571 = vmatpush.msra.mxu0 %v1709
  %2572 = vmatpush.msra.mxu0 %v1708
  %2573 = vmatpush.msra.mxu0 %v1707
  %2574 = vmatpush.msra.mxu0 %v1706
  %2575 = vmatpush.msra.mxu0 %v1705
  %2576 = vmatpush.msra.mxu0 %v1704
  %2577 = vmatpush.msra.mxu0 %v1703
  %2578 = vmatpush.msra.mxu0 %v1702
  %2579 = vmatpush.msra.mxu0 %v1701
  %2580 = vmatpush.msra.mxu0 %v1700
  %2581 = vmatpush.msra.mxu0 %v1699
  %2582 = vmatpush.msra.mxu0 %v1698
  %2583 = vmatpush.msra.mxu0 %v1697
  %2584 = vmatmul.f32.gmra.mxu0 %v240
  %v2585 = vpop.f32.mrf.mxu0
  %v2586 = vadd.f32 %v2551, %v2585
  %2587 = vmatmul.f32.gmra.mxu0 %v370
  %v2588 = vpop.f32.mrf.mxu0
  %v2589 = vadd.f32 %v2554, %v2588
  %2590 = vmatmul.f32.gmra.mxu0 %v500
  %v2591 = vpop.f32.mrf.mxu0
  %v2592 = vadd.f32 %v2557, %v2591
  %2593 = vmatmul.f32.gmra.mxu0 %v630
  %v2594 = vpop.f32.mrf.mxu0
  %v2595 = vadd.f32 %v2560, %v2594
  %2596 = vmatmul.f32.gmra.mxu0 %v760
  %v2597 = vpop.f32.mrf.mxu0
  %v2598 = vadd.f32 %v2563, %v2597
  %2599 = vmatmul.f32.gmra.mxu0 %v890
  %v2600 = vpop.f32.mrf.mxu0
  %v2601 = vadd.f32 %v2566, %v2600
  %2602 = vdwg.mxu0
  %2603 = vmatpush.msra.mxu0 %v1728
  %2604 = vmatpush.msra.mxu0 %v1727
  %2605 = vmatpush.msra.mxu0 %v1726
  %2606 = vmatpush.msra.mxu0 %v1725
  %2607 = vmatpush.msra.mxu0 %v1724
  %2608 = vmatpush.msra.mxu0 %v1723
  %2609 = vmatpush.msra.mxu0 %v1722
  %2610 = vmatpush.msra.mxu0 %v1721
  %2611 = vmatpush.msra.mxu0 %v1720
  %2612 = vmatpush.msra.mxu0 %v1719
  %2613 = vmatpush.msra.mxu0 %v1718
  %2614 = vmatpush.msra.mxu0 %v1717
  %2615 = vmatpush.msra.mxu0 %v1716
  %2616 = vmatpush.msra.mxu0 %v1715
  %2617 = vmatpush.msra.mxu0 %v1714
  %2618 = vmatpush.msra.mxu0 %v1713
  %2619 = vmatmul.f32.gmra.mxu0 %v178
  %v2620 = vpop.f32.mrf.mxu0
  %v2621 = vadd.f32 %v2586, %v2620
  %2622 = vmatmul.f32.gmra.mxu0 %v308
  %v2623 = vpop.f32.mrf.mxu0
  %v2624 = vadd.f32 %v2589, %v2623
  %2625 = vmatmul.f32.gmra.mxu0 %v438
  %v2626 = vpop.f32.mrf.mxu0
  %v2627 = vadd.f32 %v2592, %v2626
  %2628 = vmatmul.f32.gmra.mxu0 %v568
  %v2629 = vpop.f32.mrf.mxu0
  %v2630 = vadd.f32 %v2595, %v2629
  %2631 = vmatmul.f32.gmra.mxu0 %v698
  %v2632 = vpop.f32.mrf.mxu0
  %v2633 = vadd.f32 %v2598, %v2632
  %2634 = vmatmul.f32.gmra.mxu0 %v828
  %v2635 = vpop.f32.mrf.mxu0
  %v2636 = vadd.f32 %v2601, %v2635
  %2637 = vdwg.mxu0
  %2638 = vmatpush.msra.mxu0 %v1744
  %2639 = vmatpush.msra.mxu0 %v1743
  %2640 = vmatpush.msra.mxu0 %v1742
  %2641 = vmatpush.msra.mxu0 %v1741
  %2642 = vmatpush.msra.mxu0 %v1740
  %2643 = vmatpush.msra.mxu0 %v1739
  %2644 = vmatpush.msra.mxu0 %v1738
  %2645 = vmatpush.msra.mxu0 %v1737
  %2646 = vmatpush.msra.mxu0 %v1736
  %2647 = vmatpush.msra.mxu0 %v1735
  %2648 = vmatpush.msra.mxu0 %v1734
  %2649 = vmatpush.msra.mxu0 %v1733
  %2650 = vmatpush.msra.mxu0 %v1732
  %2651 = vmatpush.msra.mxu0 %v1731
  %2652 = vmatpush.msra.mxu0 %v1730
  %2653 = vmatpush.msra.mxu0 %v1729
  %2654 = vmatmul.f32.gmra.mxu0 %v243
  %v2655 = vpop.f32.mrf.mxu0
  %v2656 = vadd.f32 %v2621, %v2655
  %2657 = vmatmul.f32.gmra.mxu0 %v373
  %v2658 = vpop.f32.mrf.mxu0
  %v2659 = vadd.f32 %v2624, %v2658
  %2660 = vmatmul.f32.gmra.mxu0 %v503
  %v2661 = vpop.f32.mrf.mxu0
  %v2662 = vadd.f32 %v2627, %v2661
  %2663 = vmatmul.f32.gmra.mxu0 %v633
  %v2664 = vpop.f32.mrf.mxu0
  %v2665 = vadd.f32 %v2630, %v2664
  %2666 = vmatmul.f32.gmra.mxu0 %v763
  %v2667 = vpop.f32.mrf.mxu0
  %v2668 = vadd.f32 %v2633, %v2667
  %2669 = vmatmul.f32.gmra.mxu0 %v893
  %v2670 = vpop.f32.mrf.mxu0
  %v2671 = vadd.f32 %v2636, %v2670
  %2672 = vdwg.mxu0
  %2673 = vmatpush.msra.mxu0 %v1760
  %2674 = vmatpush.msra.mxu0 %v1759
  %2675 = vmatpush.msra.mxu0 %v1758
  %2676 = vmatpush.msra.mxu0 %v1757
  %2677 = vmatpush.msra.mxu0 %v1756
  %2678 = vmatpush.msra.mxu0 %v1755
  %2679 = vmatpush.msra.mxu0 %v1754
  %2680 = vmatpush.msra.mxu0 %v1753
  %2681 = vmatpush.msra.mxu0 %v1752
  %2682 = vmatpush.msra.mxu0 %v1751
  %2683 = vmatpush.msra.mxu0 %v1750
  %2684 = vmatpush.msra.mxu0 %v1749
  %2685 = vmatpush.msra.mxu0 %v1748
  %2686 = vmatpush.msra.mxu0 %v1747
  %2687 = vmatpush.msra.mxu0 %v1746
  %2688 = vmatpush.msra.mxu0 %v1745
  %2689 = vmatmul.f32.gmra.mxu0 %v181
  %v2690 = vpop.f32.mrf.mxu0
  %v2691 = vadd.f32 %v2656, %v2690
  %2692 = vmatmul.f32.gmra.mxu0 %v311
  %v2693 = vpop.f32.mrf.mxu0
  %v2694 = vadd.f32 %v2659, %v2693
  %2695 = vmatmul.f32.gmra.mxu0 %v441
  %v2696 = vpop.f32.mrf.mxu0
  %v2697 = vadd.f32 %v2662, %v2696
  %2698 = vmatmul.f32.gmra.mxu0 %v571
  %v2699 = vpop.f32.mrf.mxu0
  %v2700 = vadd.f32 %v2665, %v2699
  %2701 = vmatmul.f32.gmra.mxu0 %v701
  %v2702 = vpop.f32.mrf.mxu0
  %v2703 = vadd.f32 %v2668, %v2702
  %2704 = vmatmul.f32.gmra.mxu0 %v831
  %v2705 = vpop.f32.mrf.mxu0
  %v2706 = vadd.f32 %v2671, %v2705
  %2707 = vdwg.mxu0
  %2708 = vmatpush.msra.mxu0 %v1776
  %2709 = vmatpush.msra.mxu0 %v1775
  %2710 = vmatpush.msra.mxu0 %v1774
  %2711 = vmatpush.msra.mxu0 %v1773
  %2712 = vmatpush.msra.mxu0 %v1772
  %2713 = vmatpush.msra.mxu0 %v1771
  %2714 = vmatpush.msra.mxu0 %v1770
  %2715 = vmatpush.msra.mxu0 %v1769
  %2716 = vmatpush.msra.mxu0 %v1768
  %2717 = vmatpush.msra.mxu0 %v1767
  %2718 = vmatpush.msra.mxu0 %v1766
  %2719 = vmatpush.msra.mxu0 %v1765
  %2720 = vmatpush.msra.mxu0 %v1764
  %2721 = vmatpush.msra.mxu0 %v1763
  %2722 = vmatpush.msra.mxu0 %v1762
  %2723 = vmatpush.msra.mxu0 %v1761
  %2724 = vmatmul.f32.gmra.mxu0 %v246
  %v2725 = vpop.f32.mrf.mxu0
  %v2726 = vadd.f32 %v2691, %v2725
  %2727 = vmatmul.f32.gmra.mxu0 %v376
  %v2728 = vpop.f32.mrf.mxu0
  %v2729 = vadd.f32 %v2694, %v2728
  %2730 = vmatmul.f32.gmra.mxu0 %v506
  %v2731 = vpop.f32.mrf.mxu0
  %v2732 = vadd.f32 %v2697, %v2731
  %2733 = vmatmul.f32.gmra.mxu0 %v636
  %v2734 = vpop.f32.mrf.mxu0
  %v2735 = vadd.f32 %v2700, %v2734
  %2736 = vmatmul.f32.gmra.mxu0 %v766
  %v2737 = vpop.f32.mrf.mxu0
  %v2738 = vadd.f32 %v2703, %v2737
  %2739 = vmatmul.f32.gmra.mxu0 %v896
  %v2740 = vpop.f32.mrf.mxu0
  %v2741 = vadd.f32 %v2706, %v2740
  %2742 = vdwg.mxu0
  %2743 = vmatpush.msra.mxu0 %v1792
  %2744 = vmatpush.msra.mxu0 %v1791
  %2745 = vmatpush.msra.mxu0 %v1790
  %2746 = vmatpush.msra.mxu0 %v1789
  %2747 = vmatpush.msra.mxu0 %v1788
  %2748 = vmatpush.msra.mxu0 %v1787
  %2749 = vmatpush.msra.mxu0 %v1786
  %2750 = vmatpush.msra.mxu0 %v1785
  %2751 = vmatpush.msra.mxu0 %v1784
  %2752 = vmatpush.msra.mxu0 %v1783
  %2753 = vmatpush.msra.mxu0 %v1782
  %2754 = vmatpush.msra.mxu0 %v1781
  %2755 = vmatpush.msra.mxu0 %v1780
  %2756 = vmatpush.msra.mxu0 %v1779
  %2757 = vmatpush.msra.mxu0 %v1778
  %2758 = vmatpush.msra.mxu0 %v1777
  %2759 = vmatmul.f32.gmra.mxu0 %v184
  %v2760 = vpop.f32.mrf.mxu0
  %v2761 = vadd.f32 %v2726, %v2760
  %2762 = vmatmul.f32.gmra.mxu0 %v314
  %v2763 = vpop.f32.mrf.mxu0
  %v2764 = vadd.f32 %v2729, %v2763
  %2765 = vmatmul.f32.gmra.mxu0 %v444
  %v2766 = vpop.f32.mrf.mxu0
  %v2767 = vadd.f32 %v2732, %v2766
  %2768 = vmatmul.f32.gmra.mxu0 %v574
  %v2769 = vpop.f32.mrf.mxu0
  %v2770 = vadd.f32 %v2735, %v2769
  %2771 = vmatmul.f32.gmra.mxu0 %v704
  %v2772 = vpop.f32.mrf.mxu0
  %v2773 = vadd.f32 %v2738, %v2772
  %2774 = vmatmul.f32.gmra.mxu0 %v834
  %v2775 = vpop.f32.mrf.mxu0
  %v2776 = vadd.f32 %v2741, %v2775
  %2777 = vdwg.mxu0
  %2778 = vmatpush.msra.mxu0 %v1808
  %2779 = vmatpush.msra.mxu0 %v1807
  %2780 = vmatpush.msra.mxu0 %v1806
  %2781 = vmatpush.msra.mxu0 %v1805
  %2782 = vmatpush.msra.mxu0 %v1804
  %2783 = vmatpush.msra.mxu0 %v1803
  %2784 = vmatpush.msra.mxu0 %v1802
  %2785 = vmatpush.msra.mxu0 %v1801
  %2786 = vmatpush.msra.mxu0 %v1800
  %2787 = vmatpush.msra.mxu0 %v1799
  %2788 = vmatpush.msra.mxu0 %v1798
  %2789 = vmatpush.msra.mxu0 %v1797
  %2790 = vmatpush.msra.mxu0 %v1796
  %2791 = vmatpush.msra.mxu0 %v1795
  %2792 = vmatpush.msra.mxu0 %v1794
  %2793 = vmatpush.msra.mxu0 %v1793
  %2794 = vmatmul.f32.gmra.mxu0 %v249
  %v2795 = vpop.f32.mrf.mxu0
  %v2796 = vadd.f32 %v2761, %v2795
  %2797 = vmatmul.f32.gmra.mxu0 %v379
  %v2798 = vpop.f32.mrf.mxu0
  %v2799 = vadd.f32 %v2764, %v2798
  %2800 = vmatmul.f32.gmra.mxu0 %v509
  %v2801 = vpop.f32.mrf.mxu0
  %v2802 = vadd.f32 %v2767, %v2801
  %2803 = vmatmul.f32.gmra.mxu0 %v639
  %v2804 = vpop.f32.mrf.mxu0
  %v2805 = vadd.f32 %v2770, %v2804
  %2806 = vmatmul.f32.gmra.mxu0 %v769
  %v2807 = vpop.f32.mrf.mxu0
  %v2808 = vadd.f32 %v2773, %v2807
  %2809 = vmatmul.f32.gmra.mxu0 %v899
  %v2810 = vpop.f32.mrf.mxu0
  %v2811 = vadd.f32 %v2776, %v2810
  %2812 = vdwg.mxu0
  %2813 = vmatpush.msra.mxu0 %v1824
  %2814 = vmatpush.msra.mxu0 %v1823
  %2815 = vmatpush.msra.mxu0 %v1822
  %2816 = vmatpush.msra.mxu0 %v1821
  %2817 = vmatpush.msra.mxu0 %v1820
  %2818 = vmatpush.msra.mxu0 %v1819
  %2819 = vmatpush.msra.mxu0 %v1818
  %2820 = vmatpush.msra.mxu0 %v1817
  %2821 = vmatpush.msra.mxu0 %v1816
  %2822 = vmatpush.msra.mxu0 %v1815
  %2823 = vmatpush.msra.mxu0 %v1814
  %2824 = vmatpush.msra.mxu0 %v1813
  %2825 = vmatpush.msra.mxu0 %v1812
  %2826 = vmatpush.msra.mxu0 %v1811
  %2827 = vmatpush.msra.mxu0 %v1810
  %2828 = vmatpush.msra.mxu0 %v1809
  %2829 = vmatmul.f32.gmra.mxu0 %v187
  %v2830 = vpop.f32.mrf.mxu0
  %v2831 = vadd.f32 %v2796, %v2830
  %2832 = vmatmul.f32.gmra.mxu0 %v317
  %v2833 = vpop.f32.mrf.mxu0
  %v2834 = vadd.f32 %v2799, %v2833
  %2835 = vmatmul.f32.gmra.mxu0 %v447
  %v2836 = vpop.f32.mrf.mxu0
  %v2837 = vadd.f32 %v2802, %v2836
  %2838 = vmatmul.f32.gmra.mxu0 %v577
  %v2839 = vpop.f32.mrf.mxu0
  %v2840 = vadd.f32 %v2805, %v2839
  %2841 = vmatmul.f32.gmra.mxu0 %v707
  %v2842 = vpop.f32.mrf.mxu0
  %v2843 = vadd.f32 %v2808, %v2842
  %2844 = vmatmul.f32.gmra.mxu0 %v837
  %v2845 = vpop.f32.mrf.mxu0
  %v2846 = vadd.f32 %v2811, %v2845
  %2847 = vdwg.mxu0
  %2848 = vmatpush.msra.mxu0 %v1840
  %2849 = vmatpush.msra.mxu0 %v1839
  %2850 = vmatpush.msra.mxu0 %v1838
  %2851 = vmatpush.msra.mxu0 %v1837
  %2852 = vmatpush.msra.mxu0 %v1836
  %2853 = vmatpush.msra.mxu0 %v1835
  %2854 = vmatpush.msra.mxu0 %v1834
  %2855 = vmatpush.msra.mxu0 %v1833
  %2856 = vmatpush.msra.mxu0 %v1832
  %2857 = vmatpush.msra.mxu0 %v1831
  %2858 = vmatpush.msra.mxu0 %v1830
  %2859 = vmatpush.msra.mxu0 %v1829
  %2860 = vmatpush.msra.mxu0 %v1828
  %2861 = vmatpush.msra.mxu0 %v1827
  %2862 = vmatpush.msra.mxu0 %v1826
  %2863 = vmatpush.msra.mxu0 %v1825
  %2864 = vmatmul.f32.gmra.mxu0 %v252
  %v2865 = vpop.f32.mrf.mxu0
  %v2866 = vadd.f32 %v2831, %v2865
  %2867 = vmatmul.f32.gmra.mxu0 %v382
  %v2868 = vpop.f32.mrf.mxu0
  %v2869 = vadd.f32 %v2834, %v2868
  %2870 = vmatmul.f32.gmra.mxu0 %v512
  %v2871 = vpop.f32.mrf.mxu0
  %v2872 = vadd.f32 %v2837, %v2871
  %2873 = vmatmul.f32.gmra.mxu0 %v642
  %v2874 = vpop.f32.mrf.mxu0
  %v2875 = vadd.f32 %v2840, %v2874
  %2876 = vmatmul.f32.gmra.mxu0 %v772
  %v2877 = vpop.f32.mrf.mxu0
  %v2878 = vadd.f32 %v2843, %v2877
  %2879 = vmatmul.f32.gmra.mxu0 %v902
  %v2880 = vpop.f32.mrf.mxu0
  %v2881 = vadd.f32 %v2846, %v2880
  %2882 = vdwg.mxu0
  %2883 = vmatpush.msra.mxu0 %v1856
  %2884 = vmatpush.msra.mxu0 %v1855
  %2885 = vmatpush.msra.mxu0 %v1854
  %2886 = vmatpush.msra.mxu0 %v1853
  %2887 = vmatpush.msra.mxu0 %v1852
  %2888 = vmatpush.msra.mxu0 %v1851
  %2889 = vmatpush.msra.mxu0 %v1850
  %2890 = vmatpush.msra.mxu0 %v1849
  %2891 = vmatpush.msra.mxu0 %v1848
  %2892 = vmatpush.msra.mxu0 %v1847
  %2893 = vmatpush.msra.mxu0 %v1846
  %2894 = vmatpush.msra.mxu0 %v1845
  %2895 = vmatpush.msra.mxu0 %v1844
  %2896 = vmatpush.msra.mxu0 %v1843
  %2897 = vmatpush.msra.mxu0 %v1842
  %2898 = vmatpush.msra.mxu0 %v1841
  %2899 = vmatmul.f32.gmra.mxu0 %v190
  %v2900 = vpop.f32.mrf.mxu0
  %v2901 = vadd.f32 %v2866, %v2900
  %2902 = vmatmul.f32.gmra.mxu0 %v320
  %v2903 = vpop.f32.mrf.mxu0
  %v2904 = vadd.f32 %v2869, %v2903
  %2905 = vmatmul.f32.gmra.mxu0 %v450
  %v2906 = vpop.f32.mrf.mxu0
  %v2907 = vadd.f32 %v2872, %v2906
  %2908 = vmatmul.f32.gmra.mxu0 %v580
  %v2909 = vpop.f32.mrf.mxu0
  %v2910 = vadd.f32 %v2875, %v2909
  %2911 = vmatmul.f32.gmra.mxu0 %v710
  %v2912 = vpop.f32.mrf.mxu0
  %v2913 = vadd.f32 %v2878, %v2912
  %2914 = vmatmul.f32.gmra.mxu0 %v840
  %v2915 = vpop.f32.mrf.mxu0
  %v2916 = vadd.f32 %v2881, %v2915
  %2917 = vdwg.mxu0
  %2918 = vmatpush.msra.mxu0 %v1872
  %2919 = vmatpush.msra.mxu0 %v1871
  %2920 = vmatpush.msra.mxu0 %v1870
  %2921 = vmatpush.msra.mxu0 %v1869
  %2922 = vmatpush.msra.mxu0 %v1868
  %2923 = vmatpush.msra.mxu0 %v1867
  %2924 = vmatpush.msra.mxu0 %v1866
  %2925 = vmatpush.msra.mxu0 %v1865
  %2926 = vmatpush.msra.mxu0 %v1864
  %2927 = vmatpush.msra.mxu0 %v1863
  %2928 = vmatpush.msra.mxu0 %v1862
  %2929 = vmatpush.msra.mxu0 %v1861
  %2930 = vmatpush.msra.mxu0 %v1860
  %2931 = vmatpush.msra.mxu0 %v1859
  %2932 = vmatpush.msra.mxu0 %v1858
  %2933 = vmatpush.msra.mxu0 %v1857
  %2934 = vmatmul.f32.gmra.mxu0 %v255
  %v2935 = vpop.f32.mrf.mxu0
  %v2936 = vadd.f32 %v2901, %v2935
  %2937 = vmatmul.f32.gmra.mxu0 %v385
  %v2938 = vpop.f32.mrf.mxu0
  %v2939 = vadd.f32 %v2904, %v2938
  %2940 = vmatmul.f32.gmra.mxu0 %v515
  %v2941 = vpop.f32.mrf.mxu0
  %v2942 = vadd.f32 %v2907, %v2941
  %2943 = vmatmul.f32.gmra.mxu0 %v645
  %v2944 = vpop.f32.mrf.mxu0
  %v2945 = vadd.f32 %v2910, %v2944
  %2946 = vmatmul.f32.gmra.mxu0 %v775
  %v2947 = vpop.f32.mrf.mxu0
  %v2948 = vadd.f32 %v2913, %v2947
  %2949 = vmatmul.f32.gmra.mxu0 %v905
  %v2950 = vpop.f32.mrf.mxu0
  %v2951 = vadd.f32 %v2916, %v2950
  %2952 = vdwg.mxu0
  %2953 = vmatpush.msra.mxu0 %v1888
  %2954 = vmatpush.msra.mxu0 %v1887
  %2955 = vmatpush.msra.mxu0 %v1886
  %2956 = vmatpush.msra.mxu0 %v1885
  %2957 = vmatpush.msra.mxu0 %v1884
  %2958 = vmatpush.msra.mxu0 %v1883
  %2959 = vmatpush.msra.mxu0 %v1882
  %2960 = vmatpush.msra.mxu0 %v1881
  %2961 = vmatpush.msra.mxu0 %v1880
  %2962 = vmatpush.msra.mxu0 %v1879
  %2963 = vmatpush.msra.mxu0 %v1878
  %2964 = vmatpush.msra.mxu0 %v1877
  %2965 = vmatpush.msra.mxu0 %v1876
  %2966 = vmatpush.msra.mxu0 %v1875
  %2967 = vmatpush.msra.mxu0 %v1874
  %2968 = vmatpush.msra.mxu0 %v1873
  %2969 = vmatmul.f32.gmra.mxu0 %v193
  %v2970 = vpop.f32.mrf.mxu0
  %v2971 = vadd.f32 %v2936, %v2970
  %2972 = vmatmul.f32.gmra.mxu0 %v323
  %v2973 = vpop.f32.mrf.mxu0
  %v2974 = vadd.f32 %v2939, %v2973
  %2975 = vmatmul.f32.gmra.mxu0 %v453
  %v2976 = vpop.f32.mrf.mxu0
  %v2977 = vadd.f32 %v2942, %v2976
  %2978 = vmatmul.f32.gmra.mxu0 %v583
  %v2979 = vpop.f32.mrf.mxu0
  %v2980 = vadd.f32 %v2945, %v2979
  %2981 = vmatmul.f32.gmra.mxu0 %v713
  %v2982 = vpop.f32.mrf.mxu0
  %v2983 = vadd.f32 %v2948, %v2982
  %2984 = vmatmul.f32.gmra.mxu0 %v843
  %v2985 = vpop.f32.mrf.mxu0
  %v2986 = vadd.f32 %v2951, %v2985
  %2987 = vdwg.mxu0
  %2988 = vmatpush.msra.mxu0 %v1904
  %2989 = vmatpush.msra.mxu0 %v1903
  %2990 = vmatpush.msra.mxu0 %v1902
  %2991 = vmatpush.msra.mxu0 %v1901
  %2992 = vmatpush.msra.mxu0 %v1900
  %2993 = vmatpush.msra.mxu0 %v1899
  %2994 = vmatpush.msra.mxu0 %v1898
  %2995 = vmatpush.msra.mxu0 %v1897
  %2996 = vmatpush.msra.mxu0 %v1896
  %2997 = vmatpush.msra.mxu0 %v1895
  %2998 = vmatpush.msra.mxu0 %v1894
  %2999 = vmatpush.msra.mxu0 %v1893
  %3000 = vmatpush.msra.mxu0 %v1892
  %3001 = vmatpush.msra.mxu0 %v1891
  %3002 = vmatpush.msra.mxu0 %v1890
  %3003 = vmatpush.msra.mxu0 %v1889
  %3004 = vmatmul.f32.gmra.mxu0 %v258
  %v3005 = vpop.f32.mrf.mxu0
  %v3006 = vadd.f32 %v2971, %v3005
  %3007 = vmatmul.f32.gmra.mxu0 %v388
  %v3008 = vpop.f32.mrf.mxu0
  %v3009 = vadd.f32 %v2974, %v3008
  %3010 = vmatmul.f32.gmra.mxu0 %v518
  %v3011 = vpop.f32.mrf.mxu0
  %v3012 = vadd.f32 %v2977, %v3011
  %3013 = vmatmul.f32.gmra.mxu0 %v648
  %v3014 = vpop.f32.mrf.mxu0
  %v3015 = vadd.f32 %v2980, %v3014
  %3016 = vmatmul.f32.gmra.mxu0 %v778
  %v3017 = vpop.f32.mrf.mxu0
  %v3018 = vadd.f32 %v2983, %v3017
  %3019 = vmatmul.f32.gmra.mxu0 %v908
  %v3020 = vpop.f32.mrf.mxu0
  %v3021 = vadd.f32 %v2986, %v3020
  %3022 = vdwg.mxu0
  %3023 = vmatpush.msra.mxu0 %v1920
  %3024 = vmatpush.msra.mxu0 %v1919
  %3025 = vmatpush.msra.mxu0 %v1918
  %3026 = vmatpush.msra.mxu0 %v1917
  %3027 = vmatpush.msra.mxu0 %v1916
  %3028 = vmatpush.msra.mxu0 %v1915
  %3029 = vmatpush.msra.mxu0 %v1914
  %3030 = vmatpush.msra.mxu0 %v1913
  %3031 = vmatpush.msra.mxu0 %v1912
  %3032 = vmatpush.msra.mxu0 %v1911
  %3033 = vmatpush.msra.mxu0 %v1910
  %3034 = vmatpush.msra.mxu0 %v1909
  %3035 = vmatpush.msra.mxu0 %v1908
  %3036 = vmatpush.msra.mxu0 %v1907
  %3037 = vmatpush.msra.mxu0 %v1906
  %3038 = vmatpush.msra.mxu0 %v1905
  %3039 = vmatmul.f32.gmra.mxu0 %v196
  %v3040 = vpop.f32.mrf.mxu0
  %v3041 = vadd.f32 %v3006, %v3040
  %3042 = vmatmul.f32.gmra.mxu0 %v326
  %v3043 = vpop.f32.mrf.mxu0
  %v3044 = vadd.f32 %v3009, %v3043
  %3045 = vmatmul.f32.gmra.mxu0 %v456
  %v3046 = vpop.f32.mrf.mxu0
  %v3047 = vadd.f32 %v3012, %v3046
  %3048 = vmatmul.f32.gmra.mxu0 %v586
  %v3049 = vpop.f32.mrf.mxu0
  %v3050 = vadd.f32 %v3015, %v3049
  %3051 = vmatmul.f32.gmra.mxu0 %v716
  %v3052 = vpop.f32.mrf.mxu0
  %v3053 = vadd.f32 %v3018, %v3052
  %3054 = vmatmul.f32.gmra.mxu0 %v846
  %v3055 = vpop.f32.mrf.mxu0
  %v3056 = vadd.f32 %v3021, %v3055
  %3057 = vdwg.mxu0
  %3058 = vmatpush.msra.mxu0 %v1936
  %3059 = vmatpush.msra.mxu0 %v1935
  %3060 = vmatpush.msra.mxu0 %v1934
  %3061 = vmatpush.msra.mxu0 %v1933
  %3062 = vmatpush.msra.mxu0 %v1932
  %3063 = vmatpush.msra.mxu0 %v1931
  %3064 = vmatpush.msra.mxu0 %v1930
  %3065 = vmatpush.msra.mxu0 %v1929
  %3066 = vmatpush.msra.mxu0 %v1928
  %3067 = vmatpush.msra.mxu0 %v1927
  %3068 = vmatpush.msra.mxu0 %v1926
  %3069 = vmatpush.msra.mxu0 %v1925
  %3070 = vmatpush.msra.mxu0 %v1924
  %3071 = vmatpush.msra.mxu0 %v1923
  %3072 = vmatpush.msra.mxu0 %v1922
  %3073 = vmatpush.msra.mxu0 %v1921
  %3074 = vmatmul.f32.gmra.mxu0 %v261
  %v3075 = vpop.f32.mrf.mxu0
  %v3076 = vadd.f32 %v3041, %v3075
  %3077 = vmatmul.f32.gmra.mxu0 %v391
  %v3078 = vpop.f32.mrf.mxu0
  %v3079 = vadd.f32 %v3044, %v3078
  %3080 = vmatmul.f32.gmra.mxu0 %v521
  %v3081 = vpop.f32.mrf.mxu0
  %v3082 = vadd.f32 %v3047, %v3081
  %3083 = vmatmul.f32.gmra.mxu0 %v651
  %v3084 = vpop.f32.mrf.mxu0
  %v3085 = vadd.f32 %v3050, %v3084
  %3086 = vmatmul.f32.gmra.mxu0 %v781
  %v3087 = vpop.f32.mrf.mxu0
  %v3088 = vadd.f32 %v3053, %v3087
  %3089 = vmatmul.f32.gmra.mxu0 %v911
  %v3090 = vpop.f32.mrf.mxu0
  %v3091 = vadd.f32 %v3056, %v3090
  %3092 = vdwg.mxu0
  %vm3093 = vcmp.ge.f32.partialorder %v3076, 0.0
  %vm3094 = vcmp.ge.f32.partialorder %v3079, 0.0
  %vm3095 = vcmp.ge.f32.partialorder %v3082, 0.0
  %vm3096 = vcmp.ge.f32.partialorder %v3085, 0.0
  %vm3097 = vcmp.ge.f32.partialorder %v3088, 0.0
  %vm3098 = vcmp.ge.f32.partialorder %v3091, 0.0
  %v3099 = vmul.f32 %v3076, 0.2
  %v3100 = vmul.f32 %v3079, 0.2
  %v3101 = vmul.f32 %v3082, 0.2
  %v3102 = vmul.f32 %v3085, 0.2
  %v3103 = vmul.f32 %v3088, 0.2
  %v3104 = vmul.f32 %v3091, 0.2
  %v3105 = vsel %vm3093, %v3076, %v3099
  %v3106 = vsel %vm3094, %v3079, %v3100
  %v3107 = vsel %vm3095, %v3082, %v3101
  %v3108 = vsel %vm3096, %v3085, %v3102
  %v3109 = vsel %vm3097, %v3088, %v3103
  %v3110 = vsel %vm3098, %v3091, %v3104
  %v3111 = vld [vmem:[%s5] sm:$0xff]
  %v3112 = vld [vmem:[%s5 + $0x8] sm:$0xff]
  %v3113 = vld [vmem:[%s5 + $0x10] sm:$0xff]
  %v3114 = vld [vmem:[%s5 + $0x18] sm:$0xff]
  %v3115 = vld [vmem:[%s5 + $0x20] sm:$0xff]
  %v3116 = vld [vmem:[%s5 + $0x28] sm:$0xff]
  %v3117 = vld [vmem:[%s5 + $0x30] sm:$0xff]
  %v3118 = vld [vmem:[%s5 + $0x38] sm:$0xff]
  %v3119 = vld [vmem:[%s5 + $0x40] sm:$0xff]
  %v3120 = vld [vmem:[%s5 + $0x48] sm:$0xff]
  %v3121 = vld [vmem:[%s5 + $0x50] sm:$0xff]
  %v3122 = vld [vmem:[%s5 + $0x58] sm:$0xff]
  %v3123 = vld [vmem:[%s5 + $0x60] sm:$0xff]
  %v3124 = vld [vmem:[%s5 + $0x68] sm:$0xff]
  %v3125 = vld [vmem:[%s5 + $0x70] sm:$0xff]
  %v3126 = vld [vmem:[%s5 + $0x78] sm:$0xff]
  %v3127 = vld [vmem:[%s5 + $0x80] sm:$0xff]
  %v3128 = vld [vmem:[%s5 + $0x88] sm:$0xff]
  %v3129 = vld [vmem:[%s5 + $0x90] sm:$0xff]
  %v3130 = vld [vmem:[%s5 + $0x98] sm:$0xff]
  %v3131 = vld [vmem:[%s5 + $0xa0] sm:$0xff]
  %v3132 = vld [vmem:[%s5 + $0xa8] sm:$0xff]
  %v3133 = vld [vmem:[%s5 + $0xb0] sm:$0xff]
  %v3134 = vld [vmem:[%s5 + $0xb8] sm:$0xff]
  %v3135 = vld [vmem:[%s5 + $0xc0] sm:$0xff]
  %v3136 = vld [vmem:[%s5 + $0xc8] sm:$0xff]
  %v3137 = vld [vmem:[%s5 + $0xd0] sm:$0xff]
  %v3138 = vld [vmem:[%s5 + $0xd8] sm:$0xff]
  %v3139 = vld [vmem:[%s5 + $0xe0] sm:$0xff]
  %v3140 = vld [vmem:[%s5 + $0xe8] sm:$0xff]
  %v3141 = vld [vmem:[%s5 + $0xf0] sm:$0xff]
  %v3142 = vld [vmem:[%s5 + $0xf8] sm:$0xff]
  %v3144 = vsel %vm84, %v3111, 0
  %v3147 = vsel %vm84, %v3112, 0
  %v3150 = vsel %vm84, %v3113, 0
  %v3153 = vsel %vm84, %v3114, 0
  %v3156 = vsel %vm84, %v3115, 0
  %v3159 = vsel %vm84, %v3116, 0
  %v3162 = vsel %vm84, %v3117, 0
  %v3165 = vsel %vm84, %v3118, 0
  %v3168 = vsel %vm84, %v3119, 0
  %v3171 = vsel %vm84, %v3120, 0
  %v3174 = vsel %vm84, %v3121, 0
  %v3177 = vsel %vm84, %v3122, 0
  %v3180 = vsel %vm84, %v3123, 0
  %v3183 = vsel %vm84, %v3124, 0
  %v3186 = vsel %vm84, %v3125, 0
  %v3189 = vsel %vm84, %v3126, 0
  %v3192 = vsel %vm84, %v3127, 0
  %v3195 = vsel %vm84, %v3128, 0
  %v3198 = vsel %vm84, %v3129, 0
  %v3201 = vsel %vm84, %v3130, 0
  %v3204 = vsel %vm84, %v3131, 0
  %v3207 = vsel %vm84, %v3132, 0
  %v3210 = vsel %vm84, %v3133, 0
  %v3213 = vsel %vm84, %v3134, 0
  %v3216 = vsel %vm84, %v3135, 0
  %v3219 = vsel %vm84, %v3136, 0
  %v3222 = vsel %vm84, %v3137, 0
  %v3225 = vsel %vm84, %v3138, 0
  %v3228 = vsel %vm84, %v3139, 0
  %v3231 = vsel %vm84, %v3140, 0
  %v3234 = vsel %vm84, %v3141, 0
  %v3237 = vsel %vm84, %v3142, 0
  %3239 = vmatpush.msra.mxu0 0.0
  %3240 = vmatpush.msra.mxu0 0.0
  %3241 = vmatpush.msra.mxu0 0.0
  %3242 = vmatpush.msra.mxu0 0.0
  %3243 = vmatpush.msra.mxu0 0.0
  %3244 = vmatpush.msra.mxu0 0.0
  %3245 = vmatpush.msra.mxu0 0.0
  %3246 = vmatpush.msra.mxu0 0.0
  %3247 = vmatpush.msra.mxu0 0.0
  %3248 = vmatpush.msra.mxu0 0.0
  %3249 = vmatpush.msra.mxu0 0.0
  %3250 = vmatpush.msra.mxu0 0.0
  %3251 = vmatpush.msra.mxu0 0.0
  %3252 = vmatpush.msra.mxu0 0.0
  %3253 = vmatpush.msra.mxu0 0.0
  %3254 = vmatpush.msra.mxu0 %v3105
  %3255 = vmatmul.f32.gmra.mxu0 %v3144
  %v3256 = vpop.f32.mrf.mxu0
  %v3257 = vadd.f32 0.0, %v3256
  %3258 = vmatmul.f32.gmra.mxu0 %v3147
  %v3259 = vpop.f32.mrf.mxu0
  %v3260 = vadd.f32 0.0, %v3259
  %3261 = vmatmul.f32.gmra.mxu0 %v3150
  %v3262 = vpop.f32.mrf.mxu0
  %v3263 = vadd.f32 0.0, %v3262
  %3264 = vmatmul.f32.gmra.mxu0 %v3153
  %v3265 = vpop.f32.mrf.mxu0
  %v3266 = vadd.f32 0.0, %v3265
  %3267 = vmatmul.f32.gmra.mxu0 %v3156
  %v3268 = vpop.f32.mrf.mxu0
  %v3269 = vadd.f32 0.0, %v3268
  %3270 = vmatmul.f32.gmra.mxu0 %v3159
  %v3271 = vpop.f32.mrf.mxu0
  %v3272 = vadd.f32 0.0, %v3271
  %3273 = vmatmul.f32.gmra.mxu0 %v3162
  %v3274 = vpop.f32.mrf.mxu0
  %v3275 = vadd.f32 0.0, %v3274
  %3276 = vmatmul.f32.gmra.mxu0 %v3165
  %v3277 = vpop.f32.mrf.mxu0
  %v3278 = vadd.f32 0.0, %v3277
  %3279 = vmatmul.f32.gmra.mxu0 %v3168
  %v3280 = vpop.f32.mrf.mxu0
  %v3281 = vadd.f32 0.0, %v3280
  %3282 = vmatmul.f32.gmra.mxu0 %v3171
  %v3283 = vpop.f32.mrf.mxu0
  %v3284 = vadd.f32 0.0, %v3283
  %3285 = vmatmul.f32.gmra.mxu0 %v3174
  %v3286 = vpop.f32.mrf.mxu0
  %v3287 = vadd.f32 0.0, %v3286
  %3288 = vmatmul.f32.gmra.mxu0 %v3177
  %v3289 = vpop.f32.mrf.mxu0
  %v3290 = vadd.f32 0.0, %v3289
  %3291 = vmatmul.f32.gmra.mxu0 %v3180
  %v3292 = vpop.f32.mrf.mxu0
  %v3293 = vadd.f32 0.0, %v3292
  %3294 = vmatmul.f32.gmra.mxu0 %v3183
  %v3295 = vpop.f32.mrf.mxu0
  %v3296 = vadd.f32 0.0, %v3295
  %3297 = vmatmul.f32.gmra.mxu0 %v3186
  %v3298 = vpop.f32.mrf.mxu0
  %v3299 = vadd.f32 0.0, %v3298
  %3300 = vmatmul.f32.gmra.mxu0 %v3189
  %v3301 = vpop.f32.mrf.mxu0
  %v3302 = vadd.f32 0.0, %v3301
  %3303 = vmatmul.f32.gmra.mxu0 %v3192
  %v3304 = vpop.f32.mrf.mxu0
  %v3305 = vadd.f32 0.0, %v3304
  %3306 = vmatmul.f32.gmra.mxu0 %v3195
  %v3307 = vpop.f32.mrf.mxu0
  %v3308 = vadd.f32 0.0, %v3307
  %3309 = vmatmul.f32.gmra.mxu0 %v3198
  %v3310 = vpop.f32.mrf.mxu0
  %v3311 = vadd.f32 0.0, %v3310
  %3312 = vmatmul.f32.gmra.mxu0 %v3201
  %v3313 = vpop.f32.mrf.mxu0
  %v3314 = vadd.f32 0.0, %v3313
  %3315 = vmatmul.f32.gmra.mxu0 %v3204
  %v3316 = vpop.f32.mrf.mxu0
  %v3317 = vadd.f32 0.0, %v3316
  %3318 = vmatmul.f32.gmra.mxu0 %v3207
  %v3319 = vpop.f32.mrf.mxu0
  %v3320 = vadd.f32 0.0, %v3319
  %3321 = vmatmul.f32.gmra.mxu0 %v3210
  %v3322 = vpop.f32.mrf.mxu0
  %v3323 = vadd.f32 0.0, %v3322
  %3324 = vmatmul.f32.gmra.mxu0 %v3213
  %v3325 = vpop.f32.mrf.mxu0
  %v3326 = vadd.f32 0.0, %v3325
  %3327 = vmatmul.f32.gmra.mxu0 %v3216
  %v3328 = vpop.f32.mrf.mxu0
  %v3329 = vadd.f32 0.0, %v3328
  %3330 = vmatmul.f32.gmra.mxu0 %v3219
  %v3331 = vpop.f32.mrf.mxu0
  %v3332 = vadd.f32 0.0, %v3331
  %3333 = vmatmul.f32.gmra.mxu0 %v3222
  %v3334 = vpop.f32.mrf.mxu0
  %v3335 = vadd.f32 0.0, %v3334
  %3336 = vmatmul.f32.gmra.mxu0 %v3225
  %v3337 = vpop.f32.mrf.mxu0
  %v3338 = vadd.f32 0.0, %v3337
  %3339 = vmatmul.f32.gmra.mxu0 %v3228
  %v3340 = vpop.f32.mrf.mxu0
  %v3341 = vadd.f32 0.0, %v3340
  %3342 = vmatmul.f32.gmra.mxu0 %v3231
  %v3343 = vpop.f32.mrf.mxu0
  %v3344 = vadd.f32 0.0, %v3343
  %3345 = vmatmul.f32.gmra.mxu0 %v3234
  %v3346 = vpop.f32.mrf.mxu0
  %v3347 = vadd.f32 0.0, %v3346
  %3348 = vmatmul.f32.gmra.mxu0 %v3237
  %v3349 = vpop.f32.mrf.mxu0
  %v3350 = vadd.f32 0.0, %v3349
  %3351 = vdwg.mxu0
  %3352 = vmatpush.msra.mxu0 0.0
  %3353 = vmatpush.msra.mxu0 0.0
  %3354 = vmatpush.msra.mxu0 0.0
  %3355 = vmatpush.msra.mxu0 0.0
  %3356 = vmatpush.msra.mxu0 0.0
  %3357 = vmatpush.msra.mxu0 0.0
  %3358 = vmatpush.msra.mxu0 0.0
  %3359 = vmatpush.msra.mxu0 0.0
  %3360 = vmatpush.msra.mxu0 0.0
  %3361 = vmatpush.msra.mxu0 0.0
  %3362 = vmatpush.msra.mxu0 0.0
  %3363 = vmatpush.msra.mxu0 0.0
  %3364 = vmatpush.msra.mxu0 0.0
  %3365 = vmatpush.msra.mxu0 0.0
  %3366 = vmatpush.msra.mxu0 0.0
  %3367 = vmatpush.msra.mxu0 %v3106
  %3368 = vmatmul.f32.gmra.mxu0 %v3144
  %v3369 = vpop.f32.mrf.mxu0
  %v3370 = vadd.f32 0.0, %v3369
  %3371 = vmatmul.f32.gmra.mxu0 %v3147
  %v3372 = vpop.f32.mrf.mxu0
  %v3373 = vadd.f32 0.0, %v3372
  %3374 = vmatmul.f32.gmra.mxu0 %v3150
  %v3375 = vpop.f32.mrf.mxu0
  %v3376 = vadd.f32 0.0, %v3375
  %3377 = vmatmul.f32.gmra.mxu0 %v3153
  %v3378 = vpop.f32.mrf.mxu0
  %v3379 = vadd.f32 0.0, %v3378
  %3380 = vmatmul.f32.gmra.mxu0 %v3156
  %v3381 = vpop.f32.mrf.mxu0
  %v3382 = vadd.f32 0.0, %v3381
  %3383 = vmatmul.f32.gmra.mxu0 %v3159
  %v3384 = vpop.f32.mrf.mxu0
  %v3385 = vadd.f32 0.0, %v3384
  %3386 = vmatmul.f32.gmra.mxu0 %v3162
  %v3387 = vpop.f32.mrf.mxu0
  %v3388 = vadd.f32 0.0, %v3387
  %3389 = vmatmul.f32.gmra.mxu0 %v3165
  %v3390 = vpop.f32.mrf.mxu0
  %v3391 = vadd.f32 0.0, %v3390
  %3392 = vmatmul.f32.gmra.mxu0 %v3168
  %v3393 = vpop.f32.mrf.mxu0
  %v3394 = vadd.f32 0.0, %v3393
  %3395 = vmatmul.f32.gmra.mxu0 %v3171
  %v3396 = vpop.f32.mrf.mxu0
  %v3397 = vadd.f32 0.0, %v3396
  %3398 = vmatmul.f32.gmra.mxu0 %v3174
  %v3399 = vpop.f32.mrf.mxu0
  %v3400 = vadd.f32 0.0, %v3399
  %3401 = vmatmul.f32.gmra.mxu0 %v3177
  %v3402 = vpop.f32.mrf.mxu0
  %v3403 = vadd.f32 0.0, %v3402
  %3404 = vmatmul.f32.gmra.mxu0 %v3180
  %v3405 = vpop.f32.mrf.mxu0
  %v3406 = vadd.f32 0.0, %v3405
  %3407 = vmatmul.f32.gmra.mxu0 %v3183
  %v3408 = vpop.f32.mrf.mxu0
  %v3409 = vadd.f32 0.0, %v3408
  %3410 = vmatmul.f32.gmra.mxu0 %v3186
  %v3411 = vpop.f32.mrf.mxu0
  %v3412 = vadd.f32 0.0, %v3411
  %3413 = vmatmul.f32.gmra.mxu0 %v3189
  %v3414 = vpop.f32.mrf.mxu0
  %v3415 = vadd.f32 0.0, %v3414
  %3416 = vmatmul.f32.gmra.mxu0 %v3192
  %v3417 = vpop.f32.mrf.mxu0
  %v3418 = vadd.f32 0.0, %v3417
  %3419 = vmatmul.f32.gmra.mxu0 %v3195
  %v3420 = vpop.f32.mrf.mxu0
  %v3421 = vadd.f32 0.0, %v3420
  %3422 = vmatmul.f32.gmra.mxu0 %v3198
  %v3423 = vpop.f32.mrf.mxu0
  %v3424 = vadd.f32 0.0, %v3423
  %3425 = vmatmul.f32.gmra.mxu0 %v3201
  %v3426 = vpop.f32.mrf.mxu0
  %v3427 = vadd.f32 0.0, %v3426
  %3428 = vmatmul.f32.gmra.mxu0 %v3204
  %v3429 = vpop.f32.mrf.mxu0
  %v3430 = vadd.f32 0.0, %v3429
  %3431 = vmatmul.f32.gmra.mxu0 %v3207
  %v3432 = vpop.f32.mrf.mxu0
  %v3433 = vadd.f32 0.0, %v3432
  %3434 = vmatmul.f32.gmra.mxu0 %v3210
  %v3435 = vpop.f32.mrf.mxu0
  %v3436 = vadd.f32 0.0, %v3435
  %3437 = vmatmul.f32.gmra.mxu0 %v3213
  %v3438 = vpop.f32.mrf.mxu0
  %v3439 = vadd.f32 0.0, %v3438
  %3440 = vmatmul.f32.gmra.mxu0 %v3216
  %v3441 = vpop.f32.mrf.mxu0
  %v3442 = vadd.f32 0.0, %v3441
  %3443 = vmatmul.f32.gmra.mxu0 %v3219
  %v3444 = vpop.f32.mrf.mxu0
  %v3445 = vadd.f32 0.0, %v3444
  %3446 = vmatmul.f32.gmra.mxu0 %v3222
  %v3447 = vpop.f32.mrf.mxu0
  %v3448 = vadd.f32 0.0, %v3447
  %3449 = vmatmul.f32.gmra.mxu0 %v3225
  %v3450 = vpop.f32.mrf.mxu0
  %v3451 = vadd.f32 0.0, %v3450
  %3452 = vmatmul.f32.gmra.mxu0 %v3228
  %v3453 = vpop.f32.mrf.mxu0
  %v3454 = vadd.f32 0.0, %v3453
  %3455 = vmatmul.f32.gmra.mxu0 %v3231
  %v3456 = vpop.f32.mrf.mxu0
  %v3457 = vadd.f32 0.0, %v3456
  %3458 = vmatmul.f32.gmra.mxu0 %v3234
  %v3459 = vpop.f32.mrf.mxu0
  %v3460 = vadd.f32 0.0, %v3459
  %3461 = vmatmul.f32.gmra.mxu0 %v3237
  %v3462 = vpop.f32.mrf.mxu0
  %v3463 = vadd.f32 0.0, %v3462
  %3464 = vdwg.mxu0
  %3465 = vmatpush.msra.mxu0 0.0
  %3466 = vmatpush.msra.mxu0 0.0
  %3467 = vmatpush.msra.mxu0 0.0
  %3468 = vmatpush.msra.mxu0 0.0
  %3469 = vmatpush.msra.mxu0 0.0
  %3470 = vmatpush.msra.mxu0 0.0
  %3471 = vmatpush.msra.mxu0 0.0
  %3472 = vmatpush.msra.mxu0 0.0
  %3473 = vmatpush.msra.mxu0 0.0
  %3474 = vmatpush.msra.mxu0 0.0
  %3475 = vmatpush.msra.mxu0 0.0
  %3476 = vmatpush.msra.mxu0 0.0
  %3477 = vmatpush.msra.mxu0 0.0
  %3478 = vmatpush.msra.mxu0 0.0
  %3479 = vmatpush.msra.mxu0 0.0
  %3480 = vmatpush.msra.mxu0 %v3107
  %3481 = vmatmul.f32.gmra.mxu0 %v3144
  %v3482 = vpop.f32.mrf.mxu0
  %v3483 = vadd.f32 0.0, %v3482
  %3484 = vmatmul.f32.gmra.mxu0 %v3147
  %v3485 = vpop.f32.mrf.mxu0
  %v3486 = vadd.f32 0.0, %v3485
  %3487 = vmatmul.f32.gmra.mxu0 %v3150
  %v3488 = vpop.f32.mrf.mxu0
  %v3489 = vadd.f32 0.0, %v3488
  %3490 = vmatmul.f32.gmra.mxu0 %v3153
  %v3491 = vpop.f32.mrf.mxu0
  %v3492 = vadd.f32 0.0, %v3491
  %3493 = vmatmul.f32.gmra.mxu0 %v3156
  %v3494 = vpop.f32.mrf.mxu0
  %v3495 = vadd.f32 0.0, %v3494
  %3496 = vmatmul.f32.gmra.mxu0 %v3159
  %v3497 = vpop.f32.mrf.mxu0
  %v3498 = vadd.f32 0.0, %v3497
  %3499 = vmatmul.f32.gmra.mxu0 %v3162
  %v3500 = vpop.f32.mrf.mxu0
  %v3501 = vadd.f32 0.0, %v3500
  %3502 = vmatmul.f32.gmra.mxu0 %v3165
  %v3503 = vpop.f32.mrf.mxu0
  %v3504 = vadd.f32 0.0, %v3503
  %3505 = vmatmul.f32.gmra.mxu0 %v3168
  %v3506 = vpop.f32.mrf.mxu0
  %v3507 = vadd.f32 0.0, %v3506
  %3508 = vmatmul.f32.gmra.mxu0 %v3171
  %v3509 = vpop.f32.mrf.mxu0
  %v3510 = vadd.f32 0.0, %v3509
  %3511 = vmatmul.f32.gmra.mxu0 %v3174
  %v3512 = vpop.f32.mrf.mxu0
  %v3513 = vadd.f32 0.0, %v3512
  %3514 = vmatmul.f32.gmra.mxu0 %v3177
  %v3515 = vpop.f32.mrf.mxu0
  %v3516 = vadd.f32 0.0, %v3515
  %3517 = vmatmul.f32.gmra.mxu0 %v3180
  %v3518 = vpop.f32.mrf.mxu0
  %v3519 = vadd.f32 0.0, %v3518
  %3520 = vmatmul.f32.gmra.mxu0 %v3183
  %v3521 = vpop.f32.mrf.mxu0
  %v3522 = vadd.f32 0.0, %v3521
  %3523 = vmatmul.f32.gmra.mxu0 %v3186
  %v3524 = vpop.f32.mrf.mxu0
  %v3525 = vadd.f32 0.0, %v3524
  %3526 = vmatmul.f32.gmra.mxu0 %v3189
  %v3527 = vpop.f32.mrf.mxu0
  %v3528 = vadd.f32 0.0, %v3527
  %3529 = vmatmul.f32.gmra.mxu0 %v3192
  %v3530 = vpop.f32.mrf.mxu0
  %v3531 = vadd.f32 0.0, %v3530
  %3532 = vmatmul.f32.gmra.mxu0 %v3195
  %v3533 = vpop.f32.mrf.mxu0
  %v3534 = vadd.f32 0.0, %v3533
  %3535 = vmatmul.f32.gmra.mxu0 %v3198
  %v3536 = vpop.f32.mrf.mxu0
  %v3537 = vadd.f32 0.0, %v3536
  %3538 = vmatmul.f32.gmra.mxu0 %v3201
  %v3539 = vpop.f32.mrf.mxu0
  %v3540 = vadd.f32 0.0, %v3539
  %3541 = vmatmul.f32.gmra.mxu0 %v3204
  %v3542 = vpop.f32.mrf.mxu0
  %v3543 = vadd.f32 0.0, %v3542
  %3544 = vmatmul.f32.gmra.mxu0 %v3207
  %v3545 = vpop.f32.mrf.mxu0
  %v3546 = vadd.f32 0.0, %v3545
  %3547 = vmatmul.f32.gmra.mxu0 %v3210
  %v3548 = vpop.f32.mrf.mxu0
  %v3549 = vadd.f32 0.0, %v3548
  %3550 = vmatmul.f32.gmra.mxu0 %v3213
  %v3551 = vpop.f32.mrf.mxu0
  %v3552 = vadd.f32 0.0, %v3551
  %3553 = vmatmul.f32.gmra.mxu0 %v3216
  %v3554 = vpop.f32.mrf.mxu0
  %v3555 = vadd.f32 0.0, %v3554
  %3556 = vmatmul.f32.gmra.mxu0 %v3219
  %v3557 = vpop.f32.mrf.mxu0
  %v3558 = vadd.f32 0.0, %v3557
  %3559 = vmatmul.f32.gmra.mxu0 %v3222
  %v3560 = vpop.f32.mrf.mxu0
  %v3561 = vadd.f32 0.0, %v3560
  %3562 = vmatmul.f32.gmra.mxu0 %v3225
  %v3563 = vpop.f32.mrf.mxu0
  %v3564 = vadd.f32 0.0, %v3563
  %3565 = vmatmul.f32.gmra.mxu0 %v3228
  %v3566 = vpop.f32.mrf.mxu0
  %v3567 = vadd.f32 0.0, %v3566
  %3568 = vmatmul.f32.gmra.mxu0 %v3231
  %v3569 = vpop.f32.mrf.mxu0
  %v3570 = vadd.f32 0.0, %v3569
  %3571 = vmatmul.f32.gmra.mxu0 %v3234
  %v3572 = vpop.f32.mrf.mxu0
  %v3573 = vadd.f32 0.0, %v3572
  %3574 = vmatmul.f32.gmra.mxu0 %v3237
  %v3575 = vpop.f32.mrf.mxu0
  %v3576 = vadd.f32 0.0, %v3575
  %3577 = vdwg.mxu0
  %3578 = vmatpush.msra.mxu0 0.0
  %3579 = vmatpush.msra.mxu0 0.0
  %3580 = vmatpush.msra.mxu0 0.0
  %3581 = vmatpush.msra.mxu0 0.0
  %3582 = vmatpush.msra.mxu0 0.0
  %3583 = vmatpush.msra.mxu0 0.0
  %3584 = vmatpush.msra.mxu0 0.0
  %3585 = vmatpush.msra.mxu0 0.0
  %3586 = vmatpush.msra.mxu0 0.0
  %3587 = vmatpush.msra.mxu0 0.0
  %3588 = vmatpush.msra.mxu0 0.0
  %3589 = vmatpush.msra.mxu0 0.0
  %3590 = vmatpush.msra.mxu0 0.0
  %3591 = vmatpush.msra.mxu0 0.0
  %3592 = vmatpush.msra.mxu0 0.0
  %3593 = vmatpush.msra.mxu0 %v3108
  %3594 = vmatmul.f32.gmra.mxu0 %v3144
  %v3595 = vpop.f32.mrf.mxu0
  %v3596 = vadd.f32 0.0, %v3595
  %3597 = vmatmul.f32.gmra.mxu0 %v3147
  %v3598 = vpop.f32.mrf.mxu0
  %v3599 = vadd.f32 0.0, %v3598
  %3600 = vmatmul.f32.gmra.mxu0 %v3150
  %v3601 = vpop.f32.mrf.mxu0
  %v3602 = vadd.f32 0.0, %v3601
  %3603 = vmatmul.f32.gmra.mxu0 %v3153
  %v3604 = vpop.f32.mrf.mxu0
  %v3605 = vadd.f32 0.0, %v3604
  %3606 = vmatmul.f32.gmra.mxu0 %v3156
  %v3607 = vpop.f32.mrf.mxu0
  %v3608 = vadd.f32 0.0, %v3607
  %3609 = vmatmul.f32.gmra.mxu0 %v3159
  %v3610 = vpop.f32.mrf.mxu0
  %v3611 = vadd.f32 0.0, %v3610
  %3612 = vmatmul.f32.gmra.mxu0 %v3162
  %v3613 = vpop.f32.mrf.mxu0
  %v3614 = vadd.f32 0.0, %v3613
  %3615 = vmatmul.f32.gmra.mxu0 %v3165
  %v3616 = vpop.f32.mrf.mxu0
  %v3617 = vadd.f32 0.0, %v3616
  %3618 = vmatmul.f32.gmra.mxu0 %v3168
  %v3619 = vpop.f32.mrf.mxu0
  %v3620 = vadd.f32 0.0, %v3619
  %3621 = vmatmul.f32.gmra.mxu0 %v3171
  %v3622 = vpop.f32.mrf.mxu0
  %v3623 = vadd.f32 0.0, %v3622
  %3624 = vmatmul.f32.gmra.mxu0 %v3174
  %v3625 = vpop.f32.mrf.mxu0
  %v3626 = vadd.f32 0.0, %v3625
  %3627 = vmatmul.f32.gmra.mxu0 %v3177
  %v3628 = vpop.f32.mrf.mxu0
  %v3629 = vadd.f32 0.0, %v3628
  %3630 = vmatmul.f32.gmra.mxu0 %v3180
  %v3631 = vpop.f32.mrf.mxu0
  %v3632 = vadd.f32 0.0, %v3631
  %3633 = vmatmul.f32.gmra.mxu0 %v3183
  %v3634 = vpop.f32.mrf.mxu0
  %v3635 = vadd.f32 0.0, %v3634
  %3636 = vmatmul.f32.gmra.mxu0 %v3186
  %v3637 = vpop.f32.mrf.mxu0
  %v3638 = vadd.f32 0.0, %v3637
  %3639 = vmatmul.f32.gmra.mxu0 %v3189
  %v3640 = vpop.f32.mrf.mxu0
  %v3641 = vadd.f32 0.0, %v3640
  %3642 = vmatmul.f32.gmra.mxu0 %v3192
  %v3643 = vpop.f32.mrf.mxu0
  %v3644 = vadd.f32 0.0, %v3643
  %3645 = vmatmul.f32.gmra.mxu0 %v3195
  %v3646 = vpop.f32.mrf.mxu0
  %v3647 = vadd.f32 0.0, %v3646
  %3648 = vmatmul.f32.gmra.mxu0 %v3198
  %v3649 = vpop.f32.mrf.mxu0
  %v3650 = vadd.f32 0.0, %v3649
  %3651 = vmatmul.f32.gmra.mxu0 %v3201
  %v3652 = vpop.f32.mrf.mxu0
  %v3653 = vadd.f32 0.0, %v3652
  %3654 = vmatmul.f32.gmra.mxu0 %v3204
  %v3655 = vpop.f32.mrf.mxu0
  %v3656 = vadd.f32 0.0, %v3655
  %3657 = vmatmul.f32.gmra.mxu0 %v3207
  %v3658 = vpop.f32.mrf.mxu0
  %v3659 = vadd.f32 0.0, %v3658
  %3660 = vmatmul.f32.gmra.mxu0 %v3210
  %v3661 = vpop.f32.mrf.mxu0
  %v3662 = vadd.f32 0.0, %v3661
  %3663 = vmatmul.f32.gmra.mxu0 %v3213
  %v3664 = vpop.f32.mrf.mxu0
  %v3665 = vadd.f32 0.0, %v3664
  %3666 = vmatmul.f32.gmra.mxu0 %v3216
  %v3667 = vpop.f32.mrf.mxu0
  %v3668 = vadd.f32 0.0, %v3667
  %3669 = vmatmul.f32.gmra.mxu0 %v3219
  %v3670 = vpop.f32.mrf.mxu0
  %v3671 = vadd.f32 0.0, %v3670
  %3672 = vmatmul.f32.gmra.mxu0 %v3222
  %v3673 = vpop.f32.mrf.mxu0
  %v3674 = vadd.f32 0.0, %v3673
  %3675 = vmatmul.f32.gmra.mxu0 %v3225
  %v3676 = vpop.f32.mrf.mxu0
  %v3677 = vadd.f32 0.0, %v3676
  %3678 = vmatmul.f32.gmra.mxu0 %v3228
  %v3679 = vpop.f32.mrf.mxu0
  %v3680 = vadd.f32 0.0, %v3679
  %3681 = vmatmul.f32.gmra.mxu0 %v3231
  %v3682 = vpop.f32.mrf.mxu0
  %v3683 = vadd.f32 0.0, %v3682
  %3684 = vmatmul.f32.gmra.mxu0 %v3234
  %v3685 = vpop.f32.mrf.mxu0
  %v3686 = vadd.f32 0.0, %v3685
  %3687 = vmatmul.f32.gmra.mxu0 %v3237
  %v3688 = vpop.f32.mrf.mxu0
  %v3689 = vadd.f32 0.0, %v3688
  %3690 = vdwg.mxu0
  %3691 = vmatpush.msra.mxu0 0.0
  %3692 = vmatpush.msra.mxu0 0.0
  %3693 = vmatpush.msra.mxu0 0.0
  %3694 = vmatpush.msra.mxu0 0.0
  %3695 = vmatpush.msra.mxu0 0.0
  %3696 = vmatpush.msra.mxu0 0.0
  %3697 = vmatpush.msra.mxu0 0.0
  %3698 = vmatpush.msra.mxu0 0.0
  %3699 = vmatpush.msra.mxu0 0.0
  %3700 = vmatpush.msra.mxu0 0.0
  %3701 = vmatpush.msra.mxu0 0.0
  %3702 = vmatpush.msra.mxu0 0.0
  %3703 = vmatpush.msra.mxu0 0.0
  %3704 = vmatpush.msra.mxu0 0.0
  %3705 = vmatpush.msra.mxu0 0.0
  %3706 = vmatpush.msra.mxu0 %v3109
  %3707 = vmatmul.f32.gmra.mxu0 %v3144
  %v3708 = vpop.f32.mrf.mxu0
  %v3709 = vadd.f32 0.0, %v3708
  %3710 = vmatmul.f32.gmra.mxu0 %v3147
  %v3711 = vpop.f32.mrf.mxu0
  %v3712 = vadd.f32 0.0, %v3711
  %3713 = vmatmul.f32.gmra.mxu0 %v3150
  %v3714 = vpop.f32.mrf.mxu0
  %v3715 = vadd.f32 0.0, %v3714
  %3716 = vmatmul.f32.gmra.mxu0 %v3153
  %v3717 = vpop.f32.mrf.mxu0
  %v3718 = vadd.f32 0.0, %v3717
  %3719 = vmatmul.f32.gmra.mxu0 %v3156
  %v3720 = vpop.f32.mrf.mxu0
  %v3721 = vadd.f32 0.0, %v3720
  %3722 = vmatmul.f32.gmra.mxu0 %v3159
  %v3723 = vpop.f32.mrf.mxu0
  %v3724 = vadd.f32 0.0, %v3723
  %3725 = vmatmul.f32.gmra.mxu0 %v3162
  %v3726 = vpop.f32.mrf.mxu0
  %v3727 = vadd.f32 0.0, %v3726
  %3728 = vmatmul.f32.gmra.mxu0 %v3165
  %v3729 = vpop.f32.mrf.mxu0
  %v3730 = vadd.f32 0.0, %v3729
  %3731 = vmatmul.f32.gmra.mxu0 %v3168
  %v3732 = vpop.f32.mrf.mxu0
  %v3733 = vadd.f32 0.0, %v3732
  %3734 = vmatmul.f32.gmra.mxu0 %v3171
  %v3735 = vpop.f32.mrf.mxu0
  %v3736 = vadd.f32 0.0, %v3735
  %3737 = vmatmul.f32.gmra.mxu0 %v3174
  %v3738 = vpop.f32.mrf.mxu0
  %v3739 = vadd.f32 0.0, %v3738
  %3740 = vmatmul.f32.gmra.mxu0 %v3177
  %v3741 = vpop.f32.mrf.mxu0
  %v3742 = vadd.f32 0.0, %v3741
  %3743 = vmatmul.f32.gmra.mxu0 %v3180
  %v3744 = vpop.f32.mrf.mxu0
  %v3745 = vadd.f32 0.0, %v3744
  %3746 = vmatmul.f32.gmra.mxu0 %v3183
  %v3747 = vpop.f32.mrf.mxu0
  %v3748 = vadd.f32 0.0, %v3747
  %3749 = vmatmul.f32.gmra.mxu0 %v3186
  %v3750 = vpop.f32.mrf.mxu0
  %v3751 = vadd.f32 0.0, %v3750
  %3752 = vmatmul.f32.gmra.mxu0 %v3189
  %v3753 = vpop.f32.mrf.mxu0
  %v3754 = vadd.f32 0.0, %v3753
  %3755 = vmatmul.f32.gmra.mxu0 %v3192
  %v3756 = vpop.f32.mrf.mxu0
  %v3757 = vadd.f32 0.0, %v3756
  %3758 = vmatmul.f32.gmra.mxu0 %v3195
  %v3759 = vpop.f32.mrf.mxu0
  %v3760 = vadd.f32 0.0, %v3759
  %3761 = vmatmul.f32.gmra.mxu0 %v3198
  %v3762 = vpop.f32.mrf.mxu0
  %v3763 = vadd.f32 0.0, %v3762
  %3764 = vmatmul.f32.gmra.mxu0 %v3201
  %v3765 = vpop.f32.mrf.mxu0
  %v3766 = vadd.f32 0.0, %v3765
  %3767 = vmatmul.f32.gmra.mxu0 %v3204
  %v3768 = vpop.f32.mrf.mxu0
  %v3769 = vadd.f32 0.0, %v3768
  %3770 = vmatmul.f32.gmra.mxu0 %v3207
  %v3771 = vpop.f32.mrf.mxu0
  %v3772 = vadd.f32 0.0, %v3771
  %3773 = vmatmul.f32.gmra.mxu0 %v3210
  %v3774 = vpop.f32.mrf.mxu0
  %v3775 = vadd.f32 0.0, %v3774
  %3776 = vmatmul.f32.gmra.mxu0 %v3213
  %v3777 = vpop.f32.mrf.mxu0
  %v3778 = vadd.f32 0.0, %v3777
  %3779 = vmatmul.f32.gmra.mxu0 %v3216
  %v3780 = vpop.f32.mrf.mxu0
  %v3781 = vadd.f32 0.0, %v3780
  %3782 = vmatmul.f32.gmra.mxu0 %v3219
  %v3783 = vpop.f32.mrf.mxu0
  %v3784 = vadd.f32 0.0, %v3783
  %3785 = vmatmul.f32.gmra.mxu0 %v3222
  %v3786 = vpop.f32.mrf.mxu0
  %v3787 = vadd.f32 0.0, %v3786
  %3788 = vmatmul.f32.gmra.mxu0 %v3225
  %v3789 = vpop.f32.mrf.mxu0
  %v3790 = vadd.f32 0.0, %v3789
  %3791 = vmatmul.f32.gmra.mxu0 %v3228
  %v3792 = vpop.f32.mrf.mxu0
  %v3793 = vadd.f32 0.0, %v3792
  %3794 = vmatmul.f32.gmra.mxu0 %v3231
  %v3795 = vpop.f32.mrf.mxu0
  %v3796 = vadd.f32 0.0, %v3795
  %3797 = vmatmul.f32.gmra.mxu0 %v3234
  %v3798 = vpop.f32.mrf.mxu0
  %v3799 = vadd.f32 0.0, %v3798
  %3800 = vmatmul.f32.gmra.mxu0 %v3237
  %v3801 = vpop.f32.mrf.mxu0
  %v3802 = vadd.f32 0.0, %v3801
  %3803 = vdwg.mxu0
  %3804 = vmatpush.msra.mxu0 0.0
  %3805 = vmatpush.msra.mxu0 0.0
  %3806 = vmatpush.msra.mxu0 0.0
  %3807 = vmatpush.msra.mxu0 0.0
  %3808 = vmatpush.msra.mxu0 0.0
  %3809 = vmatpush.msra.mxu0 0.0
  %3810 = vmatpush.msra.mxu0 0.0
  %3811 = vmatpush.msra.mxu0 0.0
  %3812 = vmatpush.msra.mxu0 0.0
  %3813 = vmatpush.msra.mxu0 0.0
  %3814 = vmatpush.msra.mxu0 0.0
  %3815 = vmatpush.msra.mxu0 0.0
  %3816 = vmatpush.msra.mxu0 0.0
  %3817 = vmatpush.msra.mxu0 0.0
  %3818 = vmatpush.msra.mxu0 0.0
  %3819 = vmatpush.msra.mxu0 %v3110
  %3820 = vmatmul.f32.gmra.mxu0 %v3144
  %v3821 = vpop.f32.mrf.mxu0
  %v3822 = vadd.f32 0.0, %v3821
  %3823 = vmatmul.f32.gmra.mxu0 %v3147
  %v3824 = vpop.f32.mrf.mxu0
  %v3825 = vadd.f32 0.0, %v3824
  %3826 = vmatmul.f32.gmra.mxu0 %v3150
  %v3827 = vpop.f32.mrf.mxu0
  %v3828 = vadd.f32 0.0, %v3827
  %3829 = vmatmul.f32.gmra.mxu0 %v3153
  %v3830 = vpop.f32.mrf.mxu0
  %v3831 = vadd.f32 0.0, %v3830
  %3832 = vmatmul.f32.gmra.mxu0 %v3156
  %v3833 = vpop.f32.mrf.mxu0
  %v3834 = vadd.f32 0.0, %v3833
  %3835 = vmatmul.f32.gmra.mxu0 %v3159
  %v3836 = vpop.f32.mrf.mxu0
  %v3837 = vadd.f32 0.0, %v3836
  %3838 = vmatmul.f32.gmra.mxu0 %v3162
  %v3839 = vpop.f32.mrf.mxu0
  %v3840 = vadd.f32 0.0, %v3839
  %3841 = vmatmul.f32.gmra.mxu0 %v3165
  %v3842 = vpop.f32.mrf.mxu0
  %v3843 = vadd.f32 0.0, %v3842
  %3844 = vmatmul.f32.gmra.mxu0 %v3168
  %v3845 = vpop.f32.mrf.mxu0
  %v3846 = vadd.f32 0.0, %v3845
  %3847 = vmatmul.f32.gmra.mxu0 %v3171
  %v3848 = vpop.f32.mrf.mxu0
  %v3849 = vadd.f32 0.0, %v3848
  %3850 = vmatmul.f32.gmra.mxu0 %v3174
  %v3851 = vpop.f32.mrf.mxu0
  %v3852 = vadd.f32 0.0, %v3851
  %3853 = vmatmul.f32.gmra.mxu0 %v3177
  %v3854 = vpop.f32.mrf.mxu0
  %v3855 = vadd.f32 0.0, %v3854
  %3856 = vmatmul.f32.gmra.mxu0 %v3180
  %v3857 = vpop.f32.mrf.mxu0
  %v3858 = vadd.f32 0.0, %v3857
  %3859 = vmatmul.f32.gmra.mxu0 %v3183
  %v3860 = vpop.f32.mrf.mxu0
  %v3861 = vadd.f32 0.0, %v3860
  %3862 = vmatmul.f32.gmra.mxu0 %v3186
  %v3863 = vpop.f32.mrf.mxu0
  %v3864 = vadd.f32 0.0, %v3863
  %3865 = vmatmul.f32.gmra.mxu0 %v3189
  %v3866 = vpop.f32.mrf.mxu0
  %v3867 = vadd.f32 0.0, %v3866
  %3868 = vmatmul.f32.gmra.mxu0 %v3192
  %v3869 = vpop.f32.mrf.mxu0
  %v3870 = vadd.f32 0.0, %v3869
  %3871 = vmatmul.f32.gmra.mxu0 %v3195
  %v3872 = vpop.f32.mrf.mxu0
  %v3873 = vadd.f32 0.0, %v3872
  %3874 = vmatmul.f32.gmra.mxu0 %v3198
  %v3875 = vpop.f32.mrf.mxu0
  %v3876 = vadd.f32 0.0, %v3875
  %3877 = vmatmul.f32.gmra.mxu0 %v3201
  %v3878 = vpop.f32.mrf.mxu0
  %v3879 = vadd.f32 0.0, %v3878
  %3880 = vmatmul.f32.gmra.mxu0 %v3204
  %v3881 = vpop.f32.mrf.mxu0
  %v3882 = vadd.f32 0.0, %v3881
  %3883 = vmatmul.f32.gmra.mxu0 %v3207
  %v3884 = vpop.f32.mrf.mxu0
  %v3885 = vadd.f32 0.0, %v3884
  %3886 = vmatmul.f32.gmra.mxu0 %v3210
  %v3887 = vpop.f32.mrf.mxu0
  %v3888 = vadd.f32 0.0, %v3887
  %3889 = vmatmul.f32.gmra.mxu0 %v3213
  %v3890 = vpop.f32.mrf.mxu0
  %v3891 = vadd.f32 0.0, %v3890
  %3892 = vmatmul.f32.gmra.mxu0 %v3216
  %v3893 = vpop.f32.mrf.mxu0
  %v3894 = vadd.f32 0.0, %v3893
  %3895 = vmatmul.f32.gmra.mxu0 %v3219
  %v3896 = vpop.f32.mrf.mxu0
  %v3897 = vadd.f32 0.0, %v3896
  %3898 = vmatmul.f32.gmra.mxu0 %v3222
  %v3899 = vpop.f32.mrf.mxu0
  %v3900 = vadd.f32 0.0, %v3899
  %3901 = vmatmul.f32.gmra.mxu0 %v3225
  %v3902 = vpop.f32.mrf.mxu0
  %v3903 = vadd.f32 0.0, %v3902
  %3904 = vmatmul.f32.gmra.mxu0 %v3228
  %v3905 = vpop.f32.mrf.mxu0
  %v3906 = vadd.f32 0.0, %v3905
  %3907 = vmatmul.f32.gmra.mxu0 %v3231
  %v3908 = vpop.f32.mrf.mxu0
  %v3909 = vadd.f32 0.0, %v3908
  %3910 = vmatmul.f32.gmra.mxu0 %v3234
  %v3911 = vpop.f32.mrf.mxu0
  %v3912 = vadd.f32 0.0, %v3911
  %3913 = vmatmul.f32.gmra.mxu0 %v3237
  %v3914 = vpop.f32.mrf.mxu0
  %v3915 = vadd.f32 0.0, %v3914
  %3916 = vdwg.mxu0
  %3929 = vrot.lane.b32.xlu0 %v3263, 64
  %v3930 = vpop.permute.xlu0 %3929
  %3931 = vrot.lane.b32.xlu0 %v3266, 64
  %v3932 = vpop.permute.xlu0 %3931
  %3933 = vrot.lane.b32.xlu0 %v3376, 64
  %v3934 = vpop.permute.xlu0 %3933
  %3935 = vrot.lane.b32.xlu0 %v3379, 64
  %v3936 = vpop.permute.xlu0 %3935
  %3937 = vrot.lane.b32.xlu0 %v3489, 64
  %v3938 = vpop.permute.xlu0 %3937
  %3939 = vrot.lane.b32.xlu0 %v3492, 64
  %v3940 = vpop.permute.xlu0 %3939
  %3941 = vrot.lane.b32.xlu0 %v3602, 64
  %v3942 = vpop.permute.xlu0 %3941
  %3943 = vrot.lane.b32.xlu0 %v3605, 64
  %v3944 = vpop.permute.xlu0 %3943
  %3945 = vrot.lane.b32.xlu0 %v3715, 64
  %v3946 = vpop.permute.xlu0 %3945
  %3947 = vrot.lane.b32.xlu0 %v3718, 64
  %v3948 = vpop.permute.xlu0 %3947
  %3949 = vrot.lane.b32.xlu0 %v3828, 64
  %v3950 = vpop.permute.xlu0 %3949
  %3951 = vrot.lane.b32.xlu0 %v3831, 64
  %v3952 = vpop.permute.xlu0 %3951
  %3977 = vrot.lane.b32.xlu0 %v3275, 64
  %v3978 = vpop.permute.xlu0 %3977
  %3979 = vrot.lane.b32.xlu0 %v3278, 64
  %v3980 = vpop.permute.xlu0 %3979
  %3981 = vrot.lane.b32.xlu0 %v3388, 64
  %v3982 = vpop.permute.xlu0 %3981
  %3983 = vrot.lane.b32.xlu0 %v3391, 64
  %v3984 = vpop.permute.xlu0 %3983
  %3985 = vrot.lane.b32.xlu0 %v3501, 64
  %v3986 = vpop.permute.xlu0 %3985
  %3987 = vrot.lane.b32.xlu0 %v3504, 64
  %v3988 = vpop.permute.xlu0 %3987
  %3989 = vrot.lane.b32.xlu0 %v3614, 64
  %v3990 = vpop.permute.xlu0 %3989
  %3991 = vrot.lane.b32.xlu0 %v3617, 64
  %v3992 = vpop.permute.xlu0 %3991
  %3993 = vrot.lane.b32.xlu0 %v3727, 64
  %v3994 = vpop.permute.xlu0 %3993
  %3995 = vrot.lane.b32.xlu0 %v3730, 64
  %v3996 = vpop.permute.xlu0 %3995
  %3997 = vrot.lane.b32.xlu0 %v3840, 64
  %v3998 = vpop.permute.xlu0 %3997
  %3999 = vrot.lane.b32.xlu0 %v3843, 64
  %v4000 = vpop.permute.xlu0 %3999
  %4025 = vrot.lane.b32.xlu0 %v3287, 64
  %v4026 = vpop.permute.xlu0 %4025
  %4027 = vrot.lane.b32.xlu0 %v3290, 64
  %v4028 = vpop.permute.xlu0 %4027
  %4029 = vrot.lane.b32.xlu0 %v3400, 64
  %v4030 = vpop.permute.xlu0 %4029
  %4031 = vrot.lane.b32.xlu0 %v3403, 64
  %v4032 = vpop.permute.xlu0 %4031
  %4033 = vrot.lane.b32.xlu0 %v3513, 64
  %v4034 = vpop.permute.xlu0 %4033
  %4035 = vrot.lane.b32.xlu0 %v3516, 64
  %v4036 = vpop.permute.xlu0 %4035
  %4037 = vrot.lane.b32.xlu0 %v3626, 64
  %v4038 = vpop.permute.xlu0 %4037
  %4039 = vrot.lane.b32.xlu0 %v3629, 64
  %v4040 = vpop.permute.xlu0 %4039
  %4041 = vrot.lane.b32.xlu0 %v3739, 64
  %v4042 = vpop.permute.xlu0 %4041
  %4043 = vrot.lane.b32.xlu0 %v3742, 64
  %v4044 = vpop.permute.xlu0 %4043
  %4045 = vrot.lane.b32.xlu0 %v3852, 64
  %v4046 = vpop.permute.xlu0 %4045
  %4047 = vrot.lane.b32.xlu0 %v3855, 64
  %v4048 = vpop.permute.xlu0 %4047
  %4073 = vrot.lane.b32.xlu0 %v3299, 64
  %v4074 = vpop.permute.xlu0 %4073
  %4075 = vrot.lane.b32.xlu0 %v3302, 64
  %v4076 = vpop.permute.xlu0 %4075
  %4077 = vrot.lane.b32.xlu0 %v3412, 64
  %v4078 = vpop.permute.xlu0 %4077
  %4079 = vrot.lane.b32.xlu0 %v3415, 64
  %v4080 = vpop.permute.xlu0 %4079
  %4081 = vrot.lane.b32.xlu0 %v3525, 64
  %v4082 = vpop.permute.xlu0 %4081
  %4083 = vrot.lane.b32.xlu0 %v3528, 64
  %v4084 = vpop.permute.xlu0 %4083
  %4085 = vrot.lane.b32.xlu0 %v3638, 64
  %v4086 = vpop.permute.xlu0 %4085
  %4087 = vrot.lane.b32.xlu0 %v3641, 64
  %v4088 = vpop.permute.xlu0 %4087
  %4089 = vrot.lane.b32.xlu0 %v3751, 64
  %v4090 = vpop.permute.xlu0 %4089
  %4091 = vrot.lane.b32.xlu0 %v3754, 64
  %v4092 = vpop.permute.xlu0 %4091
  %4093 = vrot.lane.b32.xlu0 %v3864, 64
  %v4094 = vpop.permute.xlu0 %4093
  %4095 = vrot.lane.b32.xlu0 %v3867, 64
  %v4096 = vpop.permute.xlu0 %4095
  %4121 = vrot.lane.b32.xlu0 %v3311, 64
  %v4122 = vpop.permute.xlu0 %4121
  %4123 = vrot.lane.b32.xlu0 %v3314, 64
  %v4124 = vpop.permute.xlu0 %4123
  %4125 = vrot.lane.b32.xlu0 %v3424, 64
  %v4126 = vpop.permute.xlu0 %4125
  %4127 = vrot.lane.b32.xlu0 %v3427, 64
  %v4128 = vpop.permute.xlu0 %4127
  %4129 = vrot.lane.b32.xlu0 %v3537, 64
  %v4130 = vpop.permute.xlu0 %4129
  %4131 = vrot.lane.b32.xlu0 %v3540, 64
  %v4132 = vpop.permute.xlu0 %4131
  %4133 = vrot.lane.b32.xlu0 %v3650, 64
  %v4134 = vpop.permute.xlu0 %4133
  %4135 = vrot.lane.b32.xlu0 %v3653, 64
  %v4136 = vpop.permute.xlu0 %4135
  %4137 = vrot.lane.b32.xlu0 %v3763, 64
  %v4138 = vpop.permute.xlu0 %4137
  %4139 = vrot.lane.b32.xlu0 %v3766, 64
  %v4140 = vpop.permute.xlu0 %4139
  %4141 = vrot.lane.b32.xlu0 %v3876, 64
  %v4142 = vpop.permute.xlu0 %4141
  %4143 = vrot.lane.b32.xlu0 %v3879, 64
  %v4144 = vpop.permute.xlu0 %4143
  %4169 = vrot.lane.b32.xlu0 %v3323, 64
  %v4170 = vpop.permute.xlu0 %4169
  %4171 = vrot.lane.b32.xlu0 %v3326, 64
  %v4172 = vpop.permute.xlu0 %4171
  %4173 = vrot.lane.b32.xlu0 %v3436, 64
  %v4174 = vpop.permute.xlu0 %4173
  %4175 = vrot.lane.b32.xlu0 %v3439, 64
  %v4176 = vpop.permute.xlu0 %4175
  %4177 = vrot.lane.b32.xlu0 %v3549, 64
  %v4178 = vpop.permute.xlu0 %4177
  %4179 = vrot.lane.b32.xlu0 %v3552, 64
  %v4180 = vpop.permute.xlu0 %4179
  %4181 = vrot.lane.b32.xlu0 %v3662, 64
  %v4182 = vpop.permute.xlu0 %4181
  %4183 = vrot.lane.b32.xlu0 %v3665, 64
  %v4184 = vpop.permute.xlu0 %4183
  %4185 = vrot.lane.b32.xlu0 %v3775, 64
  %v4186 = vpop.permute.xlu0 %4185
  %4187 = vrot.lane.b32.xlu0 %v3778, 64
  %v4188 = vpop.permute.xlu0 %4187
  %4189 = vrot.lane.b32.xlu0 %v3888, 64
  %v4190 = vpop.permute.xlu0 %4189
  %4191 = vrot.lane.b32.xlu0 %v3891, 64
  %v4192 = vpop.permute.xlu0 %4191
  %4217 = vrot.lane.b32.xlu0 %v3335, 64
  %v4218 = vpop.permute.xlu0 %4217
  %4219 = vrot.lane.b32.xlu0 %v3338, 64
  %v4220 = vpop.permute.xlu0 %4219
  %4221 = vrot.lane.b32.xlu0 %v3448, 64
  %v4222 = vpop.permute.xlu0 %4221
  %4223 = vrot.lane.b32.xlu0 %v3451, 64
  %v4224 = vpop.permute.xlu0 %4223
  %4225 = vrot.lane.b32.xlu0 %v3561, 64
  %v4226 = vpop.permute.xlu0 %4225
  %4227 = vrot.lane.b32.xlu0 %v3564, 64
  %v4228 = vpop.permute.xlu0 %4227
  %4229 = vrot.lane.b32.xlu0 %v3674, 64
  %v4230 = vpop.permute.xlu0 %4229
  %4231 = vrot.lane.b32.xlu0 %v3677, 64
  %v4232 = vpop.permute.xlu0 %4231
  %4233 = vrot.lane.b32.xlu0 %v3787, 64
  %v4234 = vpop.permute.xlu0 %4233
  %4235 = vrot.lane.b32.xlu0 %v3790, 64
  %v4236 = vpop.permute.xlu0 %4235
  %4237 = vrot.lane.b32.xlu0 %v3900, 64
  %v4238 = vpop.permute.xlu0 %4237
  %4239 = vrot.lane.b32.xlu0 %v3903, 64
  %v4240 = vpop.permute.xlu0 %4239
  %4265 = vrot.lane.b32.xlu0 %v3347, 64
  %v4266 = vpop.permute.xlu0 %4265
  %4267 = vrot.lane.b32.xlu0 %v3350, 64
  %v4268 = vpop.permute.xlu0 %4267
  %4269 = vrot.lane.b32.xlu0 %v3460, 64
  %v4270 = vpop.permute.xlu0 %4269
  %4271 = vrot.lane.b32.xlu0 %v3463, 64
  %v4272 = vpop.permute.xlu0 %4271
  %4273 = vrot.lane.b32.xlu0 %v3573, 64
  %v4274 = vpop.permute.xlu0 %4273
  %4275 = vrot.lane.b32.xlu0 %v3576, 64
  %v4276 = vpop.permute.xlu0 %4275
  %4277 = vrot.lane.b32.xlu0 %v3686, 64
  %v4278 = vpop.permute.xlu0 %4277
  %4279 = vrot.lane.b32.xlu0 %v3689, 64
  %v4280 = vpop.permute.xlu0 %4279
  %4281 = vrot.lane.b32.xlu0 %v3799, 64
  %v4282 = vpop.permute.xlu0 %4281
  %4283 = vrot.lane.b32.xlu0 %v3802, 64
  %v4284 = vpop.permute.xlu0 %4283
  %4285 = vrot.lane.b32.xlu0 %v3912, 64
  %v4286 = vpop.permute.xlu0 %4285
  %4287 = vrot.lane.b32.xlu0 %v3915, 64
  %v4288 = vpop.permute.xlu0 %4287
  %vm4301 = vcmask 523264
  %v4302 = vsel %vm4301, %v3257, %v3930
  %v4303 = vsel %vm4301, %v3260, %v3932
  %v4304 = vsel %vm4301, %v3370, %v3934
  %v4305 = vsel %vm4301, %v3373, %v3936
  %v4306 = vsel %vm4301, %v3483, %v3938
  %v4307 = vsel %vm4301, %v3486, %v3940
  %v4308 = vsel %vm4301, %v3596, %v3942
  %v4309 = vsel %vm4301, %v3599, %v3944
  %v4310 = vsel %vm4301, %v3709, %v3946
  %v4311 = vsel %vm4301, %v3712, %v3948
  %v4312 = vsel %vm4301, %v3822, %v3950
  %v4313 = vsel %vm4301, %v3825, %v3952
  %v4314 = vsel %vm4301, %v3269, %v3978
  %v4315 = vsel %vm4301, %v3272, %v3980
  %v4316 = vsel %vm4301, %v3382, %v3982
  %v4317 = vsel %vm4301, %v3385, %v3984
  %v4318 = vsel %vm4301, %v3495, %v3986
  %v4319 = vsel %vm4301, %v3498, %v3988
  %v4320 = vsel %vm4301, %v3608, %v3990
  %v4321 = vsel %vm4301, %v3611, %v3992
  %v4322 = vsel %vm4301, %v3721, %v3994
  %v4323 = vsel %vm4301, %v3724, %v3996
  %v4324 = vsel %vm4301, %v3834, %v3998
  %v4325 = vsel %vm4301, %v3837, %v4000
  %v4326 = vsel %vm4301, %v3281, %v4026
  %v4327 = vsel %vm4301, %v3284, %v4028
  %v4328 = vsel %vm4301, %v3394, %v4030
  %v4329 = vsel %vm4301, %v3397, %v4032
  %v4330 = vsel %vm4301, %v3507, %v4034
  %v4331 = vsel %vm4301, %v3510, %v4036
  %v4332 = vsel %vm4301, %v3620, %v4038
  %v4333 = vsel %vm4301, %v3623, %v4040
  %v4334 = vsel %vm4301, %v3733, %v4042
  %v4335 = vsel %vm4301, %v3736, %v4044
  %v4336 = vsel %vm4301, %v3846, %v4046
  %v4337 = vsel %vm4301, %v3849, %v4048
  %v4338 = vsel %vm4301, %v3293, %v4074
  %v4339 = vsel %vm4301, %v3296, %v4076
  %v4340 = vsel %vm4301, %v3406, %v4078
  %v4341 = vsel %vm4301, %v3409, %v4080
  %v4342 = vsel %vm4301, %v3519, %v4082
  %v4343 = vsel %vm4301, %v3522, %v4084
  %v4344 = vsel %vm4301, %v3632, %v4086
  %v4345 = vsel %vm4301, %v3635, %v4088
  %v4346 = vsel %vm4301, %v3745, %v4090
  %v4347 = vsel %vm4301, %v3748, %v4092
  %v4348 = vsel %vm4301, %v3858, %v4094
  %v4349 = vsel %vm4301, %v3861, %v4096
  %v4350 = vsel %vm4301, %v3305, %v4122
  %v4351 = vsel %vm4301, %v3308, %v4124
  %v4352 = vsel %vm4301, %v3418, %v4126
  %v4353 = vsel %vm4301, %v3421, %v4128
  %v4354 = vsel %vm4301, %v3531, %v4130
  %v4355 = vsel %vm4301, %v3534, %v4132
  %v4356 = vsel %vm4301, %v3644, %v4134
  %v4357 = vsel %vm4301, %v3647, %v4136
  %v4358 = vsel %vm4301, %v3757, %v4138
  %v4359 = vsel %vm4301, %v3760, %v4140
  %v4360 = vsel %vm4301, %v3870, %v4142
  %v4361 = vsel %vm4301, %v3873, %v4144
  %v4362 = vsel %vm4301, %v3317, %v4170
  %v4363 = vsel %vm4301, %v3320, %v4172
  %v4364 = vsel %vm4301, %v3430, %v4174
  %v4365 = vsel %vm4301, %v3433, %v4176
  %v4366 = vsel %vm4301, %v3543, %v4178
  %v4367 = vsel %vm4301, %v3546, %v4180
  %v4368 = vsel %vm4301, %v3656, %v4182
  %v4369 = vsel %vm4301, %v3659, %v4184
  %v4370 = vsel %vm4301, %v3769, %v4186
  %v4371 = vsel %vm4301, %v3772, %v4188
  %v4372 = vsel %vm4301, %v3882, %v4190
  %v4373 = vsel %vm4301, %v3885, %v4192
  %v4374 = vsel %vm4301, %v3329, %v4218
  %v4375 = vsel %vm4301, %v3332, %v4220
  %v4376 = vsel %vm4301, %v3442, %v4222
  %v4377 = vsel %vm4301, %v3445, %v4224
  %v4378 = vsel %vm4301, %v3555, %v4226
  %v4379 = vsel %vm4301, %v3558, %v4228
  %v4380 = vsel %vm4301, %v3668, %v4230
  %v4381 = vsel %vm4301, %v3671, %v4232
  %v4382 = vsel %vm4301, %v3781, %v4234
  %v4383 = vsel %vm4301, %v3784, %v4236
  %v4384 = vsel %vm4301, %v3894, %v4238
  %v4385 = vsel %vm4301, %v3897, %v4240
  %v4386 = vsel %vm4301, %v3341, %v4266
  %v4387 = vsel %vm4301, %v3344, %v4268
  %v4388 = vsel %vm4301, %v3454, %v4270
  %v4389 = vsel %vm4301, %v3457, %v4272
  %v4390 = vsel %vm4301, %v3567, %v4274
  %v4391 = vsel %vm4301, %v3570, %v4276
  %v4392 = vsel %vm4301, %v3680, %v4278
  %v4393 = vsel %vm4301, %v3683, %v4280
  %v4394 = vsel %vm4301, %v3793, %v4282
  %v4395 = vsel %vm4301, %v3796, %v4284
  %v4396 = vsel %vm4301, %v3906, %v4286
  %v4397 = vsel %vm4301, %v3909, %v4288
  %v4398 = vld [vmem:[%s4] sm:$0xf]
  %v4399 = vld [vmem:[%s4 + $0x4] sm:$0xf]
  %v4400 = vld [vmem:[%s4 + $0x8] sm:$0xf]
  %v4401 = vld [vmem:[%s4 + $0xc] sm:$0xf]
  %v4402 = vld [vmem:[%s4 + $0x10] sm:$0xf]
  %v4403 = vld [vmem:[%s4 + $0x14] sm:$0xf]
  %v4404 = vld [vmem:[%s4 + $0x18] sm:$0xf]
  %v4405 = vld [vmem:[%s4 + $0x1c] sm:$0xf]
  %v4406 = vld [vmem:[%s4 + $0x20] sm:$0xf]
  %v4407 = vld [vmem:[%s4 + $0x24] sm:$0xf]
  %v4408 = vld [vmem:[%s4 + $0x28] sm:$0xf]
  %v4409 = vld [vmem:[%s4 + $0x2c] sm:$0xf]
  %v4410 = vld [vmem:[%s4 + $0x30] sm:$0xf]
  %v4411 = vld [vmem:[%s4 + $0x34] sm:$0xf]
  %v4412 = vld [vmem:[%s4 + $0x38] sm:$0xf]
  %v4413 = vld [vmem:[%s4 + $0x3c] sm:$0xf]
  %v4414 = vld [vmem:[%s4 + $0x40] sm:$0xf]
  %v4415 = vld [vmem:[%s4 + $0x44] sm:$0xf]
  %v4416 = vld [vmem:[%s4 + $0x48] sm:$0xf]
  %v4417 = vld [vmem:[%s4 + $0x4c] sm:$0xf]
  %v4418 = vld [vmem:[%s4 + $0x50] sm:$0xf]
  %v4419 = vld [vmem:[%s4 + $0x54] sm:$0xf]
  %v4420 = vld [vmem:[%s4 + $0x58] sm:$0xf]
  %v4421 = vld [vmem:[%s4 + $0x5c] sm:$0xf]
  %v4422 = vld [vmem:[%s4 + $0x60] sm:$0xf]
  %v4423 = vld [vmem:[%s4 + $0x64] sm:$0xf]
  %v4424 = vld [vmem:[%s4 + $0x68] sm:$0xf]
  %v4425 = vld [vmem:[%s4 + $0x6c] sm:$0xf]
  %v4426 = vld [vmem:[%s4 + $0x70] sm:$0xf]
  %v4427 = vld [vmem:[%s4 + $0x74] sm:$0xf]
  %v4428 = vld [vmem:[%s4 + $0x78] sm:$0xf]
  %v4429 = vld [vmem:[%s4 + $0x7c] sm:$0xf]
  %v4430 = vld [vmem:[%s4 + $0x80] sm:$0xf]
  %v4431 = vld [vmem:[%s4 + $0x84] sm:$0xf]
  %v4432 = vld [vmem:[%s4 + $0x88] sm:$0xf]
  %v4433 = vld [vmem:[%s4 + $0x8c] sm:$0xf]
  %v4434 = vld [vmem:[%s4 + $0x90] sm:$0xf]
  %v4435 = vld [vmem:[%s4 + $0x94] sm:$0xf]
  %v4436 = vld [vmem:[%s4 + $0x98] sm:$0xf]
  %v4437 = vld [vmem:[%s4 + $0x9c] sm:$0xf]
  %v4438 = vld [vmem:[%s4 + $0xa0] sm:$0xf]
  %v4439 = vld [vmem:[%s4 + $0xa4] sm:$0xf]
  %v4440 = vld [vmem:[%s4 + $0xa8] sm:$0xf]
  %v4441 = vld [vmem:[%s4 + $0xac] sm:$0xf]
  %v4442 = vld [vmem:[%s4 + $0xb0] sm:$0xf]
  %v4443 = vld [vmem:[%s4 + $0xb4] sm:$0xf]
  %v4444 = vld [vmem:[%s4 + $0xb8] sm:$0xf]
  %v4445 = vld [vmem:[%s4 + $0xbc] sm:$0xf]
  %v4446 = vld [vmem:[%s4 + $0xc0] sm:$0xf]
  %v4447 = vld [vmem:[%s4 + $0xc4] sm:$0xf]
  %v4448 = vld [vmem:[%s4 + $0xc8] sm:$0xf]
  %v4449 = vld [vmem:[%s4 + $0xcc] sm:$0xf]
  %v4450 = vld [vmem:[%s4 + $0xd0] sm:$0xf]
  %v4451 = vld [vmem:[%s4 + $0xd4] sm:$0xf]
  %v4452 = vld [vmem:[%s4 + $0xd8] sm:$0xf]
  %v4453 = vld [vmem:[%s4 + $0xdc] sm:$0xf]
  %v4454 = vld [vmem:[%s4 + $0xe0] sm:$0xf]
  %v4455 = vld [vmem:[%s4 + $0xe4] sm:$0xf]
  %v4456 = vld [vmem:[%s4 + $0xe8] sm:$0xf]
  %v4457 = vld [vmem:[%s4 + $0xec] sm:$0xf]
  %v4458 = vld [vmem:[%s4 + $0xf0] sm:$0xf]
  %v4459 = vld [vmem:[%s4 + $0xf4] sm:$0xf]
  %v4460 = vld [vmem:[%s4 + $0xf8] sm:$0xf]
  %v4461 = vld [vmem:[%s4 + $0xfc] sm:$0xf]
  %v4462 = vld [vmem:[%s4 + $0x100] sm:$0xf]
  %v4463 = vld [vmem:[%s4 + $0x104] sm:$0xf]
  %v4464 = vld [vmem:[%s4 + $0x108] sm:$0xf]
  %v4465 = vld [vmem:[%s4 + $0x10c] sm:$0xf]
  %v4466 = vld [vmem:[%s4 + $0x110] sm:$0xf]
  %v4467 = vld [vmem:[%s4 + $0x114] sm:$0xf]
  %v4468 = vld [vmem:[%s4 + $0x118] sm:$0xf]
  %v4469 = vld [vmem:[%s4 + $0x11c] sm:$0xf]
  %v4470 = vld [vmem:[%s4 + $0x120] sm:$0xf]
  %v4471 = vld [vmem:[%s4 + $0x124] sm:$0xf]
  %v4472 = vld [vmem:[%s4 + $0x128] sm:$0xf]
  %v4473 = vld [vmem:[%s4 + $0x12c] sm:$0xf]
  %v4474 = vld [vmem:[%s4 + $0x130] sm:$0xf]
  %v4475 = vld [vmem:[%s4 + $0x134] sm:$0xf]
  %v4476 = vld [vmem:[%s4 + $0x138] sm:$0xf]
  %v4477 = vld [vmem:[%s4 + $0x13c] sm:$0xf]
  %v4478 = vld [vmem:[%s4 + $0x140] sm:$0xf]
  %v4479 = vld [vmem:[%s4 + $0x144] sm:$0xf]
  %v4480 = vld [vmem:[%s4 + $0x148] sm:$0xf]
  %v4481 = vld [vmem:[%s4 + $0x14c] sm:$0xf]
  %v4482 = vld [vmem:[%s4 + $0x150] sm:$0xf]
  %v4483 = vld [vmem:[%s4 + $0x154] sm:$0xf]
  %v4484 = vld [vmem:[%s4 + $0x158] sm:$0xf]
  %v4485 = vld [vmem:[%s4 + $0x15c] sm:$0xf]
  %v4486 = vld [vmem:[%s4 + $0x160] sm:$0xf]
  %v4487 = vld [vmem:[%s4 + $0x164] sm:$0xf]
  %v4488 = vld [vmem:[%s4 + $0x168] sm:$0xf]
  %v4489 = vld [vmem:[%s4 + $0x16c] sm:$0xf]
  %v4490 = vld [vmem:[%s4 + $0x170] sm:$0xf]
  %v4491 = vld [vmem:[%s4 + $0x174] sm:$0xf]
  %v4492 = vld [vmem:[%s4 + $0x178] sm:$0xf]
  %v4493 = vld [vmem:[%s4 + $0x17c] sm:$0xf]
  %v4494 = vld [vmem:[%s4 + $0x180] sm:$0xf]
  %v4495 = vld [vmem:[%s4 + $0x184] sm:$0xf]
  %v4496 = vld [vmem:[%s4 + $0x188] sm:$0xf]
  %v4497 = vld [vmem:[%s4 + $0x18c] sm:$0xf]
  %v4498 = vld [vmem:[%s4 + $0x190] sm:$0xf]
  %v4499 = vld [vmem:[%s4 + $0x194] sm:$0xf]
  %v4500 = vld [vmem:[%s4 + $0x198] sm:$0xf]
  %v4501 = vld [vmem:[%s4 + $0x19c] sm:$0xf]
  %v4502 = vld [vmem:[%s4 + $0x1a0] sm:$0xf]
  %v4503 = vld [vmem:[%s4 + $0x1a4] sm:$0xf]
  %v4504 = vld [vmem:[%s4 + $0x1a8] sm:$0xf]
  %v4505 = vld [vmem:[%s4 + $0x1ac] sm:$0xf]
  %v4506 = vld [vmem:[%s4 + $0x1b0] sm:$0xf]
  %v4507 = vld [vmem:[%s4 + $0x1b4] sm:$0xf]
  %v4508 = vld [vmem:[%s4 + $0x1b8] sm:$0xf]
  %v4509 = vld [vmem:[%s4 + $0x1bc] sm:$0xf]
  %v4510 = vld [vmem:[%s4 + $0x1c0] sm:$0xf]
  %v4511 = vld [vmem:[%s4 + $0x1c4] sm:$0xf]
  %v4512 = vld [vmem:[%s4 + $0x1c8] sm:$0xf]
  %v4513 = vld [vmem:[%s4 + $0x1cc] sm:$0xf]
  %v4514 = vld [vmem:[%s4 + $0x1d0] sm:$0xf]
  %v4515 = vld [vmem:[%s4 + $0x1d4] sm:$0xf]
  %v4516 = vld [vmem:[%s4 + $0x1d8] sm:$0xf]
  %v4517 = vld [vmem:[%s4 + $0x1dc] sm:$0xf]
  %v4518 = vld [vmem:[%s4 + $0x1e0] sm:$0xf]
  %v4519 = vld [vmem:[%s4 + $0x1e4] sm:$0xf]
  %v4520 = vld [vmem:[%s4 + $0x1e8] sm:$0xf]
  %v4521 = vld [vmem:[%s4 + $0x1ec] sm:$0xf]
  %v4522 = vld [vmem:[%s4 + $0x1f0] sm:$0xf]
  %v4523 = vld [vmem:[%s4 + $0x1f4] sm:$0xf]
  %v4524 = vld [vmem:[%s4 + $0x1f8] sm:$0xf]
  %v4525 = vld [vmem:[%s4 + $0x1fc] sm:$0xf]
  %v4526 = vunpack.c.l.bf16 %v4398
  %v4527 = vunpack.c.l.bf16 %v4399
  %v4528 = vunpack.c.l.bf16 %v4400
  %v4529 = vunpack.c.l.bf16 %v4401
  %v4530 = vunpack.c.l.bf16 %v4402
  %v4531 = vunpack.c.l.bf16 %v4403
  %v4532 = vunpack.c.l.bf16 %v4404
  %v4533 = vunpack.c.l.bf16 %v4405
  %v4534 = vunpack.c.l.bf16 %v4406
  %v4535 = vunpack.c.l.bf16 %v4407
  %v4536 = vunpack.c.l.bf16 %v4408
  %v4537 = vunpack.c.l.bf16 %v4409
  %v4538 = vunpack.c.l.bf16 %v4410
  %v4539 = vunpack.c.l.bf16 %v4411
  %v4540 = vunpack.c.l.bf16 %v4412
  %v4541 = vunpack.c.l.bf16 %v4413
  %v4542 = vunpack.c.l.bf16 %v4414
  %v4543 = vunpack.c.l.bf16 %v4415
  %v4544 = vunpack.c.l.bf16 %v4416
  %v4545 = vunpack.c.l.bf16 %v4417
  %v4546 = vunpack.c.l.bf16 %v4418
  %v4547 = vunpack.c.l.bf16 %v4419
  %v4548 = vunpack.c.l.bf16 %v4420
  %v4549 = vunpack.c.l.bf16 %v4421
  %v4550 = vunpack.c.l.bf16 %v4422
  %v4551 = vunpack.c.l.bf16 %v4423
  %v4552 = vunpack.c.l.bf16 %v4424
  %v4553 = vunpack.c.l.bf16 %v4425
  %v4554 = vunpack.c.l.bf16 %v4426
  %v4555 = vunpack.c.l.bf16 %v4427
  %v4556 = vunpack.c.l.bf16 %v4428
  %v4557 = vunpack.c.l.bf16 %v4429
  %v4558 = vunpack.c.l.bf16 %v4430
  %v4559 = vunpack.c.l.bf16 %v4431
  %v4560 = vunpack.c.l.bf16 %v4432
  %v4561 = vunpack.c.l.bf16 %v4433
  %v4562 = vunpack.c.l.bf16 %v4434
  %v4563 = vunpack.c.l.bf16 %v4435
  %v4564 = vunpack.c.l.bf16 %v4436
  %v4565 = vunpack.c.l.bf16 %v4437
  %v4566 = vunpack.c.l.bf16 %v4438
  %v4567 = vunpack.c.l.bf16 %v4439
  %v4568 = vunpack.c.l.bf16 %v4440
  %v4569 = vunpack.c.l.bf16 %v4441
  %v4570 = vunpack.c.l.bf16 %v4442
  %v4571 = vunpack.c.l.bf16 %v4443
  %v4572 = vunpack.c.l.bf16 %v4444
  %v4573 = vunpack.c.l.bf16 %v4445
  %v4574 = vunpack.c.l.bf16 %v4446
  %v4575 = vunpack.c.l.bf16 %v4447
  %v4576 = vunpack.c.l.bf16 %v4448
  %v4577 = vunpack.c.l.bf16 %v4449
  %v4578 = vunpack.c.l.bf16 %v4450
  %v4579 = vunpack.c.l.bf16 %v4451
  %v4580 = vunpack.c.l.bf16 %v4452
  %v4581 = vunpack.c.l.bf16 %v4453
  %v4582 = vunpack.c.l.bf16 %v4454
  %v4583 = vunpack.c.l.bf16 %v4455
  %v4584 = vunpack.c.l.bf16 %v4456
  %v4585 = vunpack.c.l.bf16 %v4457
  %v4586 = vunpack.c.l.bf16 %v4458
  %v4587 = vunpack.c.l.bf16 %v4459
  %v4588 = vunpack.c.l.bf16 %v4460
  %v4589 = vunpack.c.l.bf16 %v4461
  %v4590 = vunpack.c.l.bf16 %v4462
  %v4591 = vunpack.c.l.bf16 %v4463
  %v4592 = vunpack.c.l.bf16 %v4464
  %v4593 = vunpack.c.l.bf16 %v4465
  %v4594 = vunpack.c.l.bf16 %v4466
  %v4595 = vunpack.c.l.bf16 %v4467
  %v4596 = vunpack.c.l.bf16 %v4468
  %v4597 = vunpack.c.l.bf16 %v4469
  %v4598 = vunpack.c.l.bf16 %v4470
  %v4599 = vunpack.c.l.bf16 %v4471
  %v4600 = vunpack.c.l.bf16 %v4472
  %v4601 = vunpack.c.l.bf16 %v4473
  %v4602 = vunpack.c.l.bf16 %v4474
  %v4603 = vunpack.c.l.bf16 %v4475
  %v4604 = vunpack.c.l.bf16 %v4476
  %v4605 = vunpack.c.l.bf16 %v4477
  %v4606 = vunpack.c.l.bf16 %v4478
  %v4607 = vunpack.c.l.bf16 %v4479
  %v4608 = vunpack.c.l.bf16 %v4480
  %v4609 = vunpack.c.l.bf16 %v4481
  %v4610 = vunpack.c.l.bf16 %v4482
  %v4611 = vunpack.c.l.bf16 %v4483
  %v4612 = vunpack.c.l.bf16 %v4484
  %v4613 = vunpack.c.l.bf16 %v4485
  %v4614 = vunpack.c.l.bf16 %v4486
  %v4615 = vunpack.c.l.bf16 %v4487
  %v4616 = vunpack.c.l.bf16 %v4488
  %v4617 = vunpack.c.l.bf16 %v4489
  %v4618 = vunpack.c.l.bf16 %v4490
  %v4619 = vunpack.c.l.bf16 %v4491
  %v4620 = vunpack.c.l.bf16 %v4492
  %v4621 = vunpack.c.l.bf16 %v4493
  %v4622 = vunpack.c.l.bf16 %v4494
  %v4623 = vunpack.c.l.bf16 %v4495
  %v4624 = vunpack.c.l.bf16 %v4496
  %v4625 = vunpack.c.l.bf16 %v4497
  %v4626 = vunpack.c.l.bf16 %v4498
  %v4627 = vunpack.c.l.bf16 %v4499
  %v4628 = vunpack.c.l.bf16 %v4500
  %v4629 = vunpack.c.l.bf16 %v4501
  %v4630 = vunpack.c.l.bf16 %v4502
  %v4631 = vunpack.c.l.bf16 %v4503
  %v4632 = vunpack.c.l.bf16 %v4504
  %v4633 = vunpack.c.l.bf16 %v4505
  %v4634 = vunpack.c.l.bf16 %v4506
  %v4635 = vunpack.c.l.bf16 %v4507
  %v4636 = vunpack.c.l.bf16 %v4508
  %v4637 = vunpack.c.l.bf16 %v4509
  %v4638 = vunpack.c.l.bf16 %v4510
  %v4639 = vunpack.c.l.bf16 %v4511
  %v4640 = vunpack.c.l.bf16 %v4512
  %v4641 = vunpack.c.l.bf16 %v4513
  %v4642 = vunpack.c.l.bf16 %v4514
  %v4643 = vunpack.c.l.bf16 %v4515
  %v4644 = vunpack.c.l.bf16 %v4516
  %v4645 = vunpack.c.l.bf16 %v4517
  %v4646 = vunpack.c.l.bf16 %v4518
  %v4647 = vunpack.c.l.bf16 %v4519
  %v4648 = vunpack.c.l.bf16 %v4520
  %v4649 = vunpack.c.l.bf16 %v4521
  %v4650 = vunpack.c.l.bf16 %v4522
  %v4651 = vunpack.c.l.bf16 %v4523
  %v4652 = vunpack.c.l.bf16 %v4524
  %v4653 = vunpack.c.l.bf16 %v4525
  %v4654 = vld [vmem:[%s6] sm:$0xff]
  %v4655 = vld [vmem:[%s6 + $0x8] sm:$0xff]
  %v4656 = vld [vmem:[%s6 + $0x10] sm:$0xff]
  %v4657 = vld [vmem:[%s6 + $0x18] sm:$0xff]
  %v4658 = vld [vmem:[%s6 + $0x20] sm:$0xff]
  %v4659 = vld [vmem:[%s6 + $0x28] sm:$0xff]
  %v4660 = vld [vmem:[%s6 + $0x30] sm:$0xff]
  %v4661 = vld [vmem:[%s6 + $0x38] sm:$0xff]
  %v4662 = vld [vmem:[%s6 + $0x40] sm:$0xff]
  %v4663 = vld [vmem:[%s6 + $0x48] sm:$0xff]
  %v4664 = vld [vmem:[%s6 + $0x50] sm:$0xff]
  %v4665 = vld [vmem:[%s6 + $0x58] sm:$0xff]
  %4667 = vset.pattern.permute.xlu0 0
  %4668 = vperm.xlu0 %4667, %v4654
  %v4669 = vpop.permute.xlu0 %4668
  %4672 = vset.pattern.permute.xlu0 0
  %4673 = vperm.xlu0 %4672, %v4655
  %v4674 = vpop.permute.xlu0 %4673
  %4677 = vset.pattern.permute.xlu0 0
  %4678 = vperm.xlu0 %4677, %v4656
  %v4679 = vpop.permute.xlu0 %4678
  %4682 = vset.pattern.permute.xlu0 0
  %4683 = vperm.xlu0 %4682, %v4657
  %v4684 = vpop.permute.xlu0 %4683
  %4687 = vset.pattern.permute.xlu0 0
  %4688 = vperm.xlu0 %4687, %v4658
  %v4689 = vpop.permute.xlu0 %4688
  %4692 = vset.pattern.permute.xlu0 0
  %4693 = vperm.xlu0 %4692, %v4659
  %v4694 = vpop.permute.xlu0 %4693
  %4697 = vset.pattern.permute.xlu0 0
  %4698 = vperm.xlu0 %4697, %v4660
  %v4699 = vpop.permute.xlu0 %4698
  %4702 = vset.pattern.permute.xlu0 0
  %4703 = vperm.xlu0 %4702, %v4661
  %v4704 = vpop.permute.xlu0 %4703
  %4707 = vset.pattern.permute.xlu0 0
  %4708 = vperm.xlu0 %4707, %v4662
  %v4709 = vpop.permute.xlu0 %4708
  %4712 = vset.pattern.permute.xlu0 0
  %4713 = vperm.xlu0 %4712, %v4663
  %v4714 = vpop.permute.xlu0 %4713
  %4717 = vset.pattern.permute.xlu0 0
  %4718 = vperm.xlu0 %4717, %v4664
  %v4719 = vpop.permute.xlu0 %4718
  %4722 = vset.pattern.permute.xlu0 0
  %4723 = vperm.xlu0 %4722, %v4665
  %v4724 = vpop.permute.xlu0 %4723
  %4726 = vmatpush.msra.mxu0 %v4541
  %4727 = vmatpush.msra.mxu0 %v4540
  %4728 = vmatpush.msra.mxu0 %v4539
  %4729 = vmatpush.msra.mxu0 %v4538
  %4730 = vmatpush.msra.mxu0 %v4537
  %4731 = vmatpush.msra.mxu0 %v4536
  %4732 = vmatpush.msra.mxu0 %v4535
  %4733 = vmatpush.msra.mxu0 %v4534
  %4734 = vmatpush.msra.mxu0 %v4533
  %4735 = vmatpush.msra.mxu0 %v4532
  %4736 = vmatpush.msra.mxu0 %v4531
  %4737 = vmatpush.msra.mxu0 %v4530
  %4738 = vmatpush.msra.mxu0 %v4529
  %4739 = vmatpush.msra.mxu0 %v4528
  %4740 = vmatpush.msra.mxu0 %v4527
  %4741 = vmatpush.msra.mxu0 %v4526
  %4742 = vmatmul.f32.gmra.mxu0 %v4302
  %v4743 = vpop.f32.mrf.mxu0
  %v4744 = vadd.f32 %v4669, %v4743
  %4745 = vmatmul.f32.gmra.mxu0 %v4303
  %v4746 = vpop.f32.mrf.mxu0
  %v4747 = vadd.f32 %v4674, %v4746
  %4748 = vmatmul.f32.gmra.mxu0 %v4304
  %v4749 = vpop.f32.mrf.mxu0
  %v4750 = vadd.f32 %v4679, %v4749
  %4751 = vmatmul.f32.gmra.mxu0 %v4305
  %v4752 = vpop.f32.mrf.mxu0
  %v4753 = vadd.f32 %v4684, %v4752
  %4754 = vmatmul.f32.gmra.mxu0 %v4306
  %v4755 = vpop.f32.mrf.mxu0
  %v4756 = vadd.f32 %v4689, %v4755
  %4757 = vmatmul.f32.gmra.mxu0 %v4307
  %v4758 = vpop.f32.mrf.mxu0
  %v4759 = vadd.f32 %v4694, %v4758
  %4760 = vmatmul.f32.gmra.mxu0 %v4308
  %v4761 = vpop.f32.mrf.mxu0
  %v4762 = vadd.f32 %v4699, %v4761
  %4763 = vmatmul.f32.gmra.mxu0 %v4309
  %v4764 = vpop.f32.mrf.mxu0
  %v4765 = vadd.f32 %v4704, %v4764
  %4766 = vmatmul.f32.gmra.mxu0 %v4310
  %v4767 = vpop.f32.mrf.mxu0
  %v4768 = vadd.f32 %v4709, %v4767
  %4769 = vmatmul.f32.gmra.mxu0 %v4311
  %v4770 = vpop.f32.mrf.mxu0
  %v4771 = vadd.f32 %v4714, %v4770
  %4772 = vmatmul.f32.gmra.mxu0 %v4312
  %v4773 = vpop.f32.mrf.mxu0
  %v4774 = vadd.f32 %v4719, %v4773
  %4775 = vmatmul.f32.gmra.mxu0 %v4313
  %v4776 = vpop.f32.mrf.mxu0
  %v4777 = vadd.f32 %v4724, %v4776
  %4778 = vdwg.mxu0
  %4779 = vmatpush.msra.mxu0 %v4557
  %4780 = vmatpush.msra.mxu0 %v4556
  %4781 = vmatpush.msra.mxu0 %v4555
  %4782 = vmatpush.msra.mxu0 %v4554
  %4783 = vmatpush.msra.mxu0 %v4553
  %4784 = vmatpush.msra.mxu0 %v4552
  %4785 = vmatpush.msra.mxu0 %v4551
  %4786 = vmatpush.msra.mxu0 %v4550
  %4787 = vmatpush.msra.mxu0 %v4549
  %4788 = vmatpush.msra.mxu0 %v4548
  %4789 = vmatpush.msra.mxu0 %v4547
  %4790 = vmatpush.msra.mxu0 %v4546
  %4791 = vmatpush.msra.mxu0 %v4545
  %4792 = vmatpush.msra.mxu0 %v4544
  %4793 = vmatpush.msra.mxu0 %v4543
  %4794 = vmatpush.msra.mxu0 %v4542
  %4795 = vmatmul.f32.gmra.mxu0 %v4314
  %v4796 = vpop.f32.mrf.mxu0
  %v4797 = vadd.f32 %v4744, %v4796
  %4798 = vmatmul.f32.gmra.mxu0 %v4315
  %v4799 = vpop.f32.mrf.mxu0
  %v4800 = vadd.f32 %v4747, %v4799
  %4801 = vmatmul.f32.gmra.mxu0 %v4316
  %v4802 = vpop.f32.mrf.mxu0
  %v4803 = vadd.f32 %v4750, %v4802
  %4804 = vmatmul.f32.gmra.mxu0 %v4317
  %v4805 = vpop.f32.mrf.mxu0
  %v4806 = vadd.f32 %v4753, %v4805
  %4807 = vmatmul.f32.gmra.mxu0 %v4318
  %v4808 = vpop.f32.mrf.mxu0
  %v4809 = vadd.f32 %v4756, %v4808
  %4810 = vmatmul.f32.gmra.mxu0 %v4319
  %v4811 = vpop.f32.mrf.mxu0
  %v4812 = vadd.f32 %v4759, %v4811
  %4813 = vmatmul.f32.gmra.mxu0 %v4320
  %v4814 = vpop.f32.mrf.mxu0
  %v4815 = vadd.f32 %v4762, %v4814
  %4816 = vmatmul.f32.gmra.mxu0 %v4321
  %v4817 = vpop.f32.mrf.mxu0
  %v4818 = vadd.f32 %v4765, %v4817
  %4819 = vmatmul.f32.gmra.mxu0 %v4322
  %v4820 = vpop.f32.mrf.mxu0
  %v4821 = vadd.f32 %v4768, %v4820
  %4822 = vmatmul.f32.gmra.mxu0 %v4323
  %v4823 = vpop.f32.mrf.mxu0
  %v4824 = vadd.f32 %v4771, %v4823
  %4825 = vmatmul.f32.gmra.mxu0 %v4324
  %v4826 = vpop.f32.mrf.mxu0
  %v4827 = vadd.f32 %v4774, %v4826
  %4828 = vmatmul.f32.gmra.mxu0 %v4325
  %v4829 = vpop.f32.mrf.mxu0
  %v4830 = vadd.f32 %v4777, %v4829
  %4831 = vdwg.mxu0
  %4832 = vmatpush.msra.mxu0 %v4573
  %4833 = vmatpush.msra.mxu0 %v4572
  %4834 = vmatpush.msra.mxu0 %v4571
  %4835 = vmatpush.msra.mxu0 %v4570
  %4836 = vmatpush.msra.mxu0 %v4569
  %4837 = vmatpush.msra.mxu0 %v4568
  %4838 = vmatpush.msra.mxu0 %v4567
  %4839 = vmatpush.msra.mxu0 %v4566
  %4840 = vmatpush.msra.mxu0 %v4565
  %4841 = vmatpush.msra.mxu0 %v4564
  %4842 = vmatpush.msra.mxu0 %v4563
  %4843 = vmatpush.msra.mxu0 %v4562
  %4844 = vmatpush.msra.mxu0 %v4561
  %4845 = vmatpush.msra.mxu0 %v4560
  %4846 = vmatpush.msra.mxu0 %v4559
  %4847 = vmatpush.msra.mxu0 %v4558
  %4848 = vmatmul.f32.gmra.mxu0 %v4326
  %v4849 = vpop.f32.mrf.mxu0
  %v4850 = vadd.f32 %v4797, %v4849
  %4851 = vmatmul.f32.gmra.mxu0 %v4327
  %v4852 = vpop.f32.mrf.mxu0
  %v4853 = vadd.f32 %v4800, %v4852
  %4854 = vmatmul.f32.gmra.mxu0 %v4328
  %v4855 = vpop.f32.mrf.mxu0
  %v4856 = vadd.f32 %v4803, %v4855
  %4857 = vmatmul.f32.gmra.mxu0 %v4329
  %v4858 = vpop.f32.mrf.mxu0
  %v4859 = vadd.f32 %v4806, %v4858
  %4860 = vmatmul.f32.gmra.mxu0 %v4330
  %v4861 = vpop.f32.mrf.mxu0
  %v4862 = vadd.f32 %v4809, %v4861
  %4863 = vmatmul.f32.gmra.mxu0 %v4331
  %v4864 = vpop.f32.mrf.mxu0
  %v4865 = vadd.f32 %v4812, %v4864
  %4866 = vmatmul.f32.gmra.mxu0 %v4332
  %v4867 = vpop.f32.mrf.mxu0
  %v4868 = vadd.f32 %v4815, %v4867
  %4869 = vmatmul.f32.gmra.mxu0 %v4333
  %v4870 = vpop.f32.mrf.mxu0
  %v4871 = vadd.f32 %v4818, %v4870
  %4872 = vmatmul.f32.gmra.mxu0 %v4334
  %v4873 = vpop.f32.mrf.mxu0
  %v4874 = vadd.f32 %v4821, %v4873
  %4875 = vmatmul.f32.gmra.mxu0 %v4335
  %v4876 = vpop.f32.mrf.mxu0
  %v4877 = vadd.f32 %v4824, %v4876
  %4878 = vmatmul.f32.gmra.mxu0 %v4336
  %v4879 = vpop.f32.mrf.mxu0
  %v4880 = vadd.f32 %v4827, %v4879
  %4881 = vmatmul.f32.gmra.mxu0 %v4337
  %v4882 = vpop.f32.mrf.mxu0
  %v4883 = vadd.f32 %v4830, %v4882
  %4884 = vdwg.mxu0
  %4885 = vmatpush.msra.mxu0 %v4589
  %4886 = vmatpush.msra.mxu0 %v4588
  %4887 = vmatpush.msra.mxu0 %v4587
  %4888 = vmatpush.msra.mxu0 %v4586
  %4889 = vmatpush.msra.mxu0 %v4585
  %4890 = vmatpush.msra.mxu0 %v4584
  %4891 = vmatpush.msra.mxu0 %v4583
  %4892 = vmatpush.msra.mxu0 %v4582
  %4893 = vmatpush.msra.mxu0 %v4581
  %4894 = vmatpush.msra.mxu0 %v4580
  %4895 = vmatpush.msra.mxu0 %v4579
  %4896 = vmatpush.msra.mxu0 %v4578
  %4897 = vmatpush.msra.mxu0 %v4577
  %4898 = vmatpush.msra.mxu0 %v4576
  %4899 = vmatpush.msra.mxu0 %v4575
  %4900 = vmatpush.msra.mxu0 %v4574
  %4901 = vmatmul.f32.gmra.mxu0 %v4338
  %v4902 = vpop.f32.mrf.mxu0
  %v4903 = vadd.f32 %v4850, %v4902
  %4904 = vmatmul.f32.gmra.mxu0 %v4339
  %v4905 = vpop.f32.mrf.mxu0
  %v4906 = vadd.f32 %v4853, %v4905
  %4907 = vmatmul.f32.gmra.mxu0 %v4340
  %v4908 = vpop.f32.mrf.mxu0
  %v4909 = vadd.f32 %v4856, %v4908
  %4910 = vmatmul.f32.gmra.mxu0 %v4341
  %v4911 = vpop.f32.mrf.mxu0
  %v4912 = vadd.f32 %v4859, %v4911
  %4913 = vmatmul.f32.gmra.mxu0 %v4342
  %v4914 = vpop.f32.mrf.mxu0
  %v4915 = vadd.f32 %v4862, %v4914
  %4916 = vmatmul.f32.gmra.mxu0 %v4343
  %v4917 = vpop.f32.mrf.mxu0
  %v4918 = vadd.f32 %v4865, %v4917
  %4919 = vmatmul.f32.gmra.mxu0 %v4344
  %v4920 = vpop.f32.mrf.mxu0
  %v4921 = vadd.f32 %v4868, %v4920
  %4922 = vmatmul.f32.gmra.mxu0 %v4345
  %v4923 = vpop.f32.mrf.mxu0
  %v4924 = vadd.f32 %v4871, %v4923
  %4925 = vmatmul.f32.gmra.mxu0 %v4346
  %v4926 = vpop.f32.mrf.mxu0
  %v4927 = vadd.f32 %v4874, %v4926
  %4928 = vmatmul.f32.gmra.mxu0 %v4347
  %v4929 = vpop.f32.mrf.mxu0
  %v4930 = vadd.f32 %v4877, %v4929
  %4931 = vmatmul.f32.gmra.mxu0 %v4348
  %v4932 = vpop.f32.mrf.mxu0
  %v4933 = vadd.f32 %v4880, %v4932
  %4934 = vmatmul.f32.gmra.mxu0 %v4349
  %v4935 = vpop.f32.mrf.mxu0
  %v4936 = vadd.f32 %v4883, %v4935
  %4937 = vdwg.mxu0
  %4938 = vmatpush.msra.mxu0 %v4605
  %4939 = vmatpush.msra.mxu0 %v4604
  %4940 = vmatpush.msra.mxu0 %v4603
  %4941 = vmatpush.msra.mxu0 %v4602
  %4942 = vmatpush.msra.mxu0 %v4601
  %4943 = vmatpush.msra.mxu0 %v4600
  %4944 = vmatpush.msra.mxu0 %v4599
  %4945 = vmatpush.msra.mxu0 %v4598
  %4946 = vmatpush.msra.mxu0 %v4597
  %4947 = vmatpush.msra.mxu0 %v4596
  %4948 = vmatpush.msra.mxu0 %v4595
  %4949 = vmatpush.msra.mxu0 %v4594
  %4950 = vmatpush.msra.mxu0 %v4593
  %4951 = vmatpush.msra.mxu0 %v4592
  %4952 = vmatpush.msra.mxu0 %v4591
  %4953 = vmatpush.msra.mxu0 %v4590
  %4954 = vmatmul.f32.gmra.mxu0 %v4350
  %v4955 = vpop.f32.mrf.mxu0
  %v4956 = vadd.f32 %v4903, %v4955
  %4957 = vmatmul.f32.gmra.mxu0 %v4351
  %v4958 = vpop.f32.mrf.mxu0
  %v4959 = vadd.f32 %v4906, %v4958
  %4960 = vmatmul.f32.gmra.mxu0 %v4352
  %v4961 = vpop.f32.mrf.mxu0
  %v4962 = vadd.f32 %v4909, %v4961
  %4963 = vmatmul.f32.gmra.mxu0 %v4353
  %v4964 = vpop.f32.mrf.mxu0
  %v4965 = vadd.f32 %v4912, %v4964
  %4966 = vmatmul.f32.gmra.mxu0 %v4354
  %v4967 = vpop.f32.mrf.mxu0
  %v4968 = vadd.f32 %v4915, %v4967
  %4969 = vmatmul.f32.gmra.mxu0 %v4355
  %v4970 = vpop.f32.mrf.mxu0
  %v4971 = vadd.f32 %v4918, %v4970
  %4972 = vmatmul.f32.gmra.mxu0 %v4356
  %v4973 = vpop.f32.mrf.mxu0
  %v4974 = vadd.f32 %v4921, %v4973
  %4975 = vmatmul.f32.gmra.mxu0 %v4357
  %v4976 = vpop.f32.mrf.mxu0
  %v4977 = vadd.f32 %v4924, %v4976
  %4978 = vmatmul.f32.gmra.mxu0 %v4358
  %v4979 = vpop.f32.mrf.mxu0
  %v4980 = vadd.f32 %v4927, %v4979
  %4981 = vmatmul.f32.gmra.mxu0 %v4359
  %v4982 = vpop.f32.mrf.mxu0
  %v4983 = vadd.f32 %v4930, %v4982
  %4984 = vmatmul.f32.gmra.mxu0 %v4360
  %v4985 = vpop.f32.mrf.mxu0
  %v4986 = vadd.f32 %v4933, %v4985
  %4987 = vmatmul.f32.gmra.mxu0 %v4361
  %v4988 = vpop.f32.mrf.mxu0
  %v4989 = vadd.f32 %v4936, %v4988
  %4990 = vdwg.mxu0
  %4991 = vmatpush.msra.mxu0 %v4621
  %4992 = vmatpush.msra.mxu0 %v4620
  %4993 = vmatpush.msra.mxu0 %v4619
  %4994 = vmatpush.msra.mxu0 %v4618
  %4995 = vmatpush.msra.mxu0 %v4617
  %4996 = vmatpush.msra.mxu0 %v4616
  %4997 = vmatpush.msra.mxu0 %v4615
  %4998 = vmatpush.msra.mxu0 %v4614
  %4999 = vmatpush.msra.mxu0 %v4613
  %5000 = vmatpush.msra.mxu0 %v4612
  %5001 = vmatpush.msra.mxu0 %v4611
  %5002 = vmatpush.msra.mxu0 %v4610
  %5003 = vmatpush.msra.mxu0 %v4609
  %5004 = vmatpush.msra.mxu0 %v4608
  %5005 = vmatpush.msra.mxu0 %v4607
  %5006 = vmatpush.msra.mxu0 %v4606
  %5007 = vmatmul.f32.gmra.mxu0 %v4362
  %v5008 = vpop.f32.mrf.mxu0
  %v5009 = vadd.f32 %v4956, %v5008
  %5010 = vmatmul.f32.gmra.mxu0 %v4363
  %v5011 = vpop.f32.mrf.mxu0
  %v5012 = vadd.f32 %v4959, %v5011
  %5013 = vmatmul.f32.gmra.mxu0 %v4364
  %v5014 = vpop.f32.mrf.mxu0
  %v5015 = vadd.f32 %v4962, %v5014
  %5016 = vmatmul.f32.gmra.mxu0 %v4365
  %v5017 = vpop.f32.mrf.mxu0
  %v5018 = vadd.f32 %v4965, %v5017
  %5019 = vmatmul.f32.gmra.mxu0 %v4366
  %v5020 = vpop.f32.mrf.mxu0
  %v5021 = vadd.f32 %v4968, %v5020
  %5022 = vmatmul.f32.gmra.mxu0 %v4367
  %v5023 = vpop.f32.mrf.mxu0
  %v5024 = vadd.f32 %v4971, %v5023
  %5025 = vmatmul.f32.gmra.mxu0 %v4368
  %v5026 = vpop.f32.mrf.mxu0
  %v5027 = vadd.f32 %v4974, %v5026
  %5028 = vmatmul.f32.gmra.mxu0 %v4369
  %v5029 = vpop.f32.mrf.mxu0
  %v5030 = vadd.f32 %v4977, %v5029
  %5031 = vmatmul.f32.gmra.mxu0 %v4370
  %v5032 = vpop.f32.mrf.mxu0
  %v5033 = vadd.f32 %v4980, %v5032
  %5034 = vmatmul.f32.gmra.mxu0 %v4371
  %v5035 = vpop.f32.mrf.mxu0
  %v5036 = vadd.f32 %v4983, %v5035
  %5037 = vmatmul.f32.gmra.mxu0 %v4372
  %v5038 = vpop.f32.mrf.mxu0
  %v5039 = vadd.f32 %v4986, %v5038
  %5040 = vmatmul.f32.gmra.mxu0 %v4373
  %v5041 = vpop.f32.mrf.mxu0
  %v5042 = vadd.f32 %v4989, %v5041
  %5043 = vdwg.mxu0
  %5044 = vmatpush.msra.mxu0 %v4637
  %5045 = vmatpush.msra.mxu0 %v4636
  %5046 = vmatpush.msra.mxu0 %v4635
  %5047 = vmatpush.msra.mxu0 %v4634
  %5048 = vmatpush.msra.mxu0 %v4633
  %5049 = vmatpush.msra.mxu0 %v4632
  %5050 = vmatpush.msra.mxu0 %v4631
  %5051 = vmatpush.msra.mxu0 %v4630
  %5052 = vmatpush.msra.mxu0 %v4629
  %5053 = vmatpush.msra.mxu0 %v4628
  %5054 = vmatpush.msra.mxu0 %v4627
  %5055 = vmatpush.msra.mxu0 %v4626
  %5056 = vmatpush.msra.mxu0 %v4625
  %5057 = vmatpush.msra.mxu0 %v4624
  %5058 = vmatpush.msra.mxu0 %v4623
  %5059 = vmatpush.msra.mxu0 %v4622
  %5060 = vmatmul.f32.gmra.mxu0 %v4374
  %v5061 = vpop.f32.mrf.mxu0
  %v5062 = vadd.f32 %v5009, %v5061
  %5063 = vmatmul.f32.gmra.mxu0 %v4375
  %v5064 = vpop.f32.mrf.mxu0
  %v5065 = vadd.f32 %v5012, %v5064
  %5066 = vmatmul.f32.gmra.mxu0 %v4376
  %v5067 = vpop.f32.mrf.mxu0
  %v5068 = vadd.f32 %v5015, %v5067
  %5069 = vmatmul.f32.gmra.mxu0 %v4377
  %v5070 = vpop.f32.mrf.mxu0
  %v5071 = vadd.f32 %v5018, %v5070
  %5072 = vmatmul.f32.gmra.mxu0 %v4378
  %v5073 = vpop.f32.mrf.mxu0
  %v5074 = vadd.f32 %v5021, %v5073
  %5075 = vmatmul.f32.gmra.mxu0 %v4379
  %v5076 = vpop.f32.mrf.mxu0
  %v5077 = vadd.f32 %v5024, %v5076
  %5078 = vmatmul.f32.gmra.mxu0 %v4380
  %v5079 = vpop.f32.mrf.mxu0
  %v5080 = vadd.f32 %v5027, %v5079
  %5081 = vmatmul.f32.gmra.mxu0 %v4381
  %v5082 = vpop.f32.mrf.mxu0
  %v5083 = vadd.f32 %v5030, %v5082
  %5084 = vmatmul.f32.gmra.mxu0 %v4382
  %v5085 = vpop.f32.mrf.mxu0
  %v5086 = vadd.f32 %v5033, %v5085
  %5087 = vmatmul.f32.gmra.mxu0 %v4383
  %v5088 = vpop.f32.mrf.mxu0
  %v5089 = vadd.f32 %v5036, %v5088
  %5090 = vmatmul.f32.gmra.mxu0 %v4384
  %v5091 = vpop.f32.mrf.mxu0
  %v5092 = vadd.f32 %v5039, %v5091
  %5093 = vmatmul.f32.gmra.mxu0 %v4385
  %v5094 = vpop.f32.mrf.mxu0
  %v5095 = vadd.f32 %v5042, %v5094
  %5096 = vdwg.mxu0
  %5097 = vmatpush.msra.mxu0 %v4653
  %5098 = vmatpush.msra.mxu0 %v4652
  %5099 = vmatpush.msra.mxu0 %v4651
  %5100 = vmatpush.msra.mxu0 %v4650
  %5101 = vmatpush.msra.mxu0 %v4649
  %5102 = vmatpush.msra.mxu0 %v4648
  %5103 = vmatpush.msra.mxu0 %v4647
  %5104 = vmatpush.msra.mxu0 %v4646
  %5105 = vmatpush.msra.mxu0 %v4645
  %5106 = vmatpush.msra.mxu0 %v4644
  %5107 = vmatpush.msra.mxu0 %v4643
  %5108 = vmatpush.msra.mxu0 %v4642
  %5109 = vmatpush.msra.mxu0 %v4641
  %5110 = vmatpush.msra.mxu0 %v4640
  %5111 = vmatpush.msra.mxu0 %v4639
  %5112 = vmatpush.msra.mxu0 %v4638
  %5113 = vmatmul.f32.gmra.mxu0 %v4386
  %v5114 = vpop.f32.mrf.mxu0
  %v5115 = vadd.f32 %v5062, %v5114
  %5116 = vmatmul.f32.gmra.mxu0 %v4387
  %v5117 = vpop.f32.mrf.mxu0
  %v5118 = vadd.f32 %v5065, %v5117
  %5119 = vmatmul.f32.gmra.mxu0 %v4388
  %v5120 = vpop.f32.mrf.mxu0
  %v5121 = vadd.f32 %v5068, %v5120
  %5122 = vmatmul.f32.gmra.mxu0 %v4389
  %v5123 = vpop.f32.mrf.mxu0
  %v5124 = vadd.f32 %v5071, %v5123
  %5125 = vmatmul.f32.gmra.mxu0 %v4390
  %v5126 = vpop.f32.mrf.mxu0
  %v5127 = vadd.f32 %v5074, %v5126
  %5128 = vmatmul.f32.gmra.mxu0 %v4391
  %v5129 = vpop.f32.mrf.mxu0
  %v5130 = vadd.f32 %v5077, %v5129
  %5131 = vmatmul.f32.gmra.mxu0 %v4392
  %v5132 = vpop.f32.mrf.mxu0
  %v5133 = vadd.f32 %v5080, %v5132
  %5134 = vmatmul.f32.gmra.mxu0 %v4393
  %v5135 = vpop.f32.mrf.mxu0
  %v5136 = vadd.f32 %v5083, %v5135
  %5137 = vmatmul.f32.gmra.mxu0 %v4394
  %v5138 = vpop.f32.mrf.mxu0
  %v5139 = vadd.f32 %v5086, %v5138
  %5140 = vmatmul.f32.gmra.mxu0 %v4395
  %v5141 = vpop.f32.mrf.mxu0
  %v5142 = vadd.f32 %v5089, %v5141
  %5143 = vmatmul.f32.gmra.mxu0 %v4396
  %v5144 = vpop.f32.mrf.mxu0
  %v5145 = vadd.f32 %v5092, %v5144
  %5146 = vmatmul.f32.gmra.mxu0 %v4397
  %v5147 = vpop.f32.mrf.mxu0
  %v5148 = vadd.f32 %v5095, %v5147
  %5149 = vdwg.mxu0
  %vm5150 = vcmp.ge.f32.partialorder %v5115, 0.0
  %vm5151 = vcmp.ge.f32.partialorder %v5118, 0.0
  %vm5152 = vcmp.ge.f32.partialorder %v5121, 0.0
  %vm5153 = vcmp.ge.f32.partialorder %v5124, 0.0
  %vm5154 = vcmp.ge.f32.partialorder %v5127, 0.0
  %vm5155 = vcmp.ge.f32.partialorder %v5130, 0.0
  %vm5156 = vcmp.ge.f32.partialorder %v5133, 0.0
  %vm5157 = vcmp.ge.f32.partialorder %v5136, 0.0
  %vm5158 = vcmp.ge.f32.partialorder %v5139, 0.0
  %vm5159 = vcmp.ge.f32.partialorder %v5142, 0.0
  %vm5160 = vcmp.ge.f32.partialorder %v5145, 0.0
  %vm5161 = vcmp.ge.f32.partialorder %v5148, 0.0
  %v5162 = vmul.f32 %v5115, 0.2
  %v5163 = vmul.f32 %v5118, 0.2
  %v5164 = vmul.f32 %v5121, 0.2
  %v5165 = vmul.f32 %v5124, 0.2
  %v5166 = vmul.f32 %v5127, 0.2
  %v5167 = vmul.f32 %v5130, 0.2
  %v5168 = vmul.f32 %v5133, 0.2
  %v5169 = vmul.f32 %v5136, 0.2
  %v5170 = vmul.f32 %v5139, 0.2
  %v5171 = vmul.f32 %v5142, 0.2
  %v5172 = vmul.f32 %v5145, 0.2
  %v5173 = vmul.f32 %v5148, 0.2
  %v5174 = vsel %vm5150, %v5115, %v5162
  %v5175 = vsel %vm5151, %v5118, %v5163
  %v5176 = vsel %vm5152, %v5121, %v5164
  %v5177 = vsel %vm5153, %v5124, %v5165
  %v5178 = vsel %vm5154, %v5127, %v5166
  %v5179 = vsel %vm5155, %v5130, %v5167
  %v5180 = vsel %vm5156, %v5133, %v5168
  %v5181 = vsel %vm5157, %v5136, %v5169
  %v5182 = vsel %vm5158, %v5139, %v5170
  %v5183 = vsel %vm5159, %v5142, %v5171
  %v5184 = vsel %vm5160, %v5145, %v5172
  %v5185 = vsel %vm5161, %v5148, %v5173
  %vm5186 = vcmask 130048
  %v5187 = vsel %vm5186, %v5174, 0.0
  %5188 = vadd.xlane.f32.xlu0 %v5187
  %v5189 = vpop.xlane.xlu0 %5188
  %v5190 = vsel %vm5186, %v5175, 0.0
  %5191 = vadd.xlane.f32.xlu0 %v5190
  %v5192 = vpop.xlane.xlu0 %5191
  %v5193 = vsel %vm5186, %v5176, 0.0
  %5194 = vadd.xlane.f32.xlu0 %v5193
  %v5195 = vpop.xlane.xlu0 %5194
  %v5196 = vsel %vm5186, %v5177, 0.0
  %5197 = vadd.xlane.f32.xlu0 %v5196
  %v5198 = vpop.xlane.xlu0 %5197
  %v5199 = vsel %vm5186, %v5178, 0.0
  %5200 = vadd.xlane.f32.xlu0 %v5199
  %v5201 = vpop.xlane.xlu0 %5200
  %v5202 = vsel %vm5186, %v5179, 0.0
  %5203 = vadd.xlane.f32.xlu0 %v5202
  %v5204 = vpop.xlane.xlu0 %5203
  %v5205 = vsel %vm5186, %v5180, 0.0
  %5206 = vadd.xlane.f32.xlu0 %v5205
  %v5207 = vpop.xlane.xlu0 %5206
  %v5208 = vsel %vm5186, %v5181, 0.0
  %5209 = vadd.xlane.f32.xlu0 %v5208
  %v5210 = vpop.xlane.xlu0 %5209
  %v5211 = vsel %vm5186, %v5182, 0.0
  %5212 = vadd.xlane.f32.xlu0 %v5211
  %v5213 = vpop.xlane.xlu0 %5212
  %v5214 = vsel %vm5186, %v5183, 0.0
  %5215 = vadd.xlane.f32.xlu0 %v5214
  %v5216 = vpop.xlane.xlu0 %5215
  %v5217 = vsel %vm5186, %v5184, 0.0
  %5218 = vadd.xlane.f32.xlu0 %v5217
  %v5219 = vpop.xlane.xlu0 %5218
  %v5220 = vsel %vm5186, %v5185, 0.0
  %5221 = vadd.xlane.f32.xlu0 %v5220
  %v5222 = vpop.xlane.xlu0 %5221
  %v5223 = vrcp.pop 16.0
  %v5224 = vmul.f32 16.0, %v5223
  %v5225 = vsub.f32 1.0, %v5224
  %v5226 = vmul.f32 %v5223, %v5225
  %v5227 = vadd.f32 %v5223, %v5226
  %vm5228 = vweird.f32 %v5223
  %v5229 = vsel %vm5228, %v5223, %v5227
  %v5230 = vmul.f32 %v5189, %v5229
  %v5231 = vmul.f32 %v5192, %v5229
  %v5232 = vmul.f32 %v5195, %v5229
  %v5233 = vmul.f32 %v5198, %v5229
  %v5234 = vmul.f32 %v5201, %v5229
  %v5235 = vmul.f32 %v5204, %v5229
  %v5236 = vmul.f32 %v5207, %v5229
  %v5237 = vmul.f32 %v5210, %v5229
  %v5238 = vmul.f32 %v5213, %v5229
  %v5239 = vmul.f32 %v5216, %v5229
  %v5240 = vmul.f32 %v5219, %v5229
  %v5241 = vmul.f32 %v5222, %v5229
  %v5242 = vsub.f32 %v5174, %v5230
  %v5243 = vsub.f32 %v5175, %v5231
  %v5244 = vsub.f32 %v5176, %v5232
  %v5245 = vsub.f32 %v5177, %v5233
  %v5246 = vsub.f32 %v5178, %v5234
  %v5247 = vsub.f32 %v5179, %v5235
  %v5248 = vsub.f32 %v5180, %v5236
  %v5249 = vsub.f32 %v5181, %v5237
  %v5250 = vsub.f32 %v5182, %v5238
  %v5251 = vsub.f32 %v5183, %v5239
  %v5252 = vsub.f32 %v5184, %v5240
  %v5253 = vsub.f32 %v5185, %v5241
  %v5254 = vmul.f32 %v5242, %v5242
  %v5255 = vmul.f32 %v5243, %v5243
  %v5256 = vmul.f32 %v5244, %v5244
  %v5257 = vmul.f32 %v5245, %v5245
  %v5258 = vmul.f32 %v5246, %v5246
  %v5259 = vmul.f32 %v5247, %v5247
  %v5260 = vmul.f32 %v5248, %v5248
  %v5261 = vmul.f32 %v5249, %v5249
  %v5262 = vmul.f32 %v5250, %v5250
  %v5263 = vmul.f32 %v5251, %v5251
  %v5264 = vmul.f32 %v5252, %v5252
  %v5265 = vmul.f32 %v5253, %v5253
  %v5266 = vsel %vm5186, %v5254, 0.0
  %5267 = vadd.xlane.f32.xlu0 %v5266
  %v5268 = vpop.xlane.xlu0 %5267
  %v5269 = vsel %vm5186, %v5255, 0.0
  %5270 = vadd.xlane.f32.xlu0 %v5269
  %v5271 = vpop.xlane.xlu0 %5270
  %v5272 = vsel %vm5186, %v5256, 0.0
  %5273 = vadd.xlane.f32.xlu0 %v5272
  %v5274 = vpop.xlane.xlu0 %5273
  %v5275 = vsel %vm5186, %v5257, 0.0
  %5276 = vadd.xlane.f32.xlu0 %v5275
  %v5277 = vpop.xlane.xlu0 %5276
  %v5278 = vsel %vm5186, %v5258, 0.0
  %5279 = vadd.xlane.f32.xlu0 %v5278
  %v5280 = vpop.xlane.xlu0 %5279
  %v5281 = vsel %vm5186, %v5259, 0.0
  %5282 = vadd.xlane.f32.xlu0 %v5281
  %v5283 = vpop.xlane.xlu0 %5282
  %v5284 = vsel %vm5186, %v5260, 0.0
  %5285 = vadd.xlane.f32.xlu0 %v5284
  %v5286 = vpop.xlane.xlu0 %5285
  %v5287 = vsel %vm5186, %v5261, 0.0
  %5288 = vadd.xlane.f32.xlu0 %v5287
  %v5289 = vpop.xlane.xlu0 %5288
  %v5290 = vsel %vm5186, %v5262, 0.0
  %5291 = vadd.xlane.f32.xlu0 %v5290
  %v5292 = vpop.xlane.xlu0 %5291
  %v5293 = vsel %vm5186, %v5263, 0.0
  %5294 = vadd.xlane.f32.xlu0 %v5293
  %v5295 = vpop.xlane.xlu0 %5294
  %v5296 = vsel %vm5186, %v5264, 0.0
  %5297 = vadd.xlane.f32.xlu0 %v5296
  %v5298 = vpop.xlane.xlu0 %5297
  %v5299 = vsel %vm5186, %v5265, 0.0
  %5300 = vadd.xlane.f32.xlu0 %v5299
  %v5301 = vpop.xlane.xlu0 %5300
  %v5302 = vmul.f32 %v5268, %v5229
  %v5303 = vmul.f32 %v5271, %v5229
  %v5304 = vmul.f32 %v5274, %v5229
  %v5305 = vmul.f32 %v5277, %v5229
  %v5306 = vmul.f32 %v5280, %v5229
  %v5307 = vmul.f32 %v5283, %v5229
  %v5308 = vmul.f32 %v5286, %v5229
  %v5309 = vmul.f32 %v5289, %v5229
  %v5310 = vmul.f32 %v5292, %v5229
  %v5311 = vmul.f32 %v5295, %v5229
  %v5312 = vmul.f32 %v5298, %v5229
  %v5313 = vmul.f32 %v5301, %v5229
  %v5314 = vadd.f32 %v5302, 1e-06
  %v5315 = vadd.f32 %v5303, 1e-06
  %v5316 = vadd.f32 %v5304, 1e-06
  %v5317 = vadd.f32 %v5305, 1e-06
  %v5318 = vadd.f32 %v5306, 1e-06
  %v5319 = vadd.f32 %v5307, 1e-06
  %v5320 = vadd.f32 %v5308, 1e-06
  %v5321 = vadd.f32 %v5309, 1e-06
  %v5322 = vadd.f32 %v5310, 1e-06
  %v5323 = vadd.f32 %v5311, 1e-06
  %v5324 = vadd.f32 %v5312, 1e-06
  %v5325 = vadd.f32 %v5313, 1e-06
  %v5326 = vrsqrt.pop %v5314
  %v5327 = vmul.f32 %v5326, %v5314
  %v5328 = vmul.f32 %v5327, %v5326
  %v5329 = vmul.f32 0.5, %v5328
  %v5330 = vsub.f32 1.5, %v5329
  %v5331 = vmul.f32 %v5326, %v5330
  %vm5332 = vweird.f32 %v5314
  %vm5333 = vweird.f32 %v5326
  %vm5334 = vmor %vm5332, %vm5333
  %v5335 = vsel %vm5334, %v5326, %v5331
  %v5336 = vrsqrt.pop %v5315
  %v5337 = vmul.f32 %v5336, %v5315
  %v5338 = vmul.f32 %v5337, %v5336
  %v5339 = vmul.f32 0.5, %v5338
  %v5340 = vsub.f32 1.5, %v5339
  %v5341 = vmul.f32 %v5336, %v5340
  %vm5342 = vweird.f32 %v5315
  %vm5343 = vweird.f32 %v5336
  %vm5344 = vmor %vm5342, %vm5343
  %v5345 = vsel %vm5344, %v5336, %v5341
  %v5346 = vrsqrt.pop %v5316
  %v5347 = vmul.f32 %v5346, %v5316
  %v5348 = vmul.f32 %v5347, %v5346
  %v5349 = vmul.f32 0.5, %v5348
  %v5350 = vsub.f32 1.5, %v5349
  %v5351 = vmul.f32 %v5346, %v5350
  %vm5352 = vweird.f32 %v5316
  %vm5353 = vweird.f32 %v5346
  %vm5354 = vmor %vm5352, %vm5353
  %v5355 = vsel %vm5354, %v5346, %v5351
  %v5356 = vrsqrt.pop %v5317
  %v5357 = vmul.f32 %v5356, %v5317
  %v5358 = vmul.f32 %v5357, %v5356
  %v5359 = vmul.f32 0.5, %v5358
  %v5360 = vsub.f32 1.5, %v5359
  %v5361 = vmul.f32 %v5356, %v5360
  %vm5362 = vweird.f32 %v5317
  %vm5363 = vweird.f32 %v5356
  %vm5364 = vmor %vm5362, %vm5363
  %v5365 = vsel %vm5364, %v5356, %v5361
  %v5366 = vrsqrt.pop %v5318
  %v5367 = vmul.f32 %v5366, %v5318
  %v5368 = vmul.f32 %v5367, %v5366
  %v5369 = vmul.f32 0.5, %v5368
  %v5370 = vsub.f32 1.5, %v5369
  %v5371 = vmul.f32 %v5366, %v5370
  %vm5372 = vweird.f32 %v5318
  %vm5373 = vweird.f32 %v5366
  %vm5374 = vmor %vm5372, %vm5373
  %v5375 = vsel %vm5374, %v5366, %v5371
  %v5376 = vrsqrt.pop %v5319
  %v5377 = vmul.f32 %v5376, %v5319
  %v5378 = vmul.f32 %v5377, %v5376
  %v5379 = vmul.f32 0.5, %v5378
  %v5380 = vsub.f32 1.5, %v5379
  %v5381 = vmul.f32 %v5376, %v5380
  %vm5382 = vweird.f32 %v5319
  %vm5383 = vweird.f32 %v5376
  %vm5384 = vmor %vm5382, %vm5383
  %v5385 = vsel %vm5384, %v5376, %v5381
  %v5386 = vrsqrt.pop %v5320
  %v5387 = vmul.f32 %v5386, %v5320
  %v5388 = vmul.f32 %v5387, %v5386
  %v5389 = vmul.f32 0.5, %v5388
  %v5390 = vsub.f32 1.5, %v5389
  %v5391 = vmul.f32 %v5386, %v5390
  %vm5392 = vweird.f32 %v5320
  %vm5393 = vweird.f32 %v5386
  %vm5394 = vmor %vm5392, %vm5393
  %v5395 = vsel %vm5394, %v5386, %v5391
  %v5396 = vrsqrt.pop %v5321
  %v5397 = vmul.f32 %v5396, %v5321
  %v5398 = vmul.f32 %v5397, %v5396
  %v5399 = vmul.f32 0.5, %v5398
  %v5400 = vsub.f32 1.5, %v5399
  %v5401 = vmul.f32 %v5396, %v5400
  %vm5402 = vweird.f32 %v5321
  %vm5403 = vweird.f32 %v5396
  %vm5404 = vmor %vm5402, %vm5403
  %v5405 = vsel %vm5404, %v5396, %v5401
  %v5406 = vrsqrt.pop %v5322
  %v5407 = vmul.f32 %v5406, %v5322
  %v5408 = vmul.f32 %v5407, %v5406
  %v5409 = vmul.f32 0.5, %v5408
  %v5410 = vsub.f32 1.5, %v5409
  %v5411 = vmul.f32 %v5406, %v5410
  %vm5412 = vweird.f32 %v5322
  %vm5413 = vweird.f32 %v5406
  %vm5414 = vmor %vm5412, %vm5413
  %v5415 = vsel %vm5414, %v5406, %v5411
  %v5416 = vrsqrt.pop %v5323
  %v5417 = vmul.f32 %v5416, %v5323
  %v5418 = vmul.f32 %v5417, %v5416
  %v5419 = vmul.f32 0.5, %v5418
  %v5420 = vsub.f32 1.5, %v5419
  %v5421 = vmul.f32 %v5416, %v5420
  %vm5422 = vweird.f32 %v5323
  %vm5423 = vweird.f32 %v5416
  %vm5424 = vmor %vm5422, %vm5423
  %v5425 = vsel %vm5424, %v5416, %v5421
  %v5426 = vrsqrt.pop %v5324
  %v5427 = vmul.f32 %v5426, %v5324
  %v5428 = vmul.f32 %v5427, %v5426
  %v5429 = vmul.f32 0.5, %v5428
  %v5430 = vsub.f32 1.5, %v5429
  %v5431 = vmul.f32 %v5426, %v5430
  %vm5432 = vweird.f32 %v5324
  %vm5433 = vweird.f32 %v5426
  %vm5434 = vmor %vm5432, %vm5433
  %v5435 = vsel %vm5434, %v5426, %v5431
  %v5436 = vrsqrt.pop %v5325
  %v5437 = vmul.f32 %v5436, %v5325
  %v5438 = vmul.f32 %v5437, %v5436
  %v5439 = vmul.f32 0.5, %v5438
  %v5440 = vsub.f32 1.5, %v5439
  %v5441 = vmul.f32 %v5436, %v5440
  %vm5442 = vweird.f32 %v5325
  %vm5443 = vweird.f32 %v5436
  %vm5444 = vmor %vm5442, %vm5443
  %v5445 = vsel %vm5444, %v5436, %v5441
  %v5446 = vmul.f32 %v5242, %v5335
  %v5447 = vmul.f32 %v5243, %v5345
  %v5448 = vmul.f32 %v5244, %v5355
  %v5449 = vmul.f32 %v5245, %v5365
  %v5450 = vmul.f32 %v5246, %v5375
  %v5451 = vmul.f32 %v5247, %v5385
  %v5452 = vmul.f32 %v5248, %v5395
  %v5453 = vmul.f32 %v5249, %v5405
  %v5454 = vmul.f32 %v5250, %v5415
  %v5455 = vmul.f32 %v5251, %v5425
  %v5456 = vmul.f32 %v5252, %v5435
  %v5457 = vmul.f32 %v5253, %v5445
  %vm5458 = vcmp.ge.f32.partialorder %v5446, 0.0
  %vm5459 = vcmp.ge.f32.partialorder %v5447, 0.0
  %vm5460 = vcmp.ge.f32.partialorder %v5448, 0.0
  %vm5461 = vcmp.ge.f32.partialorder %v5449, 0.0
  %vm5462 = vcmp.ge.f32.partialorder %v5450, 0.0
  %vm5463 = vcmp.ge.f32.partialorder %v5451, 0.0
  %vm5464 = vcmp.ge.f32.partialorder %v5452, 0.0
  %vm5465 = vcmp.ge.f32.partialorder %v5453, 0.0
  %vm5466 = vcmp.ge.f32.partialorder %v5454, 0.0
  %vm5467 = vcmp.ge.f32.partialorder %v5455, 0.0
  %vm5468 = vcmp.ge.f32.partialorder %v5456, 0.0
  %vm5469 = vcmp.ge.f32.partialorder %v5457, 0.0
  %v5470 = vmul.f32 %v5446, 0.2
  %v5471 = vmul.f32 %v5447, 0.2
  %v5472 = vmul.f32 %v5448, 0.2
  %v5473 = vmul.f32 %v5449, 0.2
  %v5474 = vmul.f32 %v5450, 0.2
  %v5475 = vmul.f32 %v5451, 0.2
  %v5476 = vmul.f32 %v5452, 0.2
  %v5477 = vmul.f32 %v5453, 0.2
  %v5478 = vmul.f32 %v5454, 0.2
  %v5479 = vmul.f32 %v5455, 0.2
  %v5480 = vmul.f32 %v5456, 0.2
  %v5481 = vmul.f32 %v5457, 0.2
  %v5482 = vsel %vm5458, %v5446, %v5470
  %v5483 = vsel %vm5459, %v5447, %v5471
  %v5484 = vsel %vm5460, %v5448, %v5472
  %v5485 = vsel %vm5461, %v5449, %v5473
  %v5486 = vsel %vm5462, %v5450, %v5474
  %v5487 = vsel %vm5463, %v5451, %v5475
  %v5488 = vsel %vm5464, %v5452, %v5476
  %v5489 = vsel %vm5465, %v5453, %v5477
  %v5490 = vsel %vm5466, %v5454, %v5478
  %v5491 = vsel %vm5467, %v5455, %v5479
  %v5492 = vsel %vm5468, %v5456, %v5480
  %v5493 = vsel %vm5469, %v5457, %v5481
  %v5494 = vld [vmem:[%s8] sm:$0xff]
  %v5495 = vld [vmem:[%s8 + $0x8] sm:$0xff]
  %v5496 = vld [vmem:[%s8 + $0x10] sm:$0xff]
  %v5497 = vld [vmem:[%s8 + $0x18] sm:$0xff]
  %v5498 = vld [vmem:[%s8 + $0x20] sm:$0xff]
  %v5499 = vld [vmem:[%s8 + $0x28] sm:$0xff]
  %v5500 = vld [vmem:[%s8 + $0x30] sm:$0xff]
  %v5501 = vld [vmem:[%s8 + $0x38] sm:$0xff]
  %v5502 = vld [vmem:[%s8 + $0x40] sm:$0xff]
  %v5503 = vld [vmem:[%s8 + $0x48] sm:$0xff]
  %v5504 = vld [vmem:[%s8 + $0x50] sm:$0xff]
  %v5505 = vld [vmem:[%s8 + $0x58] sm:$0xff]
  %v5506 = vld [vmem:[%s8 + $0x60] sm:$0xff]
  %v5507 = vld [vmem:[%s8 + $0x68] sm:$0xff]
  %v5508 = vld [vmem:[%s8 + $0x70] sm:$0xff]
  %v5509 = vld [vmem:[%s8 + $0x78] sm:$0xff]
  %v5510 = vld [vmem:[%s8 + $0x80] sm:$0xff]
  %v5511 = vld [vmem:[%s8 + $0x88] sm:$0xff]
  %v5512 = vld [vmem:[%s8 + $0x90] sm:$0xff]
  %v5513 = vld [vmem:[%s8 + $0x98] sm:$0xff]
  %v5514 = vld [vmem:[%s8 + $0xa0] sm:$0xff]
  %v5515 = vld [vmem:[%s8 + $0xa8] sm:$0xff]
  %v5516 = vld [vmem:[%s8 + $0xb0] sm:$0xff]
  %v5517 = vld [vmem:[%s8 + $0xb8] sm:$0xff]
  %v5518 = vld [vmem:[%s8 + $0xc0] sm:$0xff]
  %v5519 = vld [vmem:[%s8 + $0xc8] sm:$0xff]
  %v5520 = vld [vmem:[%s8 + $0xd0] sm:$0xff]
  %v5521 = vld [vmem:[%s8 + $0xd8] sm:$0xff]
  %v5522 = vld [vmem:[%s8 + $0xe0] sm:$0xff]
  %v5523 = vld [vmem:[%s8 + $0xe8] sm:$0xff]
  %v5524 = vld [vmem:[%s8 + $0xf0] sm:$0xff]
  %v5525 = vld [vmem:[%s8 + $0xf8] sm:$0xff]
  %v5526 = vld [vmem:[%s8 + $0x100] sm:$0xff]
  %v5527 = vld [vmem:[%s8 + $0x108] sm:$0xff]
  %v5528 = vld [vmem:[%s8 + $0x110] sm:$0xff]
  %v5529 = vld [vmem:[%s8 + $0x118] sm:$0xff]
  %v5530 = vld [vmem:[%s8 + $0x120] sm:$0xff]
  %v5531 = vld [vmem:[%s8 + $0x128] sm:$0xff]
  %v5532 = vld [vmem:[%s8 + $0x130] sm:$0xff]
  %v5533 = vld [vmem:[%s8 + $0x138] sm:$0xff]
  %v5534 = vld [vmem:[%s8 + $0x140] sm:$0xff]
  %v5535 = vld [vmem:[%s8 + $0x148] sm:$0xff]
  %v5536 = vld [vmem:[%s8 + $0x150] sm:$0xff]
  %v5537 = vld [vmem:[%s8 + $0x158] sm:$0xff]
  %v5538 = vld [vmem:[%s8 + $0x160] sm:$0xff]
  %v5539 = vld [vmem:[%s8 + $0x168] sm:$0xff]
  %v5540 = vld [vmem:[%s8 + $0x170] sm:$0xff]
  %v5541 = vld [vmem:[%s8 + $0x178] sm:$0xff]
  %v5542 = vld [vmem:[%s8 + $0x180] sm:$0xff]
  %v5543 = vld [vmem:[%s8 + $0x188] sm:$0xff]
  %v5544 = vld [vmem:[%s8 + $0x190] sm:$0xff]
  %v5545 = vld [vmem:[%s8 + $0x198] sm:$0xff]
  %v5546 = vld [vmem:[%s8 + $0x1a0] sm:$0xff]
  %v5547 = vld [vmem:[%s8 + $0x1a8] sm:$0xff]
  %v5548 = vld [vmem:[%s8 + $0x1b0] sm:$0xff]
  %v5549 = vld [vmem:[%s8 + $0x1b8] sm:$0xff]
  %v5550 = vld [vmem:[%s8 + $0x1c0] sm:$0xff]
  %v5551 = vld [vmem:[%s8 + $0x1c8] sm:$0xff]
  %v5552 = vld [vmem:[%s8 + $0x1d0] sm:$0xff]
  %v5553 = vld [vmem:[%s8 + $0x1d8] sm:$0xff]
  %v5554 = vld [vmem:[%s8 + $0x1e0] sm:$0xff]
  %v5555 = vld [vmem:[%s8 + $0x1e8] sm:$0xff]
  %v5556 = vld [vmem:[%s8 + $0x1f0] sm:$0xff]
  %v5557 = vld [vmem:[%s8 + $0x1f8] sm:$0xff]
  %v5559 = vsel %vm5186, %v5494, 0
  %v5562 = vsel %vm5186, %v5495, 0
  %v5565 = vsel %vm5186, %v5496, 0
  %v5568 = vsel %vm5186, %v5497, 0
  %v5571 = vsel %vm5186, %v5498, 0
  %v5574 = vsel %vm5186, %v5499, 0
  %v5577 = vsel %vm5186, %v5500, 0
  %v5580 = vsel %vm5186, %v5501, 0
  %v5583 = vsel %vm5186, %v5502, 0
  %v5586 = vsel %vm5186, %v5503, 0
  %v5589 = vsel %vm5186, %v5504, 0
  %v5592 = vsel %vm5186, %v5505, 0
  %v5595 = vsel %vm5186, %v5506, 0
  %v5598 = vsel %vm5186, %v5507, 0
  %v5601 = vsel %vm5186, %v5508, 0
  %v5604 = vsel %vm5186, %v5509, 0
  %v5607 = vsel %vm5186, %v5510, 0
  %v5610 = vsel %vm5186, %v5511, 0
  %v5613 = vsel %vm5186, %v5512, 0
  %v5616 = vsel %vm5186, %v5513, 0
  %v5619 = vsel %vm5186, %v5514, 0
  %v5622 = vsel %vm5186, %v5515, 0
  %v5625 = vsel %vm5186, %v5516, 0
  %v5628 = vsel %vm5186, %v5517, 0
  %v5631 = vsel %vm5186, %v5518, 0
  %v5634 = vsel %vm5186, %v5519, 0
  %v5637 = vsel %vm5186, %v5520, 0
  %v5640 = vsel %vm5186, %v5521, 0
  %v5643 = vsel %vm5186, %v5522, 0
  %v5646 = vsel %vm5186, %v5523, 0
  %v5649 = vsel %vm5186, %v5524, 0
  %v5652 = vsel %vm5186, %v5525, 0
  %v5655 = vsel %vm5186, %v5526, 0
  %v5658 = vsel %vm5186, %v5527, 0
  %v5661 = vsel %vm5186, %v5528, 0
  %v5664 = vsel %vm5186, %v5529, 0
  %v5667 = vsel %vm5186, %v5530, 0
  %v5670 = vsel %vm5186, %v5531, 0
  %v5673 = vsel %vm5186, %v5532, 0
  %v5676 = vsel %vm5186, %v5533, 0
  %v5679 = vsel %vm5186, %v5534, 0
  %v5682 = vsel %vm5186, %v5535, 0
  %v5685 = vsel %vm5186, %v5536, 0
  %v5688 = vsel %vm5186, %v5537, 0
  %v5691 = vsel %vm5186, %v5538, 0
  %v5694 = vsel %vm5186, %v5539, 0
  %v5697 = vsel %vm5186, %v5540, 0
  %v5700 = vsel %vm5186, %v5541, 0
  %v5703 = vsel %vm5186, %v5542, 0
  %v5706 = vsel %vm5186, %v5543, 0
  %v5709 = vsel %vm5186, %v5544, 0
  %v5712 = vsel %vm5186, %v5545, 0
  %v5715 = vsel %vm5186, %v5546, 0
  %v5718 = vsel %vm5186, %v5547, 0
  %v5721 = vsel %vm5186, %v5548, 0
  %v5724 = vsel %vm5186, %v5549, 0
  %v5727 = vsel %vm5186, %v5550, 0
  %v5730 = vsel %vm5186, %v5551, 0
  %v5733 = vsel %vm5186, %v5552, 0
  %v5736 = vsel %vm5186, %v5553, 0
  %v5739 = vsel %vm5186, %v5554, 0
  %v5742 = vsel %vm5186, %v5555, 0
  %v5745 = vsel %vm5186, %v5556, 0
  %v5748 = vsel %vm5186, %v5557, 0
  %5750 = vmatpush.msra.mxu0 0.0
  %5751 = vmatpush.msra.mxu0 0.0
  %5752 = vmatpush.msra.mxu0 0.0
  %5753 = vmatpush.msra.mxu0 0.0
  %5754 = vmatpush.msra.mxu0 0.0
  %5755 = vmatpush.msra.mxu0 0.0
  %5756 = vmatpush.msra.mxu0 0.0
  %5757 = vmatpush.msra.mxu0 0.0
  %5758 = vmatpush.msra.mxu0 0.0
  %5759 = vmatpush.msra.mxu0 0.0
  %5760 = vmatpush.msra.mxu0 0.0
  %5761 = vmatpush.msra.mxu0 0.0
  %5762 = vmatpush.msra.mxu0 0.0
  %5763 = vmatpush.msra.mxu0 0.0
  %5764 = vmatpush.msra.mxu0 %v5483
  %5765 = vmatpush.msra.mxu0 %v5482
  %5766 = vmatmul.f32.gmra.mxu0 %v5559
  %v5767 = vpop.f32.mrf.mxu0
  %v5768 = vadd.f32 0.0, %v5767
  %5769 = vmatmul.f32.gmra.mxu0 %v5562
  %v5770 = vpop.f32.mrf.mxu0
  %v5771 = vadd.f32 0.0, %v5770
  %5772 = vmatmul.f32.gmra.mxu0 %v5565
  %v5773 = vpop.f32.mrf.mxu0
  %v5774 = vadd.f32 0.0, %v5773
  %5775 = vmatmul.f32.gmra.mxu0 %v5568
  %v5776 = vpop.f32.mrf.mxu0
  %v5777 = vadd.f32 0.0, %v5776
  %5778 = vmatmul.f32.gmra.mxu0 %v5571
  %v5779 = vpop.f32.mrf.mxu0
  %v5780 = vadd.f32 0.0, %v5779
  %5781 = vmatmul.f32.gmra.mxu0 %v5574
  %v5782 = vpop.f32.mrf.mxu0
  %v5783 = vadd.f32 0.0, %v5782
  %5784 = vmatmul.f32.gmra.mxu0 %v5577
  %v5785 = vpop.f32.mrf.mxu0
  %v5786 = vadd.f32 0.0, %v5785
  %5787 = vmatmul.f32.gmra.mxu0 %v5580
  %v5788 = vpop.f32.mrf.mxu0
  %v5789 = vadd.f32 0.0, %v5788
  %5790 = vmatmul.f32.gmra.mxu0 %v5583
  %v5791 = vpop.f32.mrf.mxu0
  %v5792 = vadd.f32 0.0, %v5791
  %5793 = vmatmul.f32.gmra.mxu0 %v5586
  %v5794 = vpop.f32.mrf.mxu0
  %v5795 = vadd.f32 0.0, %v5794
  %5796 = vmatmul.f32.gmra.mxu0 %v5589
  %v5797 = vpop.f32.mrf.mxu0
  %v5798 = vadd.f32 0.0, %v5797
  %5799 = vmatmul.f32.gmra.mxu0 %v5592
  %v5800 = vpop.f32.mrf.mxu0
  %v5801 = vadd.f32 0.0, %v5800
  %5802 = vmatmul.f32.gmra.mxu0 %v5595
  %v5803 = vpop.f32.mrf.mxu0
  %v5804 = vadd.f32 0.0, %v5803
  %5805 = vmatmul.f32.gmra.mxu0 %v5598
  %v5806 = vpop.f32.mrf.mxu0
  %v5807 = vadd.f32 0.0, %v5806
  %5808 = vmatmul.f32.gmra.mxu0 %v5601
  %v5809 = vpop.f32.mrf.mxu0
  %v5810 = vadd.f32 0.0, %v5809
  %5811 = vmatmul.f32.gmra.mxu0 %v5604
  %v5812 = vpop.f32.mrf.mxu0
  %v5813 = vadd.f32 0.0, %v5812
  %5814 = vmatmul.f32.gmra.mxu0 %v5607
  %v5815 = vpop.f32.mrf.mxu0
  %v5816 = vadd.f32 0.0, %v5815
  %5817 = vmatmul.f32.gmra.mxu0 %v5610
  %v5818 = vpop.f32.mrf.mxu0
  %v5819 = vadd.f32 0.0, %v5818
  %5820 = vmatmul.f32.gmra.mxu0 %v5613
  %v5821 = vpop.f32.mrf.mxu0
  %v5822 = vadd.f32 0.0, %v5821
  %5823 = vmatmul.f32.gmra.mxu0 %v5616
  %v5824 = vpop.f32.mrf.mxu0
  %v5825 = vadd.f32 0.0, %v5824
  %5826 = vmatmul.f32.gmra.mxu0 %v5619
  %v5827 = vpop.f32.mrf.mxu0
  %v5828 = vadd.f32 0.0, %v5827
  %5829 = vmatmul.f32.gmra.mxu0 %v5622
  %v5830 = vpop.f32.mrf.mxu0
  %v5831 = vadd.f32 0.0, %v5830
  %5832 = vmatmul.f32.gmra.mxu0 %v5625
  %v5833 = vpop.f32.mrf.mxu0
  %v5834 = vadd.f32 0.0, %v5833
  %5835 = vmatmul.f32.gmra.mxu0 %v5628
  %v5836 = vpop.f32.mrf.mxu0
  %v5837 = vadd.f32 0.0, %v5836
  %5838 = vmatmul.f32.gmra.mxu0 %v5631
  %v5839 = vpop.f32.mrf.mxu0
  %v5840 = vadd.f32 0.0, %v5839
  %5841 = vmatmul.f32.gmra.mxu0 %v5634
  %v5842 = vpop.f32.mrf.mxu0
  %v5843 = vadd.f32 0.0, %v5842
  %5844 = vmatmul.f32.gmra.mxu0 %v5637
  %v5845 = vpop.f32.mrf.mxu0
  %v5846 = vadd.f32 0.0, %v5845
  %5847 = vmatmul.f32.gmra.mxu0 %v5640
  %v5848 = vpop.f32.mrf.mxu0
  %v5849 = vadd.f32 0.0, %v5848
  %5850 = vmatmul.f32.gmra.mxu0 %v5643
  %v5851 = vpop.f32.mrf.mxu0
  %v5852 = vadd.f32 0.0, %v5851
  %5853 = vmatmul.f32.gmra.mxu0 %v5646
  %v5854 = vpop.f32.mrf.mxu0
  %v5855 = vadd.f32 0.0, %v5854
  %5856 = vmatmul.f32.gmra.mxu0 %v5649
  %v5857 = vpop.f32.mrf.mxu0
  %v5858 = vadd.f32 0.0, %v5857
  %5859 = vmatmul.f32.gmra.mxu0 %v5652
  %v5860 = vpop.f32.mrf.mxu0
  %v5861 = vadd.f32 0.0, %v5860
  %5862 = vmatmul.f32.gmra.mxu0 %v5655
  %v5863 = vpop.f32.mrf.mxu0
  %v5864 = vadd.f32 0.0, %v5863
  %5865 = vmatmul.f32.gmra.mxu0 %v5658
  %v5866 = vpop.f32.mrf.mxu0
  %v5867 = vadd.f32 0.0, %v5866
  %5868 = vmatmul.f32.gmra.mxu0 %v5661
  %v5869 = vpop.f32.mrf.mxu0
  %v5870 = vadd.f32 0.0, %v5869
  %5871 = vmatmul.f32.gmra.mxu0 %v5664
  %v5872 = vpop.f32.mrf.mxu0
  %v5873 = vadd.f32 0.0, %v5872
  %5874 = vmatmul.f32.gmra.mxu0 %v5667
  %v5875 = vpop.f32.mrf.mxu0
  %v5876 = vadd.f32 0.0, %v5875
  %5877 = vmatmul.f32.gmra.mxu0 %v5670
  %v5878 = vpop.f32.mrf.mxu0
  %v5879 = vadd.f32 0.0, %v5878
  %5880 = vmatmul.f32.gmra.mxu0 %v5673
  %v5881 = vpop.f32.mrf.mxu0
  %v5882 = vadd.f32 0.0, %v5881
  %5883 = vmatmul.f32.gmra.mxu0 %v5676
  %v5884 = vpop.f32.mrf.mxu0
  %v5885 = vadd.f32 0.0, %v5884
  %5886 = vmatmul.f32.gmra.mxu0 %v5679
  %v5887 = vpop.f32.mrf.mxu0
  %v5888 = vadd.f32 0.0, %v5887
  %5889 = vmatmul.f32.gmra.mxu0 %v5682
  %v5890 = vpop.f32.mrf.mxu0
  %v5891 = vadd.f32 0.0, %v5890
  %5892 = vmatmul.f32.gmra.mxu0 %v5685
  %v5893 = vpop.f32.mrf.mxu0
  %v5894 = vadd.f32 0.0, %v5893
  %5895 = vmatmul.f32.gmra.mxu0 %v5688
  %v5896 = vpop.f32.mrf.mxu0
  %v5897 = vadd.f32 0.0, %v5896
  %5898 = vmatmul.f32.gmra.mxu0 %v5691
  %v5899 = vpop.f32.mrf.mxu0
  %v5900 = vadd.f32 0.0, %v5899
  %5901 = vmatmul.f32.gmra.mxu0 %v5694
  %v5902 = vpop.f32.mrf.mxu0
  %v5903 = vadd.f32 0.0, %v5902
  %5904 = vmatmul.f32.gmra.mxu0 %v5697
  %v5905 = vpop.f32.mrf.mxu0
  %v5906 = vadd.f32 0.0, %v5905
  %5907 = vmatmul.f32.gmra.mxu0 %v5700
  %v5908 = vpop.f32.mrf.mxu0
  %v5909 = vadd.f32 0.0, %v5908
  %5910 = vmatmul.f32.gmra.mxu0 %v5703
  %v5911 = vpop.f32.mrf.mxu0
  %v5912 = vadd.f32 0.0, %v5911
  %5913 = vmatmul.f32.gmra.mxu0 %v5706
  %v5914 = vpop.f32.mrf.mxu0
  %v5915 = vadd.f32 0.0, %v5914
  %5916 = vmatmul.f32.gmra.mxu0 %v5709
  %v5917 = vpop.f32.mrf.mxu0
  %v5918 = vadd.f32 0.0, %v5917
  %5919 = vmatmul.f32.gmra.mxu0 %v5712
  %v5920 = vpop.f32.mrf.mxu0
  %v5921 = vadd.f32 0.0, %v5920
  %5922 = vmatmul.f32.gmra.mxu0 %v5715
  %v5923 = vpop.f32.mrf.mxu0
  %v5924 = vadd.f32 0.0, %v5923
  %5925 = vmatmul.f32.gmra.mxu0 %v5718
  %v5926 = vpop.f32.mrf.mxu0
  %v5927 = vadd.f32 0.0, %v5926
  %5928 = vmatmul.f32.gmra.mxu0 %v5721
  %v5929 = vpop.f32.mrf.mxu0
  %v5930 = vadd.f32 0.0, %v5929
  %5931 = vmatmul.f32.gmra.mxu0 %v5724
  %v5932 = vpop.f32.mrf.mxu0
  %v5933 = vadd.f32 0.0, %v5932
  %5934 = vmatmul.f32.gmra.mxu0 %v5727
  %v5935 = vpop.f32.mrf.mxu0
  %v5936 = vadd.f32 0.0, %v5935
  %5937 = vmatmul.f32.gmra.mxu0 %v5730
  %v5938 = vpop.f32.mrf.mxu0
  %v5939 = vadd.f32 0.0, %v5938
  %5940 = vmatmul.f32.gmra.mxu0 %v5733
  %v5941 = vpop.f32.mrf.mxu0
  %v5942 = vadd.f32 0.0, %v5941
  %5943 = vmatmul.f32.gmra.mxu0 %v5736
  %v5944 = vpop.f32.mrf.mxu0
  %v5945 = vadd.f32 0.0, %v5944
  %5946 = vmatmul.f32.gmra.mxu0 %v5739
  %v5947 = vpop.f32.mrf.mxu0
  %v5948 = vadd.f32 0.0, %v5947
  %5949 = vmatmul.f32.gmra.mxu0 %v5742
  %v5950 = vpop.f32.mrf.mxu0
  %v5951 = vadd.f32 0.0, %v5950
  %5952 = vmatmul.f32.gmra.mxu0 %v5745
  %v5953 = vpop.f32.mrf.mxu0
  %v5954 = vadd.f32 0.0, %v5953
  %5955 = vmatmul.f32.gmra.mxu0 %v5748
  %v5956 = vpop.f32.mrf.mxu0
  %v5957 = vadd.f32 0.0, %v5956
  %5958 = vdwg.mxu0
  %5959 = vmatpush.msra.mxu0 0.0
  %5960 = vmatpush.msra.mxu0 0.0
  %5961 = vmatpush.msra.mxu0 0.0
  %5962 = vmatpush.msra.mxu0 0.0
  %5963 = vmatpush.msra.mxu0 0.0
  %5964 = vmatpush.msra.mxu0 0.0
  %5965 = vmatpush.msra.mxu0 0.0
  %5966 = vmatpush.msra.mxu0 0.0
  %5967 = vmatpush.msra.mxu0 0.0
  %5968 = vmatpush.msra.mxu0 0.0
  %5969 = vmatpush.msra.mxu0 0.0
  %5970 = vmatpush.msra.mxu0 0.0
  %5971 = vmatpush.msra.mxu0 0.0
  %5972 = vmatpush.msra.mxu0 0.0
  %5973 = vmatpush.msra.mxu0 %v5485
  %5974 = vmatpush.msra.mxu0 %v5484
  %5975 = vmatmul.f32.gmra.mxu0 %v5559
  %v5976 = vpop.f32.mrf.mxu0
  %v5977 = vadd.f32 0.0, %v5976
  %5978 = vmatmul.f32.gmra.mxu0 %v5562
  %v5979 = vpop.f32.mrf.mxu0
  %v5980 = vadd.f32 0.0, %v5979
  %5981 = vmatmul.f32.gmra.mxu0 %v5565
  %v5982 = vpop.f32.mrf.mxu0
  %v5983 = vadd.f32 0.0, %v5982
  %5984 = vmatmul.f32.gmra.mxu0 %v5568
  %v5985 = vpop.f32.mrf.mxu0
  %v5986 = vadd.f32 0.0, %v5985
  %5987 = vmatmul.f32.gmra.mxu0 %v5571
  %v5988 = vpop.f32.mrf.mxu0
  %v5989 = vadd.f32 0.0, %v5988
  %5990 = vmatmul.f32.gmra.mxu0 %v5574
  %v5991 = vpop.f32.mrf.mxu0
  %v5992 = vadd.f32 0.0, %v5991
  %5993 = vmatmul.f32.gmra.mxu0 %v5577
  %v5994 = vpop.f32.mrf.mxu0
  %v5995 = vadd.f32 0.0, %v5994
  %5996 = vmatmul.f32.gmra.mxu0 %v5580
  %v5997 = vpop.f32.mrf.mxu0
  %v5998 = vadd.f32 0.0, %v5997
  %5999 = vmatmul.f32.gmra.mxu0 %v5583
  %v6000 = vpop.f32.mrf.mxu0
  %v6001 = vadd.f32 0.0, %v6000
  %6002 = vmatmul.f32.gmra.mxu0 %v5586
  %v6003 = vpop.f32.mrf.mxu0
  %v6004 = vadd.f32 0.0, %v6003
  %6005 = vmatmul.f32.gmra.mxu0 %v5589
  %v6006 = vpop.f32.mrf.mxu0
  %v6007 = vadd.f32 0.0, %v6006
  %6008 = vmatmul.f32.gmra.mxu0 %v5592
  %v6009 = vpop.f32.mrf.mxu0
  %v6010 = vadd.f32 0.0, %v6009
  %6011 = vmatmul.f32.gmra.mxu0 %v5595
  %v6012 = vpop.f32.mrf.mxu0
  %v6013 = vadd.f32 0.0, %v6012
  %6014 = vmatmul.f32.gmra.mxu0 %v5598
  %v6015 = vpop.f32.mrf.mxu0
  %v6016 = vadd.f32 0.0, %v6015
  %6017 = vmatmul.f32.gmra.mxu0 %v5601
  %v6018 = vpop.f32.mrf.mxu0
  %v6019 = vadd.f32 0.0, %v6018
  %6020 = vmatmul.f32.gmra.mxu0 %v5604
  %v6021 = vpop.f32.mrf.mxu0
  %v6022 = vadd.f32 0.0, %v6021
  %6023 = vmatmul.f32.gmra.mxu0 %v5607
  %v6024 = vpop.f32.mrf.mxu0
  %v6025 = vadd.f32 0.0, %v6024
  %6026 = vmatmul.f32.gmra.mxu0 %v5610
  %v6027 = vpop.f32.mrf.mxu0
  %v6028 = vadd.f32 0.0, %v6027
  %6029 = vmatmul.f32.gmra.mxu0 %v5613
  %v6030 = vpop.f32.mrf.mxu0
  %v6031 = vadd.f32 0.0, %v6030
  %6032 = vmatmul.f32.gmra.mxu0 %v5616
  %v6033 = vpop.f32.mrf.mxu0
  %v6034 = vadd.f32 0.0, %v6033
  %6035 = vmatmul.f32.gmra.mxu0 %v5619
  %v6036 = vpop.f32.mrf.mxu0
  %v6037 = vadd.f32 0.0, %v6036
  %6038 = vmatmul.f32.gmra.mxu0 %v5622
  %v6039 = vpop.f32.mrf.mxu0
  %v6040 = vadd.f32 0.0, %v6039
  %6041 = vmatmul.f32.gmra.mxu0 %v5625
  %v6042 = vpop.f32.mrf.mxu0
  %v6043 = vadd.f32 0.0, %v6042
  %6044 = vmatmul.f32.gmra.mxu0 %v5628
  %v6045 = vpop.f32.mrf.mxu0
  %v6046 = vadd.f32 0.0, %v6045
  %6047 = vmatmul.f32.gmra.mxu0 %v5631
  %v6048 = vpop.f32.mrf.mxu0
  %v6049 = vadd.f32 0.0, %v6048
  %6050 = vmatmul.f32.gmra.mxu0 %v5634
  %v6051 = vpop.f32.mrf.mxu0
  %v6052 = vadd.f32 0.0, %v6051
  %6053 = vmatmul.f32.gmra.mxu0 %v5637
  %v6054 = vpop.f32.mrf.mxu0
  %v6055 = vadd.f32 0.0, %v6054
  %6056 = vmatmul.f32.gmra.mxu0 %v5640
  %v6057 = vpop.f32.mrf.mxu0
  %v6058 = vadd.f32 0.0, %v6057
  %6059 = vmatmul.f32.gmra.mxu0 %v5643
  %v6060 = vpop.f32.mrf.mxu0
  %v6061 = vadd.f32 0.0, %v6060
  %6062 = vmatmul.f32.gmra.mxu0 %v5646
  %v6063 = vpop.f32.mrf.mxu0
  %v6064 = vadd.f32 0.0, %v6063
  %6065 = vmatmul.f32.gmra.mxu0 %v5649
  %v6066 = vpop.f32.mrf.mxu0
  %v6067 = vadd.f32 0.0, %v6066
  %6068 = vmatmul.f32.gmra.mxu0 %v5652
  %v6069 = vpop.f32.mrf.mxu0
  %v6070 = vadd.f32 0.0, %v6069
  %6071 = vmatmul.f32.gmra.mxu0 %v5655
  %v6072 = vpop.f32.mrf.mxu0
  %v6073 = vadd.f32 0.0, %v6072
  %6074 = vmatmul.f32.gmra.mxu0 %v5658
  %v6075 = vpop.f32.mrf.mxu0
  %v6076 = vadd.f32 0.0, %v6075
  %6077 = vmatmul.f32.gmra.mxu0 %v5661
  %v6078 = vpop.f32.mrf.mxu0
  %v6079 = vadd.f32 0.0, %v6078
  %6080 = vmatmul.f32.gmra.mxu0 %v5664
  %v6081 = vpop.f32.mrf.mxu0
  %v6082 = vadd.f32 0.0, %v6081
  %6083 = vmatmul.f32.gmra.mxu0 %v5667
  %v6084 = vpop.f32.mrf.mxu0
  %v6085 = vadd.f32 0.0, %v6084
  %6086 = vmatmul.f32.gmra.mxu0 %v5670
  %v6087 = vpop.f32.mrf.mxu0
  %v6088 = vadd.f32 0.0, %v6087
  %6089 = vmatmul.f32.gmra.mxu0 %v5673
  %v6090 = vpop.f32.mrf.mxu0
  %v6091 = vadd.f32 0.0, %v6090
  %6092 = vmatmul.f32.gmra.mxu0 %v5676
  %v6093 = vpop.f32.mrf.mxu0
  %v6094 = vadd.f32 0.0, %v6093
  %6095 = vmatmul.f32.gmra.mxu0 %v5679
  %v6096 = vpop.f32.mrf.mxu0
  %v6097 = vadd.f32 0.0, %v6096
  %6098 = vmatmul.f32.gmra.mxu0 %v5682
  %v6099 = vpop.f32.mrf.mxu0
  %v6100 = vadd.f32 0.0, %v6099
  %6101 = vmatmul.f32.gmra.mxu0 %v5685
  %v6102 = vpop.f32.mrf.mxu0
  %v6103 = vadd.f32 0.0, %v6102
  %6104 = vmatmul.f32.gmra.mxu0 %v5688
  %v6105 = vpop.f32.mrf.mxu0
  %v6106 = vadd.f32 0.0, %v6105
  %6107 = vmatmul.f32.gmra.mxu0 %v5691
  %v6108 = vpop.f32.mrf.mxu0
  %v6109 = vadd.f32 0.0, %v6108
  %6110 = vmatmul.f32.gmra.mxu0 %v5694
  %v6111 = vpop.f32.mrf.mxu0
  %v6112 = vadd.f32 0.0, %v6111
  %6113 = vmatmul.f32.gmra.mxu0 %v5697
  %v6114 = vpop.f32.mrf.mxu0
  %v6115 = vadd.f32 0.0, %v6114
  %6116 = vmatmul.f32.gmra.mxu0 %v5700
  %v6117 = vpop.f32.mrf.mxu0
  %v6118 = vadd.f32 0.0, %v6117
  %6119 = vmatmul.f32.gmra.mxu0 %v5703
  %v6120 = vpop.f32.mrf.mxu0
  %v6121 = vadd.f32 0.0, %v6120
  %6122 = vmatmul.f32.gmra.mxu0 %v5706
  %v6123 = vpop.f32.mrf.mxu0
  %v6124 = vadd.f32 0.0, %v6123
  %6125 = vmatmul.f32.gmra.mxu0 %v5709
  %v6126 = vpop.f32.mrf.mxu0
  %v6127 = vadd.f32 0.0, %v6126
  %6128 = vmatmul.f32.gmra.mxu0 %v5712
  %v6129 = vpop.f32.mrf.mxu0
  %v6130 = vadd.f32 0.0, %v6129
  %6131 = vmatmul.f32.gmra.mxu0 %v5715
  %v6132 = vpop.f32.mrf.mxu0
  %v6133 = vadd.f32 0.0, %v6132
  %6134 = vmatmul.f32.gmra.mxu0 %v5718
  %v6135 = vpop.f32.mrf.mxu0
  %v6136 = vadd.f32 0.0, %v6135
  %6137 = vmatmul.f32.gmra.mxu0 %v5721
  %v6138 = vpop.f32.mrf.mxu0
  %v6139 = vadd.f32 0.0, %v6138
  %6140 = vmatmul.f32.gmra.mxu0 %v5724
  %v6141 = vpop.f32.mrf.mxu0
  %v6142 = vadd.f32 0.0, %v6141
  %6143 = vmatmul.f32.gmra.mxu0 %v5727
  %v6144 = vpop.f32.mrf.mxu0
  %v6145 = vadd.f32 0.0, %v6144
  %6146 = vmatmul.f32.gmra.mxu0 %v5730
  %v6147 = vpop.f32.mrf.mxu0
  %v6148 = vadd.f32 0.0, %v6147
  %6149 = vmatmul.f32.gmra.mxu0 %v5733
  %v6150 = vpop.f32.mrf.mxu0
  %v6151 = vadd.f32 0.0, %v6150
  %6152 = vmatmul.f32.gmra.mxu0 %v5736
  %v6153 = vpop.f32.mrf.mxu0
  %v6154 = vadd.f32 0.0, %v6153
  %6155 = vmatmul.f32.gmra.mxu0 %v5739
  %v6156 = vpop.f32.mrf.mxu0
  %v6157 = vadd.f32 0.0, %v6156
  %6158 = vmatmul.f32.gmra.mxu0 %v5742
  %v6159 = vpop.f32.mrf.mxu0
  %v6160 = vadd.f32 0.0, %v6159
  %6161 = vmatmul.f32.gmra.mxu0 %v5745
  %v6162 = vpop.f32.mrf.mxu0
  %v6163 = vadd.f32 0.0, %v6162
  %6164 = vmatmul.f32.gmra.mxu0 %v5748
  %v6165 = vpop.f32.mrf.mxu0
  %v6166 = vadd.f32 0.0, %v6165
  %6167 = vdwg.mxu0
  %6168 = vmatpush.msra.mxu0 0.0
  %6169 = vmatpush.msra.mxu0 0.0
  %6170 = vmatpush.msra.mxu0 0.0
  %6171 = vmatpush.msra.mxu0 0.0
  %6172 = vmatpush.msra.mxu0 0.0
  %6173 = vmatpush.msra.mxu0 0.0
  %6174 = vmatpush.msra.mxu0 0.0
  %6175 = vmatpush.msra.mxu0 0.0
  %6176 = vmatpush.msra.mxu0 0.0
  %6177 = vmatpush.msra.mxu0 0.0
  %6178 = vmatpush.msra.mxu0 0.0
  %6179 = vmatpush.msra.mxu0 0.0
  %6180 = vmatpush.msra.mxu0 0.0
  %6181 = vmatpush.msra.mxu0 0.0
  %6182 = vmatpush.msra.mxu0 %v5487
  %6183 = vmatpush.msra.mxu0 %v5486
  %6184 = vmatmul.f32.gmra.mxu0 %v5559
  %v6185 = vpop.f32.mrf.mxu0
  %v6186 = vadd.f32 0.0, %v6185
  %6187 = vmatmul.f32.gmra.mxu0 %v5562
  %v6188 = vpop.f32.mrf.mxu0
  %v6189 = vadd.f32 0.0, %v6188
  %6190 = vmatmul.f32.gmra.mxu0 %v5565
  %v6191 = vpop.f32.mrf.mxu0
  %v6192 = vadd.f32 0.0, %v6191
  %6193 = vmatmul.f32.gmra.mxu0 %v5568
  %v6194 = vpop.f32.mrf.mxu0
  %v6195 = vadd.f32 0.0, %v6194
  %6196 = vmatmul.f32.gmra.mxu0 %v5571
  %v6197 = vpop.f32.mrf.mxu0
  %v6198 = vadd.f32 0.0, %v6197
  %6199 = vmatmul.f32.gmra.mxu0 %v5574
  %v6200 = vpop.f32.mrf.mxu0
  %v6201 = vadd.f32 0.0, %v6200
  %6202 = vmatmul.f32.gmra.mxu0 %v5577
  %v6203 = vpop.f32.mrf.mxu0
  %v6204 = vadd.f32 0.0, %v6203
  %6205 = vmatmul.f32.gmra.mxu0 %v5580
  %v6206 = vpop.f32.mrf.mxu0
  %v6207 = vadd.f32 0.0, %v6206
  %6208 = vmatmul.f32.gmra.mxu0 %v5583
  %v6209 = vpop.f32.mrf.mxu0
  %v6210 = vadd.f32 0.0, %v6209
  %6211 = vmatmul.f32.gmra.mxu0 %v5586
  %v6212 = vpop.f32.mrf.mxu0
  %v6213 = vadd.f32 0.0, %v6212
  %6214 = vmatmul.f32.gmra.mxu0 %v5589
  %v6215 = vpop.f32.mrf.mxu0
  %v6216 = vadd.f32 0.0, %v6215
  %6217 = vmatmul.f32.gmra.mxu0 %v5592
  %v6218 = vpop.f32.mrf.mxu0
  %v6219 = vadd.f32 0.0, %v6218
  %6220 = vmatmul.f32.gmra.mxu0 %v5595
  %v6221 = vpop.f32.mrf.mxu0
  %v6222 = vadd.f32 0.0, %v6221
  %6223 = vmatmul.f32.gmra.mxu0 %v5598
  %v6224 = vpop.f32.mrf.mxu0
  %v6225 = vadd.f32 0.0, %v6224
  %6226 = vmatmul.f32.gmra.mxu0 %v5601
  %v6227 = vpop.f32.mrf.mxu0
  %v6228 = vadd.f32 0.0, %v6227
  %6229 = vmatmul.f32.gmra.mxu0 %v5604
  %v6230 = vpop.f32.mrf.mxu0
  %v6231 = vadd.f32 0.0, %v6230
  %6232 = vmatmul.f32.gmra.mxu0 %v5607
  %v6233 = vpop.f32.mrf.mxu0
  %v6234 = vadd.f32 0.0, %v6233
  %6235 = vmatmul.f32.gmra.mxu0 %v5610
  %v6236 = vpop.f32.mrf.mxu0
  %v6237 = vadd.f32 0.0, %v6236
  %6238 = vmatmul.f32.gmra.mxu0 %v5613
  %v6239 = vpop.f32.mrf.mxu0
  %v6240 = vadd.f32 0.0, %v6239
  %6241 = vmatmul.f32.gmra.mxu0 %v5616
  %v6242 = vpop.f32.mrf.mxu0
  %v6243 = vadd.f32 0.0, %v6242
  %6244 = vmatmul.f32.gmra.mxu0 %v5619
  %v6245 = vpop.f32.mrf.mxu0
  %v6246 = vadd.f32 0.0, %v6245
  %6247 = vmatmul.f32.gmra.mxu0 %v5622
  %v6248 = vpop.f32.mrf.mxu0
  %v6249 = vadd.f32 0.0, %v6248
  %6250 = vmatmul.f32.gmra.mxu0 %v5625
  %v6251 = vpop.f32.mrf.mxu0
  %v6252 = vadd.f32 0.0, %v6251
  %6253 = vmatmul.f32.gmra.mxu0 %v5628
  %v6254 = vpop.f32.mrf.mxu0
  %v6255 = vadd.f32 0.0, %v6254
  %6256 = vmatmul.f32.gmra.mxu0 %v5631
  %v6257 = vpop.f32.mrf.mxu0
  %v6258 = vadd.f32 0.0, %v6257
  %6259 = vmatmul.f32.gmra.mxu0 %v5634
  %v6260 = vpop.f32.mrf.mxu0
  %v6261 = vadd.f32 0.0, %v6260
  %6262 = vmatmul.f32.gmra.mxu0 %v5637
  %v6263 = vpop.f32.mrf.mxu0
  %v6264 = vadd.f32 0.0, %v6263
  %6265 = vmatmul.f32.gmra.mxu0 %v5640
  %v6266 = vpop.f32.mrf.mxu0
  %v6267 = vadd.f32 0.0, %v6266
  %6268 = vmatmul.f32.gmra.mxu0 %v5643
  %v6269 = vpop.f32.mrf.mxu0
  %v6270 = vadd.f32 0.0, %v6269
  %6271 = vmatmul.f32.gmra.mxu0 %v5646
  %v6272 = vpop.f32.mrf.mxu0
  %v6273 = vadd.f32 0.0, %v6272
  %6274 = vmatmul.f32.gmra.mxu0 %v5649
  %v6275 = vpop.f32.mrf.mxu0
  %v6276 = vadd.f32 0.0, %v6275
  %6277 = vmatmul.f32.gmra.mxu0 %v5652
  %v6278 = vpop.f32.mrf.mxu0
  %v6279 = vadd.f32 0.0, %v6278
  %6280 = vmatmul.f32.gmra.mxu0 %v5655
  %v6281 = vpop.f32.mrf.mxu0
  %v6282 = vadd.f32 0.0, %v6281
  %6283 = vmatmul.f32.gmra.mxu0 %v5658
  %v6284 = vpop.f32.mrf.mxu0
  %v6285 = vadd.f32 0.0, %v6284
  %6286 = vmatmul.f32.gmra.mxu0 %v5661
  %v6287 = vpop.f32.mrf.mxu0
  %v6288 = vadd.f32 0.0, %v6287
  %6289 = vmatmul.f32.gmra.mxu0 %v5664
  %v6290 = vpop.f32.mrf.mxu0
  %v6291 = vadd.f32 0.0, %v6290
  %6292 = vmatmul.f32.gmra.mxu0 %v5667
  %v6293 = vpop.f32.mrf.mxu0
  %v6294 = vadd.f32 0.0, %v6293
  %6295 = vmatmul.f32.gmra.mxu0 %v5670
  %v6296 = vpop.f32.mrf.mxu0
  %v6297 = vadd.f32 0.0, %v6296
  %6298 = vmatmul.f32.gmra.mxu0 %v5673
  %v6299 = vpop.f32.mrf.mxu0
  %v6300 = vadd.f32 0.0, %v6299
  %6301 = vmatmul.f32.gmra.mxu0 %v5676
  %v6302 = vpop.f32.mrf.mxu0
  %v6303 = vadd.f32 0.0, %v6302
  %6304 = vmatmul.f32.gmra.mxu0 %v5679
  %v6305 = vpop.f32.mrf.mxu0
  %v6306 = vadd.f32 0.0, %v6305
  %6307 = vmatmul.f32.gmra.mxu0 %v5682
  %v6308 = vpop.f32.mrf.mxu0
  %v6309 = vadd.f32 0.0, %v6308
  %6310 = vmatmul.f32.gmra.mxu0 %v5685
  %v6311 = vpop.f32.mrf.mxu0
  %v6312 = vadd.f32 0.0, %v6311
  %6313 = vmatmul.f32.gmra.mxu0 %v5688
  %v6314 = vpop.f32.mrf.mxu0
  %v6315 = vadd.f32 0.0, %v6314
  %6316 = vmatmul.f32.gmra.mxu0 %v5691
  %v6317 = vpop.f32.mrf.mxu0
  %v6318 = vadd.f32 0.0, %v6317
  %6319 = vmatmul.f32.gmra.mxu0 %v5694
  %v6320 = vpop.f32.mrf.mxu0
  %v6321 = vadd.f32 0.0, %v6320
  %6322 = vmatmul.f32.gmra.mxu0 %v5697
  %v6323 = vpop.f32.mrf.mxu0
  %v6324 = vadd.f32 0.0, %v6323
  %6325 = vmatmul.f32.gmra.mxu0 %v5700
  %v6326 = vpop.f32.mrf.mxu0
  %v6327 = vadd.f32 0.0, %v6326
  %6328 = vmatmul.f32.gmra.mxu0 %v5703
  %v6329 = vpop.f32.mrf.mxu0
  %v6330 = vadd.f32 0.0, %v6329
  %6331 = vmatmul.f32.gmra.mxu0 %v5706
  %v6332 = vpop.f32.mrf.mxu0
  %v6333 = vadd.f32 0.0, %v6332
  %6334 = vmatmul.f32.gmra.mxu0 %v5709
  %v6335 = vpop.f32.mrf.mxu0
  %v6336 = vadd.f32 0.0, %v6335
  %6337 = vmatmul.f32.gmra.mxu0 %v5712
  %v6338 = vpop.f32.mrf.mxu0
  %v6339 = vadd.f32 0.0, %v6338
  %6340 = vmatmul.f32.gmra.mxu0 %v5715
  %v6341 = vpop.f32.mrf.mxu0
  %v6342 = vadd.f32 0.0, %v6341
  %6343 = vmatmul.f32.gmra.mxu0 %v5718
  %v6344 = vpop.f32.mrf.mxu0
  %v6345 = vadd.f32 0.0, %v6344
  %6346 = vmatmul.f32.gmra.mxu0 %v5721
  %v6347 = vpop.f32.mrf.mxu0
  %v6348 = vadd.f32 0.0, %v6347
  %6349 = vmatmul.f32.gmra.mxu0 %v5724
  %v6350 = vpop.f32.mrf.mxu0
  %v6351 = vadd.f32 0.0, %v6350
  %6352 = vmatmul.f32.gmra.mxu0 %v5727
  %v6353 = vpop.f32.mrf.mxu0
  %v6354 = vadd.f32 0.0, %v6353
  %6355 = vmatmul.f32.gmra.mxu0 %v5730
  %v6356 = vpop.f32.mrf.mxu0
  %v6357 = vadd.f32 0.0, %v6356
  %6358 = vmatmul.f32.gmra.mxu0 %v5733
  %v6359 = vpop.f32.mrf.mxu0
  %v6360 = vadd.f32 0.0, %v6359
  %6361 = vmatmul.f32.gmra.mxu0 %v5736
  %v6362 = vpop.f32.mrf.mxu0
  %v6363 = vadd.f32 0.0, %v6362
  %6364 = vmatmul.f32.gmra.mxu0 %v5739
  %v6365 = vpop.f32.mrf.mxu0
  %v6366 = vadd.f32 0.0, %v6365
  %6367 = vmatmul.f32.gmra.mxu0 %v5742
  %v6368 = vpop.f32.mrf.mxu0
  %v6369 = vadd.f32 0.0, %v6368
  %6370 = vmatmul.f32.gmra.mxu0 %v5745
  %v6371 = vpop.f32.mrf.mxu0
  %v6372 = vadd.f32 0.0, %v6371
  %6373 = vmatmul.f32.gmra.mxu0 %v5748
  %v6374 = vpop.f32.mrf.mxu0
  %v6375 = vadd.f32 0.0, %v6374
  %6376 = vdwg.mxu0
  %6377 = vmatpush.msra.mxu0 0.0
  %6378 = vmatpush.msra.mxu0 0.0
  %6379 = vmatpush.msra.mxu0 0.0
  %6380 = vmatpush.msra.mxu0 0.0
  %6381 = vmatpush.msra.mxu0 0.0
  %6382 = vmatpush.msra.mxu0 0.0
  %6383 = vmatpush.msra.mxu0 0.0
  %6384 = vmatpush.msra.mxu0 0.0
  %6385 = vmatpush.msra.mxu0 0.0
  %6386 = vmatpush.msra.mxu0 0.0
  %6387 = vmatpush.msra.mxu0 0.0
  %6388 = vmatpush.msra.mxu0 0.0
  %6389 = vmatpush.msra.mxu0 0.0
  %6390 = vmatpush.msra.mxu0 0.0
  %6391 = vmatpush.msra.mxu0 %v5489
  %6392 = vmatpush.msra.mxu0 %v5488
  %6393 = vmatmul.f32.gmra.mxu0 %v5559
  %v6394 = vpop.f32.mrf.mxu0
  %v6395 = vadd.f32 0.0, %v6394
  %6396 = vmatmul.f32.gmra.mxu0 %v5562
  %v6397 = vpop.f32.mrf.mxu0
  %v6398 = vadd.f32 0.0, %v6397
  %6399 = vmatmul.f32.gmra.mxu0 %v5565
  %v6400 = vpop.f32.mrf.mxu0
  %v6401 = vadd.f32 0.0, %v6400
  %6402 = vmatmul.f32.gmra.mxu0 %v5568
  %v6403 = vpop.f32.mrf.mxu0
  %v6404 = vadd.f32 0.0, %v6403
  %6405 = vmatmul.f32.gmra.mxu0 %v5571
  %v6406 = vpop.f32.mrf.mxu0
  %v6407 = vadd.f32 0.0, %v6406
  %6408 = vmatmul.f32.gmra.mxu0 %v5574
  %v6409 = vpop.f32.mrf.mxu0
  %v6410 = vadd.f32 0.0, %v6409
  %6411 = vmatmul.f32.gmra.mxu0 %v5577
  %v6412 = vpop.f32.mrf.mxu0
  %v6413 = vadd.f32 0.0, %v6412
  %6414 = vmatmul.f32.gmra.mxu0 %v5580
  %v6415 = vpop.f32.mrf.mxu0
  %v6416 = vadd.f32 0.0, %v6415
  %6417 = vmatmul.f32.gmra.mxu0 %v5583
  %v6418 = vpop.f32.mrf.mxu0
  %v6419 = vadd.f32 0.0, %v6418
  %6420 = vmatmul.f32.gmra.mxu0 %v5586
  %v6421 = vpop.f32.mrf.mxu0
  %v6422 = vadd.f32 0.0, %v6421
  %6423 = vmatmul.f32.gmra.mxu0 %v5589
  %v6424 = vpop.f32.mrf.mxu0
  %v6425 = vadd.f32 0.0, %v6424
  %6426 = vmatmul.f32.gmra.mxu0 %v5592
  %v6427 = vpop.f32.mrf.mxu0
  %v6428 = vadd.f32 0.0, %v6427
  %6429 = vmatmul.f32.gmra.mxu0 %v5595
  %v6430 = vpop.f32.mrf.mxu0
  %v6431 = vadd.f32 0.0, %v6430
  %6432 = vmatmul.f32.gmra.mxu0 %v5598
  %v6433 = vpop.f32.mrf.mxu0
  %v6434 = vadd.f32 0.0, %v6433
  %6435 = vmatmul.f32.gmra.mxu0 %v5601
  %v6436 = vpop.f32.mrf.mxu0
  %v6437 = vadd.f32 0.0, %v6436
  %6438 = vmatmul.f32.gmra.mxu0 %v5604
  %v6439 = vpop.f32.mrf.mxu0
  %v6440 = vadd.f32 0.0, %v6439
  %6441 = vmatmul.f32.gmra.mxu0 %v5607
  %v6442 = vpop.f32.mrf.mxu0
  %v6443 = vadd.f32 0.0, %v6442
  %6444 = vmatmul.f32.gmra.mxu0 %v5610
  %v6445 = vpop.f32.mrf.mxu0
  %v6446 = vadd.f32 0.0, %v6445
  %6447 = vmatmul.f32.gmra.mxu0 %v5613
  %v6448 = vpop.f32.mrf.mxu0
  %v6449 = vadd.f32 0.0, %v6448
  %6450 = vmatmul.f32.gmra.mxu0 %v5616
  %v6451 = vpop.f32.mrf.mxu0
  %v6452 = vadd.f32 0.0, %v6451
  %6453 = vmatmul.f32.gmra.mxu0 %v5619
  %v6454 = vpop.f32.mrf.mxu0
  %v6455 = vadd.f32 0.0, %v6454
  %6456 = vmatmul.f32.gmra.mxu0 %v5622
  %v6457 = vpop.f32.mrf.mxu0
  %v6458 = vadd.f32 0.0, %v6457
  %6459 = vmatmul.f32.gmra.mxu0 %v5625
  %v6460 = vpop.f32.mrf.mxu0
  %v6461 = vadd.f32 0.0, %v6460
  %6462 = vmatmul.f32.gmra.mxu0 %v5628
  %v6463 = vpop.f32.mrf.mxu0
  %v6464 = vadd.f32 0.0, %v6463
  %6465 = vmatmul.f32.gmra.mxu0 %v5631
  %v6466 = vpop.f32.mrf.mxu0
  %v6467 = vadd.f32 0.0, %v6466
  %6468 = vmatmul.f32.gmra.mxu0 %v5634
  %v6469 = vpop.f32.mrf.mxu0
  %v6470 = vadd.f32 0.0, %v6469
  %6471 = vmatmul.f32.gmra.mxu0 %v5637
  %v6472 = vpop.f32.mrf.mxu0
  %v6473 = vadd.f32 0.0, %v6472
  %6474 = vmatmul.f32.gmra.mxu0 %v5640
  %v6475 = vpop.f32.mrf.mxu0
  %v6476 = vadd.f32 0.0, %v6475
  %6477 = vmatmul.f32.gmra.mxu0 %v5643
  %v6478 = vpop.f32.mrf.mxu0
  %v6479 = vadd.f32 0.0, %v6478
  %6480 = vmatmul.f32.gmra.mxu0 %v5646
  %v6481 = vpop.f32.mrf.mxu0
  %v6482 = vadd.f32 0.0, %v6481
  %6483 = vmatmul.f32.gmra.mxu0 %v5649
  %v6484 = vpop.f32.mrf.mxu0
  %v6485 = vadd.f32 0.0, %v6484
  %6486 = vmatmul.f32.gmra.mxu0 %v5652
  %v6487 = vpop.f32.mrf.mxu0
  %v6488 = vadd.f32 0.0, %v6487
  %6489 = vmatmul.f32.gmra.mxu0 %v5655
  %v6490 = vpop.f32.mrf.mxu0
  %v6491 = vadd.f32 0.0, %v6490
  %6492 = vmatmul.f32.gmra.mxu0 %v5658
  %v6493 = vpop.f32.mrf.mxu0
  %v6494 = vadd.f32 0.0, %v6493
  %6495 = vmatmul.f32.gmra.mxu0 %v5661
  %v6496 = vpop.f32.mrf.mxu0
  %v6497 = vadd.f32 0.0, %v6496
  %6498 = vmatmul.f32.gmra.mxu0 %v5664
  %v6499 = vpop.f32.mrf.mxu0
  %v6500 = vadd.f32 0.0, %v6499
  %6501 = vmatmul.f32.gmra.mxu0 %v5667
  %v6502 = vpop.f32.mrf.mxu0
  %v6503 = vadd.f32 0.0, %v6502
  %6504 = vmatmul.f32.gmra.mxu0 %v5670
  %v6505 = vpop.f32.mrf.mxu0
  %v6506 = vadd.f32 0.0, %v6505
  %6507 = vmatmul.f32.gmra.mxu0 %v5673
  %v6508 = vpop.f32.mrf.mxu0
  %v6509 = vadd.f32 0.0, %v6508
  %6510 = vmatmul.f32.gmra.mxu0 %v5676
  %v6511 = vpop.f32.mrf.mxu0
  %v6512 = vadd.f32 0.0, %v6511
  %6513 = vmatmul.f32.gmra.mxu0 %v5679
  %v6514 = vpop.f32.mrf.mxu0
  %v6515 = vadd.f32 0.0, %v6514
  %6516 = vmatmul.f32.gmra.mxu0 %v5682
  %v6517 = vpop.f32.mrf.mxu0
  %v6518 = vadd.f32 0.0, %v6517
  %6519 = vmatmul.f32.gmra.mxu0 %v5685
  %v6520 = vpop.f32.mrf.mxu0
  %v6521 = vadd.f32 0.0, %v6520
  %6522 = vmatmul.f32.gmra.mxu0 %v5688
  %v6523 = vpop.f32.mrf.mxu0
  %v6524 = vadd.f32 0.0, %v6523
  %6525 = vmatmul.f32.gmra.mxu0 %v5691
  %v6526 = vpop.f32.mrf.mxu0
  %v6527 = vadd.f32 0.0, %v6526
  %6528 = vmatmul.f32.gmra.mxu0 %v5694
  %v6529 = vpop.f32.mrf.mxu0
  %v6530 = vadd.f32 0.0, %v6529
  %6531 = vmatmul.f32.gmra.mxu0 %v5697
  %v6532 = vpop.f32.mrf.mxu0
  %v6533 = vadd.f32 0.0, %v6532
  %6534 = vmatmul.f32.gmra.mxu0 %v5700
  %v6535 = vpop.f32.mrf.mxu0
  %v6536 = vadd.f32 0.0, %v6535
  %6537 = vmatmul.f32.gmra.mxu0 %v5703
  %v6538 = vpop.f32.mrf.mxu0
  %v6539 = vadd.f32 0.0, %v6538
  %6540 = vmatmul.f32.gmra.mxu0 %v5706
  %v6541 = vpop.f32.mrf.mxu0
  %v6542 = vadd.f32 0.0, %v6541
  %6543 = vmatmul.f32.gmra.mxu0 %v5709
  %v6544 = vpop.f32.mrf.mxu0
  %v6545 = vadd.f32 0.0, %v6544
  %6546 = vmatmul.f32.gmra.mxu0 %v5712
  %v6547 = vpop.f32.mrf.mxu0
  %v6548 = vadd.f32 0.0, %v6547
  %6549 = vmatmul.f32.gmra.mxu0 %v5715
  %v6550 = vpop.f32.mrf.mxu0
  %v6551 = vadd.f32 0.0, %v6550
  %6552 = vmatmul.f32.gmra.mxu0 %v5718
  %v6553 = vpop.f32.mrf.mxu0
  %v6554 = vadd.f32 0.0, %v6553
  %6555 = vmatmul.f32.gmra.mxu0 %v5721
  %v6556 = vpop.f32.mrf.mxu0
  %v6557 = vadd.f32 0.0, %v6556
  %6558 = vmatmul.f32.gmra.mxu0 %v5724
  %v6559 = vpop.f32.mrf.mxu0
  %v6560 = vadd.f32 0.0, %v6559
  %6561 = vmatmul.f32.gmra.mxu0 %v5727
  %v6562 = vpop.f32.mrf.mxu0
  %v6563 = vadd.f32 0.0, %v6562
  %6564 = vmatmul.f32.gmra.mxu0 %v5730
  %v6565 = vpop.f32.mrf.mxu0
  %v6566 = vadd.f32 0.0, %v6565
  %6567 = vmatmul.f32.gmra.mxu0 %v5733
  %v6568 = vpop.f32.mrf.mxu0
  %v6569 = vadd.f32 0.0, %v6568
  %6570 = vmatmul.f32.gmra.mxu0 %v5736
  %v6571 = vpop.f32.mrf.mxu0
  %v6572 = vadd.f32 0.0, %v6571
  %6573 = vmatmul.f32.gmra.mxu0 %v5739
  %v6574 = vpop.f32.mrf.mxu0
  %v6575 = vadd.f32 0.0, %v6574
  %6576 = vmatmul.f32.gmra.mxu0 %v5742
  %v6577 = vpop.f32.mrf.mxu0
  %v6578 = vadd.f32 0.0, %v6577
  %6579 = vmatmul.f32.gmra.mxu0 %v5745
  %v6580 = vpop.f32.mrf.mxu0
  %v6581 = vadd.f32 0.0, %v6580
  %6582 = vmatmul.f32.gmra.mxu0 %v5748
  %v6583 = vpop.f32.mrf.mxu0
  %v6584 = vadd.f32 0.0, %v6583
  %6585 = vdwg.mxu0
  %6586 = vmatpush.msra.mxu0 0.0
  %6587 = vmatpush.msra.mxu0 0.0
  %6588 = vmatpush.msra.mxu0 0.0
  %6589 = vmatpush.msra.mxu0 0.0
  %6590 = vmatpush.msra.mxu0 0.0
  %6591 = vmatpush.msra.mxu0 0.0
  %6592 = vmatpush.msra.mxu0 0.0
  %6593 = vmatpush.msra.mxu0 0.0
  %6594 = vmatpush.msra.mxu0 0.0
  %6595 = vmatpush.msra.mxu0 0.0
  %6596 = vmatpush.msra.mxu0 0.0
  %6597 = vmatpush.msra.mxu0 0.0
  %6598 = vmatpush.msra.mxu0 0.0
  %6599 = vmatpush.msra.mxu0 0.0
  %6600 = vmatpush.msra.mxu0 %v5491
  %6601 = vmatpush.msra.mxu0 %v5490
  %6602 = vmatmul.f32.gmra.mxu0 %v5559
  %v6603 = vpop.f32.mrf.mxu0
  %v6604 = vadd.f32 0.0, %v6603
  %6605 = vmatmul.f32.gmra.mxu0 %v5562
  %v6606 = vpop.f32.mrf.mxu0
  %v6607 = vadd.f32 0.0, %v6606
  %6608 = vmatmul.f32.gmra.mxu0 %v5565
  %v6609 = vpop.f32.mrf.mxu0
  %v6610 = vadd.f32 0.0, %v6609
  %6611 = vmatmul.f32.gmra.mxu0 %v5568
  %v6612 = vpop.f32.mrf.mxu0
  %v6613 = vadd.f32 0.0, %v6612
  %6614 = vmatmul.f32.gmra.mxu0 %v5571
  %v6615 = vpop.f32.mrf.mxu0
  %v6616 = vadd.f32 0.0, %v6615
  %6617 = vmatmul.f32.gmra.mxu0 %v5574
  %v6618 = vpop.f32.mrf.mxu0
  %v6619 = vadd.f32 0.0, %v6618
  %6620 = vmatmul.f32.gmra.mxu0 %v5577
  %v6621 = vpop.f32.mrf.mxu0
  %v6622 = vadd.f32 0.0, %v6621
  %6623 = vmatmul.f32.gmra.mxu0 %v5580
  %v6624 = vpop.f32.mrf.mxu0
  %v6625 = vadd.f32 0.0, %v6624
  %6626 = vmatmul.f32.gmra.mxu0 %v5583
  %v6627 = vpop.f32.mrf.mxu0
  %v6628 = vadd.f32 0.0, %v6627
  %6629 = vmatmul.f32.gmra.mxu0 %v5586
  %v6630 = vpop.f32.mrf.mxu0
  %v6631 = vadd.f32 0.0, %v6630
  %6632 = vmatmul.f32.gmra.mxu0 %v5589
  %v6633 = vpop.f32.mrf.mxu0
  %v6634 = vadd.f32 0.0, %v6633
  %6635 = vmatmul.f32.gmra.mxu0 %v5592
  %v6636 = vpop.f32.mrf.mxu0
  %v6637 = vadd.f32 0.0, %v6636
  %6638 = vmatmul.f32.gmra.mxu0 %v5595
  %v6639 = vpop.f32.mrf.mxu0
  %v6640 = vadd.f32 0.0, %v6639
  %6641 = vmatmul.f32.gmra.mxu0 %v5598
  %v6642 = vpop.f32.mrf.mxu0
  %v6643 = vadd.f32 0.0, %v6642
  %6644 = vmatmul.f32.gmra.mxu0 %v5601
  %v6645 = vpop.f32.mrf.mxu0
  %v6646 = vadd.f32 0.0, %v6645
  %6647 = vmatmul.f32.gmra.mxu0 %v5604
  %v6648 = vpop.f32.mrf.mxu0
  %v6649 = vadd.f32 0.0, %v6648
  %6650 = vmatmul.f32.gmra.mxu0 %v5607
  %v6651 = vpop.f32.mrf.mxu0
  %v6652 = vadd.f32 0.0, %v6651
  %6653 = vmatmul.f32.gmra.mxu0 %v5610
  %v6654 = vpop.f32.mrf.mxu0
  %v6655 = vadd.f32 0.0, %v6654
  %6656 = vmatmul.f32.gmra.mxu0 %v5613
  %v6657 = vpop.f32.mrf.mxu0
  %v6658 = vadd.f32 0.0, %v6657
  %6659 = vmatmul.f32.gmra.mxu0 %v5616
  %v6660 = vpop.f32.mrf.mxu0
  %v6661 = vadd.f32 0.0, %v6660
  %6662 = vmatmul.f32.gmra.mxu0 %v5619
  %v6663 = vpop.f32.mrf.mxu0
  %v6664 = vadd.f32 0.0, %v6663
  %6665 = vmatmul.f32.gmra.mxu0 %v5622
  %v6666 = vpop.f32.mrf.mxu0
  %v6667 = vadd.f32 0.0, %v6666
  %6668 = vmatmul.f32.gmra.mxu0 %v5625
  %v6669 = vpop.f32.mrf.mxu0
  %v6670 = vadd.f32 0.0, %v6669
  %6671 = vmatmul.f32.gmra.mxu0 %v5628
  %v6672 = vpop.f32.mrf.mxu0
  %v6673 = vadd.f32 0.0, %v6672
  %6674 = vmatmul.f32.gmra.mxu0 %v5631
  %v6675 = vpop.f32.mrf.mxu0
  %v6676 = vadd.f32 0.0, %v6675
  %6677 = vmatmul.f32.gmra.mxu0 %v5634
  %v6678 = vpop.f32.mrf.mxu0
  %v6679 = vadd.f32 0.0, %v6678
  %6680 = vmatmul.f32.gmra.mxu0 %v5637
  %v6681 = vpop.f32.mrf.mxu0
  %v6682 = vadd.f32 0.0, %v6681
  %6683 = vmatmul.f32.gmra.mxu0 %v5640
  %v6684 = vpop.f32.mrf.mxu0
  %v6685 = vadd.f32 0.0, %v6684
  %6686 = vmatmul.f32.gmra.mxu0 %v5643
  %v6687 = vpop.f32.mrf.mxu0
  %v6688 = vadd.f32 0.0, %v6687
  %6689 = vmatmul.f32.gmra.mxu0 %v5646
  %v6690 = vpop.f32.mrf.mxu0
  %v6691 = vadd.f32 0.0, %v6690
  %6692 = vmatmul.f32.gmra.mxu0 %v5649
  %v6693 = vpop.f32.mrf.mxu0
  %v6694 = vadd.f32 0.0, %v6693
  %6695 = vmatmul.f32.gmra.mxu0 %v5652
  %v6696 = vpop.f32.mrf.mxu0
  %v6697 = vadd.f32 0.0, %v6696
  %6698 = vmatmul.f32.gmra.mxu0 %v5655
  %v6699 = vpop.f32.mrf.mxu0
  %v6700 = vadd.f32 0.0, %v6699
  %6701 = vmatmul.f32.gmra.mxu0 %v5658
  %v6702 = vpop.f32.mrf.mxu0
  %v6703 = vadd.f32 0.0, %v6702
  %6704 = vmatmul.f32.gmra.mxu0 %v5661
  %v6705 = vpop.f32.mrf.mxu0
  %v6706 = vadd.f32 0.0, %v6705
  %6707 = vmatmul.f32.gmra.mxu0 %v5664
  %v6708 = vpop.f32.mrf.mxu0
  %v6709 = vadd.f32 0.0, %v6708
  %6710 = vmatmul.f32.gmra.mxu0 %v5667
  %v6711 = vpop.f32.mrf.mxu0
  %v6712 = vadd.f32 0.0, %v6711
  %6713 = vmatmul.f32.gmra.mxu0 %v5670
  %v6714 = vpop.f32.mrf.mxu0
  %v6715 = vadd.f32 0.0, %v6714
  %6716 = vmatmul.f32.gmra.mxu0 %v5673
  %v6717 = vpop.f32.mrf.mxu0
  %v6718 = vadd.f32 0.0, %v6717
  %6719 = vmatmul.f32.gmra.mxu0 %v5676
  %v6720 = vpop.f32.mrf.mxu0
  %v6721 = vadd.f32 0.0, %v6720
  %6722 = vmatmul.f32.gmra.mxu0 %v5679
  %v6723 = vpop.f32.mrf.mxu0
  %v6724 = vadd.f32 0.0, %v6723
  %6725 = vmatmul.f32.gmra.mxu0 %v5682
  %v6726 = vpop.f32.mrf.mxu0
  %v6727 = vadd.f32 0.0, %v6726
  %6728 = vmatmul.f32.gmra.mxu0 %v5685
  %v6729 = vpop.f32.mrf.mxu0
  %v6730 = vadd.f32 0.0, %v6729
  %6731 = vmatmul.f32.gmra.mxu0 %v5688
  %v6732 = vpop.f32.mrf.mxu0
  %v6733 = vadd.f32 0.0, %v6732
  %6734 = vmatmul.f32.gmra.mxu0 %v5691
  %v6735 = vpop.f32.mrf.mxu0
  %v6736 = vadd.f32 0.0, %v6735
  %6737 = vmatmul.f32.gmra.mxu0 %v5694
  %v6738 = vpop.f32.mrf.mxu0
  %v6739 = vadd.f32 0.0, %v6738
  %6740 = vmatmul.f32.gmra.mxu0 %v5697
  %v6741 = vpop.f32.mrf.mxu0
  %v6742 = vadd.f32 0.0, %v6741
  %6743 = vmatmul.f32.gmra.mxu0 %v5700
  %v6744 = vpop.f32.mrf.mxu0
  %v6745 = vadd.f32 0.0, %v6744
  %6746 = vmatmul.f32.gmra.mxu0 %v5703
  %v6747 = vpop.f32.mrf.mxu0
  %v6748 = vadd.f32 0.0, %v6747
  %6749 = vmatmul.f32.gmra.mxu0 %v5706
  %v6750 = vpop.f32.mrf.mxu0
  %v6751 = vadd.f32 0.0, %v6750
  %6752 = vmatmul.f32.gmra.mxu0 %v5709
  %v6753 = vpop.f32.mrf.mxu0
  %v6754 = vadd.f32 0.0, %v6753
  %6755 = vmatmul.f32.gmra.mxu0 %v5712
  %v6756 = vpop.f32.mrf.mxu0
  %v6757 = vadd.f32 0.0, %v6756
  %6758 = vmatmul.f32.gmra.mxu0 %v5715
  %v6759 = vpop.f32.mrf.mxu0
  %v6760 = vadd.f32 0.0, %v6759
  %6761 = vmatmul.f32.gmra.mxu0 %v5718
  %v6762 = vpop.f32.mrf.mxu0
  %v6763 = vadd.f32 0.0, %v6762
  %6764 = vmatmul.f32.gmra.mxu0 %v5721
  %v6765 = vpop.f32.mrf.mxu0
  %v6766 = vadd.f32 0.0, %v6765
  %6767 = vmatmul.f32.gmra.mxu0 %v5724
  %v6768 = vpop.f32.mrf.mxu0
  %v6769 = vadd.f32 0.0, %v6768
  %6770 = vmatmul.f32.gmra.mxu0 %v5727
  %v6771 = vpop.f32.mrf.mxu0
  %v6772 = vadd.f32 0.0, %v6771
  %6773 = vmatmul.f32.gmra.mxu0 %v5730
  %v6774 = vpop.f32.mrf.mxu0
  %v6775 = vadd.f32 0.0, %v6774
  %6776 = vmatmul.f32.gmra.mxu0 %v5733
  %v6777 = vpop.f32.mrf.mxu0
  %v6778 = vadd.f32 0.0, %v6777
  %6779 = vmatmul.f32.gmra.mxu0 %v5736
  %v6780 = vpop.f32.mrf.mxu0
  %v6781 = vadd.f32 0.0, %v6780
  %6782 = vmatmul.f32.gmra.mxu0 %v5739
  %v6783 = vpop.f32.mrf.mxu0
  %v6784 = vadd.f32 0.0, %v6783
  %6785 = vmatmul.f32.gmra.mxu0 %v5742
  %v6786 = vpop.f32.mrf.mxu0
  %v6787 = vadd.f32 0.0, %v6786
  %6788 = vmatmul.f32.gmra.mxu0 %v5745
  %v6789 = vpop.f32.mrf.mxu0
  %v6790 = vadd.f32 0.0, %v6789
  %6791 = vmatmul.f32.gmra.mxu0 %v5748
  %v6792 = vpop.f32.mrf.mxu0
  %v6793 = vadd.f32 0.0, %v6792
  %6794 = vdwg.mxu0
  %6795 = vmatpush.msra.mxu0 0.0
  %6796 = vmatpush.msra.mxu0 0.0
  %6797 = vmatpush.msra.mxu0 0.0
  %6798 = vmatpush.msra.mxu0 0.0
  %6799 = vmatpush.msra.mxu0 0.0
  %6800 = vmatpush.msra.mxu0 0.0
  %6801 = vmatpush.msra.mxu0 0.0
  %6802 = vmatpush.msra.mxu0 0.0
  %6803 = vmatpush.msra.mxu0 0.0
  %6804 = vmatpush.msra.mxu0 0.0
  %6805 = vmatpush.msra.mxu0 0.0
  %6806 = vmatpush.msra.mxu0 0.0
  %6807 = vmatpush.msra.mxu0 0.0
  %6808 = vmatpush.msra.mxu0 0.0
  %6809 = vmatpush.msra.mxu0 %v5493
  %6810 = vmatpush.msra.mxu0 %v5492
  %6811 = vmatmul.f32.gmra.mxu0 %v5559
  %v6812 = vpop.f32.mrf.mxu0
  %v6813 = vadd.f32 0.0, %v6812
  %6814 = vmatmul.f32.gmra.mxu0 %v5562
  %v6815 = vpop.f32.mrf.mxu0
  %v6816 = vadd.f32 0.0, %v6815
  %6817 = vmatmul.f32.gmra.mxu0 %v5565
  %v6818 = vpop.f32.mrf.mxu0
  %v6819 = vadd.f32 0.0, %v6818
  %6820 = vmatmul.f32.gmra.mxu0 %v5568
  %v6821 = vpop.f32.mrf.mxu0
  %v6822 = vadd.f32 0.0, %v6821
  %6823 = vmatmul.f32.gmra.mxu0 %v5571
  %v6824 = vpop.f32.mrf.mxu0
  %v6825 = vadd.f32 0.0, %v6824
  %6826 = vmatmul.f32.gmra.mxu0 %v5574
  %v6827 = vpop.f32.mrf.mxu0
  %v6828 = vadd.f32 0.0, %v6827
  %6829 = vmatmul.f32.gmra.mxu0 %v5577
  %v6830 = vpop.f32.mrf.mxu0
  %v6831 = vadd.f32 0.0, %v6830
  %6832 = vmatmul.f32.gmra.mxu0 %v5580
  %v6833 = vpop.f32.mrf.mxu0
  %v6834 = vadd.f32 0.0, %v6833
  %6835 = vmatmul.f32.gmra.mxu0 %v5583
  %v6836 = vpop.f32.mrf.mxu0
  %v6837 = vadd.f32 0.0, %v6836
  %6838 = vmatmul.f32.gmra.mxu0 %v5586
  %v6839 = vpop.f32.mrf.mxu0
  %v6840 = vadd.f32 0.0, %v6839
  %6841 = vmatmul.f32.gmra.mxu0 %v5589
  %v6842 = vpop.f32.mrf.mxu0
  %v6843 = vadd.f32 0.0, %v6842
  %6844 = vmatmul.f32.gmra.mxu0 %v5592
  %v6845 = vpop.f32.mrf.mxu0
  %v6846 = vadd.f32 0.0, %v6845
  %6847 = vmatmul.f32.gmra.mxu0 %v5595
  %v6848 = vpop.f32.mrf.mxu0
  %v6849 = vadd.f32 0.0, %v6848
  %6850 = vmatmul.f32.gmra.mxu0 %v5598
  %v6851 = vpop.f32.mrf.mxu0
  %v6852 = vadd.f32 0.0, %v6851
  %6853 = vmatmul.f32.gmra.mxu0 %v5601
  %v6854 = vpop.f32.mrf.mxu0
  %v6855 = vadd.f32 0.0, %v6854
  %6856 = vmatmul.f32.gmra.mxu0 %v5604
  %v6857 = vpop.f32.mrf.mxu0
  %v6858 = vadd.f32 0.0, %v6857
  %6859 = vmatmul.f32.gmra.mxu0 %v5607
  %v6860 = vpop.f32.mrf.mxu0
  %v6861 = vadd.f32 0.0, %v6860
  %6862 = vmatmul.f32.gmra.mxu0 %v5610
  %v6863 = vpop.f32.mrf.mxu0
  %v6864 = vadd.f32 0.0, %v6863
  %6865 = vmatmul.f32.gmra.mxu0 %v5613
  %v6866 = vpop.f32.mrf.mxu0
  %v6867 = vadd.f32 0.0, %v6866
  %6868 = vmatmul.f32.gmra.mxu0 %v5616
  %v6869 = vpop.f32.mrf.mxu0
  %v6870 = vadd.f32 0.0, %v6869
  %6871 = vmatmul.f32.gmra.mxu0 %v5619
  %v6872 = vpop.f32.mrf.mxu0
  %v6873 = vadd.f32 0.0, %v6872
  %6874 = vmatmul.f32.gmra.mxu0 %v5622
  %v6875 = vpop.f32.mrf.mxu0
  %v6876 = vadd.f32 0.0, %v6875
  %6877 = vmatmul.f32.gmra.mxu0 %v5625
  %v6878 = vpop.f32.mrf.mxu0
  %v6879 = vadd.f32 0.0, %v6878
  %6880 = vmatmul.f32.gmra.mxu0 %v5628
  %v6881 = vpop.f32.mrf.mxu0
  %v6882 = vadd.f32 0.0, %v6881
  %6883 = vmatmul.f32.gmra.mxu0 %v5631
  %v6884 = vpop.f32.mrf.mxu0
  %v6885 = vadd.f32 0.0, %v6884
  %6886 = vmatmul.f32.gmra.mxu0 %v5634
  %v6887 = vpop.f32.mrf.mxu0
  %v6888 = vadd.f32 0.0, %v6887
  %6889 = vmatmul.f32.gmra.mxu0 %v5637
  %v6890 = vpop.f32.mrf.mxu0
  %v6891 = vadd.f32 0.0, %v6890
  %6892 = vmatmul.f32.gmra.mxu0 %v5640
  %v6893 = vpop.f32.mrf.mxu0
  %v6894 = vadd.f32 0.0, %v6893
  %6895 = vmatmul.f32.gmra.mxu0 %v5643
  %v6896 = vpop.f32.mrf.mxu0
  %v6897 = vadd.f32 0.0, %v6896
  %6898 = vmatmul.f32.gmra.mxu0 %v5646
  %v6899 = vpop.f32.mrf.mxu0
  %v6900 = vadd.f32 0.0, %v6899
  %6901 = vmatmul.f32.gmra.mxu0 %v5649
  %v6902 = vpop.f32.mrf.mxu0
  %v6903 = vadd.f32 0.0, %v6902
  %6904 = vmatmul.f32.gmra.mxu0 %v5652
  %v6905 = vpop.f32.mrf.mxu0
  %v6906 = vadd.f32 0.0, %v6905
  %6907 = vmatmul.f32.gmra.mxu0 %v5655
  %v6908 = vpop.f32.mrf.mxu0
  %v6909 = vadd.f32 0.0, %v6908
  %6910 = vmatmul.f32.gmra.mxu0 %v5658
  %v6911 = vpop.f32.mrf.mxu0
  %v6912 = vadd.f32 0.0, %v6911
  %6913 = vmatmul.f32.gmra.mxu0 %v5661
  %v6914 = vpop.f32.mrf.mxu0
  %v6915 = vadd.f32 0.0, %v6914
  %6916 = vmatmul.f32.gmra.mxu0 %v5664
  %v6917 = vpop.f32.mrf.mxu0
  %v6918 = vadd.f32 0.0, %v6917
  %6919 = vmatmul.f32.gmra.mxu0 %v5667
  %v6920 = vpop.f32.mrf.mxu0
  %v6921 = vadd.f32 0.0, %v6920
  %6922 = vmatmul.f32.gmra.mxu0 %v5670
  %v6923 = vpop.f32.mrf.mxu0
  %v6924 = vadd.f32 0.0, %v6923
  %6925 = vmatmul.f32.gmra.mxu0 %v5673
  %v6926 = vpop.f32.mrf.mxu0
  %v6927 = vadd.f32 0.0, %v6926
  %6928 = vmatmul.f32.gmra.mxu0 %v5676
  %v6929 = vpop.f32.mrf.mxu0
  %v6930 = vadd.f32 0.0, %v6929
  %6931 = vmatmul.f32.gmra.mxu0 %v5679
  %v6932 = vpop.f32.mrf.mxu0
  %v6933 = vadd.f32 0.0, %v6932
  %6934 = vmatmul.f32.gmra.mxu0 %v5682
  %v6935 = vpop.f32.mrf.mxu0
  %v6936 = vadd.f32 0.0, %v6935
  %6937 = vmatmul.f32.gmra.mxu0 %v5685
  %v6938 = vpop.f32.mrf.mxu0
  %v6939 = vadd.f32 0.0, %v6938
  %6940 = vmatmul.f32.gmra.mxu0 %v5688
  %v6941 = vpop.f32.mrf.mxu0
  %v6942 = vadd.f32 0.0, %v6941
  %6943 = vmatmul.f32.gmra.mxu0 %v5691
  %v6944 = vpop.f32.mrf.mxu0
  %v6945 = vadd.f32 0.0, %v6944
  %6946 = vmatmul.f32.gmra.mxu0 %v5694
  %v6947 = vpop.f32.mrf.mxu0
  %v6948 = vadd.f32 0.0, %v6947
  %6949 = vmatmul.f32.gmra.mxu0 %v5697
  %v6950 = vpop.f32.mrf.mxu0
  %v6951 = vadd.f32 0.0, %v6950
  %6952 = vmatmul.f32.gmra.mxu0 %v5700
  %v6953 = vpop.f32.mrf.mxu0
  %v6954 = vadd.f32 0.0, %v6953
  %6955 = vmatmul.f32.gmra.mxu0 %v5703
  %v6956 = vpop.f32.mrf.mxu0
  %v6957 = vadd.f32 0.0, %v6956
  %6958 = vmatmul.f32.gmra.mxu0 %v5706
  %v6959 = vpop.f32.mrf.mxu0
  %v6960 = vadd.f32 0.0, %v6959
  %6961 = vmatmul.f32.gmra.mxu0 %v5709
  %v6962 = vpop.f32.mrf.mxu0
  %v6963 = vadd.f32 0.0, %v6962
  %6964 = vmatmul.f32.gmra.mxu0 %v5712
  %v6965 = vpop.f32.mrf.mxu0
  %v6966 = vadd.f32 0.0, %v6965
  %6967 = vmatmul.f32.gmra.mxu0 %v5715
  %v6968 = vpop.f32.mrf.mxu0
  %v6969 = vadd.f32 0.0, %v6968
  %6970 = vmatmul.f32.gmra.mxu0 %v5718
  %v6971 = vpop.f32.mrf.mxu0
  %v6972 = vadd.f32 0.0, %v6971
  %6973 = vmatmul.f32.gmra.mxu0 %v5721
  %v6974 = vpop.f32.mrf.mxu0
  %v6975 = vadd.f32 0.0, %v6974
  %6976 = vmatmul.f32.gmra.mxu0 %v5724
  %v6977 = vpop.f32.mrf.mxu0
  %v6978 = vadd.f32 0.0, %v6977
  %6979 = vmatmul.f32.gmra.mxu0 %v5727
  %v6980 = vpop.f32.mrf.mxu0
  %v6981 = vadd.f32 0.0, %v6980
  %6982 = vmatmul.f32.gmra.mxu0 %v5730
  %v6983 = vpop.f32.mrf.mxu0
  %v6984 = vadd.f32 0.0, %v6983
  %6985 = vmatmul.f32.gmra.mxu0 %v5733
  %v6986 = vpop.f32.mrf.mxu0
  %v6987 = vadd.f32 0.0, %v6986
  %6988 = vmatmul.f32.gmra.mxu0 %v5736
  %v6989 = vpop.f32.mrf.mxu0
  %v6990 = vadd.f32 0.0, %v6989
  %6991 = vmatmul.f32.gmra.mxu0 %v5739
  %v6992 = vpop.f32.mrf.mxu0
  %v6993 = vadd.f32 0.0, %v6992
  %6994 = vmatmul.f32.gmra.mxu0 %v5742
  %v6995 = vpop.f32.mrf.mxu0
  %v6996 = vadd.f32 0.0, %v6995
  %6997 = vmatmul.f32.gmra.mxu0 %v5745
  %v6998 = vpop.f32.mrf.mxu0
  %v6999 = vadd.f32 0.0, %v6998
  %7000 = vmatmul.f32.gmra.mxu0 %v5748
  %v7001 = vpop.f32.mrf.mxu0
  %v7002 = vadd.f32 0.0, %v7001
  %7003 = vdwg.mxu0
  %7028 = vrot.lane.b32.xlu0 %v5780, 16
  %v7029 = vpop.permute.xlu0 %7028
  %7030 = vrot.lane.b32.xlu0 %v5783, 16
  %v7031 = vpop.permute.xlu0 %7030
  %7032 = vrot.lane.b32.xlu0 %v5786, 16
  %v7033 = vpop.permute.xlu0 %7032
  %7034 = vrot.lane.b32.xlu0 %v5789, 16
  %v7035 = vpop.permute.xlu0 %7034
  %7036 = vrot.lane.b32.xlu0 %v5989, 16
  %v7037 = vpop.permute.xlu0 %7036
  %7038 = vrot.lane.b32.xlu0 %v5992, 16
  %v7039 = vpop.permute.xlu0 %7038
  %7040 = vrot.lane.b32.xlu0 %v5995, 16
  %v7041 = vpop.permute.xlu0 %7040
  %7042 = vrot.lane.b32.xlu0 %v5998, 16
  %v7043 = vpop.permute.xlu0 %7042
  %7044 = vrot.lane.b32.xlu0 %v6198, 16
  %v7045 = vpop.permute.xlu0 %7044
  %7046 = vrot.lane.b32.xlu0 %v6201, 16
  %v7047 = vpop.permute.xlu0 %7046
  %7048 = vrot.lane.b32.xlu0 %v6204, 16
  %v7049 = vpop.permute.xlu0 %7048
  %7050 = vrot.lane.b32.xlu0 %v6207, 16
  %v7051 = vpop.permute.xlu0 %7050
  %7052 = vrot.lane.b32.xlu0 %v6407, 16
  %v7053 = vpop.permute.xlu0 %7052
  %7054 = vrot.lane.b32.xlu0 %v6410, 16
  %v7055 = vpop.permute.xlu0 %7054
  %7056 = vrot.lane.b32.xlu0 %v6413, 16
  %v7057 = vpop.permute.xlu0 %7056
  %7058 = vrot.lane.b32.xlu0 %v6416, 16
  %v7059 = vpop.permute.xlu0 %7058
  %7060 = vrot.lane.b32.xlu0 %v6616, 16
  %v7061 = vpop.permute.xlu0 %7060
  %7062 = vrot.lane.b32.xlu0 %v6619, 16
  %v7063 = vpop.permute.xlu0 %7062
  %7064 = vrot.lane.b32.xlu0 %v6622, 16
  %v7065 = vpop.permute.xlu0 %7064
  %7066 = vrot.lane.b32.xlu0 %v6625, 16
  %v7067 = vpop.permute.xlu0 %7066
  %7068 = vrot.lane.b32.xlu0 %v6825, 16
  %v7069 = vpop.permute.xlu0 %7068
  %7070 = vrot.lane.b32.xlu0 %v6828, 16
  %v7071 = vpop.permute.xlu0 %7070
  %7072 = vrot.lane.b32.xlu0 %v6831, 16
  %v7073 = vpop.permute.xlu0 %7072
  %7074 = vrot.lane.b32.xlu0 %v6834, 16
  %v7075 = vpop.permute.xlu0 %7074
  %7124 = vrot.lane.b32.xlu0 %v5792, 32
  %v7125 = vpop.permute.xlu0 %7124
  %7126 = vrot.lane.b32.xlu0 %v5795, 32
  %v7127 = vpop.permute.xlu0 %7126
  %7128 = vrot.lane.b32.xlu0 %v5798, 32
  %v7129 = vpop.permute.xlu0 %7128
  %7130 = vrot.lane.b32.xlu0 %v5801, 32
  %v7131 = vpop.permute.xlu0 %7130
  %7132 = vrot.lane.b32.xlu0 %v6001, 32
  %v7133 = vpop.permute.xlu0 %7132
  %7134 = vrot.lane.b32.xlu0 %v6004, 32
  %v7135 = vpop.permute.xlu0 %7134
  %7136 = vrot.lane.b32.xlu0 %v6007, 32
  %v7137 = vpop.permute.xlu0 %7136
  %7138 = vrot.lane.b32.xlu0 %v6010, 32
  %v7139 = vpop.permute.xlu0 %7138
  %7140 = vrot.lane.b32.xlu0 %v6210, 32
  %v7141 = vpop.permute.xlu0 %7140
  %7142 = vrot.lane.b32.xlu0 %v6213, 32
  %v7143 = vpop.permute.xlu0 %7142
  %7144 = vrot.lane.b32.xlu0 %v6216, 32
  %v7145 = vpop.permute.xlu0 %7144
  %7146 = vrot.lane.b32.xlu0 %v6219, 32
  %v7147 = vpop.permute.xlu0 %7146
  %7148 = vrot.lane.b32.xlu0 %v6419, 32
  %v7149 = vpop.permute.xlu0 %7148
  %7150 = vrot.lane.b32.xlu0 %v6422, 32
  %v7151 = vpop.permute.xlu0 %7150
  %7152 = vrot.lane.b32.xlu0 %v6425, 32
  %v7153 = vpop.permute.xlu0 %7152
  %7154 = vrot.lane.b32.xlu0 %v6428, 32
  %v7155 = vpop.permute.xlu0 %7154
  %7156 = vrot.lane.b32.xlu0 %v6628, 32
  %v7157 = vpop.permute.xlu0 %7156
  %7158 = vrot.lane.b32.xlu0 %v6631, 32
  %v7159 = vpop.permute.xlu0 %7158
  %7160 = vrot.lane.b32.xlu0 %v6634, 32
  %v7161 = vpop.permute.xlu0 %7160
  %7162 = vrot.lane.b32.xlu0 %v6637, 32
  %v7163 = vpop.permute.xlu0 %7162
  %7164 = vrot.lane.b32.xlu0 %v6837, 32
  %v7165 = vpop.permute.xlu0 %7164
  %7166 = vrot.lane.b32.xlu0 %v6840, 32
  %v7167 = vpop.permute.xlu0 %7166
  %7168 = vrot.lane.b32.xlu0 %v6843, 32
  %v7169 = vpop.permute.xlu0 %7168
  %7170 = vrot.lane.b32.xlu0 %v6846, 32
  %v7171 = vpop.permute.xlu0 %7170
  %7220 = vrot.lane.b32.xlu0 %v5804, 48
  %v7221 = vpop.permute.xlu0 %7220
  %7222 = vrot.lane.b32.xlu0 %v5807, 48
  %v7223 = vpop.permute.xlu0 %7222
  %7224 = vrot.lane.b32.xlu0 %v5810, 48
  %v7225 = vpop.permute.xlu0 %7224
  %7226 = vrot.lane.b32.xlu0 %v5813, 48
  %v7227 = vpop.permute.xlu0 %7226
  %7228 = vrot.lane.b32.xlu0 %v6013, 48
  %v7229 = vpop.permute.xlu0 %7228
  %7230 = vrot.lane.b32.xlu0 %v6016, 48
  %v7231 = vpop.permute.xlu0 %7230
  %7232 = vrot.lane.b32.xlu0 %v6019, 48
  %v7233 = vpop.permute.xlu0 %7232
  %7234 = vrot.lane.b32.xlu0 %v6022, 48
  %v7235 = vpop.permute.xlu0 %7234
  %7236 = vrot.lane.b32.xlu0 %v6222, 48
  %v7237 = vpop.permute.xlu0 %7236
  %7238 = vrot.lane.b32.xlu0 %v6225, 48
  %v7239 = vpop.permute.xlu0 %7238
  %7240 = vrot.lane.b32.xlu0 %v6228, 48
  %v7241 = vpop.permute.xlu0 %7240
  %7242 = vrot.lane.b32.xlu0 %v6231, 48
  %v7243 = vpop.permute.xlu0 %7242
  %7244 = vrot.lane.b32.xlu0 %v6431, 48
  %v7245 = vpop.permute.xlu0 %7244
  %7246 = vrot.lane.b32.xlu0 %v6434, 48
  %v7247 = vpop.permute.xlu0 %7246
  %7248 = vrot.lane.b32.xlu0 %v6437, 48
  %v7249 = vpop.permute.xlu0 %7248
  %7250 = vrot.lane.b32.xlu0 %v6440, 48
  %v7251 = vpop.permute.xlu0 %7250
  %7252 = vrot.lane.b32.xlu0 %v6640, 48
  %v7253 = vpop.permute.xlu0 %7252
  %7254 = vrot.lane.b32.xlu0 %v6643, 48
  %v7255 = vpop.permute.xlu0 %7254
  %7256 = vrot.lane.b32.xlu0 %v6646, 48
  %v7257 = vpop.permute.xlu0 %7256
  %7258 = vrot.lane.b32.xlu0 %v6649, 48
  %v7259 = vpop.permute.xlu0 %7258
  %7260 = vrot.lane.b32.xlu0 %v6849, 48
  %v7261 = vpop.permute.xlu0 %7260
  %7262 = vrot.lane.b32.xlu0 %v6852, 48
  %v7263 = vpop.permute.xlu0 %7262
  %7264 = vrot.lane.b32.xlu0 %v6855, 48
  %v7265 = vpop.permute.xlu0 %7264
  %7266 = vrot.lane.b32.xlu0 %v6858, 48
  %v7267 = vpop.permute.xlu0 %7266
  %7316 = vrot.lane.b32.xlu0 %v5816, 64
  %v7317 = vpop.permute.xlu0 %7316
  %7318 = vrot.lane.b32.xlu0 %v5819, 64
  %v7319 = vpop.permute.xlu0 %7318
  %7320 = vrot.lane.b32.xlu0 %v5822, 64
  %v7321 = vpop.permute.xlu0 %7320
  %7322 = vrot.lane.b32.xlu0 %v5825, 64
  %v7323 = vpop.permute.xlu0 %7322
  %7324 = vrot.lane.b32.xlu0 %v6025, 64
  %v7325 = vpop.permute.xlu0 %7324
  %7326 = vrot.lane.b32.xlu0 %v6028, 64
  %v7327 = vpop.permute.xlu0 %7326
  %7328 = vrot.lane.b32.xlu0 %v6031, 64
  %v7329 = vpop.permute.xlu0 %7328
  %7330 = vrot.lane.b32.xlu0 %v6034, 64
  %v7331 = vpop.permute.xlu0 %7330
  %7332 = vrot.lane.b32.xlu0 %v6234, 64
  %v7333 = vpop.permute.xlu0 %7332
  %7334 = vrot.lane.b32.xlu0 %v6237, 64
  %v7335 = vpop.permute.xlu0 %7334
  %7336 = vrot.lane.b32.xlu0 %v6240, 64
  %v7337 = vpop.permute.xlu0 %7336
  %7338 = vrot.lane.b32.xlu0 %v6243, 64
  %v7339 = vpop.permute.xlu0 %7338
  %7340 = vrot.lane.b32.xlu0 %v6443, 64
  %v7341 = vpop.permute.xlu0 %7340
  %7342 = vrot.lane.b32.xlu0 %v6446, 64
  %v7343 = vpop.permute.xlu0 %7342
  %7344 = vrot.lane.b32.xlu0 %v6449, 64
  %v7345 = vpop.permute.xlu0 %7344
  %7346 = vrot.lane.b32.xlu0 %v6452, 64
  %v7347 = vpop.permute.xlu0 %7346
  %7348 = vrot.lane.b32.xlu0 %v6652, 64
  %v7349 = vpop.permute.xlu0 %7348
  %7350 = vrot.lane.b32.xlu0 %v6655, 64
  %v7351 = vpop.permute.xlu0 %7350
  %7352 = vrot.lane.b32.xlu0 %v6658, 64
  %v7353 = vpop.permute.xlu0 %7352
  %7354 = vrot.lane.b32.xlu0 %v6661, 64
  %v7355 = vpop.permute.xlu0 %7354
  %7356 = vrot.lane.b32.xlu0 %v6861, 64
  %v7357 = vpop.permute.xlu0 %7356
  %7358 = vrot.lane.b32.xlu0 %v6864, 64
  %v7359 = vpop.permute.xlu0 %7358
  %7360 = vrot.lane.b32.xlu0 %v6867, 64
  %v7361 = vpop.permute.xlu0 %7360
  %7362 = vrot.lane.b32.xlu0 %v6870, 64
  %v7363 = vpop.permute.xlu0 %7362
  %7412 = vrot.lane.b32.xlu0 %v5828, 80
  %v7413 = vpop.permute.xlu0 %7412
  %7414 = vrot.lane.b32.xlu0 %v5831, 80
  %v7415 = vpop.permute.xlu0 %7414
  %7416 = vrot.lane.b32.xlu0 %v5834, 80
  %v7417 = vpop.permute.xlu0 %7416
  %7418 = vrot.lane.b32.xlu0 %v5837, 80
  %v7419 = vpop.permute.xlu0 %7418
  %7420 = vrot.lane.b32.xlu0 %v6037, 80
  %v7421 = vpop.permute.xlu0 %7420
  %7422 = vrot.lane.b32.xlu0 %v6040, 80
  %v7423 = vpop.permute.xlu0 %7422
  %7424 = vrot.lane.b32.xlu0 %v6043, 80
  %v7425 = vpop.permute.xlu0 %7424
  %7426 = vrot.lane.b32.xlu0 %v6046, 80
  %v7427 = vpop.permute.xlu0 %7426
  %7428 = vrot.lane.b32.xlu0 %v6246, 80
  %v7429 = vpop.permute.xlu0 %7428
  %7430 = vrot.lane.b32.xlu0 %v6249, 80
  %v7431 = vpop.permute.xlu0 %7430
  %7432 = vrot.lane.b32.xlu0 %v6252, 80
  %v7433 = vpop.permute.xlu0 %7432
  %7434 = vrot.lane.b32.xlu0 %v6255, 80
  %v7435 = vpop.permute.xlu0 %7434
  %7436 = vrot.lane.b32.xlu0 %v6455, 80
  %v7437 = vpop.permute.xlu0 %7436
  %7438 = vrot.lane.b32.xlu0 %v6458, 80
  %v7439 = vpop.permute.xlu0 %7438
  %7440 = vrot.lane.b32.xlu0 %v6461, 80
  %v7441 = vpop.permute.xlu0 %7440
  %7442 = vrot.lane.b32.xlu0 %v6464, 80
  %v7443 = vpop.permute.xlu0 %7442
  %7444 = vrot.lane.b32.xlu0 %v6664, 80
  %v7445 = vpop.permute.xlu0 %7444
  %7446 = vrot.lane.b32.xlu0 %v6667, 80
  %v7447 = vpop.permute.xlu0 %7446
  %7448 = vrot.lane.b32.xlu0 %v6670, 80
  %v7449 = vpop.permute.xlu0 %7448
  %7450 = vrot.lane.b32.xlu0 %v6673, 80
  %v7451 = vpop.permute.xlu0 %7450
  %7452 = vrot.lane.b32.xlu0 %v6873, 80
  %v7453 = vpop.permute.xlu0 %7452
  %7454 = vrot.lane.b32.xlu0 %v6876, 80
  %v7455 = vpop.permute.xlu0 %7454
  %7456 = vrot.lane.b32.xlu0 %v6879, 80
  %v7457 = vpop.permute.xlu0 %7456
  %7458 = vrot.lane.b32.xlu0 %v6882, 80
  %v7459 = vpop.permute.xlu0 %7458
  %7508 = vrot.lane.b32.xlu0 %v5840, 96
  %v7509 = vpop.permute.xlu0 %7508
  %7510 = vrot.lane.b32.xlu0 %v5843, 96
  %v7511 = vpop.permute.xlu0 %7510
  %7512 = vrot.lane.b32.xlu0 %v5846, 96
  %v7513 = vpop.permute.xlu0 %7512
  %7514 = vrot.lane.b32.xlu0 %v5849, 96
  %v7515 = vpop.permute.xlu0 %7514
  %7516 = vrot.lane.b32.xlu0 %v6049, 96
  %v7517 = vpop.permute.xlu0 %7516
  %7518 = vrot.lane.b32.xlu0 %v6052, 96
  %v7519 = vpop.permute.xlu0 %7518
  %7520 = vrot.lane.b32.xlu0 %v6055, 96
  %v7521 = vpop.permute.xlu0 %7520
  %7522 = vrot.lane.b32.xlu0 %v6058, 96
  %v7523 = vpop.permute.xlu0 %7522
  %7524 = vrot.lane.b32.xlu0 %v6258, 96
  %v7525 = vpop.permute.xlu0 %7524
  %7526 = vrot.lane.b32.xlu0 %v6261, 96
  %v7527 = vpop.permute.xlu0 %7526
  %7528 = vrot.lane.b32.xlu0 %v6264, 96
  %v7529 = vpop.permute.xlu0 %7528
  %7530 = vrot.lane.b32.xlu0 %v6267, 96
  %v7531 = vpop.permute.xlu0 %7530
  %7532 = vrot.lane.b32.xlu0 %v6467, 96
  %v7533 = vpop.permute.xlu0 %7532
  %7534 = vrot.lane.b32.xlu0 %v6470, 96
  %v7535 = vpop.permute.xlu0 %7534
  %7536 = vrot.lane.b32.xlu0 %v6473, 96
  %v7537 = vpop.permute.xlu0 %7536
  %7538 = vrot.lane.b32.xlu0 %v6476, 96
  %v7539 = vpop.permute.xlu0 %7538
  %7540 = vrot.lane.b32.xlu0 %v6676, 96
  %v7541 = vpop.permute.xlu0 %7540
  %7542 = vrot.lane.b32.xlu0 %v6679, 96
  %v7543 = vpop.permute.xlu0 %7542
  %7544 = vrot.lane.b32.xlu0 %v6682, 96
  %v7545 = vpop.permute.xlu0 %7544
  %7546 = vrot.lane.b32.xlu0 %v6685, 96
  %v7547 = vpop.permute.xlu0 %7546
  %7548 = vrot.lane.b32.xlu0 %v6885, 96
  %v7549 = vpop.permute.xlu0 %7548
  %7550 = vrot.lane.b32.xlu0 %v6888, 96
  %v7551 = vpop.permute.xlu0 %7550
  %7552 = vrot.lane.b32.xlu0 %v6891, 96
  %v7553 = vpop.permute.xlu0 %7552
  %7554 = vrot.lane.b32.xlu0 %v6894, 96
  %v7555 = vpop.permute.xlu0 %7554
  %7604 = vrot.lane.b32.xlu0 %v5852, 112
  %v7605 = vpop.permute.xlu0 %7604
  %7606 = vrot.lane.b32.xlu0 %v5855, 112
  %v7607 = vpop.permute.xlu0 %7606
  %7608 = vrot.lane.b32.xlu0 %v5858, 112
  %v7609 = vpop.permute.xlu0 %7608
  %7610 = vrot.lane.b32.xlu0 %v5861, 112
  %v7611 = vpop.permute.xlu0 %7610
  %7612 = vrot.lane.b32.xlu0 %v6061, 112
  %v7613 = vpop.permute.xlu0 %7612
  %7614 = vrot.lane.b32.xlu0 %v6064, 112
  %v7615 = vpop.permute.xlu0 %7614
  %7616 = vrot.lane.b32.xlu0 %v6067, 112
  %v7617 = vpop.permute.xlu0 %7616
  %7618 = vrot.lane.b32.xlu0 %v6070, 112
  %v7619 = vpop.permute.xlu0 %7618
  %7620 = vrot.lane.b32.xlu0 %v6270, 112
  %v7621 = vpop.permute.xlu0 %7620
  %7622 = vrot.lane.b32.xlu0 %v6273, 112
  %v7623 = vpop.permute.xlu0 %7622
  %7624 = vrot.lane.b32.xlu0 %v6276, 112
  %v7625 = vpop.permute.xlu0 %7624
  %7626 = vrot.lane.b32.xlu0 %v6279, 112
  %v7627 = vpop.permute.xlu0 %7626
  %7628 = vrot.lane.b32.xlu0 %v6479, 112
  %v7629 = vpop.permute.xlu0 %7628
  %7630 = vrot.lane.b32.xlu0 %v6482, 112
  %v7631 = vpop.permute.xlu0 %7630
  %7632 = vrot.lane.b32.xlu0 %v6485, 112
  %v7633 = vpop.permute.xlu0 %7632
  %7634 = vrot.lane.b32.xlu0 %v6488, 112
  %v7635 = vpop.permute.xlu0 %7634
  %7636 = vrot.lane.b32.xlu0 %v6688, 112
  %v7637 = vpop.permute.xlu0 %7636
  %7638 = vrot.lane.b32.xlu0 %v6691, 112
  %v7639 = vpop.permute.xlu0 %7638
  %7640 = vrot.lane.b32.xlu0 %v6694, 112
  %v7641 = vpop.permute.xlu0 %7640
  %7642 = vrot.lane.b32.xlu0 %v6697, 112
  %v7643 = vpop.permute.xlu0 %7642
  %7644 = vrot.lane.b32.xlu0 %v6897, 112
  %v7645 = vpop.permute.xlu0 %7644
  %7646 = vrot.lane.b32.xlu0 %v6900, 112
  %v7647 = vpop.permute.xlu0 %7646
  %7648 = vrot.lane.b32.xlu0 %v6903, 112
  %v7649 = vpop.permute.xlu0 %7648
  %7650 = vrot.lane.b32.xlu0 %v6906, 112
  %v7651 = vpop.permute.xlu0 %7650
  %7700 = vrot.lane.b32.xlu0 %v5876, 16
  %v7701 = vpop.permute.xlu0 %7700
  %7702 = vrot.lane.b32.xlu0 %v5879, 16
  %v7703 = vpop.permute.xlu0 %7702
  %7704 = vrot.lane.b32.xlu0 %v5882, 16
  %v7705 = vpop.permute.xlu0 %7704
  %7706 = vrot.lane.b32.xlu0 %v5885, 16
  %v7707 = vpop.permute.xlu0 %7706
  %7708 = vrot.lane.b32.xlu0 %v6085, 16
  %v7709 = vpop.permute.xlu0 %7708
  %7710 = vrot.lane.b32.xlu0 %v6088, 16
  %v7711 = vpop.permute.xlu0 %7710
  %7712 = vrot.lane.b32.xlu0 %v6091, 16
  %v7713 = vpop.permute.xlu0 %7712
  %7714 = vrot.lane.b32.xlu0 %v6094, 16
  %v7715 = vpop.permute.xlu0 %7714
  %7716 = vrot.lane.b32.xlu0 %v6294, 16
  %v7717 = vpop.permute.xlu0 %7716
  %7718 = vrot.lane.b32.xlu0 %v6297, 16
  %v7719 = vpop.permute.xlu0 %7718
  %7720 = vrot.lane.b32.xlu0 %v6300, 16
  %v7721 = vpop.permute.xlu0 %7720
  %7722 = vrot.lane.b32.xlu0 %v6303, 16
  %v7723 = vpop.permute.xlu0 %7722
  %7724 = vrot.lane.b32.xlu0 %v6503, 16
  %v7725 = vpop.permute.xlu0 %7724
  %7726 = vrot.lane.b32.xlu0 %v6506, 16
  %v7727 = vpop.permute.xlu0 %7726
  %7728 = vrot.lane.b32.xlu0 %v6509, 16
  %v7729 = vpop.permute.xlu0 %7728
  %7730 = vrot.lane.b32.xlu0 %v6512, 16
  %v7731 = vpop.permute.xlu0 %7730
  %7732 = vrot.lane.b32.xlu0 %v6712, 16
  %v7733 = vpop.permute.xlu0 %7732
  %7734 = vrot.lane.b32.xlu0 %v6715, 16
  %v7735 = vpop.permute.xlu0 %7734
  %7736 = vrot.lane.b32.xlu0 %v6718, 16
  %v7737 = vpop.permute.xlu0 %7736
  %7738 = vrot.lane.b32.xlu0 %v6721, 16
  %v7739 = vpop.permute.xlu0 %7738
  %7740 = vrot.lane.b32.xlu0 %v6921, 16
  %v7741 = vpop.permute.xlu0 %7740
  %7742 = vrot.lane.b32.xlu0 %v6924, 16
  %v7743 = vpop.permute.xlu0 %7742
  %7744 = vrot.lane.b32.xlu0 %v6927, 16
  %v7745 = vpop.permute.xlu0 %7744
  %7746 = vrot.lane.b32.xlu0 %v6930, 16
  %v7747 = vpop.permute.xlu0 %7746
  %7796 = vrot.lane.b32.xlu0 %v5888, 32
  %v7797 = vpop.permute.xlu0 %7796
  %7798 = vrot.lane.b32.xlu0 %v5891, 32
  %v7799 = vpop.permute.xlu0 %7798
  %7800 = vrot.lane.b32.xlu0 %v5894, 32
  %v7801 = vpop.permute.xlu0 %7800
  %7802 = vrot.lane.b32.xlu0 %v5897, 32
  %v7803 = vpop.permute.xlu0 %7802
  %7804 = vrot.lane.b32.xlu0 %v6097, 32
  %v7805 = vpop.permute.xlu0 %7804
  %7806 = vrot.lane.b32.xlu0 %v6100, 32
  %v7807 = vpop.permute.xlu0 %7806
  %7808 = vrot.lane.b32.xlu0 %v6103, 32
  %v7809 = vpop.permute.xlu0 %7808
  %7810 = vrot.lane.b32.xlu0 %v6106, 32
  %v7811 = vpop.permute.xlu0 %7810
  %7812 = vrot.lane.b32.xlu0 %v6306, 32
  %v7813 = vpop.permute.xlu0 %7812
  %7814 = vrot.lane.b32.xlu0 %v6309, 32
  %v7815 = vpop.permute.xlu0 %7814
  %7816 = vrot.lane.b32.xlu0 %v6312, 32
  %v7817 = vpop.permute.xlu0 %7816
  %7818 = vrot.lane.b32.xlu0 %v6315, 32
  %v7819 = vpop.permute.xlu0 %7818
  %7820 = vrot.lane.b32.xlu0 %v6515, 32
  %v7821 = vpop.permute.xlu0 %7820
  %7822 = vrot.lane.b32.xlu0 %v6518, 32
  %v7823 = vpop.permute.xlu0 %7822
  %7824 = vrot.lane.b32.xlu0 %v6521, 32
  %v7825 = vpop.permute.xlu0 %7824
  %7826 = vrot.lane.b32.xlu0 %v6524, 32
  %v7827 = vpop.permute.xlu0 %7826
  %7828 = vrot.lane.b32.xlu0 %v6724, 32
  %v7829 = vpop.permute.xlu0 %7828
  %7830 = vrot.lane.b32.xlu0 %v6727, 32
  %v7831 = vpop.permute.xlu0 %7830
  %7832 = vrot.lane.b32.xlu0 %v6730, 32
  %v7833 = vpop.permute.xlu0 %7832
  %7834 = vrot.lane.b32.xlu0 %v6733, 32
  %v7835 = vpop.permute.xlu0 %7834
  %7836 = vrot.lane.b32.xlu0 %v6933, 32
  %v7837 = vpop.permute.xlu0 %7836
  %7838 = vrot.lane.b32.xlu0 %v6936, 32
  %v7839 = vpop.permute.xlu0 %7838
  %7840 = vrot.lane.b32.xlu0 %v6939, 32
  %v7841 = vpop.permute.xlu0 %7840
  %7842 = vrot.lane.b32.xlu0 %v6942, 32
  %v7843 = vpop.permute.xlu0 %7842
  %7892 = vrot.lane.b32.xlu0 %v5900, 48
  %v7893 = vpop.permute.xlu0 %7892
  %7894 = vrot.lane.b32.xlu0 %v5903, 48
  %v7895 = vpop.permute.xlu0 %7894
  %7896 = vrot.lane.b32.xlu0 %v5906, 48
  %v7897 = vpop.permute.xlu0 %7896
  %7898 = vrot.lane.b32.xlu0 %v5909, 48
  %v7899 = vpop.permute.xlu0 %7898
  %7900 = vrot.lane.b32.xlu0 %v6109, 48
  %v7901 = vpop.permute.xlu0 %7900
  %7902 = vrot.lane.b32.xlu0 %v6112, 48
  %v7903 = vpop.permute.xlu0 %7902
  %7904 = vrot.lane.b32.xlu0 %v6115, 48
  %v7905 = vpop.permute.xlu0 %7904
  %7906 = vrot.lane.b32.xlu0 %v6118, 48
  %v7907 = vpop.permute.xlu0 %7906
  %7908 = vrot.lane.b32.xlu0 %v6318, 48
  %v7909 = vpop.permute.xlu0 %7908
  %7910 = vrot.lane.b32.xlu0 %v6321, 48
  %v7911 = vpop.permute.xlu0 %7910
  %7912 = vrot.lane.b32.xlu0 %v6324, 48
  %v7913 = vpop.permute.xlu0 %7912
  %7914 = vrot.lane.b32.xlu0 %v6327, 48
  %v7915 = vpop.permute.xlu0 %7914
  %7916 = vrot.lane.b32.xlu0 %v6527, 48
  %v7917 = vpop.permute.xlu0 %7916
  %7918 = vrot.lane.b32.xlu0 %v6530, 48
  %v7919 = vpop.permute.xlu0 %7918
  %7920 = vrot.lane.b32.xlu0 %v6533, 48
  %v7921 = vpop.permute.xlu0 %7920
  %7922 = vrot.lane.b32.xlu0 %v6536, 48
  %v7923 = vpop.permute.xlu0 %7922
  %7924 = vrot.lane.b32.xlu0 %v6736, 48
  %v7925 = vpop.permute.xlu0 %7924
  %7926 = vrot.lane.b32.xlu0 %v6739, 48
  %v7927 = vpop.permute.xlu0 %7926
  %7928 = vrot.lane.b32.xlu0 %v6742, 48
  %v7929 = vpop.permute.xlu0 %7928
  %7930 = vrot.lane.b32.xlu0 %v6745, 48
  %v7931 = vpop.permute.xlu0 %7930
  %7932 = vrot.lane.b32.xlu0 %v6945, 48
  %v7933 = vpop.permute.xlu0 %7932
  %7934 = vrot.lane.b32.xlu0 %v6948, 48
  %v7935 = vpop.permute.xlu0 %7934
  %7936 = vrot.lane.b32.xlu0 %v6951, 48
  %v7937 = vpop.permute.xlu0 %7936
  %7938 = vrot.lane.b32.xlu0 %v6954, 48
  %v7939 = vpop.permute.xlu0 %7938
  %7988 = vrot.lane.b32.xlu0 %v5912, 64
  %v7989 = vpop.permute.xlu0 %7988
  %7990 = vrot.lane.b32.xlu0 %v5915, 64
  %v7991 = vpop.permute.xlu0 %7990
  %7992 = vrot.lane.b32.xlu0 %v5918, 64
  %v7993 = vpop.permute.xlu0 %7992
  %7994 = vrot.lane.b32.xlu0 %v5921, 64
  %v7995 = vpop.permute.xlu0 %7994
  %7996 = vrot.lane.b32.xlu0 %v6121, 64
  %v7997 = vpop.permute.xlu0 %7996
  %7998 = vrot.lane.b32.xlu0 %v6124, 64
  %v7999 = vpop.permute.xlu0 %7998
  %8000 = vrot.lane.b32.xlu0 %v6127, 64
  %v8001 = vpop.permute.xlu0 %8000
  %8002 = vrot.lane.b32.xlu0 %v6130, 64
  %v8003 = vpop.permute.xlu0 %8002
  %8004 = vrot.lane.b32.xlu0 %v6330, 64
  %v8005 = vpop.permute.xlu0 %8004
  %8006 = vrot.lane.b32.xlu0 %v6333, 64
  %v8007 = vpop.permute.xlu0 %8006
  %8008 = vrot.lane.b32.xlu0 %v6336, 64
  %v8009 = vpop.permute.xlu0 %8008
  %8010 = vrot.lane.b32.xlu0 %v6339, 64
  %v8011 = vpop.permute.xlu0 %8010
  %8012 = vrot.lane.b32.xlu0 %v6539, 64
  %v8013 = vpop.permute.xlu0 %8012
  %8014 = vrot.lane.b32.xlu0 %v6542, 64
  %v8015 = vpop.permute.xlu0 %8014
  %8016 = vrot.lane.b32.xlu0 %v6545, 64
  %v8017 = vpop.permute.xlu0 %8016
  %8018 = vrot.lane.b32.xlu0 %v6548, 64
  %v8019 = vpop.permute.xlu0 %8018
  %8020 = vrot.lane.b32.xlu0 %v6748, 64
  %v8021 = vpop.permute.xlu0 %8020
  %8022 = vrot.lane.b32.xlu0 %v6751, 64
  %v8023 = vpop.permute.xlu0 %8022
  %8024 = vrot.lane.b32.xlu0 %v6754, 64
  %v8025 = vpop.permute.xlu0 %8024
  %8026 = vrot.lane.b32.xlu0 %v6757, 64
  %v8027 = vpop.permute.xlu0 %8026
  %8028 = vrot.lane.b32.xlu0 %v6957, 64
  %v8029 = vpop.permute.xlu0 %8028
  %8030 = vrot.lane.b32.xlu0 %v6960, 64
  %v8031 = vpop.permute.xlu0 %8030
  %8032 = vrot.lane.b32.xlu0 %v6963, 64
  %v8033 = vpop.permute.xlu0 %8032
  %8034 = vrot.lane.b32.xlu0 %v6966, 64
  %v8035 = vpop.permute.xlu0 %8034
  %8084 = vrot.lane.b32.xlu0 %v5924, 80
  %v8085 = vpop.permute.xlu0 %8084
  %8086 = vrot.lane.b32.xlu0 %v5927, 80
  %v8087 = vpop.permute.xlu0 %8086
  %8088 = vrot.lane.b32.xlu0 %v5930, 80
  %v8089 = vpop.permute.xlu0 %8088
  %8090 = vrot.lane.b32.xlu0 %v5933, 80
  %v8091 = vpop.permute.xlu0 %8090
  %8092 = vrot.lane.b32.xlu0 %v6133, 80
  %v8093 = vpop.permute.xlu0 %8092
  %8094 = vrot.lane.b32.xlu0 %v6136, 80
  %v8095 = vpop.permute.xlu0 %8094
  %8096 = vrot.lane.b32.xlu0 %v6139, 80
  %v8097 = vpop.permute.xlu0 %8096
  %8098 = vrot.lane.b32.xlu0 %v6142, 80
  %v8099 = vpop.permute.xlu0 %8098
  %8100 = vrot.lane.b32.xlu0 %v6342, 80
  %v8101 = vpop.permute.xlu0 %8100
  %8102 = vrot.lane.b32.xlu0 %v6345, 80
  %v8103 = vpop.permute.xlu0 %8102
  %8104 = vrot.lane.b32.xlu0 %v6348, 80
  %v8105 = vpop.permute.xlu0 %8104
  %8106 = vrot.lane.b32.xlu0 %v6351, 80
  %v8107 = vpop.permute.xlu0 %8106
  %8108 = vrot.lane.b32.xlu0 %v6551, 80
  %v8109 = vpop.permute.xlu0 %8108
  %8110 = vrot.lane.b32.xlu0 %v6554, 80
  %v8111 = vpop.permute.xlu0 %8110
  %8112 = vrot.lane.b32.xlu0 %v6557, 80
  %v8113 = vpop.permute.xlu0 %8112
  %8114 = vrot.lane.b32.xlu0 %v6560, 80
  %v8115 = vpop.permute.xlu0 %8114
  %8116 = vrot.lane.b32.xlu0 %v6760, 80
  %v8117 = vpop.permute.xlu0 %8116
  %8118 = vrot.lane.b32.xlu0 %v6763, 80
  %v8119 = vpop.permute.xlu0 %8118
  %8120 = vrot.lane.b32.xlu0 %v6766, 80
  %v8121 = vpop.permute.xlu0 %8120
  %8122 = vrot.lane.b32.xlu0 %v6769, 80
  %v8123 = vpop.permute.xlu0 %8122
  %8124 = vrot.lane.b32.xlu0 %v6969, 80
  %v8125 = vpop.permute.xlu0 %8124
  %8126 = vrot.lane.b32.xlu0 %v6972, 80
  %v8127 = vpop.permute.xlu0 %8126
  %8128 = vrot.lane.b32.xlu0 %v6975, 80
  %v8129 = vpop.permute.xlu0 %8128
  %8130 = vrot.lane.b32.xlu0 %v6978, 80
  %v8131 = vpop.permute.xlu0 %8130
  %8180 = vrot.lane.b32.xlu0 %v5936, 96
  %v8181 = vpop.permute.xlu0 %8180
  %8182 = vrot.lane.b32.xlu0 %v5939, 96
  %v8183 = vpop.permute.xlu0 %8182
  %8184 = vrot.lane.b32.xlu0 %v5942, 96
  %v8185 = vpop.permute.xlu0 %8184
  %8186 = vrot.lane.b32.xlu0 %v5945, 96
  %v8187 = vpop.permute.xlu0 %8186
  %8188 = vrot.lane.b32.xlu0 %v6145, 96
  %v8189 = vpop.permute.xlu0 %8188
  %8190 = vrot.lane.b32.xlu0 %v6148, 96
  %v8191 = vpop.permute.xlu0 %8190
  %8192 = vrot.lane.b32.xlu0 %v6151, 96
  %v8193 = vpop.permute.xlu0 %8192
  %8194 = vrot.lane.b32.xlu0 %v6154, 96
  %v8195 = vpop.permute.xlu0 %8194
  %8196 = vrot.lane.b32.xlu0 %v6354, 96
  %v8197 = vpop.permute.xlu0 %8196
  %8198 = vrot.lane.b32.xlu0 %v6357, 96
  %v8199 = vpop.permute.xlu0 %8198
  %8200 = vrot.lane.b32.xlu0 %v6360, 96
  %v8201 = vpop.permute.xlu0 %8200
  %8202 = vrot.lane.b32.xlu0 %v6363, 96
  %v8203 = vpop.permute.xlu0 %8202
  %8204 = vrot.lane.b32.xlu0 %v6563, 96
  %v8205 = vpop.permute.xlu0 %8204
  %8206 = vrot.lane.b32.xlu0 %v6566, 96
  %v8207 = vpop.permute.xlu0 %8206
  %8208 = vrot.lane.b32.xlu0 %v6569, 96
  %v8209 = vpop.permute.xlu0 %8208
  %8210 = vrot.lane.b32.xlu0 %v6572, 96
  %v8211 = vpop.permute.xlu0 %8210
  %8212 = vrot.lane.b32.xlu0 %v6772, 96
  %v8213 = vpop.permute.xlu0 %8212
  %8214 = vrot.lane.b32.xlu0 %v6775, 96
  %v8215 = vpop.permute.xlu0 %8214
  %8216 = vrot.lane.b32.xlu0 %v6778, 96
  %v8217 = vpop.permute.xlu0 %8216
  %8218 = vrot.lane.b32.xlu0 %v6781, 96
  %v8219 = vpop.permute.xlu0 %8218
  %8220 = vrot.lane.b32.xlu0 %v6981, 96
  %v8221 = vpop.permute.xlu0 %8220
  %8222 = vrot.lane.b32.xlu0 %v6984, 96
  %v8223 = vpop.permute.xlu0 %8222
  %8224 = vrot.lane.b32.xlu0 %v6987, 96
  %v8225 = vpop.permute.xlu0 %8224
  %8226 = vrot.lane.b32.xlu0 %v6990, 96
  %v8227 = vpop.permute.xlu0 %8226
  %8276 = vrot.lane.b32.xlu0 %v5948, 112
  %v8277 = vpop.permute.xlu0 %8276
  %8278 = vrot.lane.b32.xlu0 %v5951, 112
  %v8279 = vpop.permute.xlu0 %8278
  %8280 = vrot.lane.b32.xlu0 %v5954, 112
  %v8281 = vpop.permute.xlu0 %8280
  %8282 = vrot.lane.b32.xlu0 %v5957, 112
  %v8283 = vpop.permute.xlu0 %8282
  %8284 = vrot.lane.b32.xlu0 %v6157, 112
  %v8285 = vpop.permute.xlu0 %8284
  %8286 = vrot.lane.b32.xlu0 %v6160, 112
  %v8287 = vpop.permute.xlu0 %8286
  %8288 = vrot.lane.b32.xlu0 %v6163, 112
  %v8289 = vpop.permute.xlu0 %8288
  %8290 = vrot.lane.b32.xlu0 %v6166, 112
  %v8291 = vpop.permute.xlu0 %8290
  %8292 = vrot.lane.b32.xlu0 %v6366, 112
  %v8293 = vpop.permute.xlu0 %8292
  %8294 = vrot.lane.b32.xlu0 %v6369, 112
  %v8295 = vpop.permute.xlu0 %8294
  %8296 = vrot.lane.b32.xlu0 %v6372, 112
  %v8297 = vpop.permute.xlu0 %8296
  %8298 = vrot.lane.b32.xlu0 %v6375, 112
  %v8299 = vpop.permute.xlu0 %8298
  %8300 = vrot.lane.b32.xlu0 %v6575, 112
  %v8301 = vpop.permute.xlu0 %8300
  %8302 = vrot.lane.b32.xlu0 %v6578, 112
  %v8303 = vpop.permute.xlu0 %8302
  %8304 = vrot.lane.b32.xlu0 %v6581, 112
  %v8305 = vpop.permute.xlu0 %8304
  %8306 = vrot.lane.b32.xlu0 %v6584, 112
  %v8307 = vpop.permute.xlu0 %8306
  %8308 = vrot.lane.b32.xlu0 %v6784, 112
  %v8309 = vpop.permute.xlu0 %8308
  %8310 = vrot.lane.b32.xlu0 %v6787, 112
  %v8311 = vpop.permute.xlu0 %8310
  %8312 = vrot.lane.b32.xlu0 %v6790, 112
  %v8313 = vpop.permute.xlu0 %8312
  %8314 = vrot.lane.b32.xlu0 %v6793, 112
  %v8315 = vpop.permute.xlu0 %8314
  %8316 = vrot.lane.b32.xlu0 %v6993, 112
  %v8317 = vpop.permute.xlu0 %8316
  %8318 = vrot.lane.b32.xlu0 %v6996, 112
  %v8319 = vpop.permute.xlu0 %8318
  %8320 = vrot.lane.b32.xlu0 %v6999, 112
  %v8321 = vpop.permute.xlu0 %8320
  %8322 = vrot.lane.b32.xlu0 %v7002, 112
  %v8323 = vpop.permute.xlu0 %8322
  %v8348 = vsel %vm5186, %v5768, %v7029
  %v8349 = vsel %vm5186, %v5771, %v7031
  %v8350 = vsel %vm5186, %v5774, %v7033
  %v8351 = vsel %vm5186, %v5777, %v7035
  %v8352 = vsel %vm5186, %v5977, %v7037
  %v8353 = vsel %vm5186, %v5980, %v7039
  %v8354 = vsel %vm5186, %v5983, %v7041
  %v8355 = vsel %vm5186, %v5986, %v7043
  %v8356 = vsel %vm5186, %v6186, %v7045
  %v8357 = vsel %vm5186, %v6189, %v7047
  %v8358 = vsel %vm5186, %v6192, %v7049
  %v8359 = vsel %vm5186, %v6195, %v7051
  %v8360 = vsel %vm5186, %v6395, %v7053
  %v8361 = vsel %vm5186, %v6398, %v7055
  %v8362 = vsel %vm5186, %v6401, %v7057
  %v8363 = vsel %vm5186, %v6404, %v7059
  %v8364 = vsel %vm5186, %v6604, %v7061
  %v8365 = vsel %vm5186, %v6607, %v7063
  %v8366 = vsel %vm5186, %v6610, %v7065
  %v8367 = vsel %vm5186, %v6613, %v7067
  %v8368 = vsel %vm5186, %v6813, %v7069
  %v8369 = vsel %vm5186, %v6816, %v7071
  %v8370 = vsel %vm5186, %v6819, %v7073
  %v8371 = vsel %vm5186, %v6822, %v7075
  %vm8372 = vcmask 261120
  %v8373 = vsel %vm8372, %v8348, %v7125
  %v8374 = vsel %vm8372, %v8349, %v7127
  %v8375 = vsel %vm8372, %v8350, %v7129
  %v8376 = vsel %vm8372, %v8351, %v7131
  %v8377 = vsel %vm8372, %v8352, %v7133
  %v8378 = vsel %vm8372, %v8353, %v7135
  %v8379 = vsel %vm8372, %v8354, %v7137
  %v8380 = vsel %vm8372, %v8355, %v7139
  %v8381 = vsel %vm8372, %v8356, %v7141
  %v8382 = vsel %vm8372, %v8357, %v7143
  %v8383 = vsel %vm8372, %v8358, %v7145
  %v8384 = vsel %vm8372, %v8359, %v7147
  %v8385 = vsel %vm8372, %v8360, %v7149
  %v8386 = vsel %vm8372, %v8361, %v7151
  %v8387 = vsel %vm8372, %v8362, %v7153
  %v8388 = vsel %vm8372, %v8363, %v7155
  %v8389 = vsel %vm8372, %v8364, %v7157
  %v8390 = vsel %vm8372, %v8365, %v7159
  %v8391 = vsel %vm8372, %v8366, %v7161
  %v8392 = vsel %vm8372, %v8367, %v7163
  %v8393 = vsel %vm8372, %v8368, %v7165
  %v8394 = vsel %vm8372, %v8369, %v7167
  %v8395 = vsel %vm8372, %v8370, %v7169
  %v8396 = vsel %vm8372, %v8371, %v7171
  %vm8397 = vcmask 392192
  %v8398 = vsel %vm8397, %v8373, %v7221
  %v8399 = vsel %vm8397, %v8374, %v7223
  %v8400 = vsel %vm8397, %v8375, %v7225
  %v8401 = vsel %vm8397, %v8376, %v7227
  %v8402 = vsel %vm8397, %v8377, %v7229
  %v8403 = vsel %vm8397, %v8378, %v7231
  %v8404 = vsel %vm8397, %v8379, %v7233
  %v8405 = vsel %vm8397, %v8380, %v7235
  %v8406 = vsel %vm8397, %v8381, %v7237
  %v8407 = vsel %vm8397, %v8382, %v7239
  %v8408 = vsel %vm8397, %v8383, %v7241
  %v8409 = vsel %vm8397, %v8384, %v7243
  %v8410 = vsel %vm8397, %v8385, %v7245
  %v8411 = vsel %vm8397, %v8386, %v7247
  %v8412 = vsel %vm8397, %v8387, %v7249
  %v8413 = vsel %vm8397, %v8388, %v7251
  %v8414 = vsel %vm8397, %v8389, %v7253
  %v8415 = vsel %vm8397, %v8390, %v7255
  %v8416 = vsel %vm8397, %v8391, %v7257
  %v8417 = vsel %vm8397, %v8392, %v7259
  %v8418 = vsel %vm8397, %v8393, %v7261
  %v8419 = vsel %vm8397, %v8394, %v7263
  %v8420 = vsel %vm8397, %v8395, %v7265
  %v8421 = vsel %vm8397, %v8396, %v7267
  %v8422 = vsel %vm4301, %v8398, %v7317
  %v8423 = vsel %vm4301, %v8399, %v7319
  %v8424 = vsel %vm4301, %v8400, %v7321
  %v8425 = vsel %vm4301, %v8401, %v7323
  %v8426 = vsel %vm4301, %v8402, %v7325
  %v8427 = vsel %vm4301, %v8403, %v7327
  %v8428 = vsel %vm4301, %v8404, %v7329
  %v8429 = vsel %vm4301, %v8405, %v7331
  %v8430 = vsel %vm4301, %v8406, %v7333
  %v8431 = vsel %vm4301, %v8407, %v7335
  %v8432 = vsel %vm4301, %v8408, %v7337
  %v8433 = vsel %vm4301, %v8409, %v7339
  %v8434 = vsel %vm4301, %v8410, %v7341
  %v8435 = vsel %vm4301, %v8411, %v7343
  %v8436 = vsel %vm4301, %v8412, %v7345
  %v8437 = vsel %vm4301, %v8413, %v7347
  %v8438 = vsel %vm4301, %v8414, %v7349
  %v8439 = vsel %vm4301, %v8415, %v7351
  %v8440 = vsel %vm4301, %v8416, %v7353
  %v8441 = vsel %vm4301, %v8417, %v7355
  %v8442 = vsel %vm4301, %v8418, %v7357
  %v8443 = vsel %vm4301, %v8419, %v7359
  %v8444 = vsel %vm4301, %v8420, %v7361
  %v8445 = vsel %vm4301, %v8421, %v7363
  %vm8446 = vcmask 654336
  %v8447 = vsel %vm8446, %v8422, %v7413
  %v8448 = vsel %vm8446, %v8423, %v7415
  %v8449 = vsel %vm8446, %v8424, %v7417
  %v8450 = vsel %vm8446, %v8425, %v7419
  %v8451 = vsel %vm8446, %v8426, %v7421
  %v8452 = vsel %vm8446, %v8427, %v7423
  %v8453 = vsel %vm8446, %v8428, %v7425
  %v8454 = vsel %vm8446, %v8429, %v7427
  %v8455 = vsel %vm8446, %v8430, %v7429
  %v8456 = vsel %vm8446, %v8431, %v7431
  %v8457 = vsel %vm8446, %v8432, %v7433
  %v8458 = vsel %vm8446, %v8433, %v7435
  %v8459 = vsel %vm8446, %v8434, %v7437
  %v8460 = vsel %vm8446, %v8435, %v7439
  %v8461 = vsel %vm8446, %v8436, %v7441
  %v8462 = vsel %vm8446, %v8437, %v7443
  %v8463 = vsel %vm8446, %v8438, %v7445
  %v8464 = vsel %vm8446, %v8439, %v7447
  %v8465 = vsel %vm8446, %v8440, %v7449
  %v8466 = vsel %vm8446, %v8441, %v7451
  %v8467 = vsel %vm8446, %v8442, %v7453
  %v8468 = vsel %vm8446, %v8443, %v7455
  %v8469 = vsel %vm8446, %v8444, %v7457
  %v8470 = vsel %vm8446, %v8445, %v7459
  %vm8471 = vcmask 785408
  %v8472 = vsel %vm8471, %v8447, %v7509
  %v8473 = vsel %vm8471, %v8448, %v7511
  %v8474 = vsel %vm8471, %v8449, %v7513
  %v8475 = vsel %vm8471, %v8450, %v7515
  %v8476 = vsel %vm8471, %v8451, %v7517
  %v8477 = vsel %vm8471, %v8452, %v7519
  %v8478 = vsel %vm8471, %v8453, %v7521
  %v8479 = vsel %vm8471, %v8454, %v7523
  %v8480 = vsel %vm8471, %v8455, %v7525
  %v8481 = vsel %vm8471, %v8456, %v7527
  %v8482 = vsel %vm8471, %v8457, %v7529
  %v8483 = vsel %vm8471, %v8458, %v7531
  %v8484 = vsel %vm8471, %v8459, %v7533
  %v8485 = vsel %vm8471, %v8460, %v7535
  %v8486 = vsel %vm8471, %v8461, %v7537
  %v8487 = vsel %vm8471, %v8462, %v7539
  %v8488 = vsel %vm8471, %v8463, %v7541
  %v8489 = vsel %vm8471, %v8464, %v7543
  %v8490 = vsel %vm8471, %v8465, %v7545
  %v8491 = vsel %vm8471, %v8466, %v7547
  %v8492 = vsel %vm8471, %v8467, %v7549
  %v8493 = vsel %vm8471, %v8468, %v7551
  %v8494 = vsel %vm8471, %v8469, %v7553
  %v8495 = vsel %vm8471, %v8470, %v7555
  %vm8496 = vcmask 916480
  %v8497 = vsel %vm8496, %v8472, %v7605
  %v8498 = vsel %vm8496, %v8473, %v7607
  %v8499 = vsel %vm8496, %v8474, %v7609
  %v8500 = vsel %vm8496, %v8475, %v7611
  %v8501 = vsel %vm8496, %v8476, %v7613
  %v8502 = vsel %vm8496, %v8477, %v7615
  %v8503 = vsel %vm8496, %v8478, %v7617
  %v8504 = vsel %vm8496, %v8479, %v7619
  %v8505 = vsel %vm8496, %v8480, %v7621
  %v8506 = vsel %vm8496, %v8481, %v7623
  %v8507 = vsel %vm8496, %v8482, %v7625
  %v8508 = vsel %vm8496, %v8483, %v7627
  %v8509 = vsel %vm8496, %v8484, %v7629
  %v8510 = vsel %vm8496, %v8485, %v7631
  %v8511 = vsel %vm8496, %v8486, %v7633
  %v8512 = vsel %vm8496, %v8487, %v7635
  %v8513 = vsel %vm8496, %v8488, %v7637
  %v8514 = vsel %vm8496, %v8489, %v7639
  %v8515 = vsel %vm8496, %v8490, %v7641
  %v8516 = vsel %vm8496, %v8491, %v7643
  %v8517 = vsel %vm8496, %v8492, %v7645
  %v8518 = vsel %vm8496, %v8493, %v7647
  %v8519 = vsel %vm8496, %v8494, %v7649
  %v8520 = vsel %vm8496, %v8495, %v7651
  %v8521 = vsel %vm5186, %v5864, %v7701
  %v8522 = vsel %vm5186, %v5867, %v7703
  %v8523 = vsel %vm5186, %v5870, %v7705
  %v8524 = vsel %vm5186, %v5873, %v7707
  %v8525 = vsel %vm5186, %v6073, %v7709
  %v8526 = vsel %vm5186, %v6076, %v7711
  %v8527 = vsel %vm5186, %v6079, %v7713
  %v8528 = vsel %vm5186, %v6082, %v7715
  %v8529 = vsel %vm5186, %v6282, %v7717
  %v8530 = vsel %vm5186, %v6285, %v7719
  %v8531 = vsel %vm5186, %v6288, %v7721
  %v8532 = vsel %vm5186, %v6291, %v7723
  %v8533 = vsel %vm5186, %v6491, %v7725
  %v8534 = vsel %vm5186, %v6494, %v7727
  %v8535 = vsel %vm5186, %v6497, %v7729
  %v8536 = vsel %vm5186, %v6500, %v7731
  %v8537 = vsel %vm5186, %v6700, %v7733
  %v8538 = vsel %vm5186, %v6703, %v7735
  %v8539 = vsel %vm5186, %v6706, %v7737
  %v8540 = vsel %vm5186, %v6709, %v7739
  %v8541 = vsel %vm5186, %v6909, %v7741
  %v8542 = vsel %vm5186, %v6912, %v7743
  %v8543 = vsel %vm5186, %v6915, %v7745
  %v8544 = vsel %vm5186, %v6918, %v7747
  %v8545 = vsel %vm8372, %v8521, %v7797
  %v8546 = vsel %vm8372, %v8522, %v7799
  %v8547 = vsel %vm8372, %v8523, %v7801
  %v8548 = vsel %vm8372, %v8524, %v7803
  %v8549 = vsel %vm8372, %v8525, %v7805
  %v8550 = vsel %vm8372, %v8526, %v7807
  %v8551 = vsel %vm8372, %v8527, %v7809
  %v8552 = vsel %vm8372, %v8528, %v7811
  %v8553 = vsel %vm8372, %v8529, %v7813
  %v8554 = vsel %vm8372, %v8530, %v7815
  %v8555 = vsel %vm8372, %v8531, %v7817
  %v8556 = vsel %vm8372, %v8532, %v7819
  %v8557 = vsel %vm8372, %v8533, %v7821
  %v8558 = vsel %vm8372, %v8534, %v7823
  %v8559 = vsel %vm8372, %v8535, %v7825
  %v8560 = vsel %vm8372, %v8536, %v7827
  %v8561 = vsel %vm8372, %v8537, %v7829
  %v8562 = vsel %vm8372, %v8538, %v7831
  %v8563 = vsel %vm8372, %v8539, %v7833
  %v8564 = vsel %vm8372, %v8540, %v7835
  %v8565 = vsel %vm8372, %v8541, %v7837
  %v8566 = vsel %vm8372, %v8542, %v7839
  %v8567 = vsel %vm8372, %v8543, %v7841
  %v8568 = vsel %vm8372, %v8544, %v7843
  %v8569 = vsel %vm8397, %v8545, %v7893
  %v8570 = vsel %vm8397, %v8546, %v7895
  %v8571 = vsel %vm8397, %v8547, %v7897
  %v8572 = vsel %vm8397, %v8548, %v7899
  %v8573 = vsel %vm8397, %v8549, %v7901
  %v8574 = vsel %vm8397, %v8550, %v7903
  %v8575 = vsel %vm8397, %v8551, %v7905
  %v8576 = vsel %vm8397, %v8552, %v7907
  %v8577 = vsel %vm8397, %v8553, %v7909
  %v8578 = vsel %vm8397, %v8554, %v7911
  %v8579 = vsel %vm8397, %v8555, %v7913
  %v8580 = vsel %vm8397, %v8556, %v7915
  %v8581 = vsel %vm8397, %v8557, %v7917
  %v8582 = vsel %vm8397, %v8558, %v7919
  %v8583 = vsel %vm8397, %v8559, %v7921
  %v8584 = vsel %vm8397, %v8560, %v7923
  %v8585 = vsel %vm8397, %v8561, %v7925
  %v8586 = vsel %vm8397, %v8562, %v7927
  %v8587 = vsel %vm8397, %v8563, %v7929
  %v8588 = vsel %vm8397, %v8564, %v7931
  %v8589 = vsel %vm8397, %v8565, %v7933
  %v8590 = vsel %vm8397, %v8566, %v7935
  %v8591 = vsel %vm8397, %v8567, %v7937
  %v8592 = vsel %vm8397, %v8568, %v7939
  %v8593 = vsel %vm4301, %v8569, %v7989
  %v8594 = vsel %vm4301, %v8570, %v7991
  %v8595 = vsel %vm4301, %v8571, %v7993
  %v8596 = vsel %vm4301, %v8572, %v7995
  %v8597 = vsel %vm4301, %v8573, %v7997
  %v8598 = vsel %vm4301, %v8574, %v7999
  %v8599 = vsel %vm4301, %v8575, %v8001
  %v8600 = vsel %vm4301, %v8576, %v8003
  %v8601 = vsel %vm4301, %v8577, %v8005
  %v8602 = vsel %vm4301, %v8578, %v8007
  %v8603 = vsel %vm4301, %v8579, %v8009
  %v8604 = vsel %vm4301, %v8580, %v8011
  %v8605 = vsel %vm4301, %v8581, %v8013
  %v8606 = vsel %vm4301, %v8582, %v8015
  %v8607 = vsel %vm4301, %v8583, %v8017
  %v8608 = vsel %vm4301, %v8584, %v8019
  %v8609 = vsel %vm4301, %v8585, %v8021
  %v8610 = vsel %vm4301, %v8586, %v8023
  %v8611 = vsel %vm4301, %v8587, %v8025
  %v8612 = vsel %vm4301, %v8588, %v8027
  %v8613 = vsel %vm4301, %v8589, %v8029
  %v8614 = vsel %vm4301, %v8590, %v8031
  %v8615 = vsel %vm4301, %v8591, %v8033
  %v8616 = vsel %vm4301, %v8592, %v8035
  %v8617 = vsel %vm8446, %v8593, %v8085
  %v8618 = vsel %vm8446, %v8594, %v8087
  %v8619 = vsel %vm8446, %v8595, %v8089
  %v8620 = vsel %vm8446, %v8596, %v8091
  %v8621 = vsel %vm8446, %v8597, %v8093
  %v8622 = vsel %vm8446, %v8598, %v8095
  %v8623 = vsel %vm8446, %v8599, %v8097
  %v8624 = vsel %vm8446, %v8600, %v8099
  %v8625 = vsel %vm8446, %v8601, %v8101
  %v8626 = vsel %vm8446, %v8602, %v8103
  %v8627 = vsel %vm8446, %v8603, %v8105
  %v8628 = vsel %vm8446, %v8604, %v8107
  %v8629 = vsel %vm8446, %v8605, %v8109
  %v8630 = vsel %vm8446, %v8606, %v8111
  %v8631 = vsel %vm8446, %v8607, %v8113
  %v8632 = vsel %vm8446, %v8608, %v8115
  %v8633 = vsel %vm8446, %v8609, %v8117
  %v8634 = vsel %vm8446, %v8610, %v8119
  %v8635 = vsel %vm8446, %v8611, %v8121
  %v8636 = vsel %vm8446, %v8612, %v8123
  %v8637 = vsel %vm8446, %v8613, %v8125
  %v8638 = vsel %vm8446, %v8614, %v8127
  %v8639 = vsel %vm8446, %v8615, %v8129
  %v8640 = vsel %vm8446, %v8616, %v8131
  %v8641 = vsel %vm8471, %v8617, %v8181
  %v8642 = vsel %vm8471, %v8618, %v8183
  %v8643 = vsel %vm8471, %v8619, %v8185
  %v8644 = vsel %vm8471, %v8620, %v8187
  %v8645 = vsel %vm8471, %v8621, %v8189
  %v8646 = vsel %vm8471, %v8622, %v8191
  %v8647 = vsel %vm8471, %v8623, %v8193
  %v8648 = vsel %vm8471, %v8624, %v8195
  %v8649 = vsel %vm8471, %v8625, %v8197
  %v8650 = vsel %vm8471, %v8626, %v8199
  %v8651 = vsel %vm8471, %v8627, %v8201
  %v8652 = vsel %vm8471, %v8628, %v8203
  %v8653 = vsel %vm8471, %v8629, %v8205
  %v8654 = vsel %vm8471, %v8630, %v8207
  %v8655 = vsel %vm8471, %v8631, %v8209
  %v8656 = vsel %vm8471, %v8632, %v8211
  %v8657 = vsel %vm8471, %v8633, %v8213
  %v8658 = vsel %vm8471, %v8634, %v8215
  %v8659 = vsel %vm8471, %v8635, %v8217
  %v8660 = vsel %vm8471, %v8636, %v8219
  %v8661 = vsel %vm8471, %v8637, %v8221
  %v8662 = vsel %vm8471, %v8638, %v8223
  %v8663 = vsel %vm8471, %v8639, %v8225
  %v8664 = vsel %vm8471, %v8640, %v8227
  %v8665 = vsel %vm8496, %v8641, %v8277
  %v8666 = vsel %vm8496, %v8642, %v8279
  %v8667 = vsel %vm8496, %v8643, %v8281
  %v8668 = vsel %vm8496, %v8644, %v8283
  %v8669 = vsel %vm8496, %v8645, %v8285
  %v8670 = vsel %vm8496, %v8646, %v8287
  %v8671 = vsel %vm8496, %v8647, %v8289
  %v8672 = vsel %vm8496, %v8648, %v8291
  %v8673 = vsel %vm8496, %v8649, %v8293
  %v8674 = vsel %vm8496, %v8650, %v8295
  %v8675 = vsel %vm8496, %v8651, %v8297
  %v8676 = vsel %vm8496, %v8652, %v8299
  %v8677 = vsel %vm8496, %v8653, %v8301
  %v8678 = vsel %vm8496, %v8654, %v8303
  %v8679 = vsel %vm8496, %v8655, %v8305
  %v8680 = vsel %vm8496, %v8656, %v8307
  %v8681 = vsel %vm8496, %v8657, %v8309
  %v8682 = vsel %vm8496, %v8658, %v8311
  %v8683 = vsel %vm8496, %v8659, %v8313
  %v8684 = vsel %vm8496, %v8660, %v8315
  %v8685 = vsel %vm8496, %v8661, %v8317
  %v8686 = vsel %vm8496, %v8662, %v8319
  %v8687 = vsel %vm8496, %v8663, %v8321
  %v8688 = vsel %vm8496, %v8664, %v8323
  %v8689 = vld [vmem:[%s7] sm:$0xf]
  %v8690 = vld [vmem:[%s7 + $0x4] sm:$0xf]
  %v8691 = vld [vmem:[%s7 + $0x8] sm:$0xf]
  %v8692 = vld [vmem:[%s7 + $0xc] sm:$0xf]
  %v8693 = vld [vmem:[%s7 + $0x10] sm:$0xf]
  %v8694 = vld [vmem:[%s7 + $0x14] sm:$0xf]
  %v8695 = vld [vmem:[%s7 + $0x18] sm:$0xf]
  %v8696 = vld [vmem:[%s7 + $0x1c] sm:$0xf]
  %v8697 = vld [vmem:[%s7 + $0x20] sm:$0xf]
  %v8698 = vld [vmem:[%s7 + $0x24] sm:$0xf]
  %v8699 = vld [vmem:[%s7 + $0x28] sm:$0xf]
  %v8700 = vld [vmem:[%s7 + $0x2c] sm:$0xf]
  %v8701 = vld [vmem:[%s7 + $0x30] sm:$0xf]
  %v8702 = vld [vmem:[%s7 + $0x34] sm:$0xf]
  %v8703 = vld [vmem:[%s7 + $0x38] sm:$0xf]
  %v8704 = vld [vmem:[%s7 + $0x3c] sm:$0xf]
  %v8705 = vld [vmem:[%s7 + $0x40] sm:$0xf]
  %v8706 = vld [vmem:[%s7 + $0x44] sm:$0xf]
  %v8707 = vld [vmem:[%s7 + $0x48] sm:$0xf]
  %v8708 = vld [vmem:[%s7 + $0x4c] sm:$0xf]
  %v8709 = vld [vmem:[%s7 + $0x50] sm:$0xf]
  %v8710 = vld [vmem:[%s7 + $0x54] sm:$0xf]
  %v8711 = vld [vmem:[%s7 + $0x58] sm:$0xf]
  %v8712 = vld [vmem:[%s7 + $0x5c] sm:$0xf]
  %v8713 = vld [vmem:[%s7 + $0x60] sm:$0xf]
  %v8714 = vld [vmem:[%s7 + $0x64] sm:$0xf]
  %v8715 = vld [vmem:[%s7 + $0x68] sm:$0xf]
  %v8716 = vld [vmem:[%s7 + $0x6c] sm:$0xf]
  %v8717 = vld [vmem:[%s7 + $0x70] sm:$0xf]
  %v8718 = vld [vmem:[%s7 + $0x74] sm:$0xf]
  %v8719 = vld [vmem:[%s7 + $0x78] sm:$0xf]
  %v8720 = vld [vmem:[%s7 + $0x7c] sm:$0xf]
  %v8721 = vunpack.c.l.bf16 %v8689
  %v8722 = vunpack.c.l.bf16 %v8690
  %v8723 = vunpack.c.l.bf16 %v8691
  %v8724 = vunpack.c.l.bf16 %v8692
  %v8725 = vunpack.c.l.bf16 %v8693
  %v8726 = vunpack.c.l.bf16 %v8694
  %v8727 = vunpack.c.l.bf16 %v8695
  %v8728 = vunpack.c.l.bf16 %v8696
  %v8729 = vunpack.c.l.bf16 %v8697
  %v8730 = vunpack.c.l.bf16 %v8698
  %v8731 = vunpack.c.l.bf16 %v8699
  %v8732 = vunpack.c.l.bf16 %v8700
  %v8733 = vunpack.c.l.bf16 %v8701
  %v8734 = vunpack.c.l.bf16 %v8702
  %v8735 = vunpack.c.l.bf16 %v8703
  %v8736 = vunpack.c.l.bf16 %v8704
  %v8737 = vunpack.c.l.bf16 %v8705
  %v8738 = vunpack.c.l.bf16 %v8706
  %v8739 = vunpack.c.l.bf16 %v8707
  %v8740 = vunpack.c.l.bf16 %v8708
  %v8741 = vunpack.c.l.bf16 %v8709
  %v8742 = vunpack.c.l.bf16 %v8710
  %v8743 = vunpack.c.l.bf16 %v8711
  %v8744 = vunpack.c.l.bf16 %v8712
  %v8745 = vunpack.c.l.bf16 %v8713
  %v8746 = vunpack.c.l.bf16 %v8714
  %v8747 = vunpack.c.l.bf16 %v8715
  %v8748 = vunpack.c.l.bf16 %v8716
  %v8749 = vunpack.c.l.bf16 %v8717
  %v8750 = vunpack.c.l.bf16 %v8718
  %v8751 = vunpack.c.l.bf16 %v8719
  %v8752 = vunpack.c.l.bf16 %v8720
  %v8753 = vld [vmem:[%s9] sm:$0xff]
  %v8754 = vld [vmem:[%s9 + $0x8] sm:$0xff]
  %v8755 = vld [vmem:[%s9 + $0x10] sm:$0xff]
  %v8756 = vld [vmem:[%s9 + $0x18] sm:$0xff]
  %v8757 = vld [vmem:[%s9 + $0x20] sm:$0xff]
  %v8758 = vld [vmem:[%s9 + $0x28] sm:$0xff]
  %v8759 = vld [vmem:[%s9 + $0x30] sm:$0xff]
  %v8760 = vld [vmem:[%s9 + $0x38] sm:$0xff]
  %v8761 = vld [vmem:[%s9 + $0x40] sm:$0xff]
  %v8762 = vld [vmem:[%s9 + $0x48] sm:$0xff]
  %v8763 = vld [vmem:[%s9 + $0x50] sm:$0xff]
  %v8764 = vld [vmem:[%s9 + $0x58] sm:$0xff]
  %v8765 = vld [vmem:[%s9 + $0x60] sm:$0xff]
  %v8766 = vld [vmem:[%s9 + $0x68] sm:$0xff]
  %v8767 = vld [vmem:[%s9 + $0x70] sm:$0xff]
  %v8768 = vld [vmem:[%s9 + $0x78] sm:$0xff]
  %v8769 = vld [vmem:[%s9 + $0x80] sm:$0xff]
  %v8770 = vld [vmem:[%s9 + $0x88] sm:$0xff]
  %v8771 = vld [vmem:[%s9 + $0x90] sm:$0xff]
  %v8772 = vld [vmem:[%s9 + $0x98] sm:$0xff]
  %v8773 = vld [vmem:[%s9 + $0xa0] sm:$0xff]
  %v8774 = vld [vmem:[%s9 + $0xa8] sm:$0xff]
  %v8775 = vld [vmem:[%s9 + $0xb0] sm:$0xff]
  %v8776 = vld [vmem:[%s9 + $0xb8] sm:$0xff]
  %8778 = vset.pattern.permute.xlu0 0
  %8779 = vperm.xlu0 %8778, %v8753
  %v8780 = vpop.permute.xlu0 %8779
  %8783 = vset.pattern.permute.xlu0 0
  %8784 = vperm.xlu0 %8783, %v8754
  %v8785 = vpop.permute.xlu0 %8784
  %8788 = vset.pattern.permute.xlu0 0
  %8789 = vperm.xlu0 %8788, %v8755
  %v8790 = vpop.permute.xlu0 %8789
  %8793 = vset.pattern.permute.xlu0 0
  %8794 = vperm.xlu0 %8793, %v8756
  %v8795 = vpop.permute.xlu0 %8794
  %8798 = vset.pattern.permute.xlu0 0
  %8799 = vperm.xlu0 %8798, %v8757
  %v8800 = vpop.permute.xlu0 %8799
  %8803 = vset.pattern.permute.xlu0 0
  %8804 = vperm.xlu0 %8803, %v8758
  %v8805 = vpop.permute.xlu0 %8804
  %8808 = vset.pattern.permute.xlu0 0
  %8809 = vperm.xlu0 %8808, %v8759
  %v8810 = vpop.permute.xlu0 %8809
  %8813 = vset.pattern.permute.xlu0 0
  %8814 = vperm.xlu0 %8813, %v8760
  %v8815 = vpop.permute.xlu0 %8814
  %8818 = vset.pattern.permute.xlu0 0
  %8819 = vperm.xlu0 %8818, %v8761
  %v8820 = vpop.permute.xlu0 %8819
  %8823 = vset.pattern.permute.xlu0 0
  %8824 = vperm.xlu0 %8823, %v8762
  %v8825 = vpop.permute.xlu0 %8824
  %8828 = vset.pattern.permute.xlu0 0
  %8829 = vperm.xlu0 %8828, %v8763
  %v8830 = vpop.permute.xlu0 %8829
  %8833 = vset.pattern.permute.xlu0 0
  %8834 = vperm.xlu0 %8833, %v8764
  %v8835 = vpop.permute.xlu0 %8834
  %8838 = vset.pattern.permute.xlu0 0
  %8839 = vperm.xlu0 %8838, %v8765
  %v8840 = vpop.permute.xlu0 %8839
  %8843 = vset.pattern.permute.xlu0 0
  %8844 = vperm.xlu0 %8843, %v8766
  %v8845 = vpop.permute.xlu0 %8844
  %8848 = vset.pattern.permute.xlu0 0
  %8849 = vperm.xlu0 %8848, %v8767
  %v8850 = vpop.permute.xlu0 %8849
  %8853 = vset.pattern.permute.xlu0 0
  %8854 = vperm.xlu0 %8853, %v8768
  %v8855 = vpop.permute.xlu0 %8854
  %8858 = vset.pattern.permute.xlu0 0
  %8859 = vperm.xlu0 %8858, %v8769
  %v8860 = vpop.permute.xlu0 %8859
  %8863 = vset.pattern.permute.xlu0 0
  %8864 = vperm.xlu0 %8863, %v8770
  %v8865 = vpop.permute.xlu0 %8864
  %8868 = vset.pattern.permute.xlu0 0
  %8869 = vperm.xlu0 %8868, %v8771
  %v8870 = vpop.permute.xlu0 %8869
  %8873 = vset.pattern.permute.xlu0 0
  %8874 = vperm.xlu0 %8873, %v8772
  %v8875 = vpop.permute.xlu0 %8874
  %8878 = vset.pattern.permute.xlu0 0
  %8879 = vperm.xlu0 %8878, %v8773
  %v8880 = vpop.permute.xlu0 %8879
  %8883 = vset.pattern.permute.xlu0 0
  %8884 = vperm.xlu0 %8883, %v8774
  %v8885 = vpop.permute.xlu0 %8884
  %8888 = vset.pattern.permute.xlu0 0
  %8889 = vperm.xlu0 %8888, %v8775
  %v8890 = vpop.permute.xlu0 %8889
  %8893 = vset.pattern.permute.xlu0 0
  %8894 = vperm.xlu0 %8893, %v8776
  %v8895 = vpop.permute.xlu0 %8894
  %8897 = vmatpush.msra.mxu0 %v8736
  %8898 = vmatpush.msra.mxu0 %v8735
  %8899 = vmatpush.msra.mxu0 %v8734
  %8900 = vmatpush.msra.mxu0 %v8733
  %8901 = vmatpush.msra.mxu0 %v8732
  %8902 = vmatpush.msra.mxu0 %v8731
  %8903 = vmatpush.msra.mxu0 %v8730
  %8904 = vmatpush.msra.mxu0 %v8729
  %8905 = vmatpush.msra.mxu0 %v8728
  %8906 = vmatpush.msra.mxu0 %v8727
  %8907 = vmatpush.msra.mxu0 %v8726
  %8908 = vmatpush.msra.mxu0 %v8725
  %8909 = vmatpush.msra.mxu0 %v8724
  %8910 = vmatpush.msra.mxu0 %v8723
  %8911 = vmatpush.msra.mxu0 %v8722
  %8912 = vmatpush.msra.mxu0 %v8721
  %8913 = vmatmul.f32.gmra.mxu0 %v8497
  %v8914 = vpop.f32.mrf.mxu0
  %v8915 = vadd.f32 %v8780, %v8914
  %8916 = vmatmul.f32.gmra.mxu0 %v8498
  %v8917 = vpop.f32.mrf.mxu0
  %v8918 = vadd.f32 %v8785, %v8917
  %8919 = vmatmul.f32.gmra.mxu0 %v8499
  %v8920 = vpop.f32.mrf.mxu0
  %v8921 = vadd.f32 %v8790, %v8920
  %8922 = vmatmul.f32.gmra.mxu0 %v8500
  %v8923 = vpop.f32.mrf.mxu0
  %v8924 = vadd.f32 %v8795, %v8923
  %8925 = vmatmul.f32.gmra.mxu0 %v8501
  %v8926 = vpop.f32.mrf.mxu0
  %v8927 = vadd.f32 %v8800, %v8926
  %8928 = vmatmul.f32.gmra.mxu0 %v8502
  %v8929 = vpop.f32.mrf.mxu0
  %v8930 = vadd.f32 %v8805, %v8929
  %8931 = vmatmul.f32.gmra.mxu0 %v8503
  %v8932 = vpop.f32.mrf.mxu0
  %v8933 = vadd.f32 %v8810, %v8932
  %8934 = vmatmul.f32.gmra.mxu0 %v8504
  %v8935 = vpop.f32.mrf.mxu0
  %v8936 = vadd.f32 %v8815, %v8935
  %8937 = vmatmul.f32.gmra.mxu0 %v8505
  %v8938 = vpop.f32.mrf.mxu0
  %v8939 = vadd.f32 %v8820, %v8938
  %8940 = vmatmul.f32.gmra.mxu0 %v8506
  %v8941 = vpop.f32.mrf.mxu0
  %v8942 = vadd.f32 %v8825, %v8941
  %8943 = vmatmul.f32.gmra.mxu0 %v8507
  %v8944 = vpop.f32.mrf.mxu0
  %v8945 = vadd.f32 %v8830, %v8944
  %8946 = vmatmul.f32.gmra.mxu0 %v8508
  %v8947 = vpop.f32.mrf.mxu0
  %v8948 = vadd.f32 %v8835, %v8947
  %8949 = vmatmul.f32.gmra.mxu0 %v8509
  %v8950 = vpop.f32.mrf.mxu0
  %v8951 = vadd.f32 %v8840, %v8950
  %8952 = vmatmul.f32.gmra.mxu0 %v8510
  %v8953 = vpop.f32.mrf.mxu0
  %v8954 = vadd.f32 %v8845, %v8953
  %8955 = vmatmul.f32.gmra.mxu0 %v8511
  %v8956 = vpop.f32.mrf.mxu0
  %v8957 = vadd.f32 %v8850, %v8956
  %8958 = vmatmul.f32.gmra.mxu0 %v8512
  %v8959 = vpop.f32.mrf.mxu0
  %v8960 = vadd.f32 %v8855, %v8959
  %8961 = vmatmul.f32.gmra.mxu0 %v8513
  %v8962 = vpop.f32.mrf.mxu0
  %v8963 = vadd.f32 %v8860, %v8962
  %8964 = vmatmul.f32.gmra.mxu0 %v8514
  %v8965 = vpop.f32.mrf.mxu0
  %v8966 = vadd.f32 %v8865, %v8965
  %8967 = vmatmul.f32.gmra.mxu0 %v8515
  %v8968 = vpop.f32.mrf.mxu0
  %v8969 = vadd.f32 %v8870, %v8968
  %8970 = vmatmul.f32.gmra.mxu0 %v8516
  %v8971 = vpop.f32.mrf.mxu0
  %v8972 = vadd.f32 %v8875, %v8971
  %8973 = vmatmul.f32.gmra.mxu0 %v8517
  %v8974 = vpop.f32.mrf.mxu0
  %v8975 = vadd.f32 %v8880, %v8974
  %8976 = vmatmul.f32.gmra.mxu0 %v8518
  %v8977 = vpop.f32.mrf.mxu0
  %v8978 = vadd.f32 %v8885, %v8977
  %8979 = vmatmul.f32.gmra.mxu0 %v8519
  %v8980 = vpop.f32.mrf.mxu0
  %v8981 = vadd.f32 %v8890, %v8980
  %8982 = vmatmul.f32.gmra.mxu0 %v8520
  %v8983 = vpop.f32.mrf.mxu0
  %v8984 = vadd.f32 %v8895, %v8983
  %8985 = vdwg.mxu0
  %8986 = vmatpush.msra.mxu0 %v8752
  %8987 = vmatpush.msra.mxu0 %v8751
  %8988 = vmatpush.msra.mxu0 %v8750
  %8989 = vmatpush.msra.mxu0 %v8749
  %8990 = vmatpush.msra.mxu0 %v8748
  %8991 = vmatpush.msra.mxu0 %v8747
  %8992 = vmatpush.msra.mxu0 %v8746
  %8993 = vmatpush.msra.mxu0 %v8745
  %8994 = vmatpush.msra.mxu0 %v8744
  %8995 = vmatpush.msra.mxu0 %v8743
  %8996 = vmatpush.msra.mxu0 %v8742
  %8997 = vmatpush.msra.mxu0 %v8741
  %8998 = vmatpush.msra.mxu0 %v8740
  %8999 = vmatpush.msra.mxu0 %v8739
  %9000 = vmatpush.msra.mxu0 %v8738
  %9001 = vmatpush.msra.mxu0 %v8737
  %9002 = vmatmul.f32.gmra.mxu0 %v8665
  %v9003 = vpop.f32.mrf.mxu0
  %v9004 = vadd.f32 %v8915, %v9003
  %9005 = vmatmul.f32.gmra.mxu0 %v8666
  %v9006 = vpop.f32.mrf.mxu0
  %v9007 = vadd.f32 %v8918, %v9006
  %9008 = vmatmul.f32.gmra.mxu0 %v8667
  %v9009 = vpop.f32.mrf.mxu0
  %v9010 = vadd.f32 %v8921, %v9009
  %9011 = vmatmul.f32.gmra.mxu0 %v8668
  %v9012 = vpop.f32.mrf.mxu0
  %v9013 = vadd.f32 %v8924, %v9012
  %9014 = vmatmul.f32.gmra.mxu0 %v8669
  %v9015 = vpop.f32.mrf.mxu0
  %v9016 = vadd.f32 %v8927, %v9015
  %9017 = vmatmul.f32.gmra.mxu0 %v8670
  %v9018 = vpop.f32.mrf.mxu0
  %v9019 = vadd.f32 %v8930, %v9018
  %9020 = vmatmul.f32.gmra.mxu0 %v8671
  %v9021 = vpop.f32.mrf.mxu0
  %v9022 = vadd.f32 %v8933, %v9021
  %9023 = vmatmul.f32.gmra.mxu0 %v8672
  %v9024 = vpop.f32.mrf.mxu0
  %v9025 = vadd.f32 %v8936, %v9024
  %9026 = vmatmul.f32.gmra.mxu0 %v8673
  %v9027 = vpop.f32.mrf.mxu0
  %v9028 = vadd.f32 %v8939, %v9027
  %9029 = vmatmul.f32.gmra.mxu0 %v8674
  %v9030 = vpop.f32.mrf.mxu0
  %v9031 = vadd.f32 %v8942, %v9030
  %9032 = vmatmul.f32.gmra.mxu0 %v8675
  %v9033 = vpop.f32.mrf.mxu0
  %v9034 = vadd.f32 %v8945, %v9033
  %9035 = vmatmul.f32.gmra.mxu0 %v8676
  %v9036 = vpop.f32.mrf.mxu0
  %v9037 = vadd.f32 %v8948, %v9036
  %9038 = vmatmul.f32.gmra.mxu0 %v8677
  %v9039 = vpop.f32.mrf.mxu0
  %v9040 = vadd.f32 %v8951, %v9039
  %9041 = vmatmul.f32.gmra.mxu0 %v8678
  %v9042 = vpop.f32.mrf.mxu0
  %v9043 = vadd.f32 %v8954, %v9042
  %9044 = vmatmul.f32.gmra.mxu0 %v8679
  %v9045 = vpop.f32.mrf.mxu0
  %v9046 = vadd.f32 %v8957, %v9045
  %9047 = vmatmul.f32.gmra.mxu0 %v8680
  %v9048 = vpop.f32.mrf.mxu0
  %v9049 = vadd.f32 %v8960, %v9048
  %9050 = vmatmul.f32.gmra.mxu0 %v8681
  %v9051 = vpop.f32.mrf.mxu0
  %v9052 = vadd.f32 %v8963, %v9051
  %9053 = vmatmul.f32.gmra.mxu0 %v8682
  %v9054 = vpop.f32.mrf.mxu0
  %v9055 = vadd.f32 %v8966, %v9054
  %9056 = vmatmul.f32.gmra.mxu0 %v8683
  %v9057 = vpop.f32.mrf.mxu0
  %v9058 = vadd.f32 %v8969, %v9057
  %9059 = vmatmul.f32.gmra.mxu0 %v8684
  %v9060 = vpop.f32.mrf.mxu0
  %v9061 = vadd.f32 %v8972, %v9060
  %9062 = vmatmul.f32.gmra.mxu0 %v8685
  %v9063 = vpop.f32.mrf.mxu0
  %v9064 = vadd.f32 %v8975, %v9063
  %9065 = vmatmul.f32.gmra.mxu0 %v8686
  %v9066 = vpop.f32.mrf.mxu0
  %v9067 = vadd.f32 %v8978, %v9066
  %9068 = vmatmul.f32.gmra.mxu0 %v8687
  %v9069 = vpop.f32.mrf.mxu0
  %v9070 = vadd.f32 %v8981, %v9069
  %9071 = vmatmul.f32.gmra.mxu0 %v8688
  %v9072 = vpop.f32.mrf.mxu0
  %v9073 = vadd.f32 %v8984, %v9072
  %9074 = vdwg.mxu0
  %vm9075 = vcmp.ge.f32.partialorder %v9004, 0.0
  %vm9076 = vcmp.ge.f32.partialorder %v9007, 0.0
  %vm9077 = vcmp.ge.f32.partialorder %v9010, 0.0
  %vm9078 = vcmp.ge.f32.partialorder %v9013, 0.0
  %vm9079 = vcmp.ge.f32.partialorder %v9016, 0.0
  %vm9080 = vcmp.ge.f32.partialorder %v9019, 0.0
  %vm9081 = vcmp.ge.f32.partialorder %v9022, 0.0
  %vm9082 = vcmp.ge.f32.partialorder %v9025, 0.0
  %vm9083 = vcmp.ge.f32.partialorder %v9028, 0.0
  %vm9084 = vcmp.ge.f32.partialorder %v9031, 0.0
  %vm9085 = vcmp.ge.f32.partialorder %v9034, 0.0
  %vm9086 = vcmp.ge.f32.partialorder %v9037, 0.0
  %vm9087 = vcmp.ge.f32.partialorder %v9040, 0.0
  %vm9088 = vcmp.ge.f32.partialorder %v9043, 0.0
  %vm9089 = vcmp.ge.f32.partialorder %v9046, 0.0
  %vm9090 = vcmp.ge.f32.partialorder %v9049, 0.0
  %vm9091 = vcmp.ge.f32.partialorder %v9052, 0.0
  %vm9092 = vcmp.ge.f32.partialorder %v9055, 0.0
  %vm9093 = vcmp.ge.f32.partialorder %v9058, 0.0
  %vm9094 = vcmp.ge.f32.partialorder %v9061, 0.0
  %vm9095 = vcmp.ge.f32.partialorder %v9064, 0.0
  %vm9096 = vcmp.ge.f32.partialorder %v9067, 0.0
  %vm9097 = vcmp.ge.f32.partialorder %v9070, 0.0
  %vm9098 = vcmp.ge.f32.partialorder %v9073, 0.0
  %v9099 = vmul.f32 %v9004, 0.2
  %v9100 = vmul.f32 %v9007, 0.2
  %v9101 = vmul.f32 %v9010, 0.2
  %v9102 = vmul.f32 %v9013, 0.2
  %v9103 = vmul.f32 %v9016, 0.2
  %v9104 = vmul.f32 %v9019, 0.2
  %v9105 = vmul.f32 %v9022, 0.2
  %v9106 = vmul.f32 %v9025, 0.2
  %v9107 = vmul.f32 %v9028, 0.2
  %v9108 = vmul.f32 %v9031, 0.2
  %v9109 = vmul.f32 %v9034, 0.2
  %v9110 = vmul.f32 %v9037, 0.2
  %v9111 = vmul.f32 %v9040, 0.2
  %v9112 = vmul.f32 %v9043, 0.2
  %v9113 = vmul.f32 %v9046, 0.2
  %v9114 = vmul.f32 %v9049, 0.2
  %v9115 = vmul.f32 %v9052, 0.2
  %v9116 = vmul.f32 %v9055, 0.2
  %v9117 = vmul.f32 %v9058, 0.2
  %v9118 = vmul.f32 %v9061, 0.2
  %v9119 = vmul.f32 %v9064, 0.2
  %v9120 = vmul.f32 %v9067, 0.2
  %v9121 = vmul.f32 %v9070, 0.2
  %v9122 = vmul.f32 %v9073, 0.2
  %v9123 = vsel %vm9075, %v9004, %v9099
  %v9124 = vsel %vm9076, %v9007, %v9100
  %v9125 = vsel %vm9077, %v9010, %v9101
  %v9126 = vsel %vm9078, %v9013, %v9102
  %v9127 = vsel %vm9079, %v9016, %v9103
  %v9128 = vsel %vm9080, %v9019, %v9104
  %v9129 = vsel %vm9081, %v9022, %v9105
  %v9130 = vsel %vm9082, %v9025, %v9106
  %v9131 = vsel %vm9083, %v9028, %v9107
  %v9132 = vsel %vm9084, %v9031, %v9108
  %v9133 = vsel %vm9085, %v9034, %v9109
  %v9134 = vsel %vm9086, %v9037, %v9110
  %v9135 = vsel %vm9087, %v9040, %v9111
  %v9136 = vsel %vm9088, %v9043, %v9112
  %v9137 = vsel %vm9089, %v9046, %v9113
  %v9138 = vsel %vm9090, %v9049, %v9114
  %v9139 = vsel %vm9091, %v9052, %v9115
  %v9140 = vsel %vm9092, %v9055, %v9116
  %v9141 = vsel %vm9093, %v9058, %v9117
  %v9142 = vsel %vm9094, %v9061, %v9118
  %v9143 = vsel %vm9095, %v9064, %v9119
  %v9144 = vsel %vm9096, %v9067, %v9120
  %v9145 = vsel %vm9097, %v9070, %v9121
  %v9146 = vsel %vm9098, %v9073, %v9122
  %vm9147 = vcmask 31744
  %v9148 = vsel %vm9147, %v9123, 0.0
  %9149 = vadd.xlane.f32.xlu0 %v9148
  %v9150 = vpop.xlane.xlu0 %9149
  %v9151 = vsel %vm9147, %v9124, 0.0
  %9152 = vadd.xlane.f32.xlu0 %v9151
  %v9153 = vpop.xlane.xlu0 %9152
  %v9154 = vsel %vm9147, %v9125, 0.0
  %9155 = vadd.xlane.f32.xlu0 %v9154
  %v9156 = vpop.xlane.xlu0 %9155
  %v9157 = vsel %vm9147, %v9126, 0.0
  %9158 = vadd.xlane.f32.xlu0 %v9157
  %v9159 = vpop.xlane.xlu0 %9158
  %v9160 = vsel %vm9147, %v9127, 0.0
  %9161 = vadd.xlane.f32.xlu0 %v9160
  %v9162 = vpop.xlane.xlu0 %9161
  %v9163 = vsel %vm9147, %v9128, 0.0
  %9164 = vadd.xlane.f32.xlu0 %v9163
  %v9165 = vpop.xlane.xlu0 %9164
  %v9166 = vsel %vm9147, %v9129, 0.0
  %9167 = vadd.xlane.f32.xlu0 %v9166
  %v9168 = vpop.xlane.xlu0 %9167
  %v9169 = vsel %vm9147, %v9130, 0.0
  %9170 = vadd.xlane.f32.xlu0 %v9169
  %v9171 = vpop.xlane.xlu0 %9170
  %v9172 = vsel %vm9147, %v9131, 0.0
  %9173 = vadd.xlane.f32.xlu0 %v9172
  %v9174 = vpop.xlane.xlu0 %9173
  %v9175 = vsel %vm9147, %v9132, 0.0
  %9176 = vadd.xlane.f32.xlu0 %v9175
  %v9177 = vpop.xlane.xlu0 %9176
  %v9178 = vsel %vm9147, %v9133, 0.0
  %9179 = vadd.xlane.f32.xlu0 %v9178
  %v9180 = vpop.xlane.xlu0 %9179
  %v9181 = vsel %vm9147, %v9134, 0.0
  %9182 = vadd.xlane.f32.xlu0 %v9181
  %v9183 = vpop.xlane.xlu0 %9182
  %v9184 = vsel %vm9147, %v9135, 0.0
  %9185 = vadd.xlane.f32.xlu0 %v9184
  %v9186 = vpop.xlane.xlu0 %9185
  %v9187 = vsel %vm9147, %v9136, 0.0
  %9188 = vadd.xlane.f32.xlu0 %v9187
  %v9189 = vpop.xlane.xlu0 %9188
  %v9190 = vsel %vm9147, %v9137, 0.0
  %9191 = vadd.xlane.f32.xlu0 %v9190
  %v9192 = vpop.xlane.xlu0 %9191
  %v9193 = vsel %vm9147, %v9138, 0.0
  %9194 = vadd.xlane.f32.xlu0 %v9193
  %v9195 = vpop.xlane.xlu0 %9194
  %v9196 = vsel %vm9147, %v9139, 0.0
  %9197 = vadd.xlane.f32.xlu0 %v9196
  %v9198 = vpop.xlane.xlu0 %9197
  %v9199 = vsel %vm9147, %v9140, 0.0
  %9200 = vadd.xlane.f32.xlu0 %v9199
  %v9201 = vpop.xlane.xlu0 %9200
  %v9202 = vsel %vm9147, %v9141, 0.0
  %9203 = vadd.xlane.f32.xlu0 %v9202
  %v9204 = vpop.xlane.xlu0 %9203
  %v9205 = vsel %vm9147, %v9142, 0.0
  %9206 = vadd.xlane.f32.xlu0 %v9205
  %v9207 = vpop.xlane.xlu0 %9206
  %v9208 = vsel %vm9147, %v9143, 0.0
  %9209 = vadd.xlane.f32.xlu0 %v9208
  %v9210 = vpop.xlane.xlu0 %9209
  %v9211 = vsel %vm9147, %v9144, 0.0
  %9212 = vadd.xlane.f32.xlu0 %v9211
  %v9213 = vpop.xlane.xlu0 %9212
  %v9214 = vsel %vm9147, %v9145, 0.0
  %9215 = vadd.xlane.f32.xlu0 %v9214
  %v9216 = vpop.xlane.xlu0 %9215
  %v9217 = vsel %vm9147, %v9146, 0.0
  %9218 = vadd.xlane.f32.xlu0 %v9217
  %v9219 = vpop.xlane.xlu0 %9218
  %v9220 = vrcp.pop 4.0
  %v9221 = vmul.f32 4.0, %v9220
  %v9222 = vsub.f32 1.0, %v9221
  %v9223 = vmul.f32 %v9220, %v9222
  %v9224 = vadd.f32 %v9220, %v9223
  %vm9225 = vweird.f32 %v9220
  %v9226 = vsel %vm9225, %v9220, %v9224
  %v9227 = vmul.f32 %v9150, %v9226
  %v9228 = vmul.f32 %v9153, %v9226
  %v9229 = vmul.f32 %v9156, %v9226
  %v9230 = vmul.f32 %v9159, %v9226
  %v9231 = vmul.f32 %v9162, %v9226
  %v9232 = vmul.f32 %v9165, %v9226
  %v9233 = vmul.f32 %v9168, %v9226
  %v9234 = vmul.f32 %v9171, %v9226
  %v9235 = vmul.f32 %v9174, %v9226
  %v9236 = vmul.f32 %v9177, %v9226
  %v9237 = vmul.f32 %v9180, %v9226
  %v9238 = vmul.f32 %v9183, %v9226
  %v9239 = vmul.f32 %v9186, %v9226
  %v9240 = vmul.f32 %v9189, %v9226
  %v9241 = vmul.f32 %v9192, %v9226
  %v9242 = vmul.f32 %v9195, %v9226
  %v9243 = vmul.f32 %v9198, %v9226
  %v9244 = vmul.f32 %v9201, %v9226
  %v9245 = vmul.f32 %v9204, %v9226
  %v9246 = vmul.f32 %v9207, %v9226
  %v9247 = vmul.f32 %v9210, %v9226
  %v9248 = vmul.f32 %v9213, %v9226
  %v9249 = vmul.f32 %v9216, %v9226
  %v9250 = vmul.f32 %v9219, %v9226
  %v9251 = vsub.f32 %v9123, %v9227
  %v9252 = vsub.f32 %v9124, %v9228
  %v9253 = vsub.f32 %v9125, %v9229
  %v9254 = vsub.f32 %v9126, %v9230
  %v9255 = vsub.f32 %v9127, %v9231
  %v9256 = vsub.f32 %v9128, %v9232
  %v9257 = vsub.f32 %v9129, %v9233
  %v9258 = vsub.f32 %v9130, %v9234
  %v9259 = vsub.f32 %v9131, %v9235
  %v9260 = vsub.f32 %v9132, %v9236
  %v9261 = vsub.f32 %v9133, %v9237
  %v9262 = vsub.f32 %v9134, %v9238
  %v9263 = vsub.f32 %v9135, %v9239
  %v9264 = vsub.f32 %v9136, %v9240
  %v9265 = vsub.f32 %v9137, %v9241
  %v9266 = vsub.f32 %v9138, %v9242
  %v9267 = vsub.f32 %v9139, %v9243
  %v9268 = vsub.f32 %v9140, %v9244
  %v9269 = vsub.f32 %v9141, %v9245
  %v9270 = vsub.f32 %v9142, %v9246
  %v9271 = vsub.f32 %v9143, %v9247
  %v9272 = vsub.f32 %v9144, %v9248
  %v9273 = vsub.f32 %v9145, %v9249
  %v9274 = vsub.f32 %v9146, %v9250
  %v9275 = vmul.f32 %v9251, %v9251
  %v9276 = vmul.f32 %v9252, %v9252
  %v9277 = vmul.f32 %v9253, %v9253
  %v9278 = vmul.f32 %v9254, %v9254
  %v9279 = vmul.f32 %v9255, %v9255
  %v9280 = vmul.f32 %v9256, %v9256
  %v9281 = vmul.f32 %v9257, %v9257
  %v9282 = vmul.f32 %v9258, %v9258
  %v9283 = vmul.f32 %v9259, %v9259
  %v9284 = vmul.f32 %v9260, %v9260
  %v9285 = vmul.f32 %v9261, %v9261
  %v9286 = vmul.f32 %v9262, %v9262
  %v9287 = vmul.f32 %v9263, %v9263
  %v9288 = vmul.f32 %v9264, %v9264
  %v9289 = vmul.f32 %v9265, %v9265
  %v9290 = vmul.f32 %v9266, %v9266
  %v9291 = vmul.f32 %v9267, %v9267
  %v9292 = vmul.f32 %v9268, %v9268
  %v9293 = vmul.f32 %v9269, %v9269
  %v9294 = vmul.f32 %v9270, %v9270
  %v9295 = vmul.f32 %v9271, %v9271
  %v9296 = vmul.f32 %v9272, %v9272
  %v9297 = vmul.f32 %v9273, %v9273
  %v9298 = vmul.f32 %v9274, %v9274
  %v9299 = vsel %vm9147, %v9275, 0.0
  %9300 = vadd.xlane.f32.xlu0 %v9299
  %v9301 = vpop.xlane.xlu0 %9300
  %v9302 = vsel %vm9147, %v9276, 0.0
  %9303 = vadd.xlane.f32.xlu0 %v9302
  %v9304 = vpop.xlane.xlu0 %9303
  %v9305 = vsel %vm9147, %v9277, 0.0
  %9306 = vadd.xlane.f32.xlu0 %v9305
  %v9307 = vpop.xlane.xlu0 %9306
  %v9308 = vsel %vm9147, %v9278, 0.0
  %9309 = vadd.xlane.f32.xlu0 %v9308
  %v9310 = vpop.xlane.xlu0 %9309
  %v9311 = vsel %vm9147, %v9279, 0.0
  %9312 = vadd.xlane.f32.xlu0 %v9311
  %v9313 = vpop.xlane.xlu0 %9312
  %v9314 = vsel %vm9147, %v9280, 0.0
  %9315 = vadd.xlane.f32.xlu0 %v9314
  %v9316 = vpop.xlane.xlu0 %9315
  %v9317 = vsel %vm9147, %v9281, 0.0
  %9318 = vadd.xlane.f32.xlu0 %v9317
  %v9319 = vpop.xlane.xlu0 %9318
  %v9320 = vsel %vm9147, %v9282, 0.0
  %9321 = vadd.xlane.f32.xlu0 %v9320
  %v9322 = vpop.xlane.xlu0 %9321
  %v9323 = vsel %vm9147, %v9283, 0.0
  %9324 = vadd.xlane.f32.xlu0 %v9323
  %v9325 = vpop.xlane.xlu0 %9324
  %v9326 = vsel %vm9147, %v9284, 0.0
  %9327 = vadd.xlane.f32.xlu0 %v9326
  %v9328 = vpop.xlane.xlu0 %9327
  %v9329 = vsel %vm9147, %v9285, 0.0
  %9330 = vadd.xlane.f32.xlu0 %v9329
  %v9331 = vpop.xlane.xlu0 %9330
  %v9332 = vsel %vm9147, %v9286, 0.0
  %9333 = vadd.xlane.f32.xlu0 %v9332
  %v9334 = vpop.xlane.xlu0 %9333
  %v9335 = vsel %vm9147, %v9287, 0.0
  %9336 = vadd.xlane.f32.xlu0 %v9335
  %v9337 = vpop.xlane.xlu0 %9336
  %v9338 = vsel %vm9147, %v9288, 0.0
  %9339 = vadd.xlane.f32.xlu0 %v9338
  %v9340 = vpop.xlane.xlu0 %9339
  %v9341 = vsel %vm9147, %v9289, 0.0
  %9342 = vadd.xlane.f32.xlu0 %v9341
  %v9343 = vpop.xlane.xlu0 %9342
  %v9344 = vsel %vm9147, %v9290, 0.0
  %9345 = vadd.xlane.f32.xlu0 %v9344
  %v9346 = vpop.xlane.xlu0 %9345
  %v9347 = vsel %vm9147, %v9291, 0.0
  %9348 = vadd.xlane.f32.xlu0 %v9347
  %v9349 = vpop.xlane.xlu0 %9348
  %v9350 = vsel %vm9147, %v9292, 0.0
  %9351 = vadd.xlane.f32.xlu0 %v9350
  %v9352 = vpop.xlane.xlu0 %9351
  %v9353 = vsel %vm9147, %v9293, 0.0
  %9354 = vadd.xlane.f32.xlu0 %v9353
  %v9355 = vpop.xlane.xlu0 %9354
  %v9356 = vsel %vm9147, %v9294, 0.0
  %9357 = vadd.xlane.f32.xlu0 %v9356
  %v9358 = vpop.xlane.xlu0 %9357
  %v9359 = vsel %vm9147, %v9295, 0.0
  %9360 = vadd.xlane.f32.xlu0 %v9359
  %v9361 = vpop.xlane.xlu0 %9360
  %v9362 = vsel %vm9147, %v9296, 0.0
  %9363 = vadd.xlane.f32.xlu0 %v9362
  %v9364 = vpop.xlane.xlu0 %9363
  %v9365 = vsel %vm9147, %v9297, 0.0
  %9366 = vadd.xlane.f32.xlu0 %v9365
  %v9367 = vpop.xlane.xlu0 %9366
  %v9368 = vsel %vm9147, %v9298, 0.0
  %9369 = vadd.xlane.f32.xlu0 %v9368
  %v9370 = vpop.xlane.xlu0 %9369
  %v9371 = vmul.f32 %v9301, %v9226
  %v9372 = vmul.f32 %v9304, %v9226
  %v9373 = vmul.f32 %v9307, %v9226
  %v9374 = vmul.f32 %v9310, %v9226
  %v9375 = vmul.f32 %v9313, %v9226
  %v9376 = vmul.f32 %v9316, %v9226
  %v9377 = vmul.f32 %v9319, %v9226
  %v9378 = vmul.f32 %v9322, %v9226
  %v9379 = vmul.f32 %v9325, %v9226
  %v9380 = vmul.f32 %v9328, %v9226
  %v9381 = vmul.f32 %v9331, %v9226
  %v9382 = vmul.f32 %v9334, %v9226
  %v9383 = vmul.f32 %v9337, %v9226
  %v9384 = vmul.f32 %v9340, %v9226
  %v9385 = vmul.f32 %v9343, %v9226
  %v9386 = vmul.f32 %v9346, %v9226
  %v9387 = vmul.f32 %v9349, %v9226
  %v9388 = vmul.f32 %v9352, %v9226
  %v9389 = vmul.f32 %v9355, %v9226
  %v9390 = vmul.f32 %v9358, %v9226
  %v9391 = vmul.f32 %v9361, %v9226
  %v9392 = vmul.f32 %v9364, %v9226
  %v9393 = vmul.f32 %v9367, %v9226
  %v9394 = vmul.f32 %v9370, %v9226
  %v9395 = vadd.f32 %v9371, 1e-06
  %v9396 = vadd.f32 %v9372, 1e-06
  %v9397 = vadd.f32 %v9373, 1e-06
  %v9398 = vadd.f32 %v9374, 1e-06
  %v9399 = vadd.f32 %v9375, 1e-06
  %v9400 = vadd.f32 %v9376, 1e-06
  %v9401 = vadd.f32 %v9377, 1e-06
  %v9402 = vadd.f32 %v9378, 1e-06
  %v9403 = vadd.f32 %v9379, 1e-06
  %v9404 = vadd.f32 %v9380, 1e-06
  %v9405 = vadd.f32 %v9381, 1e-06
  %v9406 = vadd.f32 %v9382, 1e-06
  %v9407 = vadd.f32 %v9383, 1e-06
  %v9408 = vadd.f32 %v9384, 1e-06
  %v9409 = vadd.f32 %v9385, 1e-06
  %v9410 = vadd.f32 %v9386, 1e-06
  %v9411 = vadd.f32 %v9387, 1e-06
  %v9412 = vadd.f32 %v9388, 1e-06
  %v9413 = vadd.f32 %v9389, 1e-06
  %v9414 = vadd.f32 %v9390, 1e-06
  %v9415 = vadd.f32 %v9391, 1e-06
  %v9416 = vadd.f32 %v9392, 1e-06
  %v9417 = vadd.f32 %v9393, 1e-06
  %v9418 = vadd.f32 %v9394, 1e-06
  %v9419 = vrsqrt.pop %v9395
  %v9420 = vmul.f32 %v9419, %v9395
  %v9421 = vmul.f32 %v9420, %v9419
  %v9422 = vmul.f32 0.5, %v9421
  %v9423 = vsub.f32 1.5, %v9422
  %v9424 = vmul.f32 %v9419, %v9423
  %vm9425 = vweird.f32 %v9395
  %vm9426 = vweird.f32 %v9419
  %vm9427 = vmor %vm9425, %vm9426
  %v9428 = vsel %vm9427, %v9419, %v9424
  %v9429 = vrsqrt.pop %v9396
  %v9430 = vmul.f32 %v9429, %v9396
  %v9431 = vmul.f32 %v9430, %v9429
  %v9432 = vmul.f32 0.5, %v9431
  %v9433 = vsub.f32 1.5, %v9432
  %v9434 = vmul.f32 %v9429, %v9433
  %vm9435 = vweird.f32 %v9396
  %vm9436 = vweird.f32 %v9429
  %vm9437 = vmor %vm9435, %vm9436
  %v9438 = vsel %vm9437, %v9429, %v9434
  %v9439 = vrsqrt.pop %v9397
  %v9440 = vmul.f32 %v9439, %v9397
  %v9441 = vmul.f32 %v9440, %v9439
  %v9442 = vmul.f32 0.5, %v9441
  %v9443 = vsub.f32 1.5, %v9442
  %v9444 = vmul.f32 %v9439, %v9443
  %vm9445 = vweird.f32 %v9397
  %vm9446 = vweird.f32 %v9439
  %vm9447 = vmor %vm9445, %vm9446
  %v9448 = vsel %vm9447, %v9439, %v9444
  %v9449 = vrsqrt.pop %v9398
  %v9450 = vmul.f32 %v9449, %v9398
  %v9451 = vmul.f32 %v9450, %v9449
  %v9452 = vmul.f32 0.5, %v9451
  %v9453 = vsub.f32 1.5, %v9452
  %v9454 = vmul.f32 %v9449, %v9453
  %vm9455 = vweird.f32 %v9398
  %vm9456 = vweird.f32 %v9449
  %vm9457 = vmor %vm9455, %vm9456
  %v9458 = vsel %vm9457, %v9449, %v9454
  %v9459 = vrsqrt.pop %v9399
  %v9460 = vmul.f32 %v9459, %v9399
  %v9461 = vmul.f32 %v9460, %v9459
  %v9462 = vmul.f32 0.5, %v9461
  %v9463 = vsub.f32 1.5, %v9462
  %v9464 = vmul.f32 %v9459, %v9463
  %vm9465 = vweird.f32 %v9399
  %vm9466 = vweird.f32 %v9459
  %vm9467 = vmor %vm9465, %vm9466
  %v9468 = vsel %vm9467, %v9459, %v9464
  %v9469 = vrsqrt.pop %v9400
  %v9470 = vmul.f32 %v9469, %v9400
  %v9471 = vmul.f32 %v9470, %v9469
  %v9472 = vmul.f32 0.5, %v9471
  %v9473 = vsub.f32 1.5, %v9472
  %v9474 = vmul.f32 %v9469, %v9473
  %vm9475 = vweird.f32 %v9400
  %vm9476 = vweird.f32 %v9469
  %vm9477 = vmor %vm9475, %vm9476
  %v9478 = vsel %vm9477, %v9469, %v9474
  %v9479 = vrsqrt.pop %v9401
  %v9480 = vmul.f32 %v9479, %v9401
  %v9481 = vmul.f32 %v9480, %v9479
  %v9482 = vmul.f32 0.5, %v9481
  %v9483 = vsub.f32 1.5, %v9482
  %v9484 = vmul.f32 %v9479, %v9483
  %vm9485 = vweird.f32 %v9401
  %vm9486 = vweird.f32 %v9479
  %vm9487 = vmor %vm9485, %vm9486
  %v9488 = vsel %vm9487, %v9479, %v9484
  %v9489 = vrsqrt.pop %v9402
  %v9490 = vmul.f32 %v9489, %v9402
  %v9491 = vmul.f32 %v9490, %v9489
  %v9492 = vmul.f32 0.5, %v9491
  %v9493 = vsub.f32 1.5, %v9492
  %v9494 = vmul.f32 %v9489, %v9493
  %vm9495 = vweird.f32 %v9402
  %vm9496 = vweird.f32 %v9489
  %vm9497 = vmor %vm9495, %vm9496
  %v9498 = vsel %vm9497, %v9489, %v9494
  %v9499 = vrsqrt.pop %v9403
  %v9500 = vmul.f32 %v9499, %v9403
  %v9501 = vmul.f32 %v9500, %v9499
  %v9502 = vmul.f32 0.5, %v9501
  %v9503 = vsub.f32 1.5, %v9502
  %v9504 = vmul.f32 %v9499, %v9503
  %vm9505 = vweird.f32 %v9403
  %vm9506 = vweird.f32 %v9499
  %vm9507 = vmor %vm9505, %vm9506
  %v9508 = vsel %vm9507, %v9499, %v9504
  %v9509 = vrsqrt.pop %v9404
  %v9510 = vmul.f32 %v9509, %v9404
  %v9511 = vmul.f32 %v9510, %v9509
  %v9512 = vmul.f32 0.5, %v9511
  %v9513 = vsub.f32 1.5, %v9512
  %v9514 = vmul.f32 %v9509, %v9513
  %vm9515 = vweird.f32 %v9404
  %vm9516 = vweird.f32 %v9509
  %vm9517 = vmor %vm9515, %vm9516
  %v9518 = vsel %vm9517, %v9509, %v9514
  %v9519 = vrsqrt.pop %v9405
  %v9520 = vmul.f32 %v9519, %v9405
  %v9521 = vmul.f32 %v9520, %v9519
  %v9522 = vmul.f32 0.5, %v9521
  %v9523 = vsub.f32 1.5, %v9522
  %v9524 = vmul.f32 %v9519, %v9523
  %vm9525 = vweird.f32 %v9405
  %vm9526 = vweird.f32 %v9519
  %vm9527 = vmor %vm9525, %vm9526
  %v9528 = vsel %vm9527, %v9519, %v9524
  %v9529 = vrsqrt.pop %v9406
  %v9530 = vmul.f32 %v9529, %v9406
  %v9531 = vmul.f32 %v9530, %v9529
  %v9532 = vmul.f32 0.5, %v9531
  %v9533 = vsub.f32 1.5, %v9532
  %v9534 = vmul.f32 %v9529, %v9533
  %vm9535 = vweird.f32 %v9406
  %vm9536 = vweird.f32 %v9529
  %vm9537 = vmor %vm9535, %vm9536
  %v9538 = vsel %vm9537, %v9529, %v9534
  %v9539 = vrsqrt.pop %v9407
  %v9540 = vmul.f32 %v9539, %v9407
  %v9541 = vmul.f32 %v9540, %v9539
  %v9542 = vmul.f32 0.5, %v9541
  %v9543 = vsub.f32 1.5, %v9542
  %v9544 = vmul.f32 %v9539, %v9543
  %vm9545 = vweird.f32 %v9407
  %vm9546 = vweird.f32 %v9539
  %vm9547 = vmor %vm9545, %vm9546
  %v9548 = vsel %vm9547, %v9539, %v9544
  %v9549 = vrsqrt.pop %v9408
  %v9550 = vmul.f32 %v9549, %v9408
  %v9551 = vmul.f32 %v9550, %v9549
  %v9552 = vmul.f32 0.5, %v9551
  %v9553 = vsub.f32 1.5, %v9552
  %v9554 = vmul.f32 %v9549, %v9553
  %vm9555 = vweird.f32 %v9408
  %vm9556 = vweird.f32 %v9549
  %vm9557 = vmor %vm9555, %vm9556
  %v9558 = vsel %vm9557, %v9549, %v9554
  %v9559 = vrsqrt.pop %v9409
  %v9560 = vmul.f32 %v9559, %v9409
  %v9561 = vmul.f32 %v9560, %v9559
  %v9562 = vmul.f32 0.5, %v9561
  %v9563 = vsub.f32 1.5, %v9562
  %v9564 = vmul.f32 %v9559, %v9563
  %vm9565 = vweird.f32 %v9409
  %vm9566 = vweird.f32 %v9559
  %vm9567 = vmor %vm9565, %vm9566
  %v9568 = vsel %vm9567, %v9559, %v9564
  %v9569 = vrsqrt.pop %v9410
  %v9570 = vmul.f32 %v9569, %v9410
  %v9571 = vmul.f32 %v9570, %v9569
  %v9572 = vmul.f32 0.5, %v9571
  %v9573 = vsub.f32 1.5, %v9572
  %v9574 = vmul.f32 %v9569, %v9573
  %vm9575 = vweird.f32 %v9410
  %vm9576 = vweird.f32 %v9569
  %vm9577 = vmor %vm9575, %vm9576
  %v9578 = vsel %vm9577, %v9569, %v9574
  %v9579 = vrsqrt.pop %v9411
  %v9580 = vmul.f32 %v9579, %v9411
  %v9581 = vmul.f32 %v9580, %v9579
  %v9582 = vmul.f32 0.5, %v9581
  %v9583 = vsub.f32 1.5, %v9582
  %v9584 = vmul.f32 %v9579, %v9583
  %vm9585 = vweird.f32 %v9411
  %vm9586 = vweird.f32 %v9579
  %vm9587 = vmor %vm9585, %vm9586
  %v9588 = vsel %vm9587, %v9579, %v9584
  %v9589 = vrsqrt.pop %v9412
  %v9590 = vmul.f32 %v9589, %v9412
  %v9591 = vmul.f32 %v9590, %v9589
  %v9592 = vmul.f32 0.5, %v9591
  %v9593 = vsub.f32 1.5, %v9592
  %v9594 = vmul.f32 %v9589, %v9593
  %vm9595 = vweird.f32 %v9412
  %vm9596 = vweird.f32 %v9589
  %vm9597 = vmor %vm9595, %vm9596
  %v9598 = vsel %vm9597, %v9589, %v9594
  %v9599 = vrsqrt.pop %v9413
  %v9600 = vmul.f32 %v9599, %v9413
  %v9601 = vmul.f32 %v9600, %v9599
  %v9602 = vmul.f32 0.5, %v9601
  %v9603 = vsub.f32 1.5, %v9602
  %v9604 = vmul.f32 %v9599, %v9603
  %vm9605 = vweird.f32 %v9413
  %vm9606 = vweird.f32 %v9599
  %vm9607 = vmor %vm9605, %vm9606
  %v9608 = vsel %vm9607, %v9599, %v9604
  %v9609 = vrsqrt.pop %v9414
  %v9610 = vmul.f32 %v9609, %v9414
  %v9611 = vmul.f32 %v9610, %v9609
  %v9612 = vmul.f32 0.5, %v9611
  %v9613 = vsub.f32 1.5, %v9612
  %v9614 = vmul.f32 %v9609, %v9613
  %vm9615 = vweird.f32 %v9414
  %vm9616 = vweird.f32 %v9609
  %vm9617 = vmor %vm9615, %vm9616
  %v9618 = vsel %vm9617, %v9609, %v9614
  %v9619 = vrsqrt.pop %v9415
  %v9620 = vmul.f32 %v9619, %v9415
  %v9621 = vmul.f32 %v9620, %v9619
  %v9622 = vmul.f32 0.5, %v9621
  %v9623 = vsub.f32 1.5, %v9622
  %v9624 = vmul.f32 %v9619, %v9623
  %vm9625 = vweird.f32 %v9415
  %vm9626 = vweird.f32 %v9619
  %vm9627 = vmor %vm9625, %vm9626
  %v9628 = vsel %vm9627, %v9619, %v9624
  %v9629 = vrsqrt.pop %v9416
  %v9630 = vmul.f32 %v9629, %v9416
  %v9631 = vmul.f32 %v9630, %v9629
  %v9632 = vmul.f32 0.5, %v9631
  %v9633 = vsub.f32 1.5, %v9632
  %v9634 = vmul.f32 %v9629, %v9633
  %vm9635 = vweird.f32 %v9416
  %vm9636 = vweird.f32 %v9629
  %vm9637 = vmor %vm9635, %vm9636
  %v9638 = vsel %vm9637, %v9629, %v9634
  %v9639 = vrsqrt.pop %v9417
  %v9640 = vmul.f32 %v9639, %v9417
  %v9641 = vmul.f32 %v9640, %v9639
  %v9642 = vmul.f32 0.5, %v9641
  %v9643 = vsub.f32 1.5, %v9642
  %v9644 = vmul.f32 %v9639, %v9643
  %vm9645 = vweird.f32 %v9417
  %vm9646 = vweird.f32 %v9639
  %vm9647 = vmor %vm9645, %vm9646
  %v9648 = vsel %vm9647, %v9639, %v9644
  %v9649 = vrsqrt.pop %v9418
  %v9650 = vmul.f32 %v9649, %v9418
  %v9651 = vmul.f32 %v9650, %v9649
  %v9652 = vmul.f32 0.5, %v9651
  %v9653 = vsub.f32 1.5, %v9652
  %v9654 = vmul.f32 %v9649, %v9653
  %vm9655 = vweird.f32 %v9418
  %vm9656 = vweird.f32 %v9649
  %vm9657 = vmor %vm9655, %vm9656
  %v9658 = vsel %vm9657, %v9649, %v9654
  %v9659 = vmul.f32 %v9251, %v9428
  %v9660 = vmul.f32 %v9252, %v9438
  %v9661 = vmul.f32 %v9253, %v9448
  %v9662 = vmul.f32 %v9254, %v9458
  %v9663 = vmul.f32 %v9255, %v9468
  %v9664 = vmul.f32 %v9256, %v9478
  %v9665 = vmul.f32 %v9257, %v9488
  %v9666 = vmul.f32 %v9258, %v9498
  %v9667 = vmul.f32 %v9259, %v9508
  %v9668 = vmul.f32 %v9260, %v9518
  %v9669 = vmul.f32 %v9261, %v9528
  %v9670 = vmul.f32 %v9262, %v9538
  %v9671 = vmul.f32 %v9263, %v9548
  %v9672 = vmul.f32 %v9264, %v9558
  %v9673 = vmul.f32 %v9265, %v9568
  %v9674 = vmul.f32 %v9266, %v9578
  %v9675 = vmul.f32 %v9267, %v9588
  %v9676 = vmul.f32 %v9268, %v9598
  %v9677 = vmul.f32 %v9269, %v9608
  %v9678 = vmul.f32 %v9270, %v9618
  %v9679 = vmul.f32 %v9271, %v9628
  %v9680 = vmul.f32 %v9272, %v9638
  %v9681 = vmul.f32 %v9273, %v9648
  %v9682 = vmul.f32 %v9274, %v9658
  %vm9683 = vcmp.ge.f32.partialorder %v9659, 0.0
  %vm9684 = vcmp.ge.f32.partialorder %v9660, 0.0
  %vm9685 = vcmp.ge.f32.partialorder %v9661, 0.0
  %vm9686 = vcmp.ge.f32.partialorder %v9662, 0.0
  %vm9687 = vcmp.ge.f32.partialorder %v9663, 0.0
  %vm9688 = vcmp.ge.f32.partialorder %v9664, 0.0
  %vm9689 = vcmp.ge.f32.partialorder %v9665, 0.0
  %vm9690 = vcmp.ge.f32.partialorder %v9666, 0.0
  %vm9691 = vcmp.ge.f32.partialorder %v9667, 0.0
  %vm9692 = vcmp.ge.f32.partialorder %v9668, 0.0
  %vm9693 = vcmp.ge.f32.partialorder %v9669, 0.0
  %vm9694 = vcmp.ge.f32.partialorder %v9670, 0.0
  %vm9695 = vcmp.ge.f32.partialorder %v9671, 0.0
  %vm9696 = vcmp.ge.f32.partialorder %v9672, 0.0
  %vm9697 = vcmp.ge.f32.partialorder %v9673, 0.0
  %vm9698 = vcmp.ge.f32.partialorder %v9674, 0.0
  %vm9699 = vcmp.ge.f32.partialorder %v9675, 0.0
  %vm9700 = vcmp.ge.f32.partialorder %v9676, 0.0
  %vm9701 = vcmp.ge.f32.partialorder %v9677, 0.0
  %vm9702 = vcmp.ge.f32.partialorder %v9678, 0.0
  %vm9703 = vcmp.ge.f32.partialorder %v9679, 0.0
  %vm9704 = vcmp.ge.f32.partialorder %v9680, 0.0
  %vm9705 = vcmp.ge.f32.partialorder %v9681, 0.0
  %vm9706 = vcmp.ge.f32.partialorder %v9682, 0.0
  %v9707 = vmul.f32 %v9659, 0.2
  %v9708 = vmul.f32 %v9660, 0.2
  %v9709 = vmul.f32 %v9661, 0.2
  %v9710 = vmul.f32 %v9662, 0.2
  %v9711 = vmul.f32 %v9663, 0.2
  %v9712 = vmul.f32 %v9664, 0.2
  %v9713 = vmul.f32 %v9665, 0.2
  %v9714 = vmul.f32 %v9666, 0.2
  %v9715 = vmul.f32 %v9667, 0.2
  %v9716 = vmul.f32 %v9668, 0.2
  %v9717 = vmul.f32 %v9669, 0.2
  %v9718 = vmul.f32 %v9670, 0.2
  %v9719 = vmul.f32 %v9671, 0.2
  %v9720 = vmul.f32 %v9672, 0.2
  %v9721 = vmul.f32 %v9673, 0.2
  %v9722 = vmul.f32 %v9674, 0.2
  %v9723 = vmul.f32 %v9675, 0.2
  %v9724 = vmul.f32 %v9676, 0.2
  %v9725 = vmul.f32 %v9677, 0.2
  %v9726 = vmul.f32 %v9678, 0.2
  %v9727 = vmul.f32 %v9679, 0.2
  %v9728 = vmul.f32 %v9680, 0.2
  %v9729 = vmul.f32 %v9681, 0.2
  %v9730 = vmul.f32 %v9682, 0.2
  %v9731 = vsel %vm9683, %v9659, %v9707
  %v9732 = vsel %vm9684, %v9660, %v9708
  %v9733 = vsel %vm9685, %v9661, %v9709
  %v9734 = vsel %vm9686, %v9662, %v9710
  %v9735 = vsel %vm9687, %v9663, %v9711
  %v9736 = vsel %vm9688, %v9664, %v9712
  %v9737 = vsel %vm9689, %v9665, %v9713
  %v9738 = vsel %vm9690, %v9666, %v9714
  %v9739 = vsel %vm9691, %v9667, %v9715
  %v9740 = vsel %vm9692, %v9668, %v9716
  %v9741 = vsel %vm9693, %v9669, %v9717
  %v9742 = vsel %vm9694, %v9670, %v9718
  %v9743 = vsel %vm9695, %v9671, %v9719
  %v9744 = vsel %vm9696, %v9672, %v9720
  %v9745 = vsel %vm9697, %v9673, %v9721
  %v9746 = vsel %vm9698, %v9674, %v9722
  %v9747 = vsel %vm9699, %v9675, %v9723
  %v9748 = vsel %vm9700, %v9676, %v9724
  %v9749 = vsel %vm9701, %v9677, %v9725
  %v9750 = vsel %vm9702, %v9678, %v9726
  %v9751 = vsel %vm9703, %v9679, %v9727
  %v9752 = vsel %vm9704, %v9680, %v9728
  %v9753 = vsel %vm9705, %v9681, %v9729
  %v9754 = vsel %vm9706, %v9682, %v9730
  %v9755 = vsel %vm9147, %v9731, 0.0
  %9756 = vadd.xlane.f32.xlu0 %v9755
  %v9757 = vpop.xlane.xlu0 %9756
  %v9758 = vsel %vm9147, %v9732, 0.0
  %9759 = vadd.xlane.f32.xlu0 %v9758
  %v9760 = vpop.xlane.xlu0 %9759
  %v9761 = vsel %vm9147, %v9733, 0.0
  %9762 = vadd.xlane.f32.xlu0 %v9761
  %v9763 = vpop.xlane.xlu0 %9762
  %v9764 = vsel %vm9147, %v9734, 0.0
  %9765 = vadd.xlane.f32.xlu0 %v9764
  %v9766 = vpop.xlane.xlu0 %9765
  %v9767 = vsel %vm9147, %v9735, 0.0
  %9768 = vadd.xlane.f32.xlu0 %v9767
  %v9769 = vpop.xlane.xlu0 %9768
  %v9770 = vsel %vm9147, %v9736, 0.0
  %9771 = vadd.xlane.f32.xlu0 %v9770
  %v9772 = vpop.xlane.xlu0 %9771
  %v9773 = vsel %vm9147, %v9737, 0.0
  %9774 = vadd.xlane.f32.xlu0 %v9773
  %v9775 = vpop.xlane.xlu0 %9774
  %v9776 = vsel %vm9147, %v9738, 0.0
  %9777 = vadd.xlane.f32.xlu0 %v9776
  %v9778 = vpop.xlane.xlu0 %9777
  %v9779 = vsel %vm9147, %v9739, 0.0
  %9780 = vadd.xlane.f32.xlu0 %v9779
  %v9781 = vpop.xlane.xlu0 %9780
  %v9782 = vsel %vm9147, %v9740, 0.0
  %9783 = vadd.xlane.f32.xlu0 %v9782
  %v9784 = vpop.xlane.xlu0 %9783
  %v9785 = vsel %vm9147, %v9741, 0.0
  %9786 = vadd.xlane.f32.xlu0 %v9785
  %v9787 = vpop.xlane.xlu0 %9786
  %v9788 = vsel %vm9147, %v9742, 0.0
  %9789 = vadd.xlane.f32.xlu0 %v9788
  %v9790 = vpop.xlane.xlu0 %9789
  %v9791 = vsel %vm9147, %v9743, 0.0
  %9792 = vadd.xlane.f32.xlu0 %v9791
  %v9793 = vpop.xlane.xlu0 %9792
  %v9794 = vsel %vm9147, %v9744, 0.0
  %9795 = vadd.xlane.f32.xlu0 %v9794
  %v9796 = vpop.xlane.xlu0 %9795
  %v9797 = vsel %vm9147, %v9745, 0.0
  %9798 = vadd.xlane.f32.xlu0 %v9797
  %v9799 = vpop.xlane.xlu0 %9798
  %v9800 = vsel %vm9147, %v9746, 0.0
  %9801 = vadd.xlane.f32.xlu0 %v9800
  %v9802 = vpop.xlane.xlu0 %9801
  %v9803 = vsel %vm9147, %v9747, 0.0
  %9804 = vadd.xlane.f32.xlu0 %v9803
  %v9805 = vpop.xlane.xlu0 %9804
  %v9806 = vsel %vm9147, %v9748, 0.0
  %9807 = vadd.xlane.f32.xlu0 %v9806
  %v9808 = vpop.xlane.xlu0 %9807
  %v9809 = vsel %vm9147, %v9749, 0.0
  %9810 = vadd.xlane.f32.xlu0 %v9809
  %v9811 = vpop.xlane.xlu0 %9810
  %v9812 = vsel %vm9147, %v9750, 0.0
  %9813 = vadd.xlane.f32.xlu0 %v9812
  %v9814 = vpop.xlane.xlu0 %9813
  %v9815 = vsel %vm9147, %v9751, 0.0
  %9816 = vadd.xlane.f32.xlu0 %v9815
  %v9817 = vpop.xlane.xlu0 %9816
  %v9818 = vsel %vm9147, %v9752, 0.0
  %9819 = vadd.xlane.f32.xlu0 %v9818
  %v9820 = vpop.xlane.xlu0 %9819
  %v9821 = vsel %vm9147, %v9753, 0.0
  %9822 = vadd.xlane.f32.xlu0 %v9821
  %v9823 = vpop.xlane.xlu0 %9822
  %v9824 = vsel %vm9147, %v9754, 0.0
  %9825 = vadd.xlane.f32.xlu0 %v9824
  %v9826 = vpop.xlane.xlu0 %9825
  %v9827 = vmul.f32 %v9757, %v9226
  %v9828 = vmul.f32 %v9760, %v9226
  %v9829 = vmul.f32 %v9763, %v9226
  %v9830 = vmul.f32 %v9766, %v9226
  %v9831 = vmul.f32 %v9769, %v9226
  %v9832 = vmul.f32 %v9772, %v9226
  %v9833 = vmul.f32 %v9775, %v9226
  %v9834 = vmul.f32 %v9778, %v9226
  %v9835 = vmul.f32 %v9781, %v9226
  %v9836 = vmul.f32 %v9784, %v9226
  %v9837 = vmul.f32 %v9787, %v9226
  %v9838 = vmul.f32 %v9790, %v9226
  %v9839 = vmul.f32 %v9793, %v9226
  %v9840 = vmul.f32 %v9796, %v9226
  %v9841 = vmul.f32 %v9799, %v9226
  %v9842 = vmul.f32 %v9802, %v9226
  %v9843 = vmul.f32 %v9805, %v9226
  %v9844 = vmul.f32 %v9808, %v9226
  %v9845 = vmul.f32 %v9811, %v9226
  %v9846 = vmul.f32 %v9814, %v9226
  %v9847 = vmul.f32 %v9817, %v9226
  %v9848 = vmul.f32 %v9820, %v9226
  %v9849 = vmul.f32 %v9823, %v9226
  %v9850 = vmul.f32 %v9826, %v9226
  %v9851 = vld [vmem:[%s10] sm:$0xff]
  %v9852 = vld [vmem:[%s10 + $0x8] sm:$0xff]
  %v9853 = vld [vmem:[%s10 + $0x10] sm:$0xff]
  %v9854 = vld [vmem:[%s10 + $0x18] sm:$0xff]
  %v9855 = vld [vmem:[%s11] sm:$0x1]
  %v9857 = vperm.slane %v9855, 0
  %v9883 = vlaneseq
  %v9884 = vand.u32 %v9883, 127
  %v9885 = vperm.slane %v9827, %v9884
  %v9886 = vadd.s32 %v9884, 4294967288
  %v9887 = vperm.slane %v9828, %v9886
  %vm9888 = vcmask 130112
  %v9889 = vsel %vm9888, %v9887, %v9885
  %v9890 = vadd.s32 %v9884, 4294967280
  %v9891 = vperm.slane %v9829, %v9890
  %vm9892 = vcmask 195712
  %v9893 = vsel %vm9892, %v9891, %v9889
  %v9894 = vadd.s32 %v9884, 4294967272
  %v9895 = vperm.slane %v9830, %v9894
  %vm9896 = vcmask 261312
  %v9897 = vsel %vm9896, %v9895, %v9893
  %v9898 = vperm.slane %v9831, %v9884
  %v9899 = vperm.slane %v9832, %v9886
  %v9900 = vsel %vm9888, %v9899, %v9898
  %v9901 = vperm.slane %v9833, %v9890
  %v9902 = vsel %vm9892, %v9901, %v9900
  %v9903 = vperm.slane %v9834, %v9894
  %v9904 = vsel %vm9896, %v9903, %v9902
  %v9905 = vperm.slane %v9835, %v9884
  %v9906 = vperm.slane %v9836, %v9886
  %v9907 = vsel %vm9888, %v9906, %v9905
  %v9908 = vperm.slane %v9837, %v9890
  %v9909 = vsel %vm9892, %v9908, %v9907
  %v9910 = vperm.slane %v9838, %v9894
  %v9911 = vsel %vm9896, %v9910, %v9909
  %v9912 = vperm.slane %v9839, %v9884
  %v9913 = vperm.slane %v9840, %v9886
  %v9914 = vsel %vm9888, %v9913, %v9912
  %v9915 = vperm.slane %v9841, %v9890
  %v9916 = vsel %vm9892, %v9915, %v9914
  %v9917 = vperm.slane %v9842, %v9894
  %v9918 = vsel %vm9896, %v9917, %v9916
  %v9919 = vperm.slane %v9843, %v9884
  %v9920 = vperm.slane %v9844, %v9886
  %v9921 = vsel %vm9888, %v9920, %v9919
  %v9922 = vperm.slane %v9845, %v9890
  %v9923 = vsel %vm9892, %v9922, %v9921
  %v9924 = vperm.slane %v9846, %v9894
  %v9925 = vsel %vm9896, %v9924, %v9923
  %v9926 = vperm.slane %v9847, %v9884
  %v9927 = vperm.slane %v9848, %v9886
  %v9928 = vsel %vm9888, %v9927, %v9926
  %v9929 = vperm.slane %v9849, %v9890
  %v9930 = vsel %vm9892, %v9929, %v9928
  %v9931 = vperm.slane %v9850, %v9894
  %v9932 = vsel %vm9896, %v9931, %v9930
  %vm9933 = vcmask 1041409
  %v9934 = vsel %vm9933, %v9904, %v9897
  %vm9935 = vcmask 1042434
  %v9936 = vsel %vm9935, %v9911, %v9934
  %vm9937 = vcmask 1043459
  %v9938 = vsel %vm9937, %v9918, %v9936
  %vm9939 = vcmask 1044484
  %v9940 = vsel %vm9939, %v9925, %v9938
  %vm9941 = vcmask 1045509
  %v9942 = vsel %vm9941, %v9932, %v9940
  %v9943 = vsel %vm8372, %v9942, 0
  %9945 = vmatpush.msra.mxu0 0.0
  %9946 = vmatpush.msra.mxu0 0.0
  %9947 = vmatpush.msra.mxu0 0.0
  %9948 = vmatpush.msra.mxu0 0.0
  %9949 = vmatpush.msra.mxu0 0.0
  %9950 = vmatpush.msra.mxu0 0.0
  %9951 = vmatpush.msra.mxu0 0.0
  %9952 = vmatpush.msra.mxu0 0.0
  %9953 = vmatpush.msra.mxu0 0.0
  %9954 = vmatpush.msra.mxu0 0.0
  %9955 = vmatpush.msra.mxu0 0.0
  %9956 = vmatpush.msra.mxu0 0.0
  %9957 = vmatpush.msra.mxu0 %v9854
  %9958 = vmatpush.msra.mxu0 %v9853
  %9959 = vmatpush.msra.mxu0 %v9852
  %9960 = vmatpush.msra.mxu0 %v9851
  %9961 = vmatmul.f32.gmra.mxu0 %v9943
  %v9962 = vpop.f32.mrf.mxu0
  %v9963 = vadd.f32 %v9857, %v9962
  %9964 = vdwg.mxu0
  %v9965 = vld [vmem:[%s12] sm:$0xff]
  %v9966 = vld [vmem:[%s12 + $0x8] sm:$0xff]
  %v9967 = vld [vmem:[%s12 + $0x10] sm:$0xff]
  %v9968 = vld [vmem:[%s12 + $0x18] sm:$0xff]
  %v9969 = vld [vmem:[%s14] sm:$0x1]
  %v9971 = vperm.slane %v9969, 0
  %v9974 = vsel %vm8372, %v9963, 0
  %9976 = vmatpush.msra.mxu0 0.0
  %9977 = vmatpush.msra.mxu0 0.0
  %9978 = vmatpush.msra.mxu0 0.0
  %9979 = vmatpush.msra.mxu0 0.0
  %9980 = vmatpush.msra.mxu0 0.0
  %9981 = vmatpush.msra.mxu0 0.0
  %9982 = vmatpush.msra.mxu0 0.0
  %9983 = vmatpush.msra.mxu0 0.0
  %9984 = vmatpush.msra.mxu0 0.0
  %9985 = vmatpush.msra.mxu0 0.0
  %9986 = vmatpush.msra.mxu0 0.0
  %9987 = vmatpush.msra.mxu0 0.0
  %9988 = vmatpush.msra.mxu0 %v9968
  %9989 = vmatpush.msra.mxu0 %v9967
  %9990 = vmatpush.msra.mxu0 %v9966
  %9991 = vmatpush.msra.mxu0 %v9965
  %9992 = vmatmul.f32.gmra.mxu0 %v9974
  %v9993 = vpop.f32.mrf.mxu0
  %v9994 = vadd.f32 %v9971, %v9993
  %9995 = vdwg.mxu0
  %v9996 = vld [vmem:[%s13] sm:$0xff]
  %v9997 = vld [vmem:[%s13 + $0x8] sm:$0xff]
  %v9998 = vld [vmem:[%s13 + $0x10] sm:$0xff]
  %v9999 = vld [vmem:[%s13 + $0x18] sm:$0xff]
  %v10001 = vsel %vm8372, 0.0, 0
  %10003 = vmatpush.msra.mxu0 0.0
  %10004 = vmatpush.msra.mxu0 0.0
  %10005 = vmatpush.msra.mxu0 0.0
  %10006 = vmatpush.msra.mxu0 0.0
  %10007 = vmatpush.msra.mxu0 0.0
  %10008 = vmatpush.msra.mxu0 0.0
  %10009 = vmatpush.msra.mxu0 0.0
  %10010 = vmatpush.msra.mxu0 0.0
  %10011 = vmatpush.msra.mxu0 0.0
  %10012 = vmatpush.msra.mxu0 0.0
  %10013 = vmatpush.msra.mxu0 0.0
  %10014 = vmatpush.msra.mxu0 0.0
  %10015 = vmatpush.msra.mxu0 %v9999
  %10016 = vmatpush.msra.mxu0 %v9998
  %10017 = vmatpush.msra.mxu0 %v9997
  %10018 = vmatpush.msra.mxu0 %v9996
  %10019 = vmatmul.f32.gmra.mxu0 %v10001
  %v10020 = vpop.f32.mrf.mxu0
  %v10021 = vadd.f32 0.0, %v10020
  %10022 = vdwg.mxu0
  %v10023 = vadd.f32 %v9994, %v10021
  %v10024 = vxor.u32 %v10023, 2147483648
  %v10025 = vmul.f32 %v10024, 1.442695
  %v10026 = vpow.pop %v10025
  %v10027 = vadd.f32 %v10026, 1.0
  %v10028 = vrcp.pop %v10027
  %v10029 = vmul.f32 %v10027, %v10028
  %v10030 = vsub.f32 1.0, %v10029
  %v10031 = vmul.f32 %v10028, %v10030
  %v10032 = vadd.f32 %v10028, %v10031
  %vm10033 = vweird.f32 %v10027
  %vm10034 = vweird.f32 %v10028
  %vm10035 = vmor %vm10033, %vm10034
  %v10036 = vsel %vm10035, %v10028, %v10032
  %v10037 = vand.u32 2147483647, %v10027
  %vm10038 = vcmp.eq.f32.partialorder %v10037, 8.507059e+37
  %v10039 = vand.u32 %v10027, 2147483648
  %v10040 = vor.u32 1.1754944e-38, %v10039
  %v10041 = vsel %vm10038, %v10040, %v10036
  %v10042 = vmul.f32 1.0, %v10041
  %v10043 = vtanh.pop %v10023
  %v10044 = vmul.f32 %v10042, 0.0
  %10046 = vrot.lane.b32.xlu0 %v10043, 64
  %v10047 = vpop.permute.xlu0 %10046
  %v10049 = vmul.f32 %v10042, %v10047
  %10051 = vrot.lane.b32.xlu0 %v10049, 32
  %v10052 = vpop.permute.xlu0 %10051
  %v10054 = vadd.f32 %v10044, %v10052
  %v10055 = vtanh.pop %v10054
  %10057 = vrot.lane.b32.xlu0 %v10055, 64
  %v10058 = vpop.permute.xlu0 %10057
  %v10060 = vmul.f32 %v10042, %v10058
  %10062 = vrot.lane.b32.xlu0 %v10060, 32
  %v10063 = vpop.permute.xlu0 %10062
  %v10064 = vsel %vm8372, %v10063, 0
  %10066 = vmatpush.msra.mxu0 0.0
  %10067 = vmatpush.msra.mxu0 0.0
  %10068 = vmatpush.msra.mxu0 0.0
  %10069 = vmatpush.msra.mxu0 0.0
  %10070 = vmatpush.msra.mxu0 0.0
  %10071 = vmatpush.msra.mxu0 0.0
  %10072 = vmatpush.msra.mxu0 0.0
  %10073 = vmatpush.msra.mxu0 0.0
  %10074 = vmatpush.msra.mxu0 0.0
  %10075 = vmatpush.msra.mxu0 0.0
  %10076 = vmatpush.msra.mxu0 0.0
  %10077 = vmatpush.msra.mxu0 0.0
  %10078 = vmatpush.msra.mxu0 %v9999
  %10079 = vmatpush.msra.mxu0 %v9998
  %10080 = vmatpush.msra.mxu0 %v9997
  %10081 = vmatpush.msra.mxu0 %v9996
  %10082 = vmatmul.f32.gmra.mxu0 %v10064
  %v10083 = vpop.f32.mrf.mxu0
  %v10084 = vadd.f32 0.0, %v10083
  %10085 = vdwg.mxu0
  %v10087 = vrot.slane %v10084, 6
  %v10089 = vadd.f32 %v9994, %v10087
  %v10090 = vxor.u32 %v10089, 2147483648
  %v10091 = vmul.f32 %v10090, 1.442695
  %v10092 = vpow.pop %v10091
  %v10093 = vadd.f32 %v10092, 1.0
  %v10094 = vrcp.pop %v10093
  %v10095 = vmul.f32 %v10093, %v10094
  %v10096 = vsub.f32 1.0, %v10095
  %v10097 = vmul.f32 %v10094, %v10096
  %v10098 = vadd.f32 %v10094, %v10097
  %vm10099 = vweird.f32 %v10093
  %vm10100 = vweird.f32 %v10094
  %vm10101 = vmor %vm10099, %vm10100
  %v10102 = vsel %vm10101, %v10094, %v10098
  %v10103 = vand.u32 2147483647, %v10093
  %vm10104 = vcmp.eq.f32.partialorder %v10103, 8.507059e+37
  %v10105 = vand.u32 %v10093, 2147483648
  %v10106 = vor.u32 1.1754944e-38, %v10105
  %v10107 = vsel %vm10104, %v10106, %v10102
  %v10108 = vmul.f32 1.0, %v10107
  %v10109 = vtanh.pop %v10089
  %v10111 = vrot.slane %v10054, 6
  %v10113 = vmul.f32 %v10108, %v10111
  %10115 = vrot.lane.b32.xlu0 %v10109, 64
  %v10116 = vpop.permute.xlu0 %10115
  %v10118 = vmul.f32 %v10108, %v10116
  %10120 = vrot.lane.b32.xlu0 %v10118, 32
  %v10121 = vpop.permute.xlu0 %10120
  %v10123 = vadd.f32 %v10113, %v10121
  %v10124 = vtanh.pop %v10123
  %10126 = vrot.lane.b32.xlu0 %v10124, 64
  %v10127 = vpop.permute.xlu0 %10126
  %v10129 = vmul.f32 %v10108, %v10127
  %v10131 = vrot.slane %v10129, 2
  %10132 = vrot.lane.b32.xlu0 %v10131, 32
  %v10133 = vpop.permute.xlu0 %10132
  %v10134 = vsel %vm8372, %v10133, 0
  %10136 = vmatpush.msra.mxu0 0.0
  %10137 = vmatpush.msra.mxu0 0.0
  %10138 = vmatpush.msra.mxu0 0.0
  %10139 = vmatpush.msra.mxu0 0.0
  %10140 = vmatpush.msra.mxu0 0.0
  %10141 = vmatpush.msra.mxu0 0.0
  %10142 = vmatpush.msra.mxu0 0.0
  %10143 = vmatpush.msra.mxu0 0.0
  %10144 = vmatpush.msra.mxu0 0.0
  %10145 = vmatpush.msra.mxu0 0.0
  %10146 = vmatpush.msra.mxu0 0.0
  %10147 = vmatpush.msra.mxu0 0.0
  %10148 = vmatpush.msra.mxu0 %v9999
  %10149 = vmatpush.msra.mxu0 %v9998
  %10150 = vmatpush.msra.mxu0 %v9997
  %10151 = vmatpush.msra.mxu0 %v9996
  %10152 = vmatmul.f32.gmra.mxu0 %v10134
  %v10153 = vpop.f32.mrf.mxu0
  %v10154 = vadd.f32 0.0, %v10153
  %10155 = vdwg.mxu0
  %v10157 = vrot.slane %v10154, 4
  %v10159 = vadd.f32 %v9994, %v10157
  %v10160 = vxor.u32 %v10159, 2147483648
  %v10161 = vmul.f32 %v10160, 1.442695
  %v10162 = vpow.pop %v10161
  %v10163 = vadd.f32 %v10162, 1.0
  %v10164 = vrcp.pop %v10163
  %v10165 = vmul.f32 %v10163, %v10164
  %v10166 = vsub.f32 1.0, %v10165
  %v10167 = vmul.f32 %v10164, %v10166
  %v10168 = vadd.f32 %v10164, %v10167
  %vm10169 = vweird.f32 %v10163
  %vm10170 = vweird.f32 %v10164
  %vm10171 = vmor %vm10169, %vm10170
  %v10172 = vsel %vm10171, %v10164, %v10168
  %v10173 = vand.u32 2147483647, %v10163
  %vm10174 = vcmp.eq.f32.partialorder %v10173, 8.507059e+37
  %v10175 = vand.u32 %v10163, 2147483648
  %v10176 = vor.u32 1.1754944e-38, %v10175
  %v10177 = vsel %vm10174, %v10176, %v10172
  %v10178 = vmul.f32 1.0, %v10177
  %v10179 = vtanh.pop %v10159
  %v10181 = vrot.slane %v10123, 6
  %v10183 = vmul.f32 %v10178, %v10181
  %10185 = vrot.lane.b32.xlu0 %v10179, 64
  %v10186 = vpop.permute.xlu0 %10185
  %v10188 = vmul.f32 %v10178, %v10186
  %10190 = vrot.lane.b32.xlu0 %v10188, 32
  %v10191 = vpop.permute.xlu0 %10190
  %v10193 = vadd.f32 %v10183, %v10191
  %v10194 = vtanh.pop %v10193
  %10196 = vrot.lane.b32.xlu0 %v10194, 64
  %v10197 = vpop.permute.xlu0 %10196
  %v10199 = vmul.f32 %v10178, %v10197
  %vm10200 = vcmask 1041408
  %v10201 = vsel %vm10200, %v10060, %v10129
  %vm10202 = vcmask 1043456
  %v10203 = vsel %vm10202, %v10201, %v10199
  %v10204 = vld [vmem:[%s15] sm:$0xff]
  %v10205 = vld [vmem:[%s15 + $0x8] sm:$0xff]
  %v10206 = vld [vmem:[%s15 + $0x10] sm:$0xff]
  %v10207 = vld [vmem:[%s15 + $0x18] sm:$0xff]
  %v10208 = vld [vmem:[%s16] sm:$0x1]
  %v10210 = vperm.slane %v10208, 0
  %10213 = vrot.lane.b32.xlu0 %v10203, 32
  %v10214 = vpop.permute.xlu0 %10213
  %v10215 = vsel %vm8372, %v10214, 0
  %10217 = vmatpush.msra.mxu0 0.0
  %10218 = vmatpush.msra.mxu0 0.0
  %10219 = vmatpush.msra.mxu0 0.0
  %10220 = vmatpush.msra.mxu0 0.0
  %10221 = vmatpush.msra.mxu0 0.0
  %10222 = vmatpush.msra.mxu0 0.0
  %10223 = vmatpush.msra.mxu0 0.0
  %10224 = vmatpush.msra.mxu0 0.0
  %10225 = vmatpush.msra.mxu0 0.0
  %10226 = vmatpush.msra.mxu0 0.0
  %10227 = vmatpush.msra.mxu0 0.0
  %10228 = vmatpush.msra.mxu0 0.0
  %10229 = vmatpush.msra.mxu0 %v10207
  %10230 = vmatpush.msra.mxu0 %v10206
  %10231 = vmatpush.msra.mxu0 %v10205
  %10232 = vmatpush.msra.mxu0 %v10204
  %10233 = vmatmul.f32.gmra.mxu0 %v10215
  %v10234 = vpop.f32.mrf.mxu0
  %v10235 = vadd.f32 %v10210, %v10234
  %10236 = vdwg.mxu0
  %vm10237 = vcmp.ge.s32.totalorder %v9884, 8
  %v10238 = vmax.f32 %v10235, -10.0
  %v10239 = vmin.f32 %v10238, 10.0
  %v10240 = vsel %vm10237, %v10239, %v10235
  %vm10241 = vcmask 128000
  %10242 = vst.msk [vmem:[%s17] sm:$0x3f] %vm10241, %v10240
  // Predicated region
  $region70: #{prior_forward.1} parent=0 // pred_check
    _
  $region71: #{prior_forward.1} parent=0 // pred_check_branch
    %10244 = sbr.rel (0) target = $region73
  $region72: #{prior_forward.1} parent=0 // pred_region
    _
  $region73: #{prior_forward.1} parent=0 // pred_fallthru
    _
  // Predicated region
  $region74: #{prior_forward.1} parent=0 // pred_check
    _
  $region75: #{prior_forward.1} parent=0 // pred_check_branch
    %10246 = sbr.rel (0) target = $region77
  $region76: #{prior_forward.1} parent=0 // pred_region
    _
  $region77: #{prior_forward.1} parent=0 // pred_fallthru
    _

</llo_original>
